<compile_context>
chip_gen: v7x
topology: tpu7x:2x2x1
jax: 0.10.0
libtpu: 0.0.40
codegen_flags: <defaults>
</compile_context>

<pallas_src>
import math

import jax
import jax.numpy as jnp
from jax.experimental import pallas as pl
from jax.experimental.pallas import tpu as pltpu

# ----------------------------- config ---------------------------------------
D = 32          # hidden size
H = 4           # attention heads
DH = D // H     # head dim
FFN = 64        # feed-forward hidden
EPS = 1e-12     # BERT-style LayerNorm eps
PATCH = 4       # vision patch size
VOCAB = 100

ENC_PARAM_KEYS = ["w_qkvo", "b_qkvo", "w1", "b1", "w2", "b2", "ln"]
CROSS_PARAM_KEYS = ["sa_w_qkvo", "sa_b_qkvo", "ca_w_qkvo", "ca_b_qkvo",
                    "w1", "b1", "w2", "b2", "ln"]


# --------------------------- in-kernel helpers -------------------------------
def _layer_norm(x, g, b):
    mu = jnp.mean(x, axis=-1, keepdims=True)
    var = jnp.mean(jnp.square(x - mu), axis=-1, keepdims=True)
    return (x - mu) * jax.lax.rsqrt(var + EPS) * g + b


def _gelu(x):
    # TODO(synk): tanh-approx GELU; HF/BERT default is exact erf GELU (tiny numeric diff).
    return 0.5 * x * (1.0 + jnp.tanh(0.7978845608028654 * (x + 0.044715 * x * x * x)))


def _mha_heads(q, k, v, bias, wo, bo):
    """Multi-head attention from pre-projected q/k/v.

    q: (Lq, D), k/v: (Lk, D), bias: (1, Lk) additive mask (or 0.0), wo: (D, D), bo: (1, D).
    Per-head context is accumulated directly into the output projection, avoiding the
    cross-lane relayout of a head concatenate.
    """
    scale = 1.0 / math.sqrt(DH)
    acc = None
    for h in range(H):                                   # static head loop (H=4)
        sl = slice(h * DH, (h + 1) * DH)
        qh, kh, vh = q[:, sl], k[:, sl], v[:, sl]
        s = jax.lax.dot_general(qh, kh, (((1,), (1,)), ((), ())),
                                preferred_element_type=jnp.float32) * scale + bias
        s = s - jnp.max(s, axis=-1, keepdims=True)
        p = jnp.exp(s)
        p = p * pl.reciprocal(jnp.sum(p, axis=-1, keepdims=True), approx=True)
        ctx = jnp.dot(p, vh, preferred_element_type=jnp.float32)            # (Lq, DH)
        part = jnp.dot(ctx, wo[sl, :], preferred_element_type=jnp.float32)  # (Lq, D)
        acc = part if acc is None else acc + part
    return acc + bo


def _enc_body(x, bias, w_qkvo, b_qkvo, w1, b1, w2, b2, ln1g, ln1b, ln2g, ln2b):
    """One transformer encoder layer on a (L, D) tile with fused (D, 4D) QKV+O slab."""
    # Single lane-dense (L, 32) x (32, 128) projection; last D columns (x @ wo) unused.
    proj = jnp.dot(x, w_qkvo, preferred_element_type=jnp.float32) + b_qkvo   # (L, 4D)
    q = proj[:, :D]
    k = proj[:, D:2 * D]
    v = proj[:, 2 * D:3 * D]
    attn = _mha_heads(q, k, v, bias, w_qkvo[:, 3 * D:], b_qkvo[:, 3 * D:])
    x = _layer_norm(x + attn, ln1g, ln1b)
    h = _gelu(jnp.dot(x, w1, preferred_element_type=jnp.float32) + b1)
    y = jnp.dot(h, w2, preferred_element_type=jnp.float32) + b2
    return _layer_norm(x + y, ln2g, ln2b)


# ------------------------------ kernels --------------------------------------
def _vision_kernel(patch_ref, pw_ref, pb_ref, pos_ref,
                   wq_ref, bq_ref, w1_ref, b1_ref, w2_ref, b2_ref, ln_ref, o_ref):
    # patch_ref: (1, P+1, Cp) with a zero row 0; pos_ref already folds in the CLS token.
    x = jnp.dot(patch_ref[0], pw_ref[...], preferred_element_type=jnp.float32) \
        + pb_ref[...] + pos_ref[...]                                         # (P+1, D)
    ln = ln_ref[...]                                                         # (4, D)
    x = _enc_body(x, 0.0, wq_ref[...], bq_ref[...], w1_ref[...], b1_ref[...],
                  w2_ref[...], b2_ref[...], ln[0:1], ln[1:2], ln[2:3], ln[3:4])
    o_ref[0] = x


def _text_kernel(x_ref, mask_ref,
                 wq_ref, bq_ref, w1_ref, b1_ref, w2_ref, b2_ref, ln_ref, o_ref):
    # x_ref: (1, L, D) word+pos embeddings, mask_ref: (1, 1, L), ln_ref: (6, D)
    ln = ln_ref[...]
    x = _layer_norm(x_ref[0], ln[0:1], ln[1:2])          # embedding LayerNorm (fused in)
    bias = (1.0 - mask_ref[0]) * (-1e9)                  # (1, L)
    x = _enc_body(x, bias, wq_ref[...], bq_ref[...], w1_ref[...], b1_ref[...],
                  w2_ref[...], b2_ref[...], ln[2:3], ln[3:4], ln[4:5], ln[5:6])
    o_ref[0] = x


def _cross_kernel(x_ref, tmask_ref, img_ref, imask_ref,
                  sa_w_ref, sa_b_ref, ca_w_ref, ca_b_ref,
                  w1_ref, b1_ref, w2_ref, b2_ref, ln_ref, o_ref):
    # x_ref: (1, L, D) text, img_ref: (1, P+1, D) image, masks: (1,1,L)/(1,1,P+1)
    x = x_ref[0]
    img = img_ref[0]
    ln = ln_ref[...]                                     # (6, D)
    tbias = (1.0 - tmask_ref[0]) * (-1e9)                # (1, L)
    ibias = (1.0 - imask_ref[0]) * (-1e9)                # (1, P+1)

    # text self-attention — only the CLS query is needed (downstream consumes [:, 0, :])
    sa_w = sa_w_ref[...]
    sa_b = sa_b_ref[...]
    proj = jnp.dot(x, sa_w, preferred_element_type=jnp.float32) + sa_b       # (L, 4D)
    attn0 = _mha_heads(proj[0:1, :D], proj[:, D:2 * D], proj[:, 2 * D:3 * D],
                       tbias, sa_w[:, 3 * D:], sa_b[:, 3 * D:])              # (1, D)
    xc = _layer_norm(x[0:1] + attn0, ln[0:1], ln[1:2])                       # (1, D)

    # cross-attention: CLS query, image keys/values
    ca_w = ca_w_ref[...]
    ca_b = ca_b_ref[...]
    qproj = jnp.dot(xc, ca_w, preferred_element_type=jnp.float32) + ca_b     # (1, 4D)
    kvproj = jnp.dot(img, ca_w, preferred_element_type=jnp.float32) + ca_b   # (P+1, 4D)
    cattn = _mha_heads(qproj[:, :D], kvproj[:, D:2 * D], kvproj[:, 2 * D:3 * D],
                       ibias, ca_w[:, 3 * D:], ca_b[:, 3 * D:])              # (1, D)
    xc = _layer_norm(xc + cattn, ln[2:3], ln[3:4])

    # FFN + final LN on the CLS row only
    h = _gelu(jnp.dot(xc, w1_ref[...], preferred_element_type=jnp.float32) + b1_ref[...])
    y = jnp.dot(h, w2_ref[...], preferred_element_type=jnp.float32) + b2_ref[...]
    xc = _layer_norm(xc + y, ln[4:5], ln[5:6])
    o_ref[0] = xc


# --------------------------- pallas_call wrappers -----------------------------
def _batched_spec(arr):
    nd = arr.ndim
    return pl.BlockSpec((1,) + arr.shape[1:], lambda b, _n=nd: (b,) + (0,) * (_n - 1))


def _shared_spec(arr):
    nd = arr.ndim
    return pl.BlockSpec(arr.shape, lambda b, _n=nd: (0,) * _n)


def get_vision_embeds(params, images):
    # layout: images NCHW (PyTorch convention); patchify = Conv2d(stride=patch) as matmul.
    B, C, Him, Wim = images.shape
    ps = PATCH
    Hp, Wp = Him // ps, Wim // ps
    P = Hp * Wp
    Cp = C * ps * ps
    patches = images.reshape(B, C, Hp, ps, Wp, ps) \
                    .transpose(0, 2, 4, 1, 3, 5) \
                    .reshape(B, P, Cp)
    # Prepend a zero "CLS patch" row so the fused kernel produces all P+1 tokens with
    # one matmul; fold cls_token into the position slab (row 0 = pos[0] + cls - patch_b).
    patches_ext = jnp.concatenate([jnp.zeros((B, 1, Cp), jnp.float32), patches], axis=1)
    cls_row = params["cls_token"] - params["patch_b"]                         # (1, D)
    pos_adj = jnp.concatenate([params["vis_pos"][0:1] + cls_row,
                               params["vis_pos"][1:]], axis=0)                # (P+1, D)
    P1 = P + 1
    lp = params["vis_layer"]
    weights = [params["patch_w"], params["patch_b"], pos_adj] + [lp[k] for k in ENC_PARAM_KEYS]
    x = pl.pallas_call(
        _vision_kernel,
        out_shape=jax.ShapeDtypeStruct((B, P1, D), jnp.float32),
        grid=(B,),
        in_specs=[_batched_spec(patches_ext)] + [_shared_spec(w) for w in weights],
        out_specs=pl.BlockSpec((1, P1, D), lambda b: (b, 0, 0)),
        compiler_params=pltpu.CompilerParams(dimension_semantics=("parallel",)),
    )(patches_ext, *weights)
    image_atts = jnp.ones((B, 1, P1), jnp.float32)
    return x, image_atts


def get_text_embeds_stacked(params, ids_stacked, mask_stacked):
    """Run the text encoder on all three captions stacked along batch (N = 3B)."""
    N, L = ids_stacked.shape
    # TODO(synk): embedding gather kept in plain JAX (jnp.take) — no clean small-Pallas gather.
    x = jnp.take(params["word_emb"], ids_stacked, axis=0) + params["text_pos"]  # (N, L, D)
    mask3 = mask_stacked.reshape(N, 1, L).astype(jnp.float32)
    lp = params["text_layer"]
    weights = [lp[k] for k in ENC_PARAM_KEYS]
    return pl.pallas_call(
        _text_kernel,
        out_shape=jax.ShapeDtypeStruct((N, L, D), jnp.float32),
        grid=(N,),
        in_specs=[_batched_spec(x), _batched_spec(mask3)] + [_shared_spec(w) for w in weights],
        out_specs=pl.BlockSpec((1, L, D), lambda b: (b, 0, 0)),
        compiler_params=pltpu.CompilerParams(dimension_semantics=("parallel",)),
    )(x, mask3, *weights)


def get_cross_embeds_stacked(params, image_embeds, image_atts, text_embeds, text_atts):
    """Cross-modal layer for all three captions (N = 3B); returns CLS rows (N, D)."""
    N, L, _ = text_embeds.shape
    B = image_embeds.shape[0]
    P1 = image_embeds.shape[1]
    tmask = text_atts.reshape(N, 1, L).astype(jnp.float32)
    lp = params["cross_layer"]
    weights = [lp[k] for k in CROSS_PARAM_KEYS]
    img_spec = pl.BlockSpec((1, P1, D), lambda b, _B=B: (b % _B, 0, 0))
    imask_spec = pl.BlockSpec((1, 1, P1), lambda b, _B=B: (b % _B, 0, 0))
    out = pl.pallas_call(
        _cross_kernel,
        out_shape=jax.ShapeDtypeStruct((N, 1, D), jnp.float32),
        grid=(N,),
        in_specs=[_batched_spec(text_embeds), _batched_spec(tmask), img_spec, imask_spec]
                 + [_shared_spec(w) for w in weights],
        out_specs=pl.BlockSpec((1, 1, D), lambda b: (b, 0, 0)),
        compiler_params=pltpu.CompilerParams(dimension_semantics=("parallel",)),
    )(text_embeds, tmask, image_embeds, image_atts, *weights)
    return out[:, 0, :]


# --------------------------- XVLMForSimilarities ------------------------------
def xvlm_for_similarities(params, images,
                          ta_ids, ta_mask, fa_ids, fa_mask, tp_ids, tp_mask):
    image_embeds, image_atts = get_vision_embeds(params, images)

    # mimic torch.squeeze(input_ids, dim=0): (1, B, L) -> (B, L)
    ta_ids = jnp.squeeze(ta_ids, axis=0)
    fa_ids = jnp.squeeze(fa_ids, axis=0)
    tp_ids = jnp.squeeze(tp_ids, axis=0)
    B = ta_ids.shape[0]

    # Stack the three captions along batch so text & cross each run as ONE pallas_call.
    ids_stacked = jnp.concatenate([ta_ids, fa_ids, tp_ids], axis=0)          # (3B, L)
    mask_stacked = jnp.concatenate([ta_mask, fa_mask, tp_mask], axis=0)      # (3B, L)

    text_embeds = get_text_embeds_stacked(params, ids_stacked, mask_stacked)  # (3B, L, D)
    cross_cls = get_cross_embeds_stacked(params, image_embeds, image_atts,
                                         text_embeds, mask_stacked)           # (3B, D)
    text_cls = text_embeds[:, 0, :]                                           # (3B, D)

    return (text_cls[0:B], text_cls[B:2 * B], text_cls[2 * B:3 * B],
            cross_cls[0:B], cross_cls[B:2 * B], cross_cls[2 * B:3 * B])


# ------------------------------ param init ------------------------------------
def make_params(key, num_img_tokens, text_len):
    keys = iter(jax.random.split(key, 64))

    def nrm(shape, scale=0.05):
        return scale * jax.random.normal(next(keys), shape, dtype=jnp.float32)

    ones = jnp.ones((1, D), jnp.float32)
    zeros = jnp.zeros((1, D), jnp.float32)

    def ln_slab(n_pairs):
        # rows alternate (gamma, beta) for each LayerNorm
        return jnp.concatenate([ones, zeros] * n_pairs, axis=0)

    def enc_layer(n_ln_pairs):
        return {
            "w_qkvo": nrm((D, 4 * D)),                      # [wq | wk | wv | wo]
            "b_qkvo": jnp.zeros((1, 4 * D), jnp.float32),   # [bq | bk | bv | bo]
            "w1": nrm((D, FFN)), "b1": jnp.zeros((1, FFN), jnp.float32),
            "w2": nrm((FFN, D)), "b2": jnp.zeros((1, D), jnp.float32),
            "ln": ln_slab(n_ln_pairs),
        }

    def cross_layer():
        return {
            "sa_w_qkvo": nrm((D, 4 * D)), "sa_b_qkvo": jnp.zeros((1, 4 * D), jnp.float32),
            "ca_w_qkvo": nrm((D, 4 * D)), "ca_b_qkvo": jnp.zeros((1, 4 * D), jnp.float32),
            "w1": nrm((D, FFN)), "b1": jnp.zeros((1, FFN), jnp.float32),
            "w2": nrm((FFN, D)), "b2": jnp.zeros((1, D), jnp.float32),
            "ln": ln_slab(3),   # [ln1g, ln1b, lncg, lncb, ln2g, ln2b]
        }

    return {
        "patch_w": nrm((4 * PATCH * PATCH, D)),
        "patch_b": jnp.zeros((1, D), jnp.float32),
        "cls_token": nrm((1, D)),
        "vis_pos": nrm((num_img_tokens, D)),
        "vis_layer": enc_layer(2),                          # [ln1g, ln1b, ln2g, ln2b]
        "word_emb": nrm((VOCAB, D)),
        "text_pos": nrm((1, text_len, D)),
        "text_layer": enc_layer(3),                         # [emb_g, emb_b, ln1g, ln1b, ln2g, ln2b]
        "cross_layer": cross_layer(),
    }


# -------------------------------- main -----------------------------------------
if __name__ == "__main__":
    B, C, IMG, L = 2, 4, 16, 8
    num_patches = (IMG // PATCH) * (IMG // PATCH)
    num_img_tokens = num_patches + 1

    key = jax.random.PRNGKey(0)
    k_img, k_par, k1, k2, k3 = jax.random.split(key, 5)

    images = jax.random.normal(k_img, (B, C, IMG, IMG), dtype=jnp.float32)
    params = make_params(k_par, num_img_tokens, L)

    # text inputs: input_ids carry a leading dim of 1 (squeezed in forward, like PyTorch)
    ta_ids = jax.random.randint(k1, (1, B, L), 0, VOCAB)
    fa_ids = jax.random.randint(k2, (1, B, L), 0, VOCAB)
    tp_ids = jax.random.randint(k3, (1, B, L), 0, VOCAB)
    ta_mask = jnp.ones((B, L), jnp.float32)
    fa_mask = jnp.concatenate(
        [jnp.ones((B, L - 2), jnp.float32), jnp.zeros((B, 2), jnp.float32)], axis=1)
    tp_mask = jnp.ones((B, L), jnp.float32)

    fwd = jax.jit(xvlm_for_similarities)
    outs = fwd(params, images, ta_ids, ta_mask, fa_ids, fa_mask, tp_ids, tp_mask)
    outs = jax.block_until_ready(outs)

    expected = (B, D)
    assert all(o.shape == expected for o in outs), [o.shape for o in outs]
    assert all(bool(jnp.all(jnp.isfinite(o))) for o in outs)
    print("KERNEL_OK")
</pallas_src>

<mosaic_0001>
module attributes {stable_mosaic.version = 11 : i64} {
  func.func @_text_kernel(%arg0: i32, %arg1: memref<1x8x32xf32, #tpu.memory_space<vmem>>, %arg2: memref<1x1x8xf32, #tpu.memory_space<vmem>>, %arg3: memref<32x128xf32, #tpu.memory_space<vmem>>, %arg4: memref<1x128xf32, #tpu.memory_space<vmem>>, %arg5: memref<32x64xf32, #tpu.memory_space<vmem>>, %arg6: memref<1x64xf32, #tpu.memory_space<vmem>>, %arg7: memref<64x32xf32, #tpu.memory_space<vmem>>, %arg8: memref<1x32xf32, #tpu.memory_space<vmem>>, %arg9: memref<6x32xf32, #tpu.memory_space<vmem>>, %arg10: memref<1x8x32xf32, #tpu.memory_space<vmem>>) attributes {dimension_semantics = [#tpu.dimension_semantics<parallel>], iteration_bounds = array<i64: 6>, scalar_prefetch = 0 : i64, scratch_operands = 0 : i64, tpu.core_type = #tpu.core_type<tc>, window_params = [{transform_indices = @transform_0, window_bounds = array<i64: 1, 8, 32>}, {transform_indices = @transform_1, window_bounds = array<i64: 1, 1, 8>}, {pipeline_mode = #tpu.pipeline_mode<synchronous>, transform_indices = @transform_2, window_bounds = array<i64: 32, 128>}, {pipeline_mode = #tpu.pipeline_mode<synchronous>, transform_indices = @transform_3, window_bounds = array<i64: 1, 128>}, {pipeline_mode = #tpu.pipeline_mode<synchronous>, transform_indices = @transform_4, window_bounds = array<i64: 32, 64>}, {pipeline_mode = #tpu.pipeline_mode<synchronous>, transform_indices = @transform_5, window_bounds = array<i64: 1, 64>}, {pipeline_mode = #tpu.pipeline_mode<synchronous>, transform_indices = @transform_6, window_bounds = array<i64: 64, 32>}, {pipeline_mode = #tpu.pipeline_mode<synchronous>, transform_indices = @transform_7, window_bounds = array<i64: 1, 32>}, {pipeline_mode = #tpu.pipeline_mode<synchronous>, transform_indices = @transform_8, window_bounds = array<i64: 6, 32>}, {transform_indices = @transform_9, window_bounds = array<i64: 1, 8, 32>}]} {
    %c0 = arith.constant 0 : index
    %c0_0 = arith.constant 0 : index
    %0 = vector.load %arg9[%c0, %c0_0] : memref<6x32xf32, #tpu.memory_space<vmem>>, vector<6x32xf32>
    %c0_1 = arith.constant 0 : index
    %c0_2 = arith.constant 0 : index
    %c0_3 = arith.constant 0 : index
    %1 = vector.load %arg1[%c0_1, %c0_2, %c0_3] : memref<1x8x32xf32, #tpu.memory_space<vmem>>, vector<1x8x32xf32>
    %2 = vector.shape_cast %1 : vector<1x8x32xf32> to vector<8x32xf32>
    %3 = vector.extract_strided_slice %0 {offsets = [0, 0], sizes = [1, 32], strides = [1, 1]} : vector<6x32xf32> to vector<1x32xf32>
    %4 = vector.extract_strided_slice %0 {offsets = [1, 0], sizes = [1, 32], strides = [1, 1]} : vector<6x32xf32> to vector<1x32xf32>
    %cst = arith.constant dense<0.000000e+00> : vector<8xf32>
    %5 = vector.multi_reduction <add>, %2, %cst [1] : vector<8x32xf32> to vector<8xf32>
    %6 = vector.shape_cast %5 : vector<8xf32> to vector<8x1xf32>
    %cst_4 = arith.constant 3.200000e+01 : f32
    %7 = vector.broadcast %cst_4 : f32 to vector<8x1xf32>
    %8 = arith.divf %6, %7 : vector<8x1xf32>
    %9 = vector.broadcast %8 : vector<8x1xf32> to vector<8x32xf32>
    %10 = arith.subf %2, %9 : vector<8x32xf32>
    %11 = arith.mulf %10, %10 : vector<8x32xf32>
    %cst_5 = arith.constant dense<0.000000e+00> : vector<8xf32>
    %12 = vector.multi_reduction <add>, %11, %cst_5 [1] : vector<8x32xf32> to vector<8xf32>
    %13 = vector.shape_cast %12 : vector<8xf32> to vector<8x1xf32>
    %cst_6 = arith.constant 3.200000e+01 : f32
    %14 = vector.broadcast %cst_6 : f32 to vector<8x1xf32>
    %15 = arith.divf %13, %14 : vector<8x1xf32>
    %16 = vector.broadcast %8 : vector<8x1xf32> to vector<8x32xf32>
    %17 = arith.subf %2, %16 : vector<8x32xf32>
    %cst_7 = arith.constant 9.99999996E-13 : f32
    %18 = vector.broadcast %cst_7 : f32 to vector<8x1xf32>
    %19 = arith.addf %15, %18 : vector<8x1xf32>
    %20 = math.rsqrt %19 : vector<8x1xf32>
    %21 = vector.broadcast %20 : vector<8x1xf32> to vector<8x32xf32>
    %22 = arith.mulf %17, %21 : vector<8x32xf32>
    %23 = vector.broadcast %3 : vector<1x32xf32> to vector<8x32xf32>
    %24 = arith.mulf %22, %23 : vector<8x32xf32>
    %25 = vector.broadcast %4 : vector<1x32xf32> to vector<8x32xf32>
    %26 = arith.addf %24, %25 : vector<8x32xf32>
    %c0_8 = arith.constant 0 : index
    %c0_9 = arith.constant 0 : index
    %c0_10 = arith.constant 0 : index
    %27 = vector.load %arg2[%c0_8, %c0_9, %c0_10] : memref<1x1x8xf32, #tpu.memory_space<vmem>>, vector<1x1x8xf32>
    %28 = vector.shape_cast %27 : vector<1x1x8xf32> to vector<1x8xf32>
    %cst_11 = arith.constant 1.000000e+00 : f32
    %29 = vector.broadcast %cst_11 : f32 to vector<1x8xf32>
    %30 = arith.subf %29, %28 : vector<1x8xf32>
    %cst_12 = arith.constant -1.000000e+09 : f32
    %31 = vector.broadcast %cst_12 : f32 to vector<1x8xf32>
    %32 = arith.mulf %30, %31 : vector<1x8xf32>
    %c0_13 = arith.constant 0 : index
    %c0_14 = arith.constant 0 : index
    %33 = vector.load %arg3[%c0_13, %c0_14] : memref<32x128xf32, #tpu.memory_space<vmem>>, vector<32x128xf32>
    %c0_15 = arith.constant 0 : index
    %c0_16 = arith.constant 0 : index
    %34 = vector.load %arg4[%c0_15, %c0_16] : memref<1x128xf32, #tpu.memory_space<vmem>>, vector<1x128xf32>
    %c0_17 = arith.constant 0 : index
    %c0_18 = arith.constant 0 : index
    %35 = vector.load %arg5[%c0_17, %c0_18] : memref<32x64xf32, #tpu.memory_space<vmem>>, vector<32x64xf32>
    %c0_19 = arith.constant 0 : index
    %c0_20 = arith.constant 0 : index
    %36 = vector.load %arg6[%c0_19, %c0_20] : memref<1x64xf32, #tpu.memory_space<vmem>>, vector<1x64xf32>
    %c0_21 = arith.constant 0 : index
    %c0_22 = arith.constant 0 : index
    %37 = vector.load %arg7[%c0_21, %c0_22] : memref<64x32xf32, #tpu.memory_space<vmem>>, vector<64x32xf32>
    %c0_23 = arith.constant 0 : index
    %c0_24 = arith.constant 0 : index
    %38 = vector.load %arg8[%c0_23, %c0_24] : memref<1x32xf32, #tpu.memory_space<vmem>>, vector<1x32xf32>
    %39 = vector.extract_strided_slice %0 {offsets = [2, 0], sizes = [1, 32], strides = [1, 1]} : vector<6x32xf32> to vector<1x32xf32>
    %40 = vector.extract_strided_slice %0 {offsets = [3, 0], sizes = [1, 32], strides = [1, 1]} : vector<6x32xf32> to vector<1x32xf32>
    %41 = vector.extract_strided_slice %0 {offsets = [4, 0], sizes = [1, 32], strides = [1, 1]} : vector<6x32xf32> to vector<1x32xf32>
    %42 = vector.extract_strided_slice %0 {offsets = [5, 0], sizes = [1, 32], strides = [1, 1]} : vector<6x32xf32> to vector<1x32xf32>
    %cst_25 = arith.constant dense<0.000000e+00> : vector<8x128xf32>
    %43 = tpu.matmul %26, %33, %cst_25 {dimension_numbers = #tpu.dot_dimension_numbers<[1], [0], [0], [1], [0, 0, 1, 1], [], []>} : vector<8x32xf32>, vector<32x128xf32>, vector<8x128xf32> -> vector<8x128xf32>
    %44 = vector.broadcast %34 : vector<1x128xf32> to vector<8x128xf32>
    %45 = arith.addf %43, %44 : vector<8x128xf32>
    %46 = vector.extract_strided_slice %45 {offsets = [0, 0], sizes = [8, 32], strides = [1, 1]} : vector<8x128xf32> to vector<8x32xf32>
    %47 = vector.extract_strided_slice %45 {offsets = [0, 32], sizes = [8, 32], strides = [1, 1]} : vector<8x128xf32> to vector<8x32xf32>
    %48 = vector.extract_strided_slice %45 {offsets = [0, 64], sizes = [8, 32], strides = [1, 1]} : vector<8x128xf32> to vector<8x32xf32>
    %49 = vector.extract_strided_slice %33 {offsets = [0, 96], sizes = [32, 32], strides = [1, 1]} : vector<32x128xf32> to vector<32x32xf32>
    %50 = vector.extract_strided_slice %34 {offsets = [0, 96], sizes = [1, 32], strides = [1, 1]} : vector<1x128xf32> to vector<1x32xf32>
    %51 = vector.extract_strided_slice %46 {offsets = [0, 0], sizes = [8, 8], strides = [1, 1]} : vector<8x32xf32> to vector<8x8xf32>
    %52 = vector.extract_strided_slice %47 {offsets = [0, 0], sizes = [8, 8], strides = [1, 1]} : vector<8x32xf32> to vector<8x8xf32>
    %53 = vector.extract_strided_slice %48 {offsets = [0, 0], sizes = [8, 8], strides = [1, 1]} : vector<8x32xf32> to vector<8x8xf32>
    %cst_26 = arith.constant dense<0.000000e+00> : vector<8x8xf32>
    %54 = tpu.matmul %51, %52, %cst_26 {dimension_numbers = #tpu.dot_dimension_numbers<[1], [1], [0], [0], [0, 0, 1, 0], [], []>} : vector<8x8xf32>, vector<8x8xf32>, vector<8x8xf32> -> vector<8x8xf32>
    %cst_27 = arith.constant 0.353553385 : f32
    %55 = vector.broadcast %cst_27 : f32 to vector<8x8xf32>
    %56 = arith.mulf %54, %55 : vector<8x8xf32>
    %57 = vector.broadcast %32 : vector<1x8xf32> to vector<8x8xf32>
    %58 = arith.addf %56, %57 : vector<8x8xf32>
    %cst_28 = arith.constant dense<0xFF800000> : vector<8xf32>
    %59 = vector.multi_reduction <maximumf>, %58, %cst_28 [1] : vector<8x8xf32> to vector<8xf32>
    %60 = vector.shape_cast %59 : vector<8xf32> to vector<8x1xf32>
    %61 = vector.broadcast %60 : vector<8x1xf32> to vector<8x8xf32>
    %62 = arith.subf %58, %61 : vector<8x8xf32>
    %63 = math.exp %62 : vector<8x8xf32>
    %cst_29 = arith.constant dense<0.000000e+00> : vector<8xf32>
    %64 = vector.multi_reduction <add>, %63, %cst_29 [1] : vector<8x8xf32> to vector<8xf32>
    %65 = vector.shape_cast %64 : vector<8xf32> to vector<8x1xf32>
    %66 = tpu.reciprocal %65 {approx = true} : vector<8x1xf32> -> vector<8x1xf32>
    %67 = vector.broadcast %66 : vector<8x1xf32> to vector<8x8xf32>
    %68 = arith.mulf %63, %67 : vector<8x8xf32>
    %cst_30 = arith.constant dense<0.000000e+00> : vector<8x8xf32>
    %69 = tpu.matmul %68, %53, %cst_30 {dimension_numbers = #tpu.dot_dimension_numbers<[1], [0], [0], [1], [0, 0, 1, 1], [], []>} : vector<8x8xf32>, vector<8x8xf32>, vector<8x8xf32> -> vector<8x8xf32>
    %70 = vector.extract_strided_slice %49 {offsets = [0, 0], sizes = [8, 32], strides = [1, 1]} : vector<32x32xf32> to vector<8x32xf32>
    %cst_31 = arith.constant dense<0.000000e+00> : vector<8x32xf32>
    %71 = tpu.matmul %69, %70, %cst_31 {dimension_numbers = #tpu.dot_dimension_numbers<[1], [0], [0], [1], [0, 0, 1, 1], [], []>} : vector<8x8xf32>, vector<8x32xf32>, vector<8x32xf32> -> vector<8x32xf32>
    %72 = vector.extract_strided_slice %46 {offsets = [0, 8], sizes = [8, 8], strides = [1, 1]} : vector<8x32xf32> to vector<8x8xf32>
    %73 = vector.extract_strided_slice %47 {offsets = [0, 8], sizes = [8, 8], strides = [1, 1]} : vector<8x32xf32> to vector<8x8xf32>
    %74 = vector.extract_strided_slice %48 {offsets = [0, 8], sizes = [8, 8], strides = [1, 1]} : vector<8x32xf32> to vector<8x8xf32>
    %cst_32 = arith.constant dense<0.000000e+00> : vector<8x8xf32>
    %75 = tpu.matmul %72, %73, %cst_32 {dimension_numbers = #tpu.dot_dimension_numbers<[1], [1], [0], [0], [0, 0, 1, 0], [], []>} : vector<8x8xf32>, vector<8x8xf32>, vector<8x8xf32> -> vector<8x8xf32>
    %cst_33 = arith.constant 0.353553385 : f32
    %76 = vector.broadcast %cst_33 : f32 to vector<8x8xf32>
    %77 = arith.mulf %75, %76 : vector<8x8xf32>
    %78 = vector.broadcast %32 : vector<1x8xf32> to vector<8x8xf32>
    %79 = arith.addf %77, %78 : vector<8x8xf32>
    %cst_34 = arith.constant dense<0xFF800000> : vector<8xf32>
    %80 = vector.multi_reduction <maximumf>, %79, %cst_34 [1] : vector<8x8xf32> to vector<8xf32>
    %81 = vector.shape_cast %80 : vector<8xf32> to vector<8x1xf32>
    %82 = vector.broadcast %81 : vector<8x1xf32> to vector<8x8xf32>
    %83 = arith.subf %79, %82 : vector<8x8xf32>
    %84 = math.exp %83 : vector<8x8xf32>
    %cst_35 = arith.constant dense<0.000000e+00> : vector<8xf32>
    %85 = vector.multi_reduction <add>, %84, %cst_35 [1] : vector<8x8xf32> to vector<8xf32>
    %86 = vector.shape_cast %85 : vector<8xf32> to vector<8x1xf32>
    %87 = tpu.reciprocal %86 {approx = true} : vector<8x1xf32> -> vector<8x1xf32>
    %88 = vector.broadcast %87 : vector<8x1xf32> to vector<8x8xf32>
    %89 = arith.mulf %84, %88 : vector<8x8xf32>
    %cst_36 = arith.constant dense<0.000000e+00> : vector<8x8xf32>
    %90 = tpu.matmul %89, %74, %cst_36 {dimension_numbers = #tpu.dot_dimension_numbers<[1], [0], [0], [1], [0, 0, 1, 1], [], []>} : vector<8x8xf32>, vector<8x8xf32>, vector<8x8xf32> -> vector<8x8xf32>
    %91 = vector.extract_strided_slice %49 {offsets = [8, 0], sizes = [8, 32], strides = [1, 1]} : vector<32x32xf32> to vector<8x32xf32>
    %cst_37 = arith.constant dense<0.000000e+00> : vector<8x32xf32>
    %92 = tpu.matmul %90, %91, %cst_37 {dimension_numbers = #tpu.dot_dimension_numbers<[1], [0], [0], [1], [0, 0, 1, 1], [], []>} : vector<8x8xf32>, vector<8x32xf32>, vector<8x32xf32> -> vector<8x32xf32>
    %93 = arith.addf %71, %92 : vector<8x32xf32>
    %94 = vector.extract_strided_slice %46 {offsets = [0, 16], sizes = [8, 8], strides = [1, 1]} : vector<8x32xf32> to vector<8x8xf32>
    %95 = vector.extract_strided_slice %47 {offsets = [0, 16], sizes = [8, 8], strides = [1, 1]} : vector<8x32xf32> to vector<8x8xf32>
    %96 = vector.extract_strided_slice %48 {offsets = [0, 16], sizes = [8, 8], strides = [1, 1]} : vector<8x32xf32> to vector<8x8xf32>
    %cst_38 = arith.constant dense<0.000000e+00> : vector<8x8xf32>
    %97 = tpu.matmul %94, %95, %cst_38 {dimension_numbers = #tpu.dot_dimension_numbers<[1], [1], [0], [0], [0, 0, 1, 0], [], []>} : vector<8x8xf32>, vector<8x8xf32>, vector<8x8xf32> -> vector<8x8xf32>
    %cst_39 = arith.constant 0.353553385 : f32
    %98 = vector.broadcast %cst_39 : f32 to vector<8x8xf32>
    %99 = arith.mulf %97, %98 : vector<8x8xf32>
    %100 = vector.broadcast %32 : vector<1x8xf32> to vector<8x8xf32>
    %101 = arith.addf %99, %100 : vector<8x8xf32>
    %cst_40 = arith.constant dense<0xFF800000> : vector<8xf32>
    %102 = vector.multi_reduction <maximumf>, %101, %cst_40 [1] : vector<8x8xf32> to vector<8xf32>
    %103 = vector.shape_cast %102 : vector<8xf32> to vector<8x1xf32>
    %104 = vector.broadcast %103 : vector<8x1xf32> to vector<8x8xf32>
    %105 = arith.subf %101, %104 : vector<8x8xf32>
    %106 = math.exp %105 : vector<8x8xf32>
    %cst_41 = arith.constant dense<0.000000e+00> : vector<8xf32>
    %107 = vector.multi_reduction <add>, %106, %cst_41 [1] : vector<8x8xf32> to vector<8xf32>
    %108 = vector.shape_cast %107 : vector<8xf32> to vector<8x1xf32>
    %109 = tpu.reciprocal %108 {approx = true} : vector<8x1xf32> -> vector<8x1xf32>
    %110 = vector.broadcast %109 : vector<8x1xf32> to vector<8x8xf32>
    %111 = arith.mulf %106, %110 : vector<8x8xf32>
    %cst_42 = arith.constant dense<0.000000e+00> : vector<8x8xf32>
    %112 = tpu.matmul %111, %96, %cst_42 {dimension_numbers = #tpu.dot_dimension_numbers<[1], [0], [0], [1], [0, 0, 1, 1], [], []>} : vector<8x8xf32>, vector<8x8xf32>, vector<8x8xf32> -> vector<8x8xf32>
    %113 = vector.extract_strided_slice %49 {offsets = [16, 0], sizes = [8, 32], strides = [1, 1]} : vector<32x32xf32> to vector<8x32xf32>
    %cst_43 = arith.constant dense<0.000000e+00> : vector<8x32xf32>
    %114 = tpu.matmul %112, %113, %cst_43 {dimension_numbers = #tpu.dot_dimension_numbers<[1], [0], [0], [1], [0, 0, 1, 1], [], []>} : vector<8x8xf32>, vector<8x32xf32>, vector<8x32xf32> -> vector<8x32xf32>
    %115 = arith.addf %93, %114 : vector<8x32xf32>
    %116 = vector.extract_strided_slice %46 {offsets = [0, 24], sizes = [8, 8], strides = [1, 1]} : vector<8x32xf32> to vector<8x8xf32>
    %117 = vector.extract_strided_slice %47 {offsets = [0, 24], sizes = [8, 8], strides = [1, 1]} : vector<8x32xf32> to vector<8x8xf32>
    %118 = vector.extract_strided_slice %48 {offsets = [0, 24], sizes = [8, 8], strides = [1, 1]} : vector<8x32xf32> to vector<8x8xf32>
    %cst_44 = arith.constant dense<0.000000e+00> : vector<8x8xf32>
    %119 = tpu.matmul %116, %117, %cst_44 {dimension_numbers = #tpu.dot_dimension_numbers<[1], [1], [0], [0], [0, 0, 1, 0], [], []>} : vector<8x8xf32>, vector<8x8xf32>, vector<8x8xf32> -> vector<8x8xf32>
    %cst_45 = arith.constant 0.353553385 : f32
    %120 = vector.broadcast %cst_45 : f32 to vector<8x8xf32>
    %121 = arith.mulf %119, %120 : vector<8x8xf32>
    %122 = vector.broadcast %32 : vector<1x8xf32> to vector<8x8xf32>
    %123 = arith.addf %121, %122 : vector<8x8xf32>
    %cst_46 = arith.constant dense<0xFF800000> : vector<8xf32>
    %124 = vector.multi_reduction <maximumf>, %123, %cst_46 [1] : vector<8x8xf32> to vector<8xf32>
    %125 = vector.shape_cast %124 : vector<8xf32> to vector<8x1xf32>
    %126 = vector.broadcast %125 : vector<8x1xf32> to vector<8x8xf32>
    %127 = arith.subf %123, %126 : vector<8x8xf32>
    %128 = math.exp %127 : vector<8x8xf32>
    %cst_47 = arith.constant dense<0.000000e+00> : vector<8xf32>
    %129 = vector.multi_reduction <add>, %128, %cst_47 [1] : vector<8x8xf32> to vector<8xf32>
    %130 = vector.shape_cast %129 : vector<8xf32> to vector<8x1xf32>
    %131 = tpu.reciprocal %130 {approx = true} : vector<8x1xf32> -> vector<8x1xf32>
    %132 = vector.broadcast %131 : vector<8x1xf32> to vector<8x8xf32>
    %133 = arith.mulf %128, %132 : vector<8x8xf32>
    %cst_48 = arith.constant dense<0.000000e+00> : vector<8x8xf32>
    %134 = tpu.matmul %133, %118, %cst_48 {dimension_numbers = #tpu.dot_dimension_numbers<[1], [0], [0], [1], [0, 0, 1, 1], [], []>} : vector<8x8xf32>, vector<8x8xf32>, vector<8x8xf32> -> vector<8x8xf32>
    %135 = vector.extract_strided_slice %49 {offsets = [24, 0], sizes = [8, 32], strides = [1, 1]} : vector<32x32xf32> to vector<8x32xf32>
    %cst_49 = arith.constant dense<0.000000e+00> : vector<8x32xf32>
    %136 = tpu.matmul %134, %135, %cst_49 {dimension_numbers = #tpu.dot_dimension_numbers<[1], [0], [0], [1], [0, 0, 1, 1], [], []>} : vector<8x8xf32>, vector<8x32xf32>, vector<8x32xf32> -> vector<8x32xf32>
    %137 = arith.addf %115, %136 : vector<8x32xf32>
    %138 = vector.broadcast %50 : vector<1x32xf32> to vector<8x32xf32>
    %139 = arith.addf %137, %138 : vector<8x32xf32>
    %140 = arith.addf %26, %139 : vector<8x32xf32>
    %cst_50 = arith.constant dense<0.000000e+00> : vector<8xf32>
    %141 = vector.multi_reduction <add>, %140, %cst_50 [1] : vector<8x32xf32> to vector<8xf32>
    %142 = vector.shape_cast %141 : vector<8xf32> to vector<8x1xf32>
    %cst_51 = arith.constant 3.200000e+01 : f32
    %143 = vector.broadcast %cst_51 : f32 to vector<8x1xf32>
    %144 = arith.divf %142, %143 : vector<8x1xf32>
    %145 = vector.broadcast %144 : vector<8x1xf32> to vector<8x32xf32>
    %146 = arith.subf %140, %145 : vector<8x32xf32>
    %147 = arith.mulf %146, %146 : vector<8x32xf32>
    %cst_52 = arith.constant dense<0.000000e+00> : vector<8xf32>
    %148 = vector.multi_reduction <add>, %147, %cst_52 [1] : vector<8x32xf32> to vector<8xf32>
    %149 = vector.shape_cast %148 : vector<8xf32> to vector<8x1xf32>
    %cst_53 = arith.constant 3.200000e+01 : f32
    %150 = vector.broadcast %cst_53 : f32 to vector<8x1xf32>
    %151 = arith.divf %149, %150 : vector<8x1xf32>
    %152 = vector.broadcast %144 : vector<8x1xf32> to vector<8x32xf32>
    %153 = arith.subf %140, %152 : vector<8x32xf32>
    %cst_54 = arith.constant 9.99999996E-13 : f32
    %154 = vector.broadcast %cst_54 : f32 to vector<8x1xf32>
    %155 = arith.addf %151, %154 : vector<8x1xf32>
    %156 = math.rsqrt %155 : vector<8x1xf32>
    %157 = vector.broadcast %156 : vector<8x1xf32> to vector<8x32xf32>
    %158 = arith.mulf %153, %157 : vector<8x32xf32>
    %159 = vector.broadcast %39 : vector<1x32xf32> to vector<8x32xf32>
    %160 = arith.mulf %158, %159 : vector<8x32xf32>
    %161 = vector.broadcast %40 : vector<1x32xf32> to vector<8x32xf32>
    %162 = arith.addf %160, %161 : vector<8x32xf32>
    %cst_55 = arith.constant dense<0.000000e+00> : vector<8x64xf32>
    %163 = tpu.matmul %162, %35, %cst_55 {dimension_numbers = #tpu.dot_dimension_numbers<[1], [0], [0], [1], [0, 0, 1, 1], [], []>} : vector<8x32xf32>, vector<32x64xf32>, vector<8x64xf32> -> vector<8x64xf32>
    %164 = vector.broadcast %36 : vector<1x64xf32> to vector<8x64xf32>
    %165 = arith.addf %163, %164 : vector<8x64xf32>
    %cst_56 = arith.constant 5.000000e-01 : f32
    %166 = vector.broadcast %cst_56 : f32 to vector<8x64xf32>
    %167 = arith.mulf %166, %165 : vector<8x64xf32>
    %cst_57 = arith.constant 4.471500e-02 : f32
    %168 = vector.broadcast %cst_57 : f32 to vector<8x64xf32>
    %169 = arith.mulf %168, %165 : vector<8x64xf32>
    %170 = arith.mulf %169, %165 : vector<8x64xf32>
    %171 = arith.mulf %170, %165 : vector<8x64xf32>
    %172 = arith.addf %165, %171 : vector<8x64xf32>
    %cst_58 = arith.constant 0.797884583 : f32
    %173 = vector.broadcast %cst_58 : f32 to vector<8x64xf32>
    %174 = arith.mulf %173, %172 : vector<8x64xf32>
    %175 = math.tanh %174 : vector<8x64xf32>
    %cst_59 = arith.constant 1.000000e+00 : f32
    %176 = vector.broadcast %cst_59 : f32 to vector<8x64xf32>
    %177 = arith.addf %176, %175 : vector<8x64xf32>
    %178 = arith.mulf %167, %177 : vector<8x64xf32>
    %cst_60 = arith.constant dense<0.000000e+00> : vector<8x32xf32>
    %179 = tpu.matmul %178, %37, %cst_60 {dimension_numbers = #tpu.dot_dimension_numbers<[1], [0], [0], [1], [0, 0, 1, 1], [], []>} : vector<8x64xf32>, vector<64x32xf32>, vector<8x32xf32> -> vector<8x32xf32>
    %180 = vector.broadcast %38 : vector<1x32xf32> to vector<8x32xf32>
    %181 = arith.addf %179, %180 : vector<8x32xf32>
    %182 = arith.addf %162, %181 : vector<8x32xf32>
    %cst_61 = arith.constant dense<0.000000e+00> : vector<8xf32>
    %183 = vector.multi_reduction <add>, %182, %cst_61 [1] : vector<8x32xf32> to vector<8xf32>
    %184 = vector.shape_cast %183 : vector<8xf32> to vector<8x1xf32>
    %cst_62 = arith.constant 3.200000e+01 : f32
    %185 = vector.broadcast %cst_62 : f32 to vector<8x1xf32>
    %186 = arith.divf %184, %185 : vector<8x1xf32>
    %187 = vector.broadcast %186 : vector<8x1xf32> to vector<8x32xf32>
    %188 = arith.subf %182, %187 : vector<8x32xf32>
    %189 = arith.mulf %188, %188 : vector<8x32xf32>
    %cst_63 = arith.constant dense<0.000000e+00> : vector<8xf32>
    %190 = vector.multi_reduction <add>, %189, %cst_63 [1] : vector<8x32xf32> to vector<8xf32>
    %191 = vector.shape_cast %190 : vector<8xf32> to vector<8x1xf32>
    %cst_64 = arith.constant 3.200000e+01 : f32
    %192 = vector.broadcast %cst_64 : f32 to vector<8x1xf32>
    %193 = arith.divf %191, %192 : vector<8x1xf32>
    %194 = vector.broadcast %186 : vector<8x1xf32> to vector<8x32xf32>
    %195 = arith.subf %182, %194 : vector<8x32xf32>
    %cst_65 = arith.constant 9.99999996E-13 : f32
    %196 = vector.broadcast %cst_65 : f32 to vector<8x1xf32>
    %197 = arith.addf %193, %196 : vector<8x1xf32>
    %198 = math.rsqrt %197 : vector<8x1xf32>
    %199 = vector.broadcast %198 : vector<8x1xf32> to vector<8x32xf32>
    %200 = arith.mulf %195, %199 : vector<8x32xf32>
    %201 = vector.broadcast %41 : vector<1x32xf32> to vector<8x32xf32>
    %202 = arith.mulf %200, %201 : vector<8x32xf32>
    %203 = vector.broadcast %42 : vector<1x32xf32> to vector<8x32xf32>
    %204 = arith.addf %202, %203 : vector<8x32xf32>
    %c0_66 = arith.constant 0 : index
    %c0_67 = arith.constant 0 : index
    %c0_68 = arith.constant 0 : index
    %205 = vector.load %arg10[%c0_66, %c0_67, %c0_68] : memref<1x8x32xf32, #tpu.memory_space<vmem>>, vector<1x8x32xf32>
    %206 = vector.shape_cast %205 : vector<1x8x32xf32> to vector<8x32xf32>
    %207 = vector.shape_cast %204 : vector<8x32xf32> to vector<1x8x32xf32>
    tpu.vector_store %arg10[%c0_66, %c0_67, %c0_68], %207 {strides = array<i32>} : memref<1x8x32xf32, #tpu.memory_space<vmem>>, vector<1x8x32xf32>,
    return
  }
  func.func @transform_0(%arg0: i32) -> (i32, i32, i32) {
    %c0_i32 = arith.constant 0 : i32
    %c0_i32_0 = arith.constant 0 : i32
    %c0_i32_1 = arith.constant 0 : i32
    return %arg0, %c0_i32, %c0_i32_0 : i32, i32, i32
  }
  func.func @transform_1(%arg0: i32) -> (i32, i32, i32) {
    %c0_i32 = arith.constant 0 : i32
    %c0_i32_0 = arith.constant 0 : i32
    %c0_i32_1 = arith.constant 0 : i32
    return %arg0, %c0_i32, %c0_i32_0 : i32, i32, i32
  }
  func.func @transform_2(%arg0: i32) -> (i32, i32) {
    %c0_i32 = arith.constant 0 : i32
    %c0_i32_0 = arith.constant 0 : i32
    %c0_i32_1 = arith.constant 0 : i32
    return %c0_i32, %c0_i32_0 : i32, i32
  }
  func.func @transform_3(%arg0: i32) -> (i32, i32) {
    %c0_i32 = arith.constant 0 : i32
    %c0_i32_0 = arith.constant 0 : i32
    %c0_i32_1 = arith.constant 0 : i32
    return %c0_i32, %c0_i32_0 : i32, i32
  }
  func.func @transform_4(%arg0: i32) -> (i32, i32) {
    %c0_i32 = arith.constant 0 : i32
    %c0_i32_0 = arith.constant 0 : i32
    %c0_i32_1 = arith.constant 0 : i32
    return %c0_i32, %c0_i32_0 : i32, i32
  }
  func.func @transform_5(%arg0: i32) -> (i32, i32) {
    %c0_i32 = arith.constant 0 : i32
    %c0_i32_0 = arith.constant 0 : i32
    %c0_i32_1 = arith.constant 0 : i32
    return %c0_i32, %c0_i32_0 : i32, i32
  }
  func.func @transform_6(%arg0: i32) -> (i32, i32) {
    %c0_i32 = arith.constant 0 : i32
    %c0_i32_0 = arith.constant 0 : i32
    %c0_i32_1 = arith.constant 0 : i32
    return %c0_i32, %c0_i32_0 : i32, i32
  }
  func.func @transform_7(%arg0: i32) -> (i32, i32) {
    %c0_i32 = arith.constant 0 : i32
    %c0_i32_0 = arith.constant 0 : i32
    %c0_i32_1 = arith.constant 0 : i32
    return %c0_i32, %c0_i32_0 : i32, i32
  }
  func.func @transform_8(%arg0: i32) -> (i32, i32) {
    %c0_i32 = arith.constant 0 : i32
    %c0_i32_0 = arith.constant 0 : i32
    %c0_i32_1 = arith.constant 0 : i32
    return %c0_i32, %c0_i32_0 : i32, i32
  }
  func.func @transform_9(%arg0: i32) -> (i32, i32, i32) {
    %c0_i32 = arith.constant 0 : i32
    %c0_i32_0 = arith.constant 0 : i32
    %c0_i32_1 = arith.constant 0 : i32
    return %arg0, %c0_i32, %c0_i32_0 : i32, i32, i32
  }
}

module attributes {stable_mosaic.version = 11 : i64} {
  func.func @_vision_kernel(%arg0: i32, %arg1: memref<1x17x64xf32, #tpu.memory_space<vmem>>, %arg2: memref<64x32xf32, #tpu.memory_space<vmem>>, %arg3: memref<1x32xf32, #tpu.memory_space<vmem>>, %arg4: memref<17x32xf32, #tpu.memory_space<vmem>>, %arg5: memref<32x128xf32, #tpu.memory_space<vmem>>, %arg6: memref<1x128xf32, #tpu.memory_space<vmem>>, %arg7: memref<32x64xf32, #tpu.memory_space<vmem>>, %arg8: memref<1x64xf32, #tpu.memory_space<vmem>>, %arg9: memref<64x32xf32, #tpu.memory_space<vmem>>, %arg10: memref<1x32xf32, #tpu.memory_space<vmem>>, %arg11: memref<4x32xf32, #tpu.memory_space<vmem>>, %arg12: memref<1x17x32xf32, #tpu.memory_space<vmem>>) attributes {dimension_semantics = [#tpu.dimension_semantics<parallel>], iteration_bounds = array<i64: 2>, scalar_prefetch = 0 : i64, scratch_operands = 0 : i64, tpu.core_type = #tpu.core_type<tc>, window_params = [{transform_indices = @transform_0, window_bounds = array<i64: 1, 17, 64>}, {pipeline_mode = #tpu.pipeline_mode<synchronous>, transform_indices = @transform_1, window_bounds = array<i64: 64, 32>}, {pipeline_mode = #tpu.pipeline_mode<synchronous>, transform_indices = @transform_2, window_bounds = array<i64: 1, 32>}, {pipeline_mode = #tpu.pipeline_mode<synchronous>, transform_indices = @transform_3, window_bounds = array<i64: 17, 32>}, {pipeline_mode = #tpu.pipeline_mode<synchronous>, transform_indices = @transform_4, window_bounds = array<i64: 32, 128>}, {pipeline_mode = #tpu.pipeline_mode<synchronous>, transform_indices = @transform_5, window_bounds = array<i64: 1, 128>}, {pipeline_mode = #tpu.pipeline_mode<synchronous>, transform_indices = @transform_6, window_bounds = array<i64: 32, 64>}, {pipeline_mode = #tpu.pipeline_mode<synchronous>, transform_indices = @transform_7, window_bounds = array<i64: 1, 64>}, {pipeline_mode = #tpu.pipeline_mode<synchronous>, transform_indices = @transform_8, window_bounds = array<i64: 64, 32>}, {pipeline_mode = #tpu.pipeline_mode<synchronous>, transform_indices = @transform_9, window_bounds = array<i64: 1, 32>}, {pipeline_mode = #tpu.pipeline_mode<synchronous>, transform_indices = @transform_10, window_bounds = array<i64: 4, 32>}, {transform_indices = @transform_11, window_bounds = array<i64: 1, 17, 32>}]} {
    %c0 = arith.constant 0 : index
    %c0_0 = arith.constant 0 : index
    %c0_1 = arith.constant 0 : index
    %0 = vector.load %arg1[%c0, %c0_0, %c0_1] : memref<1x17x64xf32, #tpu.memory_space<vmem>>, vector<1x17x64xf32>
    %1 = vector.shape_cast %0 : vector<1x17x64xf32> to vector<17x64xf32>
    %c0_2 = arith.constant 0 : index
    %c0_3 = arith.constant 0 : index
    %2 = vector.load %arg2[%c0_2, %c0_3] : memref<64x32xf32, #tpu.memory_space<vmem>>, vector<64x32xf32>
    %cst = arith.constant dense<0.000000e+00> : vector<17x32xf32>
    %3 = tpu.matmul %1, %2, %cst {dimension_numbers = #tpu.dot_dimension_numbers<[1], [0], [0], [1], [0, 0, 1, 1], [], []>} : vector<17x64xf32>, vector<64x32xf32>, vector<17x32xf32> -> vector<17x32xf32>
    %c0_4 = arith.constant 0 : index
    %c0_5 = arith.constant 0 : index
    %4 = vector.load %arg3[%c0_4, %c0_5] : memref<1x32xf32, #tpu.memory_space<vmem>>, vector<1x32xf32>
    %5 = vector.broadcast %4 : vector<1x32xf32> to vector<17x32xf32>
    %6 = arith.addf %3, %5 : vector<17x32xf32>
    %c0_6 = arith.constant 0 : index
    %c0_7 = arith.constant 0 : index
    %7 = vector.load %arg4[%c0_6, %c0_7] : memref<17x32xf32, #tpu.memory_space<vmem>>, vector<17x32xf32>
    %8 = arith.addf %6, %7 : vector<17x32xf32>
    %c0_8 = arith.constant 0 : index
    %c0_9 = arith.constant 0 : index
    %9 = vector.load %arg11[%c0_8, %c0_9] : memref<4x32xf32, #tpu.memory_space<vmem>>, vector<4x32xf32>
    %c0_10 = arith.constant 0 : index
    %c0_11 = arith.constant 0 : index
    %10 = vector.load %arg5[%c0_10, %c0_11] : memref<32x128xf32, #tpu.memory_space<vmem>>, vector<32x128xf32>
    %c0_12 = arith.constant 0 : index
    %c0_13 = arith.constant 0 : index
    %11 = vector.load %arg6[%c0_12, %c0_13] : memref<1x128xf32, #tpu.memory_space<vmem>>, vector<1x128xf32>
    %c0_14 = arith.constant 0 : index
    %c0_15 = arith.constant 0 : index
    %12 = vector.load %arg7[%c0_14, %c0_15] : memref<32x64xf32, #tpu.memory_space<vmem>>, vector<32x64xf32>
    %c0_16 = arith.constant 0 : index
    %c0_17 = arith.constant 0 : index
    %13 = vector.load %arg8[%c0_16, %c0_17] : memref<1x64xf32, #tpu.memory_space<vmem>>, vector<1x64xf32>
    %c0_18 = arith.constant 0 : index
    %c0_19 = arith.constant 0 : index
    %14 = vector.load %arg9[%c0_18, %c0_19] : memref<64x32xf32, #tpu.memory_space<vmem>>, vector<64x32xf32>
    %c0_20 = arith.constant 0 : index
    %c0_21 = arith.constant 0 : index
    %15 = vector.load %arg10[%c0_20, %c0_21] : memref<1x32xf32, #tpu.memory_space<vmem>>, vector<1x32xf32>
    %16 = vector.extract_strided_slice %9 {offsets = [0, 0], sizes = [1, 32], strides = [1, 1]} : vector<4x32xf32> to vector<1x32xf32>
    %17 = vector.extract_strided_slice %9 {offsets = [1, 0], sizes = [1, 32], strides = [1, 1]} : vector<4x32xf32> to vector<1x32xf32>
    %18 = vector.extract_strided_slice %9 {offsets = [2, 0], sizes = [1, 32], strides = [1, 1]} : vector<4x32xf32> to vector<1x32xf32>
    %19 = vector.extract_strided_slice %9 {offsets = [3, 0], sizes = [1, 32], strides = [1, 1]} : vector<4x32xf32> to vector<1x32xf32>
    %cst_22 = arith.constant dense<0.000000e+00> : vector<17x128xf32>
    %20 = tpu.matmul %8, %10, %cst_22 {dimension_numbers = #tpu.dot_dimension_numbers<[1], [0], [0], [1], [0, 0, 1, 1], [], []>} : vector<17x32xf32>, vector<32x128xf32>, vector<17x128xf32> -> vector<17x128xf32>
    %21 = vector.broadcast %11 : vector<1x128xf32> to vector<17x128xf32>
    %22 = arith.addf %20, %21 : vector<17x128xf32>
    %23 = vector.extract_strided_slice %22 {offsets = [0, 0], sizes = [17, 32], strides = [1, 1]} : vector<17x128xf32> to vector<17x32xf32>
    %24 = vector.extract_strided_slice %22 {offsets = [0, 32], sizes = [17, 32], strides = [1, 1]} : vector<17x128xf32> to vector<17x32xf32>
    %25 = vector.extract_strided_slice %22 {offsets = [0, 64], sizes = [17, 32], strides = [1, 1]} : vector<17x128xf32> to vector<17x32xf32>
    %26 = vector.extract_strided_slice %10 {offsets = [0, 96], sizes = [32, 32], strides = [1, 1]} : vector<32x128xf32> to vector<32x32xf32>
    %27 = vector.extract_strided_slice %11 {offsets = [0, 96], sizes = [1, 32], strides = [1, 1]} : vector<1x128xf32> to vector<1x32xf32>
    %28 = vector.extract_strided_slice %23 {offsets = [0, 0], sizes = [17, 8], strides = [1, 1]} : vector<17x32xf32> to vector<17x8xf32>
    %29 = vector.extract_strided_slice %24 {offsets = [0, 0], sizes = [17, 8], strides = [1, 1]} : vector<17x32xf32> to vector<17x8xf32>
    %30 = vector.extract_strided_slice %25 {offsets = [0, 0], sizes = [17, 8], strides = [1, 1]} : vector<17x32xf32> to vector<17x8xf32>
    %cst_23 = arith.constant dense<0.000000e+00> : vector<17x17xf32>
    %31 = tpu.matmul %28, %29, %cst_23 {dimension_numbers = #tpu.dot_dimension_numbers<[1], [1], [0], [0], [0, 0, 1, 0], [], []>} : vector<17x8xf32>, vector<17x8xf32>, vector<17x17xf32> -> vector<17x17xf32>
    %cst_24 = arith.constant 0.353553385 : f32
    %32 = vector.broadcast %cst_24 : f32 to vector<17x17xf32>
    %33 = arith.mulf %31, %32 : vector<17x17xf32>
    %cst_25 = arith.constant 0.000000e+00 : f32
    %34 = vector.broadcast %cst_25 : f32 to vector<17x17xf32>
    %35 = arith.addf %33, %34 : vector<17x17xf32>
    %cst_26 = arith.constant dense<0xFF800000> : vector<17xf32>
    %36 = vector.multi_reduction <maximumf>, %35, %cst_26 [1] : vector<17x17xf32> to vector<17xf32>
    %37 = vector.shape_cast %36 : vector<17xf32> to vector<17x1xf32>
    %38 = vector.broadcast %37 : vector<17x1xf32> to vector<17x17xf32>
    %39 = arith.subf %35, %38 : vector<17x17xf32>
    %40 = math.exp %39 : vector<17x17xf32>
    %cst_27 = arith.constant dense<0.000000e+00> : vector<17xf32>
    %41 = vector.multi_reduction <add>, %40, %cst_27 [1] : vector<17x17xf32> to vector<17xf32>
    %42 = vector.shape_cast %41 : vector<17xf32> to vector<17x1xf32>
    %43 = tpu.reciprocal %42 {approx = true} : vector<17x1xf32> -> vector<17x1xf32>
    %44 = vector.broadcast %43 : vector<17x1xf32> to vector<17x17xf32>
    %45 = arith.mulf %40, %44 : vector<17x17xf32>
    %cst_28 = arith.constant dense<0.000000e+00> : vector<17x8xf32>
    %46 = tpu.matmul %45, %30, %cst_28 {dimension_numbers = #tpu.dot_dimension_numbers<[1], [0], [0], [1], [0, 0, 1, 1], [], []>} : vector<17x17xf32>, vector<17x8xf32>, vector<17x8xf32> -> vector<17x8xf32>
    %47 = vector.extract_strided_slice %26 {offsets = [0, 0], sizes = [8, 32], strides = [1, 1]} : vector<32x32xf32> to vector<8x32xf32>
    %cst_29 = arith.constant dense<0.000000e+00> : vector<17x32xf32>
    %48 = tpu.matmul %46, %47, %cst_29 {dimension_numbers = #tpu.dot_dimension_numbers<[1], [0], [0], [1], [0, 0, 1, 1], [], []>} : vector<17x8xf32>, vector<8x32xf32>, vector<17x32xf32> -> vector<17x32xf32>
    %49 = vector.extract_strided_slice %23 {offsets = [0, 8], sizes = [17, 8], strides = [1, 1]} : vector<17x32xf32> to vector<17x8xf32>
    %50 = vector.extract_strided_slice %24 {offsets = [0, 8], sizes = [17, 8], strides = [1, 1]} : vector<17x32xf32> to vector<17x8xf32>
    %51 = vector.extract_strided_slice %25 {offsets = [0, 8], sizes = [17, 8], strides = [1, 1]} : vector<17x32xf32> to vector<17x8xf32>
    %cst_30 = arith.constant dense<0.000000e+00> : vector<17x17xf32>
    %52 = tpu.matmul %49, %50, %cst_30 {dimension_numbers = #tpu.dot_dimension_numbers<[1], [1], [0], [0], [0, 0, 1, 0], [], []>} : vector<17x8xf32>, vector<17x8xf32>, vector<17x17xf32> -> vector<17x17xf32>
    %cst_31 = arith.constant 0.353553385 : f32
    %53 = vector.broadcast %cst_31 : f32 to vector<17x17xf32>
    %54 = arith.mulf %52, %53 : vector<17x17xf32>
    %cst_32 = arith.constant 0.000000e+00 : f32
    %55 = vector.broadcast %cst_32 : f32 to vector<17x17xf32>
    %56 = arith.addf %54, %55 : vector<17x17xf32>
    %cst_33 = arith.constant dense<0xFF800000> : vector<17xf32>
    %57 = vector.multi_reduction <maximumf>, %56, %cst_33 [1] : vector<17x17xf32> to vector<17xf32>
    %58 = vector.shape_cast %57 : vector<17xf32> to vector<17x1xf32>
    %59 = vector.broadcast %58 : vector<17x1xf32> to vector<17x17xf32>
    %60 = arith.subf %56, %59 : vector<17x17xf32>
    %61 = math.exp %60 : vector<17x17xf32>
    %cst_34 = arith.constant dense<0.000000e+00> : vector<17xf32>
    %62 = vector.multi_reduction <add>, %61, %cst_34 [1] : vector<17x17xf32> to vector<17xf32>
    %63 = vector.shape_cast %62 : vector<17xf32> to vector<17x1xf32>
    %64 = tpu.reciprocal %63 {approx = true} : vector<17x1xf32> -> vector<17x1xf32>
    %65 = vector.broadcast %64 : vector<17x1xf32> to vector<17x17xf32>
    %66 = arith.mulf %61, %65 : vector<17x17xf32>
    %cst_35 = arith.constant dense<0.000000e+00> : vector<17x8xf32>
    %67 = tpu.matmul %66, %51, %cst_35 {dimension_numbers = #tpu.dot_dimension_numbers<[1], [0], [0], [1], [0, 0, 1, 1], [], []>} : vector<17x17xf32>, vector<17x8xf32>, vector<17x8xf32> -> vector<17x8xf32>
    %68 = vector.extract_strided_slice %26 {offsets = [8, 0], sizes = [8, 32], strides = [1, 1]} : vector<32x32xf32> to vector<8x32xf32>
    %cst_36 = arith.constant dense<0.000000e+00> : vector<17x32xf32>
    %69 = tpu.matmul %67, %68, %cst_36 {dimension_numbers = #tpu.dot_dimension_numbers<[1], [0], [0], [1], [0, 0, 1, 1], [], []>} : vector<17x8xf32>, vector<8x32xf32>, vector<17x32xf32> -> vector<17x32xf32>
    %70 = arith.addf %48, %69 : vector<17x32xf32>
    %71 = vector.extract_strided_slice %23 {offsets = [0, 16], sizes = [17, 8], strides = [1, 1]} : vector<17x32xf32> to vector<17x8xf32>
    %72 = vector.extract_strided_slice %24 {offsets = [0, 16], sizes = [17, 8], strides = [1, 1]} : vector<17x32xf32> to vector<17x8xf32>
    %73 = vector.extract_strided_slice %25 {offsets = [0, 16], sizes = [17, 8], strides = [1, 1]} : vector<17x32xf32> to vector<17x8xf32>
    %cst_37 = arith.constant dense<0.000000e+00> : vector<17x17xf32>
    %74 = tpu.matmul %71, %72, %cst_37 {dimension_numbers = #tpu.dot_dimension_numbers<[1], [1], [0], [0], [0, 0, 1, 0], [], []>} : vector<17x8xf32>, vector<17x8xf32>, vector<17x17xf32> -> vector<17x17xf32>
    %cst_38 = arith.constant 0.353553385 : f32
    %75 = vector.broadcast %cst_38 : f32 to vector<17x17xf32>
    %76 = arith.mulf %74, %75 : vector<17x17xf32>
    %cst_39 = arith.constant 0.000000e+00 : f32
    %77 = vector.broadcast %cst_39 : f32 to vector<17x17xf32>
    %78 = arith.addf %76, %77 : vector<17x17xf32>
    %cst_40 = arith.constant dense<0xFF800000> : vector<17xf32>
    %79 = vector.multi_reduction <maximumf>, %78, %cst_40 [1] : vector<17x17xf32> to vector<17xf32>
    %80 = vector.shape_cast %79 : vector<17xf32> to vector<17x1xf32>
    %81 = vector.broadcast %80 : vector<17x1xf32> to vector<17x17xf32>
    %82 = arith.subf %78, %81 : vector<17x17xf32>
    %83 = math.exp %82 : vector<17x17xf32>
    %cst_41 = arith.constant dense<0.000000e+00> : vector<17xf32>
    %84 = vector.multi_reduction <add>, %83, %cst_41 [1] : vector<17x17xf32> to vector<17xf32>
    %85 = vector.shape_cast %84 : vector<17xf32> to vector<17x1xf32>
    %86 = tpu.reciprocal %85 {approx = true} : vector<17x1xf32> -> vector<17x1xf32>
    %87 = vector.broadcast %86 : vector<17x1xf32> to vector<17x17xf32>
    %88 = arith.mulf %83, %87 : vector<17x17xf32>
    %cst_42 = arith.constant dense<0.000000e+00> : vector<17x8xf32>
    %89 = tpu.matmul %88, %73, %cst_42 {dimension_numbers = #tpu.dot_dimension_numbers<[1], [0], [0], [1], [0, 0, 1, 1], [], []>} : vector<17x17xf32>, vector<17x8xf32>, vector<17x8xf32> -> vector<17x8xf32>
    %90 = vector.extract_strided_slice %26 {offsets = [16, 0], sizes = [8, 32], strides = [1, 1]} : vector<32x32xf32> to vector<8x32xf32>
    %cst_43 = arith.constant dense<0.000000e+00> : vector<17x32xf32>
    %91 = tpu.matmul %89, %90, %cst_43 {dimension_numbers = #tpu.dot_dimension_numbers<[1], [0], [0], [1], [0, 0, 1, 1], [], []>} : vector<17x8xf32>, vector<8x32xf32>, vector<17x32xf32> -> vector<17x32xf32>
    %92 = arith.addf %70, %91 : vector<17x32xf32>
    %93 = vector.extract_strided_slice %23 {offsets = [0, 24], sizes = [17, 8], strides = [1, 1]} : vector<17x32xf32> to vector<17x8xf32>
    %94 = vector.extract_strided_slice %24 {offsets = [0, 24], sizes = [17, 8], strides = [1, 1]} : vector<17x32xf32> to vector<17x8xf32>
    %95 = vector.extract_strided_slice %25 {offsets = [0, 24], sizes = [17, 8], strides = [1, 1]} : vector<17x32xf32> to vector<17x8xf32>
    %cst_44 = arith.constant dense<0.000000e+00> : vector<17x17xf32>
    %96 = tpu.matmul %93, %94, %cst_44 {dimension_numbers = #tpu.dot_dimension_numbers<[1], [1], [0], [0], [0, 0, 1, 0], [], []>} : vector<17x8xf32>, vector<17x8xf32>, vector<17x17xf32> -> vector<17x17xf32>
    %cst_45 = arith.constant 0.353553385 : f32
    %97 = vector.broadcast %cst_45 : f32 to vector<17x17xf32>
    %98 = arith.mulf %96, %97 : vector<17x17xf32>
    %cst_46 = arith.constant 0.000000e+00 : f32
    %99 = vector.broadcast %cst_46 : f32 to vector<17x17xf32>
    %100 = arith.addf %98, %99 : vector<17x17xf32>
    %cst_47 = arith.constant dense<0xFF800000> : vector<17xf32>
    %101 = vector.multi_reduction <maximumf>, %100, %cst_47 [1] : vector<17x17xf32> to vector<17xf32>
    %102 = vector.shape_cast %101 : vector<17xf32> to vector<17x1xf32>
    %103 = vector.broadcast %102 : vector<17x1xf32> to vector<17x17xf32>
    %104 = arith.subf %100, %103 : vector<17x17xf32>
    %105 = math.exp %104 : vector<17x17xf32>
    %cst_48 = arith.constant dense<0.000000e+00> : vector<17xf32>
    %106 = vector.multi_reduction <add>, %105, %cst_48 [1] : vector<17x17xf32> to vector<17xf32>
    %107 = vector.shape_cast %106 : vector<17xf32> to vector<17x1xf32>
    %108 = tpu.reciprocal %107 {approx = true} : vector<17x1xf32> -> vector<17x1xf32>
    %109 = vector.broadcast %108 : vector<17x1xf32> to vector<17x17xf32>
    %110 = arith.mulf %105, %109 : vector<17x17xf32>
    %cst_49 = arith.constant dense<0.000000e+00> : vector<17x8xf32>
    %111 = tpu.matmul %110, %95, %cst_49 {dimension_numbers = #tpu.dot_dimension_numbers<[1], [0], [0], [1], [0, 0, 1, 1], [], []>} : vector<17x17xf32>, vector<17x8xf32>, vector<17x8xf32> -> vector<17x8xf32>
    %112 = vector.extract_strided_slice %26 {offsets = [24, 0], sizes = [8, 32], strides = [1, 1]} : vector<32x32xf32> to vector<8x32xf32>
    %cst_50 = arith.constant dense<0.000000e+00> : vector<17x32xf32>
    %113 = tpu.matmul %111, %112, %cst_50 {dimension_numbers = #tpu.dot_dimension_numbers<[1], [0], [0], [1], [0, 0, 1, 1], [], []>} : vector<17x8xf32>, vector<8x32xf32>, vector<17x32xf32> -> vector<17x32xf32>
    %114 = arith.addf %92, %113 : vector<17x32xf32>
    %115 = vector.broadcast %27 : vector<1x32xf32> to vector<17x32xf32>
    %116 = arith.addf %114, %115 : vector<17x32xf32>
    %117 = arith.addf %8, %116 : vector<17x32xf32>
    %cst_51 = arith.constant dense<0.000000e+00> : vector<17xf32>
    %118 = vector.multi_reduction <add>, %117, %cst_51 [1] : vector<17x32xf32> to vector<17xf32>
    %119 = vector.shape_cast %118 : vector<17xf32> to vector<17x1xf32>
    %cst_52 = arith.constant 3.200000e+01 : f32
    %120 = vector.broadcast %cst_52 : f32 to vector<17x1xf32>
    %121 = arith.divf %119, %120 : vector<17x1xf32>
    %122 = vector.broadcast %121 : vector<17x1xf32> to vector<17x32xf32>
    %123 = arith.subf %117, %122 : vector<17x32xf32>
    %124 = arith.mulf %123, %123 : vector<17x32xf32>
    %cst_53 = arith.constant dense<0.000000e+00> : vector<17xf32>
    %125 = vector.multi_reduction <add>, %124, %cst_53 [1] : vector<17x32xf32> to vector<17xf32>
    %126 = vector.shape_cast %125 : vector<17xf32> to vector<17x1xf32>
    %cst_54 = arith.constant 3.200000e+01 : f32
    %127 = vector.broadcast %cst_54 : f32 to vector<17x1xf32>
    %128 = arith.divf %126, %127 : vector<17x1xf32>
    %129 = vector.broadcast %121 : vector<17x1xf32> to vector<17x32xf32>
    %130 = arith.subf %117, %129 : vector<17x32xf32>
    %cst_55 = arith.constant 9.99999996E-13 : f32
    %131 = vector.broadcast %cst_55 : f32 to vector<17x1xf32>
    %132 = arith.addf %128, %131 : vector<17x1xf32>
    %133 = math.rsqrt %132 : vector<17x1xf32>
    %134 = vector.broadcast %133 : vector<17x1xf32> to vector<17x32xf32>
    %135 = arith.mulf %130, %134 : vector<17x32xf32>
    %136 = vector.broadcast %16 : vector<1x32xf32> to vector<17x32xf32>
    %137 = arith.mulf %135, %136 : vector<17x32xf32>
    %138 = vector.broadcast %17 : vector<1x32xf32> to vector<17x32xf32>
    %139 = arith.addf %137, %138 : vector<17x32xf32>
    %cst_56 = arith.constant dense<0.000000e+00> : vector<17x64xf32>
    %140 = tpu.matmul %139, %12, %cst_56 {dimension_numbers = #tpu.dot_dimension_numbers<[1], [0], [0], [1], [0, 0, 1, 1], [], []>} : vector<17x32xf32>, vector<32x64xf32>, vector<17x64xf32> -> vector<17x64xf32>
    %141 = vector.broadcast %13 : vector<1x64xf32> to vector<17x64xf32>
    %142 = arith.addf %140, %141 : vector<17x64xf32>
    %cst_57 = arith.constant 5.000000e-01 : f32
    %143 = vector.broadcast %cst_57 : f32 to vector<17x64xf32>
    %144 = arith.mulf %143, %142 : vector<17x64xf32>
    %cst_58 = arith.constant 4.471500e-02 : f32
    %145 = vector.broadcast %cst_58 : f32 to vector<17x64xf32>
    %146 = arith.mulf %145, %142 : vector<17x64xf32>
    %147 = arith.mulf %146, %142 : vector<17x64xf32>
    %148 = arith.mulf %147, %142 : vector<17x64xf32>
    %149 = arith.addf %142, %148 : vector<17x64xf32>
    %cst_59 = arith.constant 0.797884583 : f32
    %150 = vector.broadcast %cst_59 : f32 to vector<17x64xf32>
    %151 = arith.mulf %150, %149 : vector<17x64xf32>
    %152 = math.tanh %151 : vector<17x64xf32>
    %cst_60 = arith.constant 1.000000e+00 : f32
    %153 = vector.broadcast %cst_60 : f32 to vector<17x64xf32>
    %154 = arith.addf %153, %152 : vector<17x64xf32>
    %155 = arith.mulf %144, %154 : vector<17x64xf32>
    %cst_61 = arith.constant dense<0.000000e+00> : vector<17x32xf32>
    %156 = tpu.matmul %155, %14, %cst_61 {dimension_numbers = #tpu.dot_dimension_numbers<[1], [0], [0], [1], [0, 0, 1, 1], [], []>} : vector<17x64xf32>, vector<64x32xf32>, vector<17x32xf32> -> vector<17x32xf32>
    %157 = vector.broadcast %15 : vector<1x32xf32> to vector<17x32xf32>
    %158 = arith.addf %156, %157 : vector<17x32xf32>
    %159 = arith.addf %139, %158 : vector<17x32xf32>
    %cst_62 = arith.constant dense<0.000000e+00> : vector<17xf32>
    %160 = vector.multi_reduction <add>, %159, %cst_62 [1] : vector<17x32xf32> to vector<17xf32>
    %161 = vector.shape_cast %160 : vector<17xf32> to vector<17x1xf32>
    %cst_63 = arith.constant 3.200000e+01 : f32
    %162 = vector.broadcast %cst_63 : f32 to vector<17x1xf32>
    %163 = arith.divf %161, %162 : vector<17x1xf32>
    %164 = vector.broadcast %163 : vector<17x1xf32> to vector<17x32xf32>
    %165 = arith.subf %159, %164 : vector<17x32xf32>
    %166 = arith.mulf %165, %165 : vector<17x32xf32>
    %cst_64 = arith.constant dense<0.000000e+00> : vector<17xf32>
    %167 = vector.multi_reduction <add>, %166, %cst_64 [1] : vector<17x32xf32> to vector<17xf32>
    %168 = vector.shape_cast %167 : vector<17xf32> to vector<17x1xf32>
    %cst_65 = arith.constant 3.200000e+01 : f32
    %169 = vector.broadcast %cst_65 : f32 to vector<17x1xf32>
    %170 = arith.divf %168, %169 : vector<17x1xf32>
    %171 = vector.broadcast %163 : vector<17x1xf32> to vector<17x32xf32>
    %172 = arith.subf %159, %171 : vector<17x32xf32>
    %cst_66 = arith.constant 9.99999996E-13 : f32
    %173 = vector.broadcast %cst_66 : f32 to vector<17x1xf32>
    %174 = arith.addf %170, %173 : vector<17x1xf32>
    %175 = math.rsqrt %174 : vector<17x1xf32>
    %176 = vector.broadcast %175 : vector<17x1xf32> to vector<17x32xf32>
    %177 = arith.mulf %172, %176 : vector<17x32xf32>
    %178 = vector.broadcast %18 : vector<1x32xf32> to vector<17x32xf32>
    %179 = arith.mulf %177, %178 : vector<17x32xf32>
    %180 = vector.broadcast %19 : vector<1x32xf32> to vector<17x32xf32>
    %181 = arith.addf %179, %180 : vector<17x32xf32>
    %c0_67 = arith.constant 0 : index
    %c0_68 = arith.constant 0 : index
    %c0_69 = arith.constant 0 : index
    %182 = vector.load %arg12[%c0_67, %c0_68, %c0_69] : memref<1x17x32xf32, #tpu.memory_space<vmem>>, vector<1x17x32xf32>
    %183 = vector.shape_cast %182 : vector<1x17x32xf32> to vector<17x32xf32>
    %184 = vector.shape_cast %181 : vector<17x32xf32> to vector<1x17x32xf32>
    tpu.vector_store %arg12[%c0_67, %c0_68, %c0_69], %184 {strides = array<i32>} : memref<1x17x32xf32, #tpu.memory_space<vmem>>, vector<1x17x32xf32>,
    return
  }
  func.func @transform_0(%arg0: i32) -> (i32, i32, i32) {
    %c0_i32 = arith.constant 0 : i32
    %c0_i32_0 = arith.constant 0 : i32
    %c0_i32_1 = arith.constant 0 : i32
    return %arg0, %c0_i32, %c0_i32_0 : i32, i32, i32
  }
  func.func @transform_1(%arg0: i32) -> (i32, i32) {
    %c0_i32 = arith.constant 0 : i32
    %c0_i32_0 = arith.constant 0 : i32
    %c0_i32_1 = arith.constant 0 : i32
    return %c0_i32, %c0_i32_0 : i32, i32
  }
  func.func @transform_2(%arg0: i32) -> (i32, i32) {
    %c0_i32 = arith.constant 0 : i32
    %c0_i32_0 = arith.constant 0 : i32
    %c0_i32_1 = arith.constant 0 : i32
    return %c0_i32, %c0_i32_0 : i32, i32
  }
  func.func @transform_3(%arg0: i32) -> (i32, i32) {
    %c0_i32 = arith.constant 0 : i32
    %c0_i32_0 = arith.constant 0 : i32
    %c0_i32_1 = arith.constant 0 : i32
    return %c0_i32, %c0_i32_0 : i32, i32
  }
  func.func @transform_4(%arg0: i32) -> (i32, i32) {
    %c0_i32 = arith.constant 0 : i32
    %c0_i32_0 = arith.constant 0 : i32
    %c0_i32_1 = arith.constant 0 : i32
    return %c0_i32, %c0_i32_0 : i32, i32
  }
  func.func @transform_5(%arg0: i32) -> (i32, i32) {
    %c0_i32 = arith.constant 0 : i32
    %c0_i32_0 = arith.constant 0 : i32
    %c0_i32_1 = arith.constant 0 : i32
    return %c0_i32, %c0_i32_0 : i32, i32
  }
  func.func @transform_6(%arg0: i32) -> (i32, i32) {
    %c0_i32 = arith.constant 0 : i32
    %c0_i32_0 = arith.constant 0 : i32
    %c0_i32_1 = arith.constant 0 : i32
    return %c0_i32, %c0_i32_0 : i32, i32
  }
  func.func @transform_7(%arg0: i32) -> (i32, i32) {
    %c0_i32 = arith.constant 0 : i32
    %c0_i32_0 = arith.constant 0 : i32
    %c0_i32_1 = arith.constant 0 : i32
    return %c0_i32, %c0_i32_0 : i32, i32
  }
  func.func @transform_8(%arg0: i32) -> (i32, i32) {
    %c0_i32 = arith.constant 0 : i32
    %c0_i32_0 = arith.constant 0 : i32
    %c0_i32_1 = arith.constant 0 : i32
    return %c0_i32, %c0_i32_0 : i32, i32
  }
  func.func @transform_9(%arg0: i32) -> (i32, i32) {
    %c0_i32 = arith.constant 0 : i32
    %c0_i32_0 = arith.constant 0 : i32
    %c0_i32_1 = arith.constant 0 : i32
    return %c0_i32, %c0_i32_0 : i32, i32
  }
  func.func @transform_10(%arg0: i32) -> (i32, i32) {
    %c0_i32 = arith.constant 0 : i32
    %c0_i32_0 = arith.constant 0 : i32
    %c0_i32_1 = arith.constant 0 : i32
    return %c0_i32, %c0_i32_0 : i32, i32
  }
  func.func @transform_11(%arg0: i32) -> (i32, i32, i32) {
    %c0_i32 = arith.constant 0 : i32
    %c0_i32_0 = arith.constant 0 : i32
    %c0_i32_1 = arith.constant 0 : i32
    return %arg0, %c0_i32, %c0_i32_0 : i32, i32, i32
  }
}

module attributes {stable_mosaic.version = 11 : i64} {
  func.func @_cross_kernel(%arg0: i32, %arg1: memref<1x8x32xf32, #tpu.memory_space<vmem>>, %arg2: memref<1x1x8xf32, #tpu.memory_space<vmem>>, %arg3: memref<1x17x32xf32, #tpu.memory_space<vmem>>, %arg4: memref<1x1x17xf32, #tpu.memory_space<vmem>>, %arg5: memref<32x128xf32, #tpu.memory_space<vmem>>, %arg6: memref<1x128xf32, #tpu.memory_space<vmem>>, %arg7: memref<32x128xf32, #tpu.memory_space<vmem>>, %arg8: memref<1x128xf32, #tpu.memory_space<vmem>>, %arg9: memref<32x64xf32, #tpu.memory_space<vmem>>, %arg10: memref<1x64xf32, #tpu.memory_space<vmem>>, %arg11: memref<64x32xf32, #tpu.memory_space<vmem>>, %arg12: memref<1x32xf32, #tpu.memory_space<vmem>>, %arg13: memref<6x32xf32, #tpu.memory_space<vmem>>, %arg14: memref<1x1x32xf32, #tpu.memory_space<vmem>>) attributes {dimension_semantics = [#tpu.dimension_semantics<parallel>], iteration_bounds = array<i64: 6>, scalar_prefetch = 0 : i64, scratch_operands = 0 : i64, tpu.core_type = #tpu.core_type<tc>, window_params = [{transform_indices = @transform_0, window_bounds = array<i64: 1, 8, 32>}, {transform_indices = @transform_1, window_bounds = array<i64: 1, 1, 8>}, {transform_indices = @transform_2, window_bounds = array<i64: 1, 17, 32>}, {transform_indices = @transform_3, window_bounds = array<i64: 1, 1, 17>}, {pipeline_mode = #tpu.pipeline_mode<synchronous>, transform_indices = @transform_4, window_bounds = array<i64: 32, 128>}, {pipeline_mode = #tpu.pipeline_mode<synchronous>, transform_indices = @transform_5, window_bounds = array<i64: 1, 128>}, {pipeline_mode = #tpu.pipeline_mode<synchronous>, transform_indices = @transform_6, window_bounds = array<i64: 32, 128>}, {pipeline_mode = #tpu.pipeline_mode<synchronous>, transform_indices = @transform_7, window_bounds = array<i64: 1, 128>}, {pipeline_mode = #tpu.pipeline_mode<synchronous>, transform_indices = @transform_8, window_bounds = array<i64: 32, 64>}, {pipeline_mode = #tpu.pipeline_mode<synchronous>, transform_indices = @transform_9, window_bounds = array<i64: 1, 64>}, {pipeline_mode = #tpu.pipeline_mode<synchronous>, transform_indices = @transform_10, window_bounds = array<i64: 64, 32>}, {pipeline_mode = #tpu.pipeline_mode<synchronous>, transform_indices = @transform_11, window_bounds = array<i64: 1, 32>}, {pipeline_mode = #tpu.pipeline_mode<synchronous>, transform_indices = @transform_12, window_bounds = array<i64: 6, 32>}, {transform_indices = @transform_13, window_bounds = array<i64: 1, 1, 32>}]} {
    %c0 = arith.constant 0 : index
    %c0_0 = arith.constant 0 : index
    %c0_1 = arith.constant 0 : index
    %0 = vector.load %arg1[%c0, %c0_0, %c0_1] : memref<1x8x32xf32, #tpu.memory_space<vmem>>, vector<1x8x32xf32>
    %1 = vector.shape_cast %0 : vector<1x8x32xf32> to vector<8x32xf32>
    %c0_2 = arith.constant 0 : index
    %c0_3 = arith.constant 0 : index
    %c0_4 = arith.constant 0 : index
    %2 = vector.load %arg3[%c0_2, %c0_3, %c0_4] : memref<1x17x32xf32, #tpu.memory_space<vmem>>, vector<1x17x32xf32>
    %3 = vector.shape_cast %2 : vector<1x17x32xf32> to vector<17x32xf32>
    %c0_5 = arith.constant 0 : index
    %c0_6 = arith.constant 0 : index
    %4 = vector.load %arg13[%c0_5, %c0_6] : memref<6x32xf32, #tpu.memory_space<vmem>>, vector<6x32xf32>
    %c0_7 = arith.constant 0 : index
    %c0_8 = arith.constant 0 : index
    %c0_9 = arith.constant 0 : index
    %5 = vector.load %arg2[%c0_7, %c0_8, %c0_9] : memref<1x1x8xf32, #tpu.memory_space<vmem>>, vector<1x1x8xf32>
    %6 = vector.shape_cast %5 : vector<1x1x8xf32> to vector<1x8xf32>
    %cst = arith.constant 1.000000e+00 : f32
    %7 = vector.broadcast %cst : f32 to vector<1x8xf32>
    %8 = arith.subf %7, %6 : vector<1x8xf32>
    %cst_10 = arith.constant -1.000000e+09 : f32
    %9 = vector.broadcast %cst_10 : f32 to vector<1x8xf32>
    %10 = arith.mulf %8, %9 : vector<1x8xf32>
    %c0_11 = arith.constant 0 : index
    %c0_12 = arith.constant 0 : index
    %c0_13 = arith.constant 0 : index
    %11 = vector.load %arg4[%c0_11, %c0_12, %c0_13] : memref<1x1x17xf32, #tpu.memory_space<vmem>>, vector<1x1x17xf32>
    %12 = vector.shape_cast %11 : vector<1x1x17xf32> to vector<1x17xf32>
    %cst_14 = arith.constant 1.000000e+00 : f32
    %13 = vector.broadcast %cst_14 : f32 to vector<1x17xf32>
    %14 = arith.subf %13, %12 : vector<1x17xf32>
    %cst_15 = arith.constant -1.000000e+09 : f32
    %15 = vector.broadcast %cst_15 : f32 to vector<1x17xf32>
    %16 = arith.mulf %14, %15 : vector<1x17xf32>
    %c0_16 = arith.constant 0 : index
    %c0_17 = arith.constant 0 : index
    %17 = vector.load %arg5[%c0_16, %c0_17] : memref<32x128xf32, #tpu.memory_space<vmem>>, vector<32x128xf32>
    %c0_18 = arith.constant 0 : index
    %c0_19 = arith.constant 0 : index
    %18 = vector.load %arg6[%c0_18, %c0_19] : memref<1x128xf32, #tpu.memory_space<vmem>>, vector<1x128xf32>
    %cst_20 = arith.constant dense<0.000000e+00> : vector<8x128xf32>
    %19 = tpu.matmul %1, %17, %cst_20 {dimension_numbers = #tpu.dot_dimension_numbers<[1], [0], [0], [1], [0, 0, 1, 1], [], []>} : vector<8x32xf32>, vector<32x128xf32>, vector<8x128xf32> -> vector<8x128xf32>
    %20 = vector.broadcast %18 : vector<1x128xf32> to vector<8x128xf32>
    %21 = arith.addf %19, %20 : vector<8x128xf32>
    %22 = vector.extract_strided_slice %21 {offsets = [0, 0], sizes = [1, 32], strides = [1, 1]} : vector<8x128xf32> to vector<1x32xf32>
    %23 = vector.extract_strided_slice %21 {offsets = [0, 32], sizes = [8, 32], strides = [1, 1]} : vector<8x128xf32> to vector<8x32xf32>
    %24 = vector.extract_strided_slice %21 {offsets = [0, 64], sizes = [8, 32], strides = [1, 1]} : vector<8x128xf32> to vector<8x32xf32>
    %25 = vector.extract_strided_slice %17 {offsets = [0, 96], sizes = [32, 32], strides = [1, 1]} : vector<32x128xf32> to vector<32x32xf32>
    %26 = vector.extract_strided_slice %18 {offsets = [0, 96], sizes = [1, 32], strides = [1, 1]} : vector<1x128xf32> to vector<1x32xf32>
    %27 = vector.extract_strided_slice %22 {offsets = [0, 0], sizes = [1, 8], strides = [1, 1]} : vector<1x32xf32> to vector<1x8xf32>
    %28 = vector.extract_strided_slice %23 {offsets = [0, 0], sizes = [8, 8], strides = [1, 1]} : vector<8x32xf32> to vector<8x8xf32>
    %29 = vector.extract_strided_slice %24 {offsets = [0, 0], sizes = [8, 8], strides = [1, 1]} : vector<8x32xf32> to vector<8x8xf32>
    %cst_21 = arith.constant dense<0.000000e+00> : vector<1x8xf32>
    %30 = tpu.matmul %27, %28, %cst_21 {dimension_numbers = #tpu.dot_dimension_numbers<[1], [1], [0], [0], [0, 0, 1, 0], [], []>} : vector<1x8xf32>, vector<8x8xf32>, vector<1x8xf32> -> vector<1x8xf32>
    %cst_22 = arith.constant 0.353553385 : f32
    %31 = vector.broadcast %cst_22 : f32 to vector<1x8xf32>
    %32 = arith.mulf %30, %31 : vector<1x8xf32>
    %33 = arith.addf %32, %10 : vector<1x8xf32>
    %cst_23 = arith.constant dense<0xFF800000> : vector<1xf32>
    %34 = vector.multi_reduction <maximumf>, %33, %cst_23 [1] : vector<1x8xf32> to vector<1xf32>
    %35 = vector.shape_cast %34 : vector<1xf32> to vector<1x1xf32>
    %36 = vector.broadcast %35 : vector<1x1xf32> to vector<1x8xf32>
    %37 = arith.subf %33, %36 : vector<1x8xf32>
    %38 = math.exp %37 : vector<1x8xf32>
    %cst_24 = arith.constant dense<0.000000e+00> : vector<1xf32>
    %39 = vector.multi_reduction <add>, %38, %cst_24 [1] : vector<1x8xf32> to vector<1xf32>
    %40 = vector.shape_cast %39 : vector<1xf32> to vector<1x1xf32>
    %41 = tpu.reciprocal %40 {approx = true} : vector<1x1xf32> -> vector<1x1xf32>
    %42 = vector.broadcast %41 : vector<1x1xf32> to vector<1x8xf32>
    %43 = arith.mulf %38, %42 : vector<1x8xf32>
    %cst_25 = arith.constant dense<0.000000e+00> : vector<1x8xf32>
    %44 = tpu.matmul %43, %29, %cst_25 {dimension_numbers = #tpu.dot_dimension_numbers<[1], [0], [0], [1], [0, 0, 1, 1], [], []>} : vector<1x8xf32>, vector<8x8xf32>, vector<1x8xf32> -> vector<1x8xf32>
    %45 = vector.extract_strided_slice %25 {offsets = [0, 0], sizes = [8, 32], strides = [1, 1]} : vector<32x32xf32> to vector<8x32xf32>
    %cst_26 = arith.constant dense<0.000000e+00> : vector<1x32xf32>
    %46 = tpu.matmul %44, %45, %cst_26 {dimension_numbers = #tpu.dot_dimension_numbers<[1], [0], [0], [1], [0, 0, 1, 1], [], []>} : vector<1x8xf32>, vector<8x32xf32>, vector<1x32xf32> -> vector<1x32xf32>
    %47 = vector.extract_strided_slice %22 {offsets = [0, 8], sizes = [1, 8], strides = [1, 1]} : vector<1x32xf32> to vector<1x8xf32>
    %48 = vector.extract_strided_slice %23 {offsets = [0, 8], sizes = [8, 8], strides = [1, 1]} : vector<8x32xf32> to vector<8x8xf32>
    %49 = vector.extract_strided_slice %24 {offsets = [0, 8], sizes = [8, 8], strides = [1, 1]} : vector<8x32xf32> to vector<8x8xf32>
    %cst_27 = arith.constant dense<0.000000e+00> : vector<1x8xf32>
    %50 = tpu.matmul %47, %48, %cst_27 {dimension_numbers = #tpu.dot_dimension_numbers<[1], [1], [0], [0], [0, 0, 1, 0], [], []>} : vector<1x8xf32>, vector<8x8xf32>, vector<1x8xf32> -> vector<1x8xf32>
    %cst_28 = arith.constant 0.353553385 : f32
    %51 = vector.broadcast %cst_28 : f32 to vector<1x8xf32>
    %52 = arith.mulf %50, %51 : vector<1x8xf32>
    %53 = arith.addf %52, %10 : vector<1x8xf32>
    %cst_29 = arith.constant dense<0xFF800000> : vector<1xf32>
    %54 = vector.multi_reduction <maximumf>, %53, %cst_29 [1] : vector<1x8xf32> to vector<1xf32>
    %55 = vector.shape_cast %54 : vector<1xf32> to vector<1x1xf32>
    %56 = vector.broadcast %55 : vector<1x1xf32> to vector<1x8xf32>
    %57 = arith.subf %53, %56 : vector<1x8xf32>
    %58 = math.exp %57 : vector<1x8xf32>
    %cst_30 = arith.constant dense<0.000000e+00> : vector<1xf32>
    %59 = vector.multi_reduction <add>, %58, %cst_30 [1] : vector<1x8xf32> to vector<1xf32>
    %60 = vector.shape_cast %59 : vector<1xf32> to vector<1x1xf32>
    %61 = tpu.reciprocal %60 {approx = true} : vector<1x1xf32> -> vector<1x1xf32>
    %62 = vector.broadcast %61 : vector<1x1xf32> to vector<1x8xf32>
    %63 = arith.mulf %58, %62 : vector<1x8xf32>
    %cst_31 = arith.constant dense<0.000000e+00> : vector<1x8xf32>
    %64 = tpu.matmul %63, %49, %cst_31 {dimension_numbers = #tpu.dot_dimension_numbers<[1], [0], [0], [1], [0, 0, 1, 1], [], []>} : vector<1x8xf32>, vector<8x8xf32>, vector<1x8xf32> -> vector<1x8xf32>
    %65 = vector.extract_strided_slice %25 {offsets = [8, 0], sizes = [8, 32], strides = [1, 1]} : vector<32x32xf32> to vector<8x32xf32>
    %cst_32 = arith.constant dense<0.000000e+00> : vector<1x32xf32>
    %66 = tpu.matmul %64, %65, %cst_32 {dimension_numbers = #tpu.dot_dimension_numbers<[1], [0], [0], [1], [0, 0, 1, 1], [], []>} : vector<1x8xf32>, vector<8x32xf32>, vector<1x32xf32> -> vector<1x32xf32>
    %67 = arith.addf %46, %66 : vector<1x32xf32>
    %68 = vector.extract_strided_slice %22 {offsets = [0, 16], sizes = [1, 8], strides = [1, 1]} : vector<1x32xf32> to vector<1x8xf32>
    %69 = vector.extract_strided_slice %23 {offsets = [0, 16], sizes = [8, 8], strides = [1, 1]} : vector<8x32xf32> to vector<8x8xf32>
    %70 = vector.extract_strided_slice %24 {offsets = [0, 16], sizes = [8, 8], strides = [1, 1]} : vector<8x32xf32> to vector<8x8xf32>
    %cst_33 = arith.constant dense<0.000000e+00> : vector<1x8xf32>
    %71 = tpu.matmul %68, %69, %cst_33 {dimension_numbers = #tpu.dot_dimension_numbers<[1], [1], [0], [0], [0, 0, 1, 0], [], []>} : vector<1x8xf32>, vector<8x8xf32>, vector<1x8xf32> -> vector<1x8xf32>
    %cst_34 = arith.constant 0.353553385 : f32
    %72 = vector.broadcast %cst_34 : f32 to vector<1x8xf32>
    %73 = arith.mulf %71, %72 : vector<1x8xf32>
    %74 = arith.addf %73, %10 : vector<1x8xf32>
    %cst_35 = arith.constant dense<0xFF800000> : vector<1xf32>
    %75 = vector.multi_reduction <maximumf>, %74, %cst_35 [1] : vector<1x8xf32> to vector<1xf32>
    %76 = vector.shape_cast %75 : vector<1xf32> to vector<1x1xf32>
    %77 = vector.broadcast %76 : vector<1x1xf32> to vector<1x8xf32>
    %78 = arith.subf %74, %77 : vector<1x8xf32>
    %79 = math.exp %78 : vector<1x8xf32>
    %cst_36 = arith.constant dense<0.000000e+00> : vector<1xf32>
    %80 = vector.multi_reduction <add>, %79, %cst_36 [1] : vector<1x8xf32> to vector<1xf32>
    %81 = vector.shape_cast %80 : vector<1xf32> to vector<1x1xf32>
    %82 = tpu.reciprocal %81 {approx = true} : vector<1x1xf32> -> vector<1x1xf32>
    %83 = vector.broadcast %82 : vector<1x1xf32> to vector<1x8xf32>
    %84 = arith.mulf %79, %83 : vector<1x8xf32>
    %cst_37 = arith.constant dense<0.000000e+00> : vector<1x8xf32>
    %85 = tpu.matmul %84, %70, %cst_37 {dimension_numbers = #tpu.dot_dimension_numbers<[1], [0], [0], [1], [0, 0, 1, 1], [], []>} : vector<1x8xf32>, vector<8x8xf32>, vector<1x8xf32> -> vector<1x8xf32>
    %86 = vector.extract_strided_slice %25 {offsets = [16, 0], sizes = [8, 32], strides = [1, 1]} : vector<32x32xf32> to vector<8x32xf32>
    %cst_38 = arith.constant dense<0.000000e+00> : vector<1x32xf32>
    %87 = tpu.matmul %85, %86, %cst_38 {dimension_numbers = #tpu.dot_dimension_numbers<[1], [0], [0], [1], [0, 0, 1, 1], [], []>} : vector<1x8xf32>, vector<8x32xf32>, vector<1x32xf32> -> vector<1x32xf32>
    %88 = arith.addf %67, %87 : vector<1x32xf32>
    %89 = vector.extract_strided_slice %22 {offsets = [0, 24], sizes = [1, 8], strides = [1, 1]} : vector<1x32xf32> to vector<1x8xf32>
    %90 = vector.extract_strided_slice %23 {offsets = [0, 24], sizes = [8, 8], strides = [1, 1]} : vector<8x32xf32> to vector<8x8xf32>
    %91 = vector.extract_strided_slice %24 {offsets = [0, 24], sizes = [8, 8], strides = [1, 1]} : vector<8x32xf32> to vector<8x8xf32>
    %cst_39 = arith.constant dense<0.000000e+00> : vector<1x8xf32>
    %92 = tpu.matmul %89, %90, %cst_39 {dimension_numbers = #tpu.dot_dimension_numbers<[1], [1], [0], [0], [0, 0, 1, 0], [], []>} : vector<1x8xf32>, vector<8x8xf32>, vector<1x8xf32> -> vector<1x8xf32>
    %cst_40 = arith.constant 0.353553385 : f32
    %93 = vector.broadcast %cst_40 : f32 to vector<1x8xf32>
    %94 = arith.mulf %92, %93 : vector<1x8xf32>
    %95 = arith.addf %94, %10 : vector<1x8xf32>
    %cst_41 = arith.constant dense<0xFF800000> : vector<1xf32>
    %96 = vector.multi_reduction <maximumf>, %95, %cst_41 [1] : vector<1x8xf32> to vector<1xf32>
    %97 = vector.shape_cast %96 : vector<1xf32> to vector<1x1xf32>
    %98 = vector.broadcast %97 : vector<1x1xf32> to vector<1x8xf32>
    %99 = arith.subf %95, %98 : vector<1x8xf32>
    %100 = math.exp %99 : vector<1x8xf32>
    %cst_42 = arith.constant dense<0.000000e+00> : vector<1xf32>
    %101 = vector.multi_reduction <add>, %100, %cst_42 [1] : vector<1x8xf32> to vector<1xf32>
    %102 = vector.shape_cast %101 : vector<1xf32> to vector<1x1xf32>
    %103 = tpu.reciprocal %102 {approx = true} : vector<1x1xf32> -> vector<1x1xf32>
    %104 = vector.broadcast %103 : vector<1x1xf32> to vector<1x8xf32>
    %105 = arith.mulf %100, %104 : vector<1x8xf32>
    %cst_43 = arith.constant dense<0.000000e+00> : vector<1x8xf32>
    %106 = tpu.matmul %105, %91, %cst_43 {dimension_numbers = #tpu.dot_dimension_numbers<[1], [0], [0], [1], [0, 0, 1, 1], [], []>} : vector<1x8xf32>, vector<8x8xf32>, vector<1x8xf32> -> vector<1x8xf32>
    %107 = vector.extract_strided_slice %25 {offsets = [24, 0], sizes = [8, 32], strides = [1, 1]} : vector<32x32xf32> to vector<8x32xf32>
    %cst_44 = arith.constant dense<0.000000e+00> : vector<1x32xf32>
    %108 = tpu.matmul %106, %107, %cst_44 {dimension_numbers = #tpu.dot_dimension_numbers<[1], [0], [0], [1], [0, 0, 1, 1], [], []>} : vector<1x8xf32>, vector<8x32xf32>, vector<1x32xf32> -> vector<1x32xf32>
    %109 = arith.addf %88, %108 : vector<1x32xf32>
    %110 = arith.addf %109, %26 : vector<1x32xf32>
    %111 = vector.extract_strided_slice %1 {offsets = [0, 0], sizes = [1, 32], strides = [1, 1]} : vector<8x32xf32> to vector<1x32xf32>
    %112 = arith.addf %111, %110 : vector<1x32xf32>
    %113 = vector.extract_strided_slice %4 {offsets = [0, 0], sizes = [1, 32], strides = [1, 1]} : vector<6x32xf32> to vector<1x32xf32>
    %114 = vector.extract_strided_slice %4 {offsets = [1, 0], sizes = [1, 32], strides = [1, 1]} : vector<6x32xf32> to vector<1x32xf32>
    %cst_45 = arith.constant dense<0.000000e+00> : vector<1xf32>
    %115 = vector.multi_reduction <add>, %112, %cst_45 [1] : vector<1x32xf32> to vector<1xf32>
    %116 = vector.shape_cast %115 : vector<1xf32> to vector<1x1xf32>
    %cst_46 = arith.constant 3.200000e+01 : f32
    %117 = vector.broadcast %cst_46 : f32 to vector<1x1xf32>
    %118 = arith.divf %116, %117 : vector<1x1xf32>
    %119 = vector.broadcast %118 : vector<1x1xf32> to vector<1x32xf32>
    %120 = arith.subf %112, %119 : vector<1x32xf32>
    %121 = arith.mulf %120, %120 : vector<1x32xf32>
    %cst_47 = arith.constant dense<0.000000e+00> : vector<1xf32>
    %122 = vector.multi_reduction <add>, %121, %cst_47 [1] : vector<1x32xf32> to vector<1xf32>
    %123 = vector.shape_cast %122 : vector<1xf32> to vector<1x1xf32>
    %cst_48 = arith.constant 3.200000e+01 : f32
    %124 = vector.broadcast %cst_48 : f32 to vector<1x1xf32>
    %125 = arith.divf %123, %124 : vector<1x1xf32>
    %126 = vector.broadcast %118 : vector<1x1xf32> to vector<1x32xf32>
    %127 = arith.subf %112, %126 : vector<1x32xf32>
    %cst_49 = arith.constant 9.99999996E-13 : f32
    %128 = vector.broadcast %cst_49 : f32 to vector<1x1xf32>
    %129 = arith.addf %125, %128 : vector<1x1xf32>
    %130 = math.rsqrt %129 : vector<1x1xf32>
    %131 = vector.broadcast %130 : vector<1x1xf32> to vector<1x32xf32>
    %132 = arith.mulf %127, %131 : vector<1x32xf32>
    %133 = arith.mulf %132, %113 : vector<1x32xf32>
    %134 = arith.addf %133, %114 : vector<1x32xf32>
    %c0_50 = arith.constant 0 : index
    %c0_51 = arith.constant 0 : index
    %135 = vector.load %arg7[%c0_50, %c0_51] : memref<32x128xf32, #tpu.memory_space<vmem>>, vector<32x128xf32>
    %c0_52 = arith.constant 0 : index
    %c0_53 = arith.constant 0 : index
    %136 = vector.load %arg8[%c0_52, %c0_53] : memref<1x128xf32, #tpu.memory_space<vmem>>, vector<1x128xf32>
    %cst_54 = arith.constant dense<0.000000e+00> : vector<1x128xf32>
    %137 = tpu.matmul %134, %135, %cst_54 {dimension_numbers = #tpu.dot_dimension_numbers<[1], [0], [0], [1], [0, 0, 1, 1], [], []>} : vector<1x32xf32>, vector<32x128xf32>, vector<1x128xf32> -> vector<1x128xf32>
    %138 = arith.addf %137, %136 : vector<1x128xf32>
    %cst_55 = arith.constant dense<0.000000e+00> : vector<17x128xf32>
    %139 = tpu.matmul %3, %135, %cst_55 {dimension_numbers = #tpu.dot_dimension_numbers<[1], [0], [0], [1], [0, 0, 1, 1], [], []>} : vector<17x32xf32>, vector<32x128xf32>, vector<17x128xf32> -> vector<17x128xf32>
    %140 = vector.broadcast %136 : vector<1x128xf32> to vector<17x128xf32>
    %141 = arith.addf %139, %140 : vector<17x128xf32>
    %142 = vector.extract_strided_slice %138 {offsets = [0, 0], sizes = [1, 32], strides = [1, 1]} : vector<1x128xf32> to vector<1x32xf32>
    %143 = vector.extract_strided_slice %141 {offsets = [0, 32], sizes = [17, 32], strides = [1, 1]} : vector<17x128xf32> to vector<17x32xf32>
    %144 = vector.extract_strided_slice %141 {offsets = [0, 64], sizes = [17, 32], strides = [1, 1]} : vector<17x128xf32> to vector<17x32xf32>
    %145 = vector.extract_strided_slice %135 {offsets = [0, 96], sizes = [32, 32], strides = [1, 1]} : vector<32x128xf32> to vector<32x32xf32>
    %146 = vector.extract_strided_slice %136 {offsets = [0, 96], sizes = [1, 32], strides = [1, 1]} : vector<1x128xf32> to vector<1x32xf32>
    %147 = vector.extract_strided_slice %142 {offsets = [0, 0], sizes = [1, 8], strides = [1, 1]} : vector<1x32xf32> to vector<1x8xf32>
    %148 = vector.extract_strided_slice %143 {offsets = [0, 0], sizes = [17, 8], strides = [1, 1]} : vector<17x32xf32> to vector<17x8xf32>
    %149 = vector.extract_strided_slice %144 {offsets = [0, 0], sizes = [17, 8], strides = [1, 1]} : vector<17x32xf32> to vector<17x8xf32>
    %cst_56 = arith.constant dense<0.000000e+00> : vector<1x17xf32>
    %150 = tpu.matmul %147, %148, %cst_56 {dimension_numbers = #tpu.dot_dimension_numbers<[1], [1], [0], [0], [0, 0, 1, 0], [], []>} : vector<1x8xf32>, vector<17x8xf32>, vector<1x17xf32> -> vector<1x17xf32>
    %cst_57 = arith.constant 0.353553385 : f32
    %151 = vector.broadcast %cst_57 : f32 to vector<1x17xf32>
    %152 = arith.mulf %150, %151 : vector<1x17xf32>
    %153 = arith.addf %152, %16 : vector<1x17xf32>
    %cst_58 = arith.constant dense<0xFF800000> : vector<1xf32>
    %154 = vector.multi_reduction <maximumf>, %153, %cst_58 [1] : vector<1x17xf32> to vector<1xf32>
    %155 = vector.shape_cast %154 : vector<1xf32> to vector<1x1xf32>
    %156 = vector.broadcast %155 : vector<1x1xf32> to vector<1x17xf32>
    %157 = arith.subf %153, %156 : vector<1x17xf32>
    %158 = math.exp %157 : vector<1x17xf32>
    %cst_59 = arith.constant dense<0.000000e+00> : vector<1xf32>
    %159 = vector.multi_reduction <add>, %158, %cst_59 [1] : vector<1x17xf32> to vector<1xf32>
    %160 = vector.shape_cast %159 : vector<1xf32> to vector<1x1xf32>
    %161 = tpu.reciprocal %160 {approx = true} : vector<1x1xf32> -> vector<1x1xf32>
    %162 = vector.broadcast %161 : vector<1x1xf32> to vector<1x17xf32>
    %163 = arith.mulf %158, %162 : vector<1x17xf32>
    %cst_60 = arith.constant dense<0.000000e+00> : vector<1x8xf32>
    %164 = tpu.matmul %163, %149, %cst_60 {dimension_numbers = #tpu.dot_dimension_numbers<[1], [0], [0], [1], [0, 0, 1, 1], [], []>} : vector<1x17xf32>, vector<17x8xf32>, vector<1x8xf32> -> vector<1x8xf32>
    %165 = vector.extract_strided_slice %145 {offsets = [0, 0], sizes = [8, 32], strides = [1, 1]} : vector<32x32xf32> to vector<8x32xf32>
    %cst_61 = arith.constant dense<0.000000e+00> : vector<1x32xf32>
    %166 = tpu.matmul %164, %165, %cst_61 {dimension_numbers = #tpu.dot_dimension_numbers<[1], [0], [0], [1], [0, 0, 1, 1], [], []>} : vector<1x8xf32>, vector<8x32xf32>, vector<1x32xf32> -> vector<1x32xf32>
    %167 = vector.extract_strided_slice %142 {offsets = [0, 8], sizes = [1, 8], strides = [1, 1]} : vector<1x32xf32> to vector<1x8xf32>
    %168 = vector.extract_strided_slice %143 {offsets = [0, 8], sizes = [17, 8], strides = [1, 1]} : vector<17x32xf32> to vector<17x8xf32>
    %169 = vector.extract_strided_slice %144 {offsets = [0, 8], sizes = [17, 8], strides = [1, 1]} : vector<17x32xf32> to vector<17x8xf32>
    %cst_62 = arith.constant dense<0.000000e+00> : vector<1x17xf32>
    %170 = tpu.matmul %167, %168, %cst_62 {dimension_numbers = #tpu.dot_dimension_numbers<[1], [1], [0], [0], [0, 0, 1, 0], [], []>} : vector<1x8xf32>, vector<17x8xf32>, vector<1x17xf32> -> vector<1x17xf32>
    %cst_63 = arith.constant 0.353553385 : f32
    %171 = vector.broadcast %cst_63 : f32 to vector<1x17xf32>
    %172 = arith.mulf %170, %171 : vector<1x17xf32>
    %173 = arith.addf %172, %16 : vector<1x17xf32>
    %cst_64 = arith.constant dense<0xFF800000> : vector<1xf32>
    %174 = vector.multi_reduction <maximumf>, %173, %cst_64 [1] : vector<1x17xf32> to vector<1xf32>
    %175 = vector.shape_cast %174 : vector<1xf32> to vector<1x1xf32>
    %176 = vector.broadcast %175 : vector<1x1xf32> to vector<1x17xf32>
    %177 = arith.subf %173, %176 : vector<1x17xf32>
    %178 = math.exp %177 : vector<1x17xf32>
    %cst_65 = arith.constant dense<0.000000e+00> : vector<1xf32>
    %179 = vector.multi_reduction <add>, %178, %cst_65 [1] : vector<1x17xf32> to vector<1xf32>
    %180 = vector.shape_cast %179 : vector<1xf32> to vector<1x1xf32>
    %181 = tpu.reciprocal %180 {approx = true} : vector<1x1xf32> -> vector<1x1xf32>
    %182 = vector.broadcast %181 : vector<1x1xf32> to vector<1x17xf32>
    %183 = arith.mulf %178, %182 : vector<1x17xf32>
    %cst_66 = arith.constant dense<0.000000e+00> : vector<1x8xf32>
    %184 = tpu.matmul %183, %169, %cst_66 {dimension_numbers = #tpu.dot_dimension_numbers<[1], [0], [0], [1], [0, 0, 1, 1], [], []>} : vector<1x17xf32>, vector<17x8xf32>, vector<1x8xf32> -> vector<1x8xf32>
    %185 = vector.extract_strided_slice %145 {offsets = [8, 0], sizes = [8, 32], strides = [1, 1]} : vector<32x32xf32> to vector<8x32xf32>
    %cst_67 = arith.constant dense<0.000000e+00> : vector<1x32xf32>
    %186 = tpu.matmul %184, %185, %cst_67 {dimension_numbers = #tpu.dot_dimension_numbers<[1], [0], [0], [1], [0, 0, 1, 1], [], []>} : vector<1x8xf32>, vector<8x32xf32>, vector<1x32xf32> -> vector<1x32xf32>
    %187 = arith.addf %166, %186 : vector<1x32xf32>
    %188 = vector.extract_strided_slice %142 {offsets = [0, 16], sizes = [1, 8], strides = [1, 1]} : vector<1x32xf32> to vector<1x8xf32>
    %189 = vector.extract_strided_slice %143 {offsets = [0, 16], sizes = [17, 8], strides = [1, 1]} : vector<17x32xf32> to vector<17x8xf32>
    %190 = vector.extract_strided_slice %144 {offsets = [0, 16], sizes = [17, 8], strides = [1, 1]} : vector<17x32xf32> to vector<17x8xf32>
    %cst_68 = arith.constant dense<0.000000e+00> : vector<1x17xf32>
    %191 = tpu.matmul %188, %189, %cst_68 {dimension_numbers = #tpu.dot_dimension_numbers<[1], [1], [0], [0], [0, 0, 1, 0], [], []>} : vector<1x8xf32>, vector<17x8xf32>, vector<1x17xf32> -> vector<1x17xf32>
    %cst_69 = arith.constant 0.353553385 : f32
    %192 = vector.broadcast %cst_69 : f32 to vector<1x17xf32>
    %193 = arith.mulf %191, %192 : vector<1x17xf32>
    %194 = arith.addf %193, %16 : vector<1x17xf32>
    %cst_70 = arith.constant dense<0xFF800000> : vector<1xf32>
    %195 = vector.multi_reduction <maximumf>, %194, %cst_70 [1] : vector<1x17xf32> to vector<1xf32>
    %196 = vector.shape_cast %195 : vector<1xf32> to vector<1x1xf32>
    %197 = vector.broadcast %196 : vector<1x1xf32> to vector<1x17xf32>
    %198 = arith.subf %194, %197 : vector<1x17xf32>
    %199 = math.exp %198 : vector<1x17xf32>
    %cst_71 = arith.constant dense<0.000000e+00> : vector<1xf32>
    %200 = vector.multi_reduction <add>, %199, %cst_71 [1] : vector<1x17xf32> to vector<1xf32>
    %201 = vector.shape_cast %200 : vector<1xf32> to vector<1x1xf32>
    %202 = tpu.reciprocal %201 {approx = true} : vector<1x1xf32> -> vector<1x1xf32>
    %203 = vector.broadcast %202 : vector<1x1xf32> to vector<1x17xf32>
    %204 = arith.mulf %199, %203 : vector<1x17xf32>
    %cst_72 = arith.constant dense<0.000000e+00> : vector<1x8xf32>
    %205 = tpu.matmul %204, %190, %cst_72 {dimension_numbers = #tpu.dot_dimension_numbers<[1], [0], [0], [1], [0, 0, 1, 1], [], []>} : vector<1x17xf32>, vector<17x8xf32>, vector<1x8xf32> -> vector<1x8xf32>
    %206 = vector.extract_strided_slice %145 {offsets = [16, 0], sizes = [8, 32], strides = [1, 1]} : vector<32x32xf32> to vector<8x32xf32>
    %cst_73 = arith.constant dense<0.000000e+00> : vector<1x32xf32>
    %207 = tpu.matmul %205, %206, %cst_73 {dimension_numbers = #tpu.dot_dimension_numbers<[1], [0], [0], [1], [0, 0, 1, 1], [], []>} : vector<1x8xf32>, vector<8x32xf32>, vector<1x32xf32> -> vector<1x32xf32>
    %208 = arith.addf %187, %207 : vector<1x32xf32>
    %209 = vector.extract_strided_slice %142 {offsets = [0, 24], sizes = [1, 8], strides = [1, 1]} : vector<1x32xf32> to vector<1x8xf32>
    %210 = vector.extract_strided_slice %143 {offsets = [0, 24], sizes = [17, 8], strides = [1, 1]} : vector<17x32xf32> to vector<17x8xf32>
    %211 = vector.extract_strided_slice %144 {offsets = [0, 24], sizes = [17, 8], strides = [1, 1]} : vector<17x32xf32> to vector<17x8xf32>
    %cst_74 = arith.constant dense<0.000000e+00> : vector<1x17xf32>
    %212 = tpu.matmul %209, %210, %cst_74 {dimension_numbers = #tpu.dot_dimension_numbers<[1], [1], [0], [0], [0, 0, 1, 0], [], []>} : vector<1x8xf32>, vector<17x8xf32>, vector<1x17xf32> -> vector<1x17xf32>
    %cst_75 = arith.constant 0.353553385 : f32
    %213 = vector.broadcast %cst_75 : f32 to vector<1x17xf32>
    %214 = arith.mulf %212, %213 : vector<1x17xf32>
    %215 = arith.addf %214, %16 : vector<1x17xf32>
    %cst_76 = arith.constant dense<0xFF800000> : vector<1xf32>
    %216 = vector.multi_reduction <maximumf>, %215, %cst_76 [1] : vector<1x17xf32> to vector<1xf32>
    %217 = vector.shape_cast %216 : vector<1xf32> to vector<1x1xf32>
    %218 = vector.broadcast %217 : vector<1x1xf32> to vector<1x17xf32>
    %219 = arith.subf %215, %218 : vector<1x17xf32>
    %220 = math.exp %219 : vector<1x17xf32>
    %cst_77 = arith.constant dense<0.000000e+00> : vector<1xf32>
    %221 = vector.multi_reduction <add>, %220, %cst_77 [1] : vector<1x17xf32> to vector<1xf32>
    %222 = vector.shape_cast %221 : vector<1xf32> to vector<1x1xf32>
    %223 = tpu.reciprocal %222 {approx = true} : vector<1x1xf32> -> vector<1x1xf32>
    %224 = vector.broadcast %223 : vector<1x1xf32> to vector<1x17xf32>
    %225 = arith.mulf %220, %224 : vector<1x17xf32>
    %cst_78 = arith.constant dense<0.000000e+00> : vector<1x8xf32>
    %226 = tpu.matmul %225, %211, %cst_78 {dimension_numbers = #tpu.dot_dimension_numbers<[1], [0], [0], [1], [0, 0, 1, 1], [], []>} : vector<1x17xf32>, vector<17x8xf32>, vector<1x8xf32> -> vector<1x8xf32>
    %227 = vector.extract_strided_slice %145 {offsets = [24, 0], sizes = [8, 32], strides = [1, 1]} : vector<32x32xf32> to vector<8x32xf32>
    %cst_79 = arith.constant dense<0.000000e+00> : vector<1x32xf32>
    %228 = tpu.matmul %226, %227, %cst_79 {dimension_numbers = #tpu.dot_dimension_numbers<[1], [0], [0], [1], [0, 0, 1, 1], [], []>} : vector<1x8xf32>, vector<8x32xf32>, vector<1x32xf32> -> vector<1x32xf32>
    %229 = arith.addf %208, %228 : vector<1x32xf32>
    %230 = arith.addf %229, %146 : vector<1x32xf32>
    %231 = arith.addf %134, %230 : vector<1x32xf32>
    %232 = vector.extract_strided_slice %4 {offsets = [2, 0], sizes = [1, 32], strides = [1, 1]} : vector<6x32xf32> to vector<1x32xf32>
    %233 = vector.extract_strided_slice %4 {offsets = [3, 0], sizes = [1, 32], strides = [1, 1]} : vector<6x32xf32> to vector<1x32xf32>
    %cst_80 = arith.constant dense<0.000000e+00> : vector<1xf32>
    %234 = vector.multi_reduction <add>, %231, %cst_80 [1] : vector<1x32xf32> to vector<1xf32>
    %235 = vector.shape_cast %234 : vector<1xf32> to vector<1x1xf32>
    %cst_81 = arith.constant 3.200000e+01 : f32
    %236 = vector.broadcast %cst_81 : f32 to vector<1x1xf32>
    %237 = arith.divf %235, %236 : vector<1x1xf32>
    %238 = vector.broadcast %237 : vector<1x1xf32> to vector<1x32xf32>
    %239 = arith.subf %231, %238 : vector<1x32xf32>
    %240 = arith.mulf %239, %239 : vector<1x32xf32>
    %cst_82 = arith.constant dense<0.000000e+00> : vector<1xf32>
    %241 = vector.multi_reduction <add>, %240, %cst_82 [1] : vector<1x32xf32> to vector<1xf32>
    %242 = vector.shape_cast %241 : vector<1xf32> to vector<1x1xf32>
    %cst_83 = arith.constant 3.200000e+01 : f32
    %243 = vector.broadcast %cst_83 : f32 to vector<1x1xf32>
    %244 = arith.divf %242, %243 : vector<1x1xf32>
    %245 = vector.broadcast %237 : vector<1x1xf32> to vector<1x32xf32>
    %246 = arith.subf %231, %245 : vector<1x32xf32>
    %cst_84 = arith.constant 9.99999996E-13 : f32
    %247 = vector.broadcast %cst_84 : f32 to vector<1x1xf32>
    %248 = arith.addf %244, %247 : vector<1x1xf32>
    %249 = math.rsqrt %248 : vector<1x1xf32>
    %250 = vector.broadcast %249 : vector<1x1xf32> to vector<1x32xf32>
    %251 = arith.mulf %246, %250 : vector<1x32xf32>
    %252 = arith.mulf %251, %232 : vector<1x32xf32>
    %253 = arith.addf %252, %233 : vector<1x32xf32>
    %c0_85 = arith.constant 0 : index
    %c0_86 = arith.constant 0 : index
    %254 = vector.load %arg9[%c0_85, %c0_86] : memref<32x64xf32, #tpu.memory_space<vmem>>, vector<32x64xf32>
    %cst_87 = arith.constant dense<0.000000e+00> : vector<1x64xf32>
    %255 = tpu.matmul %253, %254, %cst_87 {dimension_numbers = #tpu.dot_dimension_numbers<[1], [0], [0], [1], [0, 0, 1, 1], [], []>} : vector<1x32xf32>, vector<32x64xf32>, vector<1x64xf32> -> vector<1x64xf32>
    %c0_88 = arith.constant 0 : index
    %c0_89 = arith.constant 0 : index
    %256 = vector.load %arg10[%c0_88, %c0_89] : memref<1x64xf32, #tpu.memory_space<vmem>>, vector<1x64xf32>
    %257 = arith.addf %255, %256 : vector<1x64xf32>
    %cst_90 = arith.constant 5.000000e-01 : f32
    %258 = vector.broadcast %cst_90 : f32 to vector<1x64xf32>
    %259 = arith.mulf %258, %257 : vector<1x64xf32>
    %cst_91 = arith.constant 4.471500e-02 : f32
    %260 = vector.broadcast %cst_91 : f32 to vector<1x64xf32>
    %261 = arith.mulf %260, %257 : vector<1x64xf32>
    %262 = arith.mulf %261, %257 : vector<1x64xf32>
    %263 = arith.mulf %262, %257 : vector<1x64xf32>
    %264 = arith.addf %257, %263 : vector<1x64xf32>
    %cst_92 = arith.constant 0.797884583 : f32
    %265 = vector.broadcast %cst_92 : f32 to vector<1x64xf32>
    %266 = arith.mulf %265, %264 : vector<1x64xf32>
    %267 = math.tanh %266 : vector<1x64xf32>
    %cst_93 = arith.constant 1.000000e+00 : f32
    %268 = vector.broadcast %cst_93 : f32 to vector<1x64xf32>
    %269 = arith.addf %268, %267 : vector<1x64xf32>
    %270 = arith.mulf %259, %269 : vector<1x64xf32>
    %c0_94 = arith.constant 0 : index
    %c0_95 = arith.constant 0 : index
    %271 = vector.load %arg11[%c0_94, %c0_95] : memref<64x32xf32, #tpu.memory_space<vmem>>, vector<64x32xf32>
    %cst_96 = arith.constant dense<0.000000e+00> : vector<1x32xf32>
    %272 = tpu.matmul %270, %271, %cst_96 {dimension_numbers = #tpu.dot_dimension_numbers<[1], [0], [0], [1], [0, 0, 1, 1], [], []>} : vector<1x64xf32>, vector<64x32xf32>, vector<1x32xf32> -> vector<1x32xf32>
    %c0_97 = arith.constant 0 : index
    %c0_98 = arith.constant 0 : index
    %273 = vector.load %arg12[%c0_97, %c0_98] : memref<1x32xf32, #tpu.memory_space<vmem>>, vector<1x32xf32>
    %274 = arith.addf %272, %273 : vector<1x32xf32>
    %275 = arith.addf %253, %274 : vector<1x32xf32>
    %276 = vector.extract_strided_slice %4 {offsets = [4, 0], sizes = [1, 32], strides = [1, 1]} : vector<6x32xf32> to vector<1x32xf32>
    %277 = vector.extract_strided_slice %4 {offsets = [5, 0], sizes = [1, 32], strides = [1, 1]} : vector<6x32xf32> to vector<1x32xf32>
    %cst_99 = arith.constant dense<0.000000e+00> : vector<1xf32>
    %278 = vector.multi_reduction <add>, %275, %cst_99 [1] : vector<1x32xf32> to vector<1xf32>
    %279 = vector.shape_cast %278 : vector<1xf32> to vector<1x1xf32>
    %cst_100 = arith.constant 3.200000e+01 : f32
    %280 = vector.broadcast %cst_100 : f32 to vector<1x1xf32>
    %281 = arith.divf %279, %280 : vector<1x1xf32>
    %282 = vector.broadcast %281 : vector<1x1xf32> to vector<1x32xf32>
    %283 = arith.subf %275, %282 : vector<1x32xf32>
    %284 = arith.mulf %283, %283 : vector<1x32xf32>
    %cst_101 = arith.constant dense<0.000000e+00> : vector<1xf32>
    %285 = vector.multi_reduction <add>, %284, %cst_101 [1] : vector<1x32xf32> to vector<1xf32>
    %286 = vector.shape_cast %285 : vector<1xf32> to vector<1x1xf32>
    %cst_102 = arith.constant 3.200000e+01 : f32
    %287 = vector.broadcast %cst_102 : f32 to vector<1x1xf32>
    %288 = arith.divf %286, %287 : vector<1x1xf32>
    %289 = vector.broadcast %281 : vector<1x1xf32> to vector<1x32xf32>
    %290 = arith.subf %275, %289 : vector<1x32xf32>
    %cst_103 = arith.constant 9.99999996E-13 : f32
    %291 = vector.broadcast %cst_103 : f32 to vector<1x1xf32>
    %292 = arith.addf %288, %291 : vector<1x1xf32>
    %293 = math.rsqrt %292 : vector<1x1xf32>
    %294 = vector.broadcast %293 : vector<1x1xf32> to vector<1x32xf32>
    %295 = arith.mulf %290, %294 : vector<1x32xf32>
    %296 = arith.mulf %295, %276 : vector<1x32xf32>
    %297 = arith.addf %296, %277 : vector<1x32xf32>
    %c0_104 = arith.constant 0 : index
    %c0_105 = arith.constant 0 : index
    %c0_106 = arith.constant 0 : index
    %298 = vector.load %arg14[%c0_104, %c0_105, %c0_106] : memref<1x1x32xf32, #tpu.memory_space<vmem>>, vector<1x1x32xf32>
    %299 = vector.shape_cast %298 : vector<1x1x32xf32> to vector<1x32xf32>
    %300 = vector.shape_cast %297 : vector<1x32xf32> to vector<1x1x32xf32>
    tpu.vector_store %arg14[%c0_104, %c0_105, %c0_106], %300 {strides = array<i32>} : memref<1x1x32xf32, #tpu.memory_space<vmem>>, vector<1x1x32xf32>,
    return
  }
  func.func @transform_0(%arg0: i32) -> (i32, i32, i32) {
    %c0_i32 = arith.constant 0 : i32
    %c0_i32_0 = arith.constant 0 : i32
    %c0_i32_1 = arith.constant 0 : i32
    return %arg0, %c0_i32, %c0_i32_0 : i32, i32, i32
  }
  func.func @transform_1(%arg0: i32) -> (i32, i32, i32) {
    %c0_i32 = arith.constant 0 : i32
    %c0_i32_0 = arith.constant 0 : i32
    %c0_i32_1 = arith.constant 0 : i32
    return %arg0, %c0_i32, %c0_i32_0 : i32, i32, i32
  }
  func.func @transform_2(%arg0: i32) -> (i32, i32, i32) {
    %c2_i32 = arith.constant 2 : i32
    %c0_i32 = arith.constant 0 : i32
    %0 = arith.cmpi eq, %c2_i32, %c0_i32 : i32
    %c1_i32 = arith.constant 1 : i32
    %1 = arith.select %0, %c1_i32, %c2_i32 : i32
    %2 = arith.remsi %arg0, %1 : i32
    %c0_i32_0 = arith.constant 0 : i32
    %3 = arith.cmpi ne, %2, %c0_i32_0 : i32
    %c0_i32_1 = arith.constant 0 : i32
    %4 = arith.cmpi slt, %2, %c0_i32_1 : i32
    %c0_i32_2 = arith.constant 0 : i32
    %5 = arith.cmpi slt, %1, %c0_i32_2 : i32
    %6 = arith.xori %4, %5 : i1
    %7 = arith.andi %6, %3 : i1
    %8 = arith.addi %2, %1 : i32
    %9 = arith.select %7, %8, %2 : i32
    %c0_i32_3 = arith.constant 0 : i32
    %c0_i32_4 = arith.constant 0 : i32
    %c0_i32_5 = arith.constant 0 : i32
    return %9, %c0_i32_3, %c0_i32_4 : i32, i32, i32
  }
  func.func @transform_3(%arg0: i32) -> (i32, i32, i32) {
    %c2_i32 = arith.constant 2 : i32
    %c0_i32 = arith.constant 0 : i32
    %0 = arith.cmpi eq, %c2_i32, %c0_i32 : i32
    %c1_i32 = arith.constant 1 : i32
    %1 = arith.select %0, %c1_i32, %c2_i32 : i32
    %2 = arith.remsi %arg0, %1 : i32
    %c0_i32_0 = arith.constant 0 : i32
    %3 = arith.cmpi ne, %2, %c0_i32_0 : i32
    %c0_i32_1 = arith.constant 0 : i32
    %4 = arith.cmpi slt, %2, %c0_i32_1 : i32
    %c0_i32_2 = arith.constant 0 : i32
    %5 = arith.cmpi slt, %1, %c0_i32_2 : i32
    %6 = arith.xori %4, %5 : i1
    %7 = arith.andi %6, %3 : i1
    %8 = arith.addi %2, %1 : i32
    %9 = arith.select %7, %8, %2 : i32
    %c0_i32_3 = arith.constant 0 : i32
    %c0_i32_4 = arith.constant 0 : i32
    %c0_i32_5 = arith.constant 0 : i32
    return %9, %c0_i32_3, %c0_i32_4 : i32, i32, i32
  }
  func.func @transform_4(%arg0: i32) -> (i32, i32) {
    %c0_i32 = arith.constant 0 : i32
    %c0_i32_0 = arith.constant 0 : i32
    %c0_i32_1 = arith.constant 0 : i32
    return %c0_i32, %c0_i32_0 : i32, i32
  }
  func.func @transform_5(%arg0: i32) -> (i32, i32) {
    %c0_i32 = arith.constant 0 : i32
    %c0_i32_0 = arith.constant 0 : i32
    %c0_i32_1 = arith.constant 0 : i32
    return %c0_i32, %c0_i32_0 : i32, i32
  }
  func.func @transform_6(%arg0: i32) -> (i32, i32) {
    %c0_i32 = arith.constant 0 : i32
    %c0_i32_0 = arith.constant 0 : i32
    %c0_i32_1 = arith.constant 0 : i32
    return %c0_i32, %c0_i32_0 : i32, i32
  }
  func.func @transform_7(%arg0: i32) -> (i32, i32) {
    %c0_i32 = arith.constant 0 : i32
    %c0_i32_0 = arith.constant 0 : i32
    %c0_i32_1 = arith.constant 0 : i32
    return %c0_i32, %c0_i32_0 : i32, i32
  }
  func.func @transform_8(%arg0: i32) -> (i32, i32) {
    %c0_i32 = arith.constant 0 : i32
    %c0_i32_0 = arith.constant 0 : i32
    %c0_i32_1 = arith.constant 0 : i32
    return %c0_i32, %c0_i32_0 : i32, i32
  }
  func.func @transform_9(%arg0: i32) -> (i32, i32) {
    %c0_i32 = arith.constant 0 : i32
    %c0_i32_0 = arith.constant 0 : i32
    %c0_i32_1 = arith.constant 0 : i32
    return %c0_i32, %c0_i32_0 : i32, i32
  }
  func.func @transform_10(%arg0: i32) -> (i32, i32) {
    %c0_i32 = arith.constant 0 : i32
    %c0_i32_0 = arith.constant 0 : i32
    %c0_i32_1 = arith.constant 0 : i32
    return %c0_i32, %c0_i32_0 : i32, i32
  }
  func.func @transform_11(%arg0: i32) -> (i32, i32) {
    %c0_i32 = arith.constant 0 : i32
    %c0_i32_0 = arith.constant 0 : i32
    %c0_i32_1 = arith.constant 0 : i32
    return %c0_i32, %c0_i32_0 : i32, i32
  }
  func.func @transform_12(%arg0: i32) -> (i32, i32) {
    %c0_i32 = arith.constant 0 : i32
    %c0_i32_0 = arith.constant 0 : i32
    %c0_i32_1 = arith.constant 0 : i32
    return %c0_i32, %c0_i32_0 : i32, i32
  }
  func.func @transform_13(%arg0: i32) -> (i32, i32, i32) {
    %c0_i32 = arith.constant 0 : i32
    %c0_i32_0 = arith.constant 0 : i32
    %c0_i32_1 = arith.constant 0 : i32
    return %arg0, %c0_i32, %c0_i32_0 : i32, i32, i32
  }
}

</mosaic_0001>

<llo_original>
// kernel: xvlm_for_similarities.4
$region0: #{xvlm_for_similarities.4}
  #allocation0 [shape = 'u32[]', space=smem, size = 0x4, offset = 0x4, fixed_abs, tag = 'smem constant byte address 0x4 - core index']
  #allocation1 [shape = 'u32[144,128]{1,0:T(1,128)}', space=vmem, size = 0x12000, scoped, tag = 'internal scratch']
  %s0 = inlined_call_operand.vmem [shape: f32[6,8,32], index: 0, kind: input, shape index: {}]
  %s1 = inlined_call_operand.vmem [shape: f32[6,1,8], index: 1, kind: input, shape index: {}]
  %s2 = inlined_call_operand.vmem [shape: f32[32,128], index: 2, kind: input, shape index: {}]
  %s3 = inlined_call_operand.vmem [shape: f32[1,128], index: 3, kind: input, shape index: {}]
  %s4 = inlined_call_operand.vmem [shape: f32[32,64], index: 4, kind: input, shape index: {}]
  %s5 = inlined_call_operand.vmem [shape: f32[1,64], index: 5, kind: input, shape index: {}]
  %s6 = inlined_call_operand.vmem [shape: f32[64,32], index: 6, kind: input, shape index: {}]
  %s7 = inlined_call_operand.vmem [shape: f32[1,32], index: 7, kind: input, shape index: {}]
  %s8 = inlined_call_operand.vmem [shape: f32[6,32], index: 8, kind: input, shape index: {}]
  %s9 = inlined_call_operand.vmem [shape: f32[6,8,32], index: 9, kind: output, shape index: {}]
  %s10 = sld [smem:[#allocation0]]
  $region69: #{xvlm_for_similarities.4} parent=0
    _
  %s12 = ssub.s32 1, %s10
  %s13 = scalar_select 0, %s12, %s10
  loop: start=0, step=1, limit=8
  $region2: #{xvlm_for_similarities.4} parent=0 // loop_pre_header
    _
  $region3: #{xvlm_for_similarities.4} parent=0 // loop_header
    %s15 = sphi 0, %s19
    %p16 = scmp.ge.s32.totalorder %s15, 8
    %s25 = sphi 0, %s27
    %s28 = sphi 0, %s25
    %s29 = sphi 0, %s28
    %s45 = sphi 0, %s29
    %s51 = sphi 0, %s53
    %s54 = sphi 0, %s51
    %s55 = sphi 0, %s54
    %s71 = sphi 0, %s55
    %s75 = sphi 0, %s75
    %s77 = sphi 0, %s75
    %s78 = sphi 0, %s77
    %s92 = sphi 0, %s78
    %s96 = sphi 0, %s96
    %s98 = sphi 0, %s96
    %s99 = sphi 0, %s98
    %s113 = sphi 0, %s99
    %s117 = sphi 0, %s117
    %s119 = sphi 0, %s117
    %s120 = sphi 0, %s119
    %s134 = sphi 0, %s120
    %s138 = sphi 0, %s138
    %s140 = sphi 0, %s138
    %s141 = sphi 0, %s140
    %s155 = sphi 0, %s141
    %s159 = sphi 0, %s159
    %s161 = sphi 0, %s159
    %s162 = sphi 0, %s161
    %s176 = sphi 0, %s162
    %s180 = sphi 0, %s180
    %s182 = sphi 0, %s180
    %s183 = sphi 0, %s182
    %s197 = sphi 0, %s183
    %s201 = sphi 0, %s201
    %s203 = sphi 0, %s201
    %s204 = sphi 0, %s203
    %s218 = sphi 0, %s204
    %s224 = sphi 0, %s226
    %s227 = sphi 0, %s224
    %s228 = sphi 0, %s227
    %s244 = sphi 0, %s228
  $region4: #{xvlm_for_similarities.4} parent=0 // loop_header_branch
    %18 = sbr.rel (%p16) target = $region8
  $region5: #{xvlm_for_similarities.4} parent=0 // loop_body
    %s20 = ssub.s32 %s15, 1
    %s21 = ssub.s32 %s15, 2
    %s22 = sadd.s32 %s15, 1
    %s23 = ssub.s32 %s15, %s22
    %p24 = scmp.eq.s32.totalorder %s23, 0
    %s26 = sadd.s32 %s25, 1
    %s27 = scalar_select %p24, %s25, %s26
    %p30 = pneg %p24
    %p31 = scmp.eq.s32.totalorder %s15, 5
    %p32 = por %p30, %p31
    %p33 = scmp.ne.s32.totalorder %s25, %s28
    %p34 = scmp.eq.s32.totalorder %s15, 0
    %p35 = por %p33, %p34
    %p36 = scmp.ne.s32.totalorder %s25, %s28
    %p37 = scmp.eq.s32.totalorder %s20, 5
    %p38 = por %p36, %p37
    %p39 = scmp.ne.s32.totalorder %s28, %s29
    %p40 = scmp.eq.s32.totalorder %s20, 0
    %p41 = por %p39, %p40
    %p42 = scmp.ne.s32.totalorder %s28, %s29
    %p43 = scmp.eq.s32.totalorder %s21, 5
    %p44 = por %p42, %p43
    %p46 = scmp.ne.s32.totalorder %s29, %s45
    %p47 = scmp.eq.s32.totalorder %s21, 0
    %p48 = por %p46, %p47
    %s49 = ssub.s32 %s15, %s22
    %p50 = scmp.eq.s32.totalorder %s49, 0
    %s52 = sadd.s32 %s51, 1
    %s53 = scalar_select %p50, %s51, %s52
    %p56 = pneg %p50
    %p57 = scmp.eq.s32.totalorder %s15, 5
    %p58 = por %p56, %p57
    %p59 = scmp.ne.s32.totalorder %s51, %s54
    %p60 = scmp.eq.s32.totalorder %s15, 0
    %p61 = por %p59, %p60
    %p62 = scmp.ne.s32.totalorder %s51, %s54
    %p63 = scmp.eq.s32.totalorder %s20, 5
    %p64 = por %p62, %p63
    %p65 = scmp.ne.s32.totalorder %s54, %s55
    %p66 = scmp.eq.s32.totalorder %s20, 0
    %p67 = por %p65, %p66
    %p68 = scmp.ne.s32.totalorder %s54, %s55
    %p69 = scmp.eq.s32.totalorder %s21, 5
    %p70 = por %p68, %p69
    %p72 = scmp.ne.s32.totalorder %s55, %s71
    %p73 = scmp.eq.s32.totalorder %s21, 0
    %p74 = por %p72, %p73
    %s76 = sadd.s32 %s75, 1
    %p79 = scmp.eq.s32.totalorder %s15, 5
    %p80 = scmp.ne.s32.totalorder %s75, %s77
    %p81 = scmp.eq.s32.totalorder %s15, 0
    %p82 = por %p80, %p81
    %p83 = scmp.ne.s32.totalorder %s75, %s77
    %p84 = scmp.eq.s32.totalorder %s20, 5
    %p85 = por %p83, %p84
    %p86 = scmp.ne.s32.totalorder %s77, %s78
    %p87 = scmp.eq.s32.totalorder %s20, 0
    %p88 = por %p86, %p87
    %p89 = scmp.ne.s32.totalorder %s77, %s78
    %p90 = scmp.eq.s32.totalorder %s21, 5
    %p91 = por %p89, %p90
    %p93 = scmp.ne.s32.totalorder %s78, %s92
    %p94 = scmp.eq.s32.totalorder %s21, 0
    %p95 = por %p93, %p94
    %s97 = sadd.s32 %s96, 1
    %p100 = scmp.eq.s32.totalorder %s15, 5
    %p101 = scmp.ne.s32.totalorder %s96, %s98
    %p102 = scmp.eq.s32.totalorder %s15, 0
    %p103 = por %p101, %p102
    %p104 = scmp.ne.s32.totalorder %s96, %s98
    %p105 = scmp.eq.s32.totalorder %s20, 5
    %p106 = por %p104, %p105
    %p107 = scmp.ne.s32.totalorder %s98, %s99
    %p108 = scmp.eq.s32.totalorder %s20, 0
    %p109 = por %p107, %p108
    %p110 = scmp.ne.s32.totalorder %s98, %s99
    %p111 = scmp.eq.s32.totalorder %s21, 5
    %p112 = por %p110, %p111
    %p114 = scmp.ne.s32.totalorder %s99, %s113
    %p115 = scmp.eq.s32.totalorder %s21, 0
    %p116 = por %p114, %p115
    %s118 = sadd.s32 %s117, 1
    %p121 = scmp.eq.s32.totalorder %s15, 5
    %p122 = scmp.ne.s32.totalorder %s117, %s119
    %p123 = scmp.eq.s32.totalorder %s15, 0
    %p124 = por %p122, %p123
    %p125 = scmp.ne.s32.totalorder %s117, %s119
    %p126 = scmp.eq.s32.totalorder %s20, 5
    %p127 = por %p125, %p126
    %p128 = scmp.ne.s32.totalorder %s119, %s120
    %p129 = scmp.eq.s32.totalorder %s20, 0
    %p130 = por %p128, %p129
    %p131 = scmp.ne.s32.totalorder %s119, %s120
    %p132 = scmp.eq.s32.totalorder %s21, 5
    %p133 = por %p131, %p132
    %p135 = scmp.ne.s32.totalorder %s120, %s134
    %p136 = scmp.eq.s32.totalorder %s21, 0
    %p137 = por %p135, %p136
    %s139 = sadd.s32 %s138, 1
    %p142 = scmp.eq.s32.totalorder %s15, 5
    %p143 = scmp.ne.s32.totalorder %s138, %s140
    %p144 = scmp.eq.s32.totalorder %s15, 0
    %p145 = por %p143, %p144
    %p146 = scmp.ne.s32.totalorder %s138, %s140
    %p147 = scmp.eq.s32.totalorder %s20, 5
    %p148 = por %p146, %p147
    %p149 = scmp.ne.s32.totalorder %s140, %s141
    %p150 = scmp.eq.s32.totalorder %s20, 0
    %p151 = por %p149, %p150
    %p152 = scmp.ne.s32.totalorder %s140, %s141
    %p153 = scmp.eq.s32.totalorder %s21, 5
    %p154 = por %p152, %p153
    %p156 = scmp.ne.s32.totalorder %s141, %s155
    %p157 = scmp.eq.s32.totalorder %s21, 0
    %p158 = por %p156, %p157
    %s160 = sadd.s32 %s159, 1
    %p163 = scmp.eq.s32.totalorder %s15, 5
    %p164 = scmp.ne.s32.totalorder %s159, %s161
    %p165 = scmp.eq.s32.totalorder %s15, 0
    %p166 = por %p164, %p165
    %p167 = scmp.ne.s32.totalorder %s159, %s161
    %p168 = scmp.eq.s32.totalorder %s20, 5
    %p169 = por %p167, %p168
    %p170 = scmp.ne.s32.totalorder %s161, %s162
    %p171 = scmp.eq.s32.totalorder %s20, 0
    %p172 = por %p170, %p171
    %p173 = scmp.ne.s32.totalorder %s161, %s162
    %p174 = scmp.eq.s32.totalorder %s21, 5
    %p175 = por %p173, %p174
    %p177 = scmp.ne.s32.totalorder %s162, %s176
    %p178 = scmp.eq.s32.totalorder %s21, 0
    %p179 = por %p177, %p178
    %s181 = sadd.s32 %s180, 1
    %p184 = scmp.eq.s32.totalorder %s15, 5
    %p185 = scmp.ne.s32.totalorder %s180, %s182
    %p186 = scmp.eq.s32.totalorder %s15, 0
    %p187 = por %p185, %p186
    %p188 = scmp.ne.s32.totalorder %s180, %s182
    %p189 = scmp.eq.s32.totalorder %s20, 5
    %p190 = por %p188, %p189
    %p191 = scmp.ne.s32.totalorder %s182, %s183
    %p192 = scmp.eq.s32.totalorder %s20, 0
    %p193 = por %p191, %p192
    %p194 = scmp.ne.s32.totalorder %s182, %s183
    %p195 = scmp.eq.s32.totalorder %s21, 5
    %p196 = por %p194, %p195
    %p198 = scmp.ne.s32.totalorder %s183, %s197
    %p199 = scmp.eq.s32.totalorder %s21, 0
    %p200 = por %p198, %p199
    %s202 = sadd.s32 %s201, 1
    %p205 = scmp.eq.s32.totalorder %s15, 5
    %p206 = scmp.ne.s32.totalorder %s201, %s203
    %p207 = scmp.eq.s32.totalorder %s15, 0
    %p208 = por %p206, %p207
    %p209 = scmp.ne.s32.totalorder %s201, %s203
    %p210 = scmp.eq.s32.totalorder %s20, 5
    %p211 = por %p209, %p210
    %p212 = scmp.ne.s32.totalorder %s203, %s204
    %p213 = scmp.eq.s32.totalorder %s20, 0
    %p214 = por %p212, %p213
    %p215 = scmp.ne.s32.totalorder %s203, %s204
    %p216 = scmp.eq.s32.totalorder %s21, 5
    %p217 = por %p215, %p216
    %p219 = scmp.ne.s32.totalorder %s204, %s218
    %p220 = scmp.eq.s32.totalorder %s21, 0
    %p221 = por %p219, %p220
    %s222 = ssub.s32 %s15, %s22
    %p223 = scmp.eq.s32.totalorder %s222, 0
    %s225 = sadd.s32 %s224, 1
    %s226 = scalar_select %p223, %s224, %s225
    %p229 = pneg %p223
    %p230 = scmp.eq.s32.totalorder %s15, 5
    %p231 = por %p229, %p230
    %p232 = scmp.ne.s32.totalorder %s224, %s227
    %p233 = scmp.eq.s32.totalorder %s15, 0
    %p234 = por %p232, %p233
    %p235 = scmp.ne.s32.totalorder %s224, %s227
    %p236 = scmp.eq.s32.totalorder %s20, 5
    %p237 = por %p235, %p236
    %p238 = scmp.ne.s32.totalorder %s227, %s228
    %p239 = scmp.eq.s32.totalorder %s20, 0
    %p240 = por %p238, %p239
    %p241 = scmp.ne.s32.totalorder %s227, %s228
    %p242 = scmp.eq.s32.totalorder %s21, 5
    %p243 = por %p241, %p242
    %p245 = scmp.ne.s32.totalorder %s228, %s244
    %p246 = scmp.eq.s32.totalorder %s21, 0
    %p247 = por %p245, %p246
    %p248 = scmp.le.s32.totalorder 1, %s15
    %p249 = scmp.lt.s32.totalorder %s15, 7
    %p250 = pnand %p248, %p249
    %p251 = pneg %p250
    // Predicated region
    $region9: #{xvlm_for_similarities.4} parent=5 // pred_check
      _
    $region10: #{xvlm_for_similarities.4} parent=5 // pred_check_branch
      %253 = sbr.rel (%p250) target = $region12
    $region11: #{xvlm_for_similarities.4} parent=5 // pred_region
      %s254 = ssub.s32 %s15, 1
      // Predicated region
      $region13: #{xvlm_for_similarities.4} parent=11 // pred_check
        %p255 = pneg %p88
      $region14: #{xvlm_for_similarities.4} parent=11 // pred_check_branch
        %257 = sbr.rel (%p255) target = $region16
      $region15: #{xvlm_for_similarities.4} parent=11 // pred_region
        _
      $region16: #{xvlm_for_similarities.4} parent=11 // pred_fallthru
        _
      // Predicated region
      $region17: #{xvlm_for_similarities.4} parent=11 // pred_check
        %p258 = pneg %p109
      $region18: #{xvlm_for_similarities.4} parent=11 // pred_check_branch
        %260 = sbr.rel (%p258) target = $region20
      $region19: #{xvlm_for_similarities.4} parent=11 // pred_region
        _
      $region20: #{xvlm_for_similarities.4} parent=11 // pred_fallthru
        _
      // Predicated region
      $region21: #{xvlm_for_similarities.4} parent=11 // pred_check
        %p261 = pneg %p130
      $region22: #{xvlm_for_similarities.4} parent=11 // pred_check_branch
        %263 = sbr.rel (%p261) target = $region24
      $region23: #{xvlm_for_similarities.4} parent=11 // pred_region
        _
      $region24: #{xvlm_for_similarities.4} parent=11 // pred_fallthru
        _
      // Predicated region
      $region25: #{xvlm_for_similarities.4} parent=11 // pred_check
        %p264 = pneg %p151
      $region26: #{xvlm_for_similarities.4} parent=11 // pred_check_branch
        %266 = sbr.rel (%p264) target = $region28
      $region27: #{xvlm_for_similarities.4} parent=11 // pred_region
        _
      $region28: #{xvlm_for_similarities.4} parent=11 // pred_fallthru
        _
      // Predicated region
      $region29: #{xvlm_for_similarities.4} parent=11 // pred_check
        %p267 = pneg %p172
      $region30: #{xvlm_for_similarities.4} parent=11 // pred_check_branch
        %269 = sbr.rel (%p267) target = $region32
      $region31: #{xvlm_for_similarities.4} parent=11 // pred_region
        _
      $region32: #{xvlm_for_similarities.4} parent=11 // pred_fallthru
        _
      // Predicated region
      $region33: #{xvlm_for_similarities.4} parent=11 // pred_check
        %p270 = pneg %p193
      $region34: #{xvlm_for_similarities.4} parent=11 // pred_check_branch
        %272 = sbr.rel (%p270) target = $region36
      $region35: #{xvlm_for_similarities.4} parent=11 // pred_region
        _
      $region36: #{xvlm_for_similarities.4} parent=11 // pred_fallthru
        _
      // Predicated region
      $region37: #{xvlm_for_similarities.4} parent=11 // pred_check
        %p273 = pneg %p214
      $region38: #{xvlm_for_similarities.4} parent=11 // pred_check_branch
        %275 = sbr.rel (%p273) target = $region40
      $region39: #{xvlm_for_similarities.4} parent=11 // pred_region
        _
      $region40: #{xvlm_for_similarities.4} parent=11 // pred_fallthru
        _
    $region12: #{xvlm_for_similarities.4} parent=5 // pred_fallthru
      _
    %p276 = scmp.lt.s32.totalorder %s15, 6
    // Predicated region
    $region41: #{xvlm_for_similarities.4} parent=5 // pred_check
      %p277 = pneg %p276
    $region42: #{xvlm_for_similarities.4} parent=5 // pred_check_branch
      %279 = sbr.rel (%p277) target = $region44
    $region43: #{xvlm_for_similarities.4} parent=5 // pred_region
      // Predicated region
      $region45: #{xvlm_for_similarities.4} parent=43 // pred_check
        %p280 = pneg %p35
      $region46: #{xvlm_for_similarities.4} parent=43 // pred_check_branch
        %282 = sbr.rel (%p280) target = $region48
      $region47: #{xvlm_for_similarities.4} parent=43 // pred_region
        %p283 = scmp.lt.s32.totalorder %s15, 5
        %s284 = scalar_select %p283, %s15, 5
        %s285 = smul.addr %s284, 8
        %s286 = scalar_lea.vmem %s0, %s285
      $region48: #{xvlm_for_similarities.4} parent=43 // pred_fallthru
        _
      // Predicated region
      $region49: #{xvlm_for_similarities.4} parent=43 // pred_check
        %p287 = pneg %p61
      $region50: #{xvlm_for_similarities.4} parent=43 // pred_check_branch
        %289 = sbr.rel (%p287) target = $region52
      $region51: #{xvlm_for_similarities.4} parent=43 // pred_region
        %p290 = scmp.lt.s32.totalorder %s15, 5
        %s291 = scalar_select %p290, %s15, 5
        %s292 = scalar_lea.vmem %s1, %s291
      $region52: #{xvlm_for_similarities.4} parent=43 // pred_fallthru
        _
    $region44: #{xvlm_for_similarities.4} parent=5 // pred_fallthru
      _
    %p293 = scmp.le.s32.totalorder 1, %s15
    %p294 = scmp.lt.s32.totalorder %s15, 7
    %p295 = pnand %p293, %p294
    %p296 = pneg %p295
    // Predicated region
    $region53: #{xvlm_for_similarities.4} parent=5 // pred_check
      _
    $region54: #{xvlm_for_similarities.4} parent=5 // pred_check_branch
      %298 = sbr.rel (%p295) target = $region56
    $region55: #{xvlm_for_similarities.4} parent=5 // pred_region
      %s299 = ssub.s32 %s15, 1
      %p300 = scmp.lt.s32.totalorder %s20, 5
      %s301 = scalar_select %p300, %s20, 5
      %s302 = smul.addr %s301, 8
      %s303 = scalar_lea.vmem %s0, %s302
      %p304 = pneg %p41
      %p305 = pneg %p38
      %p306 = scmp.lt.s32.totalorder %s20, 5
      %s307 = scalar_select %p306, %s20, 5
      %s308 = scalar_lea.vmem %s1, %s307
      %p309 = pneg %p67
      %p310 = pneg %p64
      %p311 = pneg %p88
      %p312 = pneg %p85
      %p313 = pneg %p109
      %p314 = pneg %p106
      %p315 = pneg %p130
      %p316 = pneg %p127
      %p317 = pneg %p151
      %p318 = pneg %p148
      %p319 = pneg %p172
      %p320 = pneg %p169
      %p321 = pneg %p193
      %p322 = pneg %p190
      %p323 = pneg %p214
      %p324 = pneg %p211
      %p325 = pneg %p240
      %p326 = pneg %p237
      %p327 = scmp.lt.s32.totalorder %s20, 5
      %s328 = scalar_select %p327, %s20, 5
      %s329 = smul.addr %s328, 8
      %s330 = scalar_lea.vmem %s9, %s329
      %p331 = scmp.lt.s32.totalorder %s20, 5
      %s332 = scalar_select %p331, %s20, 5
      %s333 = smul.addr %s332, 8
      %s334 = scalar_lea.vmem %s0, %s333
      %p335 = scmp.lt.s32.totalorder %s20, 5
      %s336 = scalar_select %p335, %s20, 5
      %s337 = scalar_lea.vmem %s1, %s336
      %p338 = scmp.lt.s32.totalorder %s20, 5
      %s339 = scalar_select %p338, %s20, 5
      %s340 = smul.addr %s339, 8
      %s341 = scalar_lea.vmem %s9, %s340
      %v342 = vld [vmem:[%s8] sm:$0x3f]
      %v343 = vld [vmem:[%s334] sm:$0xff]
      %vm344 = vcmask 261120
      %v345 = vsel %vm344, %v343, 0.0
      %346 = vadd.xlane.f32.xlu0 %v345
      %v347 = vpop.xlane.xlu0 %346
      %v348 = vrcp.pop 32.0
      %v349 = vmul.f32 %v347, %v348
      %v350 = vsub.f32 %v343, %v349
      %v351 = vmul.f32 %v350, %v350
      %v352 = vsel %vm344, %v351, 0.0
      %353 = vadd.xlane.f32.xlu0 %v352
      %v354 = vpop.xlane.xlu0 %353
      %v355 = vmul.f32 %v354, %v348
      %v356 = vadd.f32 %v355, 1e-12
      %v357 = vrsqrt.pop %v356
      %v358 = vmul.f32 %v350, %v357
      %v359 = vlaneseq
      %v360 = vshrl.u32 %v359, 7
      %v361 = vsub.s32 0, %v360
      %v362 = vrot.slane %v342, %v361
      %v363 = vmul.f32 %v358, %v362
      %v364 = vlaneseq
      %v365 = vshrl.u32 %v364, 7
      %v366 = vsub.s32 1, %v365
      %v367 = vrot.slane %v342, %v366
      %v368 = vadd.f32 %v363, %v367
      %v369 = vld [vmem:[%s337] sm:$0x1]
      %v370 = vsub.f32 1.0, %v369
      %v371 = vmul.f32 %v370, -1e+09
      %v372 = vld [vmem:[%s2] sm:$0xff]
      %v373 = vld [vmem:[%s2 + $0x8] sm:$0xff]
      %v374 = vld [vmem:[%s2 + $0x10] sm:$0xff]
      %v375 = vld [vmem:[%s2 + $0x18] sm:$0xff]
      %v376 = vld [vmem:[%s3] sm:$0x1]
      %v377 = vld [vmem:[%s4] sm:$0xff]
      %v378 = vld [vmem:[%s4 + $0x8] sm:$0xff]
      %v379 = vld [vmem:[%s4 + $0x10] sm:$0xff]
      %v380 = vld [vmem:[%s4 + $0x18] sm:$0xff]
      %v381 = vld [vmem:[%s5] sm:$0x1]
      %v382 = vld [vmem:[%s6] sm:$0xff]
      %v383 = vld [vmem:[%s6 + $0x8] sm:$0xff]
      %v384 = vld [vmem:[%s6 + $0x10] sm:$0xff]
      %v385 = vld [vmem:[%s6 + $0x18] sm:$0xff]
      %v386 = vld [vmem:[%s6 + $0x20] sm:$0xff]
      %v387 = vld [vmem:[%s6 + $0x28] sm:$0xff]
      %v388 = vld [vmem:[%s6 + $0x30] sm:$0xff]
      %v389 = vld [vmem:[%s6 + $0x38] sm:$0xff]
      %v390 = vld [vmem:[%s7] sm:$0x1]
      %v392 = vlaneseq
      %v393 = vshrl.u32 %v392, 7
      %v394 = vsub.s32 0, %v393
      %v395 = vrot.slane %v376, %v394
      %v398 = vsel %vm344, %v368, 0
      %400 = vmatprep.subr.mxu0 0.0
      %401 = vmatpush1.msra.mxu0 %v372
      %402 = vmatprep.subr.mxu0 0.0
      %403 = vmatpush1.msra.mxu0 %v373
      %404 = vmatprep.subr.mxu0 0.0
      %405 = vmatpush1.msra.mxu0 %v374
      %406 = vmatprep.subr.mxu0 0.0
      %407 = vmatpush1.msra.mxu0 %v375
      %408 = vmatprep.subr.mxu0 0.0
      %409 = vmatpush1.msra.mxu0 0.0
      %410 = vmatprep.subr.mxu0 0.0
      %411 = vmatpush1.msra.mxu0 0.0
      %412 = vmatprep.subr.mxu0 0.0
      %413 = vmatpush1.msra.mxu0 0.0
      %414 = vmatprep.subr.mxu0 0.0
      %415 = vmatpush1.msra.mxu0 0.0
      %416 = vmatprep.subr.mxu0 0.0
      %417 = vmatpush1.msra.mxu0 0.0
      %418 = vmatprep.subr.mxu0 0.0
      %419 = vmatpush1.msra.mxu0 0.0
      %420 = vmatprep.subr.mxu0 0.0
      %421 = vmatpush1.msra.mxu0 0.0
      %422 = vmatprep.subr.mxu0 0.0
      %423 = vmatpush1.msra.mxu0 0.0
      %424 = vmatprep.subr.mxu0 0.0
      %425 = vmatpush1.msra.mxu0 0.0
      %426 = vmatprep.subr.mxu0 0.0
      %427 = vmatpush1.msra.mxu0 0.0
      %428 = vmatprep.subr.mxu0 0.0
      %429 = vmatpush1.msra.mxu0 0.0
      %430 = vmatprep.subr.mxu0 0.0
      %431 = vmatpush1.msra.mxu0 0.0
      %432 = vmatprep.subr.mxu0 0.0
      %433 = vmatpush1.msra.mxu0 0.0
      %434 = vmatprep.subr.mxu0 0.0
      %435 = vmatpush1.msra.mxu0 0.0
      %436 = vmatprep.subr.mxu0 0.0
      %437 = vmatpush1.msra.mxu0 0.0
      %438 = vmatprep.subr.mxu0 0.0
      %439 = vmatpush1.msra.mxu0 0.0
      %440 = vmatprep.subr.mxu0 0.0
      %441 = vmatpush1.msra.mxu0 0.0
      %442 = vmatprep.subr.mxu0 0.0
      %443 = vmatpush1.msra.mxu0 0.0
      %444 = vmatprep.subr.mxu0 0.0
      %445 = vmatpush1.msra.mxu0 0.0
      %446 = vmatprep.subr.mxu0 0.0
      %447 = vmatpush1.msra.mxu0 0.0
      %448 = vmatprep.subr.mxu0 0.0
      %449 = vmatpush1.msra.mxu0 0.0
      %450 = vmatprep.subr.mxu0 0.0
      %451 = vmatpush1.msra.mxu0 0.0
      %452 = vmatprep.subr.mxu0 0.0
      %453 = vmatpush1.msra.mxu0 0.0
      %454 = vmatprep.subr.mxu0 0.0
      %455 = vmatpush1.msra.mxu0 0.0
      %456 = vmatprep.subr.mxu0 0.0
      %457 = vmatpush1.msra.mxu0 0.0
      %458 = vmatprep.subr.mxu0 0.0
      %459 = vmatpush1.msra.mxu0 0.0
      %460 = vmatprep.subr.mxu0 0.0
      %461 = vmatpush1.msra.mxu0 0.0
      %462 = vmatprep.subr.mxu0 0.0
      %463 = vmatpush1.msra.mxu0 0.0
      %464 = vmatprep.mubr.f32.mxu0 0.0
      %465 = vmatmul.mubr.f32.gmra.mrb[0].mxu0 %v398
      %v466 = vpop.f32.mrb[0].mxu0
      %v467 = vadd.f32 %v395, %v466
      %v468 = vpop.f32.mrb[0].mxu0
      %469 = vdwg.mxu0
      %471 = vrot.lane.b32.xlu0 %v467, 96
      %v472 = vpop.permute.xlu0 %471
      %vm473 = vcmask 64512
      %v474 = vsel %vm473, %v467, 0
      %v476 = vsel %vm473, %v472, 0
      %478 = vmatprep.subr.mxu0 0.0
      %479 = vmatpush1.xpose.msra.mxu0 %v476
      %480 = vmatprep.subr.mxu0 0.0
      %481 = vmatpush1.xpose.msra.mxu0 0.0
      %482 = vmatprep.subr.mxu0 0.0
      %483 = vmatpush1.xpose.msra.mxu0 0.0
      %484 = vmatprep.subr.mxu0 0.0
      %485 = vmatpush1.xpose.msra.mxu0 0.0
      %486 = vmatprep.subr.mxu0 0.0
      %487 = vmatpush1.xpose.msra.mxu0 0.0
      %488 = vmatprep.subr.mxu0 0.0
      %489 = vmatpush1.xpose.msra.mxu0 0.0
      %490 = vmatprep.subr.mxu0 0.0
      %491 = vmatpush1.xpose.msra.mxu0 0.0
      %492 = vmatprep.subr.mxu0 0.0
      %493 = vmatpush1.xpose.msra.mxu0 0.0
      %494 = vmatprep.subr.mxu0 0.0
      %495 = vmatpush1.xpose.msra.mxu0 0.0
      %496 = vmatprep.subr.mxu0 0.0
      %497 = vmatpush1.xpose.msra.mxu0 0.0
      %498 = vmatprep.subr.mxu0 0.0
      %499 = vmatpush1.xpose.msra.mxu0 0.0
      %500 = vmatprep.subr.mxu0 0.0
      %501 = vmatpush1.xpose.msra.mxu0 0.0
      %502 = vmatprep.subr.mxu0 0.0
      %503 = vmatpush1.xpose.msra.mxu0 0.0
      %504 = vmatprep.subr.mxu0 0.0
      %505 = vmatpush1.xpose.msra.mxu0 0.0
      %506 = vmatprep.subr.mxu0 0.0
      %507 = vmatpush1.xpose.msra.mxu0 0.0
      %508 = vmatprep.subr.mxu0 0.0
      %509 = vmatpush1.xpose.msra.mxu0 0.0
      %510 = vmatprep.subr.mxu0 0.0
      %511 = vmatpush1.xpose.msra.mxu0 0.0
      %512 = vmatprep.subr.mxu0 0.0
      %513 = vmatpush1.xpose.msra.mxu0 0.0
      %514 = vmatprep.subr.mxu0 0.0
      %515 = vmatpush1.xpose.msra.mxu0 0.0
      %516 = vmatprep.subr.mxu0 0.0
      %517 = vmatpush1.xpose.msra.mxu0 0.0
      %518 = vmatprep.subr.mxu0 0.0
      %519 = vmatpush1.xpose.msra.mxu0 0.0
      %520 = vmatprep.subr.mxu0 0.0
      %521 = vmatpush1.xpose.msra.mxu0 0.0
      %522 = vmatprep.subr.mxu0 0.0
      %523 = vmatpush1.xpose.msra.mxu0 0.0
      %524 = vmatprep.subr.mxu0 0.0
      %525 = vmatpush1.xpose.msra.mxu0 0.0
      %526 = vmatprep.subr.mxu0 0.0
      %527 = vmatpush1.xpose.msra.mxu0 0.0
      %528 = vmatprep.subr.mxu0 0.0
      %529 = vmatpush1.xpose.msra.mxu0 0.0
      %530 = vmatprep.subr.mxu0 0.0
      %531 = vmatpush1.xpose.msra.mxu0 0.0
      %532 = vmatprep.subr.mxu0 0.0
      %533 = vmatpush1.xpose.msra.mxu0 0.0
      %534 = vmatprep.subr.mxu0 0.0
      %535 = vmatpush1.xpose.msra.mxu0 0.0
      %536 = vmatprep.subr.mxu0 0.0
      %537 = vmatpush1.xpose.msra.mxu0 0.0
      %538 = vmatprep.subr.mxu0 0.0
      %539 = vmatpush1.xpose.msra.mxu0 0.0
      %540 = vmatprep.subr.mxu0 0.0
      %541 = vmatpush1.xpose.msra.mxu0 0.0
      %542 = vmatprep.mubr.f32.mxu0 0.0
      %543 = vmatmul.mubr.f32.gmra.mrb[0].mxu0 %v474
      %v544 = vpop.f32.mrb[0].mxu0
      %v545 = vadd.f32 0.0, %v544
      %v546 = vpop.f32.mrb[0].mxu0
      %547 = vdwg.mxu0
      %v548 = vmul.f32 %v545, 0.35355338
      %v550 = vlaneseq
      %v551 = vshrl.u32 %v550, 7
      %v552 = vsub.s32 0, %v551
      %v553 = vrot.slane %v371, %v552
      %v555 = vadd.f32 %v548, %v553
      %v556 = vsel %vm473, %v555, -inf
      %557 = vmax.xlane.f32.xlu0 %v556
      %v558 = vpop.xlane.xlu0 %557
      %v559 = vsub.f32 %v555, %v558
      %v560 = vmul.f32 %v559, 1.442695
      %v561 = vpow.pop %v560
      %v562 = vsel %vm473, %v561, 0.0
      %563 = vadd.xlane.f32.xlu0 %v562
      %v564 = vpop.xlane.xlu0 %563
      %v565 = vrcp.pop %v564
      %v566 = vmul.f32 %v561, %v565
      %567 = vrot.lane.b32.xlu0 %v467, 64
      %v568 = vpop.permute.xlu0 %567
      %v571 = vsel %vm473, %v566, 0
      %573 = vmatprep.subr.mxu0 0.0
      %574 = vmatpush1.msra.mxu0 %v568
      %575 = vmatprep.subr.mxu0 0.0
      %576 = vmatpush1.msra.mxu0 0.0
      %577 = vmatprep.subr.mxu0 0.0
      %578 = vmatpush1.msra.mxu0 0.0
      %579 = vmatprep.subr.mxu0 0.0
      %580 = vmatpush1.msra.mxu0 0.0
      %581 = vmatprep.subr.mxu0 0.0
      %582 = vmatpush1.msra.mxu0 0.0
      %583 = vmatprep.subr.mxu0 0.0
      %584 = vmatpush1.msra.mxu0 0.0
      %585 = vmatprep.subr.mxu0 0.0
      %586 = vmatpush1.msra.mxu0 0.0
      %587 = vmatprep.subr.mxu0 0.0
      %588 = vmatpush1.msra.mxu0 0.0
      %589 = vmatprep.subr.mxu0 0.0
      %590 = vmatpush1.msra.mxu0 0.0
      %591 = vmatprep.subr.mxu0 0.0
      %592 = vmatpush1.msra.mxu0 0.0
      %593 = vmatprep.subr.mxu0 0.0
      %594 = vmatpush1.msra.mxu0 0.0
      %595 = vmatprep.subr.mxu0 0.0
      %596 = vmatpush1.msra.mxu0 0.0
      %597 = vmatprep.subr.mxu0 0.0
      %598 = vmatpush1.msra.mxu0 0.0
      %599 = vmatprep.subr.mxu0 0.0
      %600 = vmatpush1.msra.mxu0 0.0
      %601 = vmatprep.subr.mxu0 0.0
      %602 = vmatpush1.msra.mxu0 0.0
      %603 = vmatprep.subr.mxu0 0.0
      %604 = vmatpush1.msra.mxu0 0.0
      %605 = vmatprep.subr.mxu0 0.0
      %606 = vmatpush1.msra.mxu0 0.0
      %607 = vmatprep.subr.mxu0 0.0
      %608 = vmatpush1.msra.mxu0 0.0
      %609 = vmatprep.subr.mxu0 0.0
      %610 = vmatpush1.msra.mxu0 0.0
      %611 = vmatprep.subr.mxu0 0.0
      %612 = vmatpush1.msra.mxu0 0.0
      %613 = vmatprep.subr.mxu0 0.0
      %614 = vmatpush1.msra.mxu0 0.0
      %615 = vmatprep.subr.mxu0 0.0
      %616 = vmatpush1.msra.mxu0 0.0
      %617 = vmatprep.subr.mxu0 0.0
      %618 = vmatpush1.msra.mxu0 0.0
      %619 = vmatprep.subr.mxu0 0.0
      %620 = vmatpush1.msra.mxu0 0.0
      %621 = vmatprep.subr.mxu0 0.0
      %622 = vmatpush1.msra.mxu0 0.0
      %623 = vmatprep.subr.mxu0 0.0
      %624 = vmatpush1.msra.mxu0 0.0
      %625 = vmatprep.subr.mxu0 0.0
      %626 = vmatpush1.msra.mxu0 0.0
      %627 = vmatprep.subr.mxu0 0.0
      %628 = vmatpush1.msra.mxu0 0.0
      %629 = vmatprep.subr.mxu0 0.0
      %630 = vmatpush1.msra.mxu0 0.0
      %631 = vmatprep.subr.mxu0 0.0
      %632 = vmatpush1.msra.mxu0 0.0
      %633 = vmatprep.subr.mxu0 0.0
      %634 = vmatpush1.msra.mxu0 0.0
      %635 = vmatprep.subr.mxu0 0.0
      %636 = vmatpush1.msra.mxu0 0.0
      %637 = vmatprep.mubr.f32.mxu0 0.0
      %638 = vmatmul.mubr.f32.gmra.mrb[0].mxu0 %v571
      %v639 = vpop.f32.mrb[0].mxu0
      %v640 = vadd.f32 0.0, %v639
      %v641 = vpop.f32.mrb[0].mxu0
      %642 = vdwg.mxu0
      %643 = vrot.lane.b32.xlu0 %v467, 120
      %v644 = vpop.permute.xlu0 %643
      %645 = vrot.lane.b32.xlu0 %v467, 88
      %v646 = vpop.permute.xlu0 %645
      %v647 = vsel %vm473, %v644, 0
      %v649 = vsel %vm473, %v646, 0
      %651 = vmatprep.subr.mxu0 0.0
      %652 = vmatpush1.xpose.msra.mxu0 %v649
      %653 = vmatprep.subr.mxu0 0.0
      %654 = vmatpush1.xpose.msra.mxu0 0.0
      %655 = vmatprep.subr.mxu0 0.0
      %656 = vmatpush1.xpose.msra.mxu0 0.0
      %657 = vmatprep.subr.mxu0 0.0
      %658 = vmatpush1.xpose.msra.mxu0 0.0
      %659 = vmatprep.subr.mxu0 0.0
      %660 = vmatpush1.xpose.msra.mxu0 0.0
      %661 = vmatprep.subr.mxu0 0.0
      %662 = vmatpush1.xpose.msra.mxu0 0.0
      %663 = vmatprep.subr.mxu0 0.0
      %664 = vmatpush1.xpose.msra.mxu0 0.0
      %665 = vmatprep.subr.mxu0 0.0
      %666 = vmatpush1.xpose.msra.mxu0 0.0
      %667 = vmatprep.subr.mxu0 0.0
      %668 = vmatpush1.xpose.msra.mxu0 0.0
      %669 = vmatprep.subr.mxu0 0.0
      %670 = vmatpush1.xpose.msra.mxu0 0.0
      %671 = vmatprep.subr.mxu0 0.0
      %672 = vmatpush1.xpose.msra.mxu0 0.0
      %673 = vmatprep.subr.mxu0 0.0
      %674 = vmatpush1.xpose.msra.mxu0 0.0
      %675 = vmatprep.subr.mxu0 0.0
      %676 = vmatpush1.xpose.msra.mxu0 0.0
      %677 = vmatprep.subr.mxu0 0.0
      %678 = vmatpush1.xpose.msra.mxu0 0.0
      %679 = vmatprep.subr.mxu0 0.0
      %680 = vmatpush1.xpose.msra.mxu0 0.0
      %681 = vmatprep.subr.mxu0 0.0
      %682 = vmatpush1.xpose.msra.mxu0 0.0
      %683 = vmatprep.subr.mxu0 0.0
      %684 = vmatpush1.xpose.msra.mxu0 0.0
      %685 = vmatprep.subr.mxu0 0.0
      %686 = vmatpush1.xpose.msra.mxu0 0.0
      %687 = vmatprep.subr.mxu0 0.0
      %688 = vmatpush1.xpose.msra.mxu0 0.0
      %689 = vmatprep.subr.mxu0 0.0
      %690 = vmatpush1.xpose.msra.mxu0 0.0
      %691 = vmatprep.subr.mxu0 0.0
      %692 = vmatpush1.xpose.msra.mxu0 0.0
      %693 = vmatprep.subr.mxu0 0.0
      %694 = vmatpush1.xpose.msra.mxu0 0.0
      %695 = vmatprep.subr.mxu0 0.0
      %696 = vmatpush1.xpose.msra.mxu0 0.0
      %697 = vmatprep.subr.mxu0 0.0
      %698 = vmatpush1.xpose.msra.mxu0 0.0
      %699 = vmatprep.subr.mxu0 0.0
      %700 = vmatpush1.xpose.msra.mxu0 0.0
      %701 = vmatprep.subr.mxu0 0.0
      %702 = vmatpush1.xpose.msra.mxu0 0.0
      %703 = vmatprep.subr.mxu0 0.0
      %704 = vmatpush1.xpose.msra.mxu0 0.0
      %705 = vmatprep.subr.mxu0 0.0
      %706 = vmatpush1.xpose.msra.mxu0 0.0
      %707 = vmatprep.subr.mxu0 0.0
      %708 = vmatpush1.xpose.msra.mxu0 0.0
      %709 = vmatprep.subr.mxu0 0.0
      %710 = vmatpush1.xpose.msra.mxu0 0.0
      %711 = vmatprep.subr.mxu0 0.0
      %712 = vmatpush1.xpose.msra.mxu0 0.0
      %713 = vmatprep.subr.mxu0 0.0
      %714 = vmatpush1.xpose.msra.mxu0 0.0
      %715 = vmatprep.mubr.f32.mxu0 0.0
      %716 = vmatmul.mubr.f32.gmra.mrb[0].mxu0 %v647
      %v717 = vpop.f32.mrb[0].mxu0
      %v718 = vadd.f32 0.0, %v717
      %v719 = vpop.f32.mrb[0].mxu0
      %720 = vdwg.mxu0
      %v721 = vmul.f32 %v718, 0.35355338
      %v722 = vadd.f32 %v721, %v553
      %v723 = vsel %vm473, %v722, -inf
      %724 = vmax.xlane.f32.xlu0 %v723
      %v725 = vpop.xlane.xlu0 %724
      %v726 = vsub.f32 %v722, %v725
      %v727 = vmul.f32 %v726, 1.442695
      %v728 = vpow.pop %v727
      %v729 = vsel %vm473, %v728, 0.0
      %730 = vadd.xlane.f32.xlu0 %v729
      %v731 = vpop.xlane.xlu0 %730
      %v732 = vrcp.pop %v731
      %v733 = vmul.f32 %v728, %v732
      %734 = vrot.lane.b32.xlu0 %v467, 56
      %v735 = vpop.permute.xlu0 %734
      %v738 = vsel %vm473, %v733, 0
      %740 = vmatprep.subr.mxu0 0.0
      %741 = vmatpush1.msra.mxu0 %v735
      %742 = vmatprep.subr.mxu0 0.0
      %743 = vmatpush1.msra.mxu0 0.0
      %744 = vmatprep.subr.mxu0 0.0
      %745 = vmatpush1.msra.mxu0 0.0
      %746 = vmatprep.subr.mxu0 0.0
      %747 = vmatpush1.msra.mxu0 0.0
      %748 = vmatprep.subr.mxu0 0.0
      %749 = vmatpush1.msra.mxu0 0.0
      %750 = vmatprep.subr.mxu0 0.0
      %751 = vmatpush1.msra.mxu0 0.0
      %752 = vmatprep.subr.mxu0 0.0
      %753 = vmatpush1.msra.mxu0 0.0
      %754 = vmatprep.subr.mxu0 0.0
      %755 = vmatpush1.msra.mxu0 0.0
      %756 = vmatprep.subr.mxu0 0.0
      %757 = vmatpush1.msra.mxu0 0.0
      %758 = vmatprep.subr.mxu0 0.0
      %759 = vmatpush1.msra.mxu0 0.0
      %760 = vmatprep.subr.mxu0 0.0
      %761 = vmatpush1.msra.mxu0 0.0
      %762 = vmatprep.subr.mxu0 0.0
      %763 = vmatpush1.msra.mxu0 0.0
      %764 = vmatprep.subr.mxu0 0.0
      %765 = vmatpush1.msra.mxu0 0.0
      %766 = vmatprep.subr.mxu0 0.0
      %767 = vmatpush1.msra.mxu0 0.0
      %768 = vmatprep.subr.mxu0 0.0
      %769 = vmatpush1.msra.mxu0 0.0
      %770 = vmatprep.subr.mxu0 0.0
      %771 = vmatpush1.msra.mxu0 0.0
      %772 = vmatprep.subr.mxu0 0.0
      %773 = vmatpush1.msra.mxu0 0.0
      %774 = vmatprep.subr.mxu0 0.0
      %775 = vmatpush1.msra.mxu0 0.0
      %776 = vmatprep.subr.mxu0 0.0
      %777 = vmatpush1.msra.mxu0 0.0
      %778 = vmatprep.subr.mxu0 0.0
      %779 = vmatpush1.msra.mxu0 0.0
      %780 = vmatprep.subr.mxu0 0.0
      %781 = vmatpush1.msra.mxu0 0.0
      %782 = vmatprep.subr.mxu0 0.0
      %783 = vmatpush1.msra.mxu0 0.0
      %784 = vmatprep.subr.mxu0 0.0
      %785 = vmatpush1.msra.mxu0 0.0
      %786 = vmatprep.subr.mxu0 0.0
      %787 = vmatpush1.msra.mxu0 0.0
      %788 = vmatprep.subr.mxu0 0.0
      %789 = vmatpush1.msra.mxu0 0.0
      %790 = vmatprep.subr.mxu0 0.0
      %791 = vmatpush1.msra.mxu0 0.0
      %792 = vmatprep.subr.mxu0 0.0
      %793 = vmatpush1.msra.mxu0 0.0
      %794 = vmatprep.subr.mxu0 0.0
      %795 = vmatpush1.msra.mxu0 0.0
      %796 = vmatprep.subr.mxu0 0.0
      %797 = vmatpush1.msra.mxu0 0.0
      %798 = vmatprep.subr.mxu0 0.0
      %799 = vmatpush1.msra.mxu0 0.0
      %800 = vmatprep.subr.mxu0 0.0
      %801 = vmatpush1.msra.mxu0 0.0
      %802 = vmatprep.subr.mxu0 0.0
      %803 = vmatpush1.msra.mxu0 0.0
      %804 = vmatprep.mubr.f32.mxu0 0.0
      %805 = vmatmul.mubr.f32.gmra.mrb[0].mxu0 %v738
      %v806 = vpop.f32.mrb[0].mxu0
      %v807 = vadd.f32 0.0, %v806
      %v808 = vpop.f32.mrb[0].mxu0
      %809 = vdwg.mxu0
      %811 = vrot.lane.b32.xlu0 %v373, 32
      %v812 = vpop.permute.xlu0 %811
      %v815 = vsel %vm473, %v807, 0
      %817 = vmatprep.subr.mxu0 0.0
      %818 = vmatpush1.msra.mxu0 %v812
      %819 = vmatprep.subr.mxu0 0.0
      %820 = vmatpush1.msra.mxu0 0.0
      %821 = vmatprep.subr.mxu0 0.0
      %822 = vmatpush1.msra.mxu0 0.0
      %823 = vmatprep.subr.mxu0 0.0
      %824 = vmatpush1.msra.mxu0 0.0
      %825 = vmatprep.subr.mxu0 0.0
      %826 = vmatpush1.msra.mxu0 0.0
      %827 = vmatprep.subr.mxu0 0.0
      %828 = vmatpush1.msra.mxu0 0.0
      %829 = vmatprep.subr.mxu0 0.0
      %830 = vmatpush1.msra.mxu0 0.0
      %831 = vmatprep.subr.mxu0 0.0
      %832 = vmatpush1.msra.mxu0 0.0
      %833 = vmatprep.subr.mxu0 0.0
      %834 = vmatpush1.msra.mxu0 0.0
      %835 = vmatprep.subr.mxu0 0.0
      %836 = vmatpush1.msra.mxu0 0.0
      %837 = vmatprep.subr.mxu0 0.0
      %838 = vmatpush1.msra.mxu0 0.0
      %839 = vmatprep.subr.mxu0 0.0
      %840 = vmatpush1.msra.mxu0 0.0
      %841 = vmatprep.subr.mxu0 0.0
      %842 = vmatpush1.msra.mxu0 0.0
      %843 = vmatprep.subr.mxu0 0.0
      %844 = vmatpush1.msra.mxu0 0.0
      %845 = vmatprep.subr.mxu0 0.0
      %846 = vmatpush1.msra.mxu0 0.0
      %847 = vmatprep.subr.mxu0 0.0
      %848 = vmatpush1.msra.mxu0 0.0
      %849 = vmatprep.subr.mxu0 0.0
      %850 = vmatpush1.msra.mxu0 0.0
      %851 = vmatprep.subr.mxu0 0.0
      %852 = vmatpush1.msra.mxu0 0.0
      %853 = vmatprep.subr.mxu0 0.0
      %854 = vmatpush1.msra.mxu0 0.0
      %855 = vmatprep.subr.mxu0 0.0
      %856 = vmatpush1.msra.mxu0 0.0
      %857 = vmatprep.subr.mxu0 0.0
      %858 = vmatpush1.msra.mxu0 0.0
      %859 = vmatprep.subr.mxu0 0.0
      %860 = vmatpush1.msra.mxu0 0.0
      %861 = vmatprep.subr.mxu0 0.0
      %862 = vmatpush1.msra.mxu0 0.0
      %863 = vmatprep.subr.mxu0 0.0
      %864 = vmatpush1.msra.mxu0 0.0
      %865 = vmatprep.subr.mxu0 0.0
      %866 = vmatpush1.msra.mxu0 0.0
      %867 = vmatprep.subr.mxu0 0.0
      %868 = vmatpush1.msra.mxu0 0.0
      %869 = vmatprep.subr.mxu0 0.0
      %870 = vmatpush1.msra.mxu0 0.0
      %871 = vmatprep.subr.mxu0 0.0
      %872 = vmatpush1.msra.mxu0 0.0
      %873 = vmatprep.subr.mxu0 0.0
      %874 = vmatpush1.msra.mxu0 0.0
      %875 = vmatprep.subr.mxu0 0.0
      %876 = vmatpush1.msra.mxu0 0.0
      %877 = vmatprep.subr.mxu0 0.0
      %878 = vmatpush1.msra.mxu0 0.0
      %879 = vmatprep.subr.mxu0 0.0
      %880 = vmatpush1.msra.mxu0 0.0
      %881 = vmatprep.mubr.f32.mxu0 0.0
      %882 = vmatmul.mubr.f32.gmra.mrb[0].mxu0 %v815
      %v883 = vpop.f32.mrb[0].mxu0
      %v884 = vadd.f32 0.0, %v883
      %v885 = vpop.f32.mrb[0].mxu0
      %886 = vdwg.mxu0
      %888 = vrot.lane.b32.xlu0 %v372, 32
      %v889 = vpop.permute.xlu0 %888
      %v892 = vsel %vm473, %v640, 0
      %894 = vmatprep.subr.mxu0 0.0
      %895 = vmatpush1.msra.mxu0 %v889
      %896 = vmatprep.subr.mxu0 0.0
      %897 = vmatpush1.msra.mxu0 0.0
      %898 = vmatprep.subr.mxu0 0.0
      %899 = vmatpush1.msra.mxu0 0.0
      %900 = vmatprep.subr.mxu0 0.0
      %901 = vmatpush1.msra.mxu0 0.0
      %902 = vmatprep.subr.mxu0 0.0
      %903 = vmatpush1.msra.mxu0 0.0
      %904 = vmatprep.subr.mxu0 0.0
      %905 = vmatpush1.msra.mxu0 0.0
      %906 = vmatprep.subr.mxu0 0.0
      %907 = vmatpush1.msra.mxu0 0.0
      %908 = vmatprep.subr.mxu0 0.0
      %909 = vmatpush1.msra.mxu0 0.0
      %910 = vmatprep.subr.mxu0 0.0
      %911 = vmatpush1.msra.mxu0 0.0
      %912 = vmatprep.subr.mxu0 0.0
      %913 = vmatpush1.msra.mxu0 0.0
      %914 = vmatprep.subr.mxu0 0.0
      %915 = vmatpush1.msra.mxu0 0.0
      %916 = vmatprep.subr.mxu0 0.0
      %917 = vmatpush1.msra.mxu0 0.0
      %918 = vmatprep.subr.mxu0 0.0
      %919 = vmatpush1.msra.mxu0 0.0
      %920 = vmatprep.subr.mxu0 0.0
      %921 = vmatpush1.msra.mxu0 0.0
      %922 = vmatprep.subr.mxu0 0.0
      %923 = vmatpush1.msra.mxu0 0.0
      %924 = vmatprep.subr.mxu0 0.0
      %925 = vmatpush1.msra.mxu0 0.0
      %926 = vmatprep.subr.mxu0 0.0
      %927 = vmatpush1.msra.mxu0 0.0
      %928 = vmatprep.subr.mxu0 0.0
      %929 = vmatpush1.msra.mxu0 0.0
      %930 = vmatprep.subr.mxu0 0.0
      %931 = vmatpush1.msra.mxu0 0.0
      %932 = vmatprep.subr.mxu0 0.0
      %933 = vmatpush1.msra.mxu0 0.0
      %934 = vmatprep.subr.mxu0 0.0
      %935 = vmatpush1.msra.mxu0 0.0
      %936 = vmatprep.subr.mxu0 0.0
      %937 = vmatpush1.msra.mxu0 0.0
      %938 = vmatprep.subr.mxu0 0.0
      %939 = vmatpush1.msra.mxu0 0.0
      %940 = vmatprep.subr.mxu0 0.0
      %941 = vmatpush1.msra.mxu0 0.0
      %942 = vmatprep.subr.mxu0 0.0
      %943 = vmatpush1.msra.mxu0 0.0
      %944 = vmatprep.subr.mxu0 0.0
      %945 = vmatpush1.msra.mxu0 0.0
      %946 = vmatprep.subr.mxu0 0.0
      %947 = vmatpush1.msra.mxu0 0.0
      %948 = vmatprep.subr.mxu0 0.0
      %949 = vmatpush1.msra.mxu0 0.0
      %950 = vmatprep.subr.mxu0 0.0
      %951 = vmatpush1.msra.mxu0 0.0
      %952 = vmatprep.subr.mxu0 0.0
      %953 = vmatpush1.msra.mxu0 0.0
      %954 = vmatprep.subr.mxu0 0.0
      %955 = vmatpush1.msra.mxu0 0.0
      %956 = vmatprep.subr.mxu0 0.0
      %957 = vmatpush1.msra.mxu0 0.0
      %958 = vmatprep.mubr.f32.mxu0 0.0
      %959 = vmatmul.mubr.f32.gmra.mrb[0].mxu0 %v892
      %v960 = vpop.f32.mrb[0].mxu0
      %v961 = vadd.f32 %v884, %v960
      %v962 = vpop.f32.mrb[0].mxu0
      %963 = vdwg.mxu0
      %964 = vrot.lane.b32.xlu0 %v467, 112
      %v965 = vpop.permute.xlu0 %964
      %966 = vrot.lane.b32.xlu0 %v467, 80
      %v967 = vpop.permute.xlu0 %966
      %v968 = vsel %vm473, %v965, 0
      %v970 = vsel %vm473, %v967, 0
      %972 = vmatprep.subr.mxu0 0.0
      %973 = vmatpush1.xpose.msra.mxu0 %v970
      %974 = vmatprep.subr.mxu0 0.0
      %975 = vmatpush1.xpose.msra.mxu0 0.0
      %976 = vmatprep.subr.mxu0 0.0
      %977 = vmatpush1.xpose.msra.mxu0 0.0
      %978 = vmatprep.subr.mxu0 0.0
      %979 = vmatpush1.xpose.msra.mxu0 0.0
      %980 = vmatprep.subr.mxu0 0.0
      %981 = vmatpush1.xpose.msra.mxu0 0.0
      %982 = vmatprep.subr.mxu0 0.0
      %983 = vmatpush1.xpose.msra.mxu0 0.0
      %984 = vmatprep.subr.mxu0 0.0
      %985 = vmatpush1.xpose.msra.mxu0 0.0
      %986 = vmatprep.subr.mxu0 0.0
      %987 = vmatpush1.xpose.msra.mxu0 0.0
      %988 = vmatprep.subr.mxu0 0.0
      %989 = vmatpush1.xpose.msra.mxu0 0.0
      %990 = vmatprep.subr.mxu0 0.0
      %991 = vmatpush1.xpose.msra.mxu0 0.0
      %992 = vmatprep.subr.mxu0 0.0
      %993 = vmatpush1.xpose.msra.mxu0 0.0
      %994 = vmatprep.subr.mxu0 0.0
      %995 = vmatpush1.xpose.msra.mxu0 0.0
      %996 = vmatprep.subr.mxu0 0.0
      %997 = vmatpush1.xpose.msra.mxu0 0.0
      %998 = vmatprep.subr.mxu0 0.0
      %999 = vmatpush1.xpose.msra.mxu0 0.0
      %1000 = vmatprep.subr.mxu0 0.0
      %1001 = vmatpush1.xpose.msra.mxu0 0.0
      %1002 = vmatprep.subr.mxu0 0.0
      %1003 = vmatpush1.xpose.msra.mxu0 0.0
      %1004 = vmatprep.subr.mxu0 0.0
      %1005 = vmatpush1.xpose.msra.mxu0 0.0
      %1006 = vmatprep.subr.mxu0 0.0
      %1007 = vmatpush1.xpose.msra.mxu0 0.0
      %1008 = vmatprep.subr.mxu0 0.0
      %1009 = vmatpush1.xpose.msra.mxu0 0.0
      %1010 = vmatprep.subr.mxu0 0.0
      %1011 = vmatpush1.xpose.msra.mxu0 0.0
      %1012 = vmatprep.subr.mxu0 0.0
      %1013 = vmatpush1.xpose.msra.mxu0 0.0
      %1014 = vmatprep.subr.mxu0 0.0
      %1015 = vmatpush1.xpose.msra.mxu0 0.0
      %1016 = vmatprep.subr.mxu0 0.0
      %1017 = vmatpush1.xpose.msra.mxu0 0.0
      %1018 = vmatprep.subr.mxu0 0.0
      %1019 = vmatpush1.xpose.msra.mxu0 0.0
      %1020 = vmatprep.subr.mxu0 0.0
      %1021 = vmatpush1.xpose.msra.mxu0 0.0
      %1022 = vmatprep.subr.mxu0 0.0
      %1023 = vmatpush1.xpose.msra.mxu0 0.0
      %1024 = vmatprep.subr.mxu0 0.0
      %1025 = vmatpush1.xpose.msra.mxu0 0.0
      %1026 = vmatprep.subr.mxu0 0.0
      %1027 = vmatpush1.xpose.msra.mxu0 0.0
      %1028 = vmatprep.subr.mxu0 0.0
      %1029 = vmatpush1.xpose.msra.mxu0 0.0
      %1030 = vmatprep.subr.mxu0 0.0
      %1031 = vmatpush1.xpose.msra.mxu0 0.0
      %1032 = vmatprep.subr.mxu0 0.0
      %1033 = vmatpush1.xpose.msra.mxu0 0.0
      %1034 = vmatprep.subr.mxu0 0.0
      %1035 = vmatpush1.xpose.msra.mxu0 0.0
      %1036 = vmatprep.mubr.f32.mxu0 0.0
      %1037 = vmatmul.mubr.f32.gmra.mrb[0].mxu0 %v968
      %v1038 = vpop.f32.mrb[0].mxu0
      %v1039 = vadd.f32 0.0, %v1038
      %v1040 = vpop.f32.mrb[0].mxu0
      %1041 = vdwg.mxu0
      %v1042 = vmul.f32 %v1039, 0.35355338
      %v1043 = vadd.f32 %v1042, %v553
      %v1044 = vsel %vm473, %v1043, -inf
      %1045 = vmax.xlane.f32.xlu0 %v1044
      %v1046 = vpop.xlane.xlu0 %1045
      %v1047 = vsub.f32 %v1043, %v1046
      %v1048 = vmul.f32 %v1047, 1.442695
      %v1049 = vpow.pop %v1048
      %v1050 = vsel %vm473, %v1049, 0.0
      %1051 = vadd.xlane.f32.xlu0 %v1050
      %v1052 = vpop.xlane.xlu0 %1051
      %v1053 = vrcp.pop %v1052
      %v1054 = vmul.f32 %v1049, %v1053
      %1055 = vrot.lane.b32.xlu0 %v467, 48
      %v1056 = vpop.permute.xlu0 %1055
      %v1059 = vsel %vm473, %v1054, 0
      %1061 = vmatprep.subr.mxu0 0.0
      %1062 = vmatpush1.msra.mxu0 %v1056
      %1063 = vmatprep.subr.mxu0 0.0
      %1064 = vmatpush1.msra.mxu0 0.0
      %1065 = vmatprep.subr.mxu0 0.0
      %1066 = vmatpush1.msra.mxu0 0.0
      %1067 = vmatprep.subr.mxu0 0.0
      %1068 = vmatpush1.msra.mxu0 0.0
      %1069 = vmatprep.subr.mxu0 0.0
      %1070 = vmatpush1.msra.mxu0 0.0
      %1071 = vmatprep.subr.mxu0 0.0
      %1072 = vmatpush1.msra.mxu0 0.0
      %1073 = vmatprep.subr.mxu0 0.0
      %1074 = vmatpush1.msra.mxu0 0.0
      %1075 = vmatprep.subr.mxu0 0.0
      %1076 = vmatpush1.msra.mxu0 0.0
      %1077 = vmatprep.subr.mxu0 0.0
      %1078 = vmatpush1.msra.mxu0 0.0
      %1079 = vmatprep.subr.mxu0 0.0
      %1080 = vmatpush1.msra.mxu0 0.0
      %1081 = vmatprep.subr.mxu0 0.0
      %1082 = vmatpush1.msra.mxu0 0.0
      %1083 = vmatprep.subr.mxu0 0.0
      %1084 = vmatpush1.msra.mxu0 0.0
      %1085 = vmatprep.subr.mxu0 0.0
      %1086 = vmatpush1.msra.mxu0 0.0
      %1087 = vmatprep.subr.mxu0 0.0
      %1088 = vmatpush1.msra.mxu0 0.0
      %1089 = vmatprep.subr.mxu0 0.0
      %1090 = vmatpush1.msra.mxu0 0.0
      %1091 = vmatprep.subr.mxu0 0.0
      %1092 = vmatpush1.msra.mxu0 0.0
      %1093 = vmatprep.subr.mxu0 0.0
      %1094 = vmatpush1.msra.mxu0 0.0
      %1095 = vmatprep.subr.mxu0 0.0
      %1096 = vmatpush1.msra.mxu0 0.0
      %1097 = vmatprep.subr.mxu0 0.0
      %1098 = vmatpush1.msra.mxu0 0.0
      %1099 = vmatprep.subr.mxu0 0.0
      %1100 = vmatpush1.msra.mxu0 0.0
      %1101 = vmatprep.subr.mxu0 0.0
      %1102 = vmatpush1.msra.mxu0 0.0
      %1103 = vmatprep.subr.mxu0 0.0
      %1104 = vmatpush1.msra.mxu0 0.0
      %1105 = vmatprep.subr.mxu0 0.0
      %1106 = vmatpush1.msra.mxu0 0.0
      %1107 = vmatprep.subr.mxu0 0.0
      %1108 = vmatpush1.msra.mxu0 0.0
      %1109 = vmatprep.subr.mxu0 0.0
      %1110 = vmatpush1.msra.mxu0 0.0
      %1111 = vmatprep.subr.mxu0 0.0
      %1112 = vmatpush1.msra.mxu0 0.0
      %1113 = vmatprep.subr.mxu0 0.0
      %1114 = vmatpush1.msra.mxu0 0.0
      %1115 = vmatprep.subr.mxu0 0.0
      %1116 = vmatpush1.msra.mxu0 0.0
      %1117 = vmatprep.subr.mxu0 0.0
      %1118 = vmatpush1.msra.mxu0 0.0
      %1119 = vmatprep.subr.mxu0 0.0
      %1120 = vmatpush1.msra.mxu0 0.0
      %1121 = vmatprep.subr.mxu0 0.0
      %1122 = vmatpush1.msra.mxu0 0.0
      %1123 = vmatprep.subr.mxu0 0.0
      %1124 = vmatpush1.msra.mxu0 0.0
      %1125 = vmatprep.mubr.f32.mxu0 0.0
      %1126 = vmatmul.mubr.f32.gmra.mrb[0].mxu0 %v1059
      %v1127 = vpop.f32.mrb[0].mxu0
      %v1128 = vadd.f32 0.0, %v1127
      %v1129 = vpop.f32.mrb[0].mxu0
      %1130 = vdwg.mxu0
      %1132 = vrot.lane.b32.xlu0 %v374, 32
      %v1133 = vpop.permute.xlu0 %1132
      %v1136 = vsel %vm473, %v1128, 0
      %1138 = vmatprep.subr.mxu0 0.0
      %1139 = vmatpush1.msra.mxu0 %v1133
      %1140 = vmatprep.subr.mxu0 0.0
      %1141 = vmatpush1.msra.mxu0 0.0
      %1142 = vmatprep.subr.mxu0 0.0
      %1143 = vmatpush1.msra.mxu0 0.0
      %1144 = vmatprep.subr.mxu0 0.0
      %1145 = vmatpush1.msra.mxu0 0.0
      %1146 = vmatprep.subr.mxu0 0.0
      %1147 = vmatpush1.msra.mxu0 0.0
      %1148 = vmatprep.subr.mxu0 0.0
      %1149 = vmatpush1.msra.mxu0 0.0
      %1150 = vmatprep.subr.mxu0 0.0
      %1151 = vmatpush1.msra.mxu0 0.0
      %1152 = vmatprep.subr.mxu0 0.0
      %1153 = vmatpush1.msra.mxu0 0.0
      %1154 = vmatprep.subr.mxu0 0.0
      %1155 = vmatpush1.msra.mxu0 0.0
      %1156 = vmatprep.subr.mxu0 0.0
      %1157 = vmatpush1.msra.mxu0 0.0
      %1158 = vmatprep.subr.mxu0 0.0
      %1159 = vmatpush1.msra.mxu0 0.0
      %1160 = vmatprep.subr.mxu0 0.0
      %1161 = vmatpush1.msra.mxu0 0.0
      %1162 = vmatprep.subr.mxu0 0.0
      %1163 = vmatpush1.msra.mxu0 0.0
      %1164 = vmatprep.subr.mxu0 0.0
      %1165 = vmatpush1.msra.mxu0 0.0
      %1166 = vmatprep.subr.mxu0 0.0
      %1167 = vmatpush1.msra.mxu0 0.0
      %1168 = vmatprep.subr.mxu0 0.0
      %1169 = vmatpush1.msra.mxu0 0.0
      %1170 = vmatprep.subr.mxu0 0.0
      %1171 = vmatpush1.msra.mxu0 0.0
      %1172 = vmatprep.subr.mxu0 0.0
      %1173 = vmatpush1.msra.mxu0 0.0
      %1174 = vmatprep.subr.mxu0 0.0
      %1175 = vmatpush1.msra.mxu0 0.0
      %1176 = vmatprep.subr.mxu0 0.0
      %1177 = vmatpush1.msra.mxu0 0.0
      %1178 = vmatprep.subr.mxu0 0.0
      %1179 = vmatpush1.msra.mxu0 0.0
      %1180 = vmatprep.subr.mxu0 0.0
      %1181 = vmatpush1.msra.mxu0 0.0
      %1182 = vmatprep.subr.mxu0 0.0
      %1183 = vmatpush1.msra.mxu0 0.0
      %1184 = vmatprep.subr.mxu0 0.0
      %1185 = vmatpush1.msra.mxu0 0.0
      %1186 = vmatprep.subr.mxu0 0.0
      %1187 = vmatpush1.msra.mxu0 0.0
      %1188 = vmatprep.subr.mxu0 0.0
      %1189 = vmatpush1.msra.mxu0 0.0
      %1190 = vmatprep.subr.mxu0 0.0
      %1191 = vmatpush1.msra.mxu0 0.0
      %1192 = vmatprep.subr.mxu0 0.0
      %1193 = vmatpush1.msra.mxu0 0.0
      %1194 = vmatprep.subr.mxu0 0.0
      %1195 = vmatpush1.msra.mxu0 0.0
      %1196 = vmatprep.subr.mxu0 0.0
      %1197 = vmatpush1.msra.mxu0 0.0
      %1198 = vmatprep.subr.mxu0 0.0
      %1199 = vmatpush1.msra.mxu0 0.0
      %1200 = vmatprep.subr.mxu0 0.0
      %1201 = vmatpush1.msra.mxu0 0.0
      %1202 = vmatprep.mubr.f32.mxu0 0.0
      %1203 = vmatmul.mubr.f32.gmra.mrb[0].mxu0 %v1136
      %v1204 = vpop.f32.mrb[0].mxu0
      %v1205 = vadd.f32 0.0, %v1204
      %v1206 = vpop.f32.mrb[0].mxu0
      %1207 = vdwg.mxu0
      %v1208 = vadd.f32 %v961, %v1205
      %1209 = vrot.lane.b32.xlu0 %v467, 104
      %v1210 = vpop.permute.xlu0 %1209
      %1211 = vrot.lane.b32.xlu0 %v467, 72
      %v1212 = vpop.permute.xlu0 %1211
      %v1213 = vsel %vm473, %v1210, 0
      %v1215 = vsel %vm473, %v1212, 0
      %1217 = vmatprep.subr.mxu0 0.0
      %1218 = vmatpush1.xpose.msra.mxu0 %v1215
      %1219 = vmatprep.subr.mxu0 0.0
      %1220 = vmatpush1.xpose.msra.mxu0 0.0
      %1221 = vmatprep.subr.mxu0 0.0
      %1222 = vmatpush1.xpose.msra.mxu0 0.0
      %1223 = vmatprep.subr.mxu0 0.0
      %1224 = vmatpush1.xpose.msra.mxu0 0.0
      %1225 = vmatprep.subr.mxu0 0.0
      %1226 = vmatpush1.xpose.msra.mxu0 0.0
      %1227 = vmatprep.subr.mxu0 0.0
      %1228 = vmatpush1.xpose.msra.mxu0 0.0
      %1229 = vmatprep.subr.mxu0 0.0
      %1230 = vmatpush1.xpose.msra.mxu0 0.0
      %1231 = vmatprep.subr.mxu0 0.0
      %1232 = vmatpush1.xpose.msra.mxu0 0.0
      %1233 = vmatprep.subr.mxu0 0.0
      %1234 = vmatpush1.xpose.msra.mxu0 0.0
      %1235 = vmatprep.subr.mxu0 0.0
      %1236 = vmatpush1.xpose.msra.mxu0 0.0
      %1237 = vmatprep.subr.mxu0 0.0
      %1238 = vmatpush1.xpose.msra.mxu0 0.0
      %1239 = vmatprep.subr.mxu0 0.0
      %1240 = vmatpush1.xpose.msra.mxu0 0.0
      %1241 = vmatprep.subr.mxu0 0.0
      %1242 = vmatpush1.xpose.msra.mxu0 0.0
      %1243 = vmatprep.subr.mxu0 0.0
      %1244 = vmatpush1.xpose.msra.mxu0 0.0
      %1245 = vmatprep.subr.mxu0 0.0
      %1246 = vmatpush1.xpose.msra.mxu0 0.0
      %1247 = vmatprep.subr.mxu0 0.0
      %1248 = vmatpush1.xpose.msra.mxu0 0.0
      %1249 = vmatprep.subr.mxu0 0.0
      %1250 = vmatpush1.xpose.msra.mxu0 0.0
      %1251 = vmatprep.subr.mxu0 0.0
      %1252 = vmatpush1.xpose.msra.mxu0 0.0
      %1253 = vmatprep.subr.mxu0 0.0
      %1254 = vmatpush1.xpose.msra.mxu0 0.0
      %1255 = vmatprep.subr.mxu0 0.0
      %1256 = vmatpush1.xpose.msra.mxu0 0.0
      %1257 = vmatprep.subr.mxu0 0.0
      %1258 = vmatpush1.xpose.msra.mxu0 0.0
      %1259 = vmatprep.subr.mxu0 0.0
      %1260 = vmatpush1.xpose.msra.mxu0 0.0
      %1261 = vmatprep.subr.mxu0 0.0
      %1262 = vmatpush1.xpose.msra.mxu0 0.0
      %1263 = vmatprep.subr.mxu0 0.0
      %1264 = vmatpush1.xpose.msra.mxu0 0.0
      %1265 = vmatprep.subr.mxu0 0.0
      %1266 = vmatpush1.xpose.msra.mxu0 0.0
      %1267 = vmatprep.subr.mxu0 0.0
      %1268 = vmatpush1.xpose.msra.mxu0 0.0
      %1269 = vmatprep.subr.mxu0 0.0
      %1270 = vmatpush1.xpose.msra.mxu0 0.0
      %1271 = vmatprep.subr.mxu0 0.0
      %1272 = vmatpush1.xpose.msra.mxu0 0.0
      %1273 = vmatprep.subr.mxu0 0.0
      %1274 = vmatpush1.xpose.msra.mxu0 0.0
      %1275 = vmatprep.subr.mxu0 0.0
      %1276 = vmatpush1.xpose.msra.mxu0 0.0
      %1277 = vmatprep.subr.mxu0 0.0
      %1278 = vmatpush1.xpose.msra.mxu0 0.0
      %1279 = vmatprep.subr.mxu0 0.0
      %1280 = vmatpush1.xpose.msra.mxu0 0.0
      %1281 = vmatprep.mubr.f32.mxu0 0.0
      %1282 = vmatmul.mubr.f32.gmra.mrb[0].mxu0 %v1213
      %v1283 = vpop.f32.mrb[0].mxu0
      %v1284 = vadd.f32 0.0, %v1283
      %v1285 = vpop.f32.mrb[0].mxu0
      %1286 = vdwg.mxu0
      %v1287 = vmul.f32 %v1284, 0.35355338
      %v1288 = vadd.f32 %v1287, %v553
      %v1289 = vsel %vm473, %v1288, -inf
      %1290 = vmax.xlane.f32.xlu0 %v1289
      %v1291 = vpop.xlane.xlu0 %1290
      %v1292 = vsub.f32 %v1288, %v1291
      %v1293 = vmul.f32 %v1292, 1.442695
      %v1294 = vpow.pop %v1293
      %v1295 = vsel %vm473, %v1294, 0.0
      %1296 = vadd.xlane.f32.xlu0 %v1295
      %v1297 = vpop.xlane.xlu0 %1296
      %v1298 = vrcp.pop %v1297
      %v1299 = vmul.f32 %v1294, %v1298
      %1300 = vrot.lane.b32.xlu0 %v467, 40
      %v1301 = vpop.permute.xlu0 %1300
      %v1304 = vsel %vm473, %v1299, 0
      %1306 = vmatprep.subr.mxu0 0.0
      %1307 = vmatpush1.msra.mxu0 %v1301
      %1308 = vmatprep.subr.mxu0 0.0
      %1309 = vmatpush1.msra.mxu0 0.0
      %1310 = vmatprep.subr.mxu0 0.0
      %1311 = vmatpush1.msra.mxu0 0.0
      %1312 = vmatprep.subr.mxu0 0.0
      %1313 = vmatpush1.msra.mxu0 0.0
      %1314 = vmatprep.subr.mxu0 0.0
      %1315 = vmatpush1.msra.mxu0 0.0
      %1316 = vmatprep.subr.mxu0 0.0
      %1317 = vmatpush1.msra.mxu0 0.0
      %1318 = vmatprep.subr.mxu0 0.0
      %1319 = vmatpush1.msra.mxu0 0.0
      %1320 = vmatprep.subr.mxu0 0.0
      %1321 = vmatpush1.msra.mxu0 0.0
      %1322 = vmatprep.subr.mxu0 0.0
      %1323 = vmatpush1.msra.mxu0 0.0
      %1324 = vmatprep.subr.mxu0 0.0
      %1325 = vmatpush1.msra.mxu0 0.0
      %1326 = vmatprep.subr.mxu0 0.0
      %1327 = vmatpush1.msra.mxu0 0.0
      %1328 = vmatprep.subr.mxu0 0.0
      %1329 = vmatpush1.msra.mxu0 0.0
      %1330 = vmatprep.subr.mxu0 0.0
      %1331 = vmatpush1.msra.mxu0 0.0
      %1332 = vmatprep.subr.mxu0 0.0
      %1333 = vmatpush1.msra.mxu0 0.0
      %1334 = vmatprep.subr.mxu0 0.0
      %1335 = vmatpush1.msra.mxu0 0.0
      %1336 = vmatprep.subr.mxu0 0.0
      %1337 = vmatpush1.msra.mxu0 0.0
      %1338 = vmatprep.subr.mxu0 0.0
      %1339 = vmatpush1.msra.mxu0 0.0
      %1340 = vmatprep.subr.mxu0 0.0
      %1341 = vmatpush1.msra.mxu0 0.0
      %1342 = vmatprep.subr.mxu0 0.0
      %1343 = vmatpush1.msra.mxu0 0.0
      %1344 = vmatprep.subr.mxu0 0.0
      %1345 = vmatpush1.msra.mxu0 0.0
      %1346 = vmatprep.subr.mxu0 0.0
      %1347 = vmatpush1.msra.mxu0 0.0
      %1348 = vmatprep.subr.mxu0 0.0
      %1349 = vmatpush1.msra.mxu0 0.0
      %1350 = vmatprep.subr.mxu0 0.0
      %1351 = vmatpush1.msra.mxu0 0.0
      %1352 = vmatprep.subr.mxu0 0.0
      %1353 = vmatpush1.msra.mxu0 0.0
      %1354 = vmatprep.subr.mxu0 0.0
      %1355 = vmatpush1.msra.mxu0 0.0
      %1356 = vmatprep.subr.mxu0 0.0
      %1357 = vmatpush1.msra.mxu0 0.0
      %1358 = vmatprep.subr.mxu0 0.0
      %1359 = vmatpush1.msra.mxu0 0.0
      %1360 = vmatprep.subr.mxu0 0.0
      %1361 = vmatpush1.msra.mxu0 0.0
      %1362 = vmatprep.subr.mxu0 0.0
      %1363 = vmatpush1.msra.mxu0 0.0
      %1364 = vmatprep.subr.mxu0 0.0
      %1365 = vmatpush1.msra.mxu0 0.0
      %1366 = vmatprep.subr.mxu0 0.0
      %1367 = vmatpush1.msra.mxu0 0.0
      %1368 = vmatprep.subr.mxu0 0.0
      %1369 = vmatpush1.msra.mxu0 0.0
      %1370 = vmatprep.mubr.f32.mxu0 0.0
      %1371 = vmatmul.mubr.f32.gmra.mrb[0].mxu0 %v1304
      %v1372 = vpop.f32.mrb[0].mxu0
      %v1373 = vadd.f32 0.0, %v1372
      %v1374 = vpop.f32.mrb[0].mxu0
      %1375 = vdwg.mxu0
      %1377 = vrot.lane.b32.xlu0 %v375, 32
      %v1378 = vpop.permute.xlu0 %1377
      %v1381 = vsel %vm473, %v1373, 0
      %1383 = vmatprep.subr.mxu0 0.0
      %1384 = vmatpush1.msra.mxu0 %v1378
      %1385 = vmatprep.subr.mxu0 0.0
      %1386 = vmatpush1.msra.mxu0 0.0
      %1387 = vmatprep.subr.mxu0 0.0
      %1388 = vmatpush1.msra.mxu0 0.0
      %1389 = vmatprep.subr.mxu0 0.0
      %1390 = vmatpush1.msra.mxu0 0.0
      %1391 = vmatprep.subr.mxu0 0.0
      %1392 = vmatpush1.msra.mxu0 0.0
      %1393 = vmatprep.subr.mxu0 0.0
      %1394 = vmatpush1.msra.mxu0 0.0
      %1395 = vmatprep.subr.mxu0 0.0
      %1396 = vmatpush1.msra.mxu0 0.0
      %1397 = vmatprep.subr.mxu0 0.0
      %1398 = vmatpush1.msra.mxu0 0.0
      %1399 = vmatprep.subr.mxu0 0.0
      %1400 = vmatpush1.msra.mxu0 0.0
      %1401 = vmatprep.subr.mxu0 0.0
      %1402 = vmatpush1.msra.mxu0 0.0
      %1403 = vmatprep.subr.mxu0 0.0
      %1404 = vmatpush1.msra.mxu0 0.0
      %1405 = vmatprep.subr.mxu0 0.0
      %1406 = vmatpush1.msra.mxu0 0.0
      %1407 = vmatprep.subr.mxu0 0.0
      %1408 = vmatpush1.msra.mxu0 0.0
      %1409 = vmatprep.subr.mxu0 0.0
      %1410 = vmatpush1.msra.mxu0 0.0
      %1411 = vmatprep.subr.mxu0 0.0
      %1412 = vmatpush1.msra.mxu0 0.0
      %1413 = vmatprep.subr.mxu0 0.0
      %1414 = vmatpush1.msra.mxu0 0.0
      %1415 = vmatprep.subr.mxu0 0.0
      %1416 = vmatpush1.msra.mxu0 0.0
      %1417 = vmatprep.subr.mxu0 0.0
      %1418 = vmatpush1.msra.mxu0 0.0
      %1419 = vmatprep.subr.mxu0 0.0
      %1420 = vmatpush1.msra.mxu0 0.0
      %1421 = vmatprep.subr.mxu0 0.0
      %1422 = vmatpush1.msra.mxu0 0.0
      %1423 = vmatprep.subr.mxu0 0.0
      %1424 = vmatpush1.msra.mxu0 0.0
      %1425 = vmatprep.subr.mxu0 0.0
      %1426 = vmatpush1.msra.mxu0 0.0
      %1427 = vmatprep.subr.mxu0 0.0
      %1428 = vmatpush1.msra.mxu0 0.0
      %1429 = vmatprep.subr.mxu0 0.0
      %1430 = vmatpush1.msra.mxu0 0.0
      %1431 = vmatprep.subr.mxu0 0.0
      %1432 = vmatpush1.msra.mxu0 0.0
      %1433 = vmatprep.subr.mxu0 0.0
      %1434 = vmatpush1.msra.mxu0 0.0
      %1435 = vmatprep.subr.mxu0 0.0
      %1436 = vmatpush1.msra.mxu0 0.0
      %1437 = vmatprep.subr.mxu0 0.0
      %1438 = vmatpush1.msra.mxu0 0.0
      %1439 = vmatprep.subr.mxu0 0.0
      %1440 = vmatpush1.msra.mxu0 0.0
      %1441 = vmatprep.subr.mxu0 0.0
      %1442 = vmatpush1.msra.mxu0 0.0
      %1443 = vmatprep.subr.mxu0 0.0
      %1444 = vmatpush1.msra.mxu0 0.0
      %1445 = vmatprep.subr.mxu0 0.0
      %1446 = vmatpush1.msra.mxu0 0.0
      %1447 = vmatprep.mubr.f32.mxu0 0.0
      %1448 = vmatmul.mubr.f32.gmra.mrb[0].mxu0 %v1381
      %v1449 = vpop.f32.mrb[0].mxu0
      %v1450 = vadd.f32 0.0, %v1449
      %v1451 = vpop.f32.mrb[0].mxu0
      %1452 = vdwg.mxu0
      %v1453 = vadd.f32 %v1208, %v1450
      %1454 = vrot.lane.b32.xlu0 %v395, 32
      %v1455 = vpop.permute.xlu0 %1454
      %v1457 = vadd.f32 %v1453, %v1455
      %v1458 = vadd.f32 %v368, %v1457
      %v1459 = vsel %vm344, %v1458, 0.0
      %1460 = vadd.xlane.f32.xlu0 %v1459
      %v1461 = vpop.xlane.xlu0 %1460
      %v1462 = vmul.f32 %v1461, %v348
      %v1463 = vsub.f32 %v1458, %v1462
      %v1464 = vmul.f32 %v1463, %v1463
      %v1465 = vsel %vm344, %v1464, 0.0
      %1466 = vadd.xlane.f32.xlu0 %v1465
      %v1467 = vpop.xlane.xlu0 %1466
      %v1468 = vmul.f32 %v1467, %v348
      %v1469 = vadd.f32 %v1468, 1e-12
      %v1470 = vrsqrt.pop %v1469
      %v1471 = vmul.f32 %v1463, %v1470
      %v1472 = vlaneseq
      %v1473 = vshrl.u32 %v1472, 7
      %v1474 = vsub.s32 2, %v1473
      %v1475 = vrot.slane %v342, %v1474
      %v1476 = vmul.f32 %v1471, %v1475
      %v1477 = vlaneseq
      %v1478 = vshrl.u32 %v1477, 7
      %v1479 = vsub.s32 3, %v1478
      %v1480 = vrot.slane %v342, %v1479
      %v1481 = vadd.f32 %v1476, %v1480
      %v1483 = vlaneseq
      %v1484 = vshrl.u32 %v1483, 7
      %v1485 = vsub.s32 0, %v1484
      %v1486 = vrot.slane %v381, %v1485
      %v1489 = vsel %vm344, %v1481, 0
      %1491 = vmatprep.subr.mxu0 0.0
      %1492 = vmatpush1.msra.mxu0 %v377
      %1493 = vmatprep.subr.mxu0 0.0
      %1494 = vmatpush1.msra.mxu0 %v378
      %1495 = vmatprep.subr.mxu0 0.0
      %1496 = vmatpush1.msra.mxu0 %v379
      %1497 = vmatprep.subr.mxu0 0.0
      %1498 = vmatpush1.msra.mxu0 %v380
      %1499 = vmatprep.subr.mxu0 0.0
      %1500 = vmatpush1.msra.mxu0 0.0
      %1501 = vmatprep.subr.mxu0 0.0
      %1502 = vmatpush1.msra.mxu0 0.0
      %1503 = vmatprep.subr.mxu0 0.0
      %1504 = vmatpush1.msra.mxu0 0.0
      %1505 = vmatprep.subr.mxu0 0.0
      %1506 = vmatpush1.msra.mxu0 0.0
      %1507 = vmatprep.subr.mxu0 0.0
      %1508 = vmatpush1.msra.mxu0 0.0
      %1509 = vmatprep.subr.mxu0 0.0
      %1510 = vmatpush1.msra.mxu0 0.0
      %1511 = vmatprep.subr.mxu0 0.0
      %1512 = vmatpush1.msra.mxu0 0.0
      %1513 = vmatprep.subr.mxu0 0.0
      %1514 = vmatpush1.msra.mxu0 0.0
      %1515 = vmatprep.subr.mxu0 0.0
      %1516 = vmatpush1.msra.mxu0 0.0
      %1517 = vmatprep.subr.mxu0 0.0
      %1518 = vmatpush1.msra.mxu0 0.0
      %1519 = vmatprep.subr.mxu0 0.0
      %1520 = vmatpush1.msra.mxu0 0.0
      %1521 = vmatprep.subr.mxu0 0.0
      %1522 = vmatpush1.msra.mxu0 0.0
      %1523 = vmatprep.subr.mxu0 0.0
      %1524 = vmatpush1.msra.mxu0 0.0
      %1525 = vmatprep.subr.mxu0 0.0
      %1526 = vmatpush1.msra.mxu0 0.0
      %1527 = vmatprep.subr.mxu0 0.0
      %1528 = vmatpush1.msra.mxu0 0.0
      %1529 = vmatprep.subr.mxu0 0.0
      %1530 = vmatpush1.msra.mxu0 0.0
      %1531 = vmatprep.subr.mxu0 0.0
      %1532 = vmatpush1.msra.mxu0 0.0
      %1533 = vmatprep.subr.mxu0 0.0
      %1534 = vmatpush1.msra.mxu0 0.0
      %1535 = vmatprep.subr.mxu0 0.0
      %1536 = vmatpush1.msra.mxu0 0.0
      %1537 = vmatprep.subr.mxu0 0.0
      %1538 = vmatpush1.msra.mxu0 0.0
      %1539 = vmatprep.subr.mxu0 0.0
      %1540 = vmatpush1.msra.mxu0 0.0
      %1541 = vmatprep.subr.mxu0 0.0
      %1542 = vmatpush1.msra.mxu0 0.0
      %1543 = vmatprep.subr.mxu0 0.0
      %1544 = vmatpush1.msra.mxu0 0.0
      %1545 = vmatprep.subr.mxu0 0.0
      %1546 = vmatpush1.msra.mxu0 0.0
      %1547 = vmatprep.subr.mxu0 0.0
      %1548 = vmatpush1.msra.mxu0 0.0
      %1549 = vmatprep.subr.mxu0 0.0
      %1550 = vmatpush1.msra.mxu0 0.0
      %1551 = vmatprep.subr.mxu0 0.0
      %1552 = vmatpush1.msra.mxu0 0.0
      %1553 = vmatprep.subr.mxu0 0.0
      %1554 = vmatpush1.msra.mxu0 0.0
      %1555 = vmatprep.mubr.f32.mxu0 0.0
      %1556 = vmatmul.mubr.f32.gmra.mrb[0].mxu0 %v1489
      %v1557 = vpop.f32.mrb[0].mxu0
      %v1558 = vadd.f32 %v1486, %v1557
      %v1559 = vpop.f32.mrb[0].mxu0
      %1560 = vdwg.mxu0
      %v1561 = vmul.f32 %v1558, 0.5
      %v1562 = vmul.f32 %v1558, 0.044715
      %v1563 = vmul.f32 %v1562, %v1558
      %v1564 = vmul.f32 %v1563, %v1558
      %v1565 = vadd.f32 %v1558, %v1564
      %v1566 = vmul.f32 %v1565, 0.7978846
      %v1567 = vtanh.pop %v1566
      %v1568 = vadd.f32 %v1567, 1.0
      %v1569 = vmul.f32 %v1561, %v1568
      %v1571 = vlaneseq
      %v1572 = vshrl.u32 %v1571, 7
      %v1573 = vsub.s32 0, %v1572
      %v1574 = vrot.slane %v390, %v1573
      %vm1576 = vcmask 523264
      %v1578 = vsel %vm1576, %v1569, 0
      %1580 = vmatprep.subr.mxu0 0.0
      %1581 = vmatpush1.msra.mxu0 %v382
      %1582 = vmatprep.subr.mxu0 0.0
      %1583 = vmatpush1.msra.mxu0 %v383
      %1584 = vmatprep.subr.mxu0 0.0
      %1585 = vmatpush1.msra.mxu0 %v384
      %1586 = vmatprep.subr.mxu0 0.0
      %1587 = vmatpush1.msra.mxu0 %v385
      %1588 = vmatprep.subr.mxu0 0.0
      %1589 = vmatpush1.msra.mxu0 %v386
      %1590 = vmatprep.subr.mxu0 0.0
      %1591 = vmatpush1.msra.mxu0 %v387
      %1592 = vmatprep.subr.mxu0 0.0
      %1593 = vmatpush1.msra.mxu0 %v388
      %1594 = vmatprep.subr.mxu0 0.0
      %1595 = vmatpush1.msra.mxu0 %v389
      %1596 = vmatprep.subr.mxu0 0.0
      %1597 = vmatpush1.msra.mxu0 0.0
      %1598 = vmatprep.subr.mxu0 0.0
      %1599 = vmatpush1.msra.mxu0 0.0
      %1600 = vmatprep.subr.mxu0 0.0
      %1601 = vmatpush1.msra.mxu0 0.0
      %1602 = vmatprep.subr.mxu0 0.0
      %1603 = vmatpush1.msra.mxu0 0.0
      %1604 = vmatprep.subr.mxu0 0.0
      %1605 = vmatpush1.msra.mxu0 0.0
      %1606 = vmatprep.subr.mxu0 0.0
      %1607 = vmatpush1.msra.mxu0 0.0
      %1608 = vmatprep.subr.mxu0 0.0
      %1609 = vmatpush1.msra.mxu0 0.0
      %1610 = vmatprep.subr.mxu0 0.0
      %1611 = vmatpush1.msra.mxu0 0.0
      %1612 = vmatprep.subr.mxu0 0.0
      %1613 = vmatpush1.msra.mxu0 0.0
      %1614 = vmatprep.subr.mxu0 0.0
      %1615 = vmatpush1.msra.mxu0 0.0
      %1616 = vmatprep.subr.mxu0 0.0
      %1617 = vmatpush1.msra.mxu0 0.0
      %1618 = vmatprep.subr.mxu0 0.0
      %1619 = vmatpush1.msra.mxu0 0.0
      %1620 = vmatprep.subr.mxu0 0.0
      %1621 = vmatpush1.msra.mxu0 0.0
      %1622 = vmatprep.subr.mxu0 0.0
      %1623 = vmatpush1.msra.mxu0 0.0
      %1624 = vmatprep.subr.mxu0 0.0
      %1625 = vmatpush1.msra.mxu0 0.0
      %1626 = vmatprep.subr.mxu0 0.0
      %1627 = vmatpush1.msra.mxu0 0.0
      %1628 = vmatprep.subr.mxu0 0.0
      %1629 = vmatpush1.msra.mxu0 0.0
      %1630 = vmatprep.subr.mxu0 0.0
      %1631 = vmatpush1.msra.mxu0 0.0
      %1632 = vmatprep.subr.mxu0 0.0
      %1633 = vmatpush1.msra.mxu0 0.0
      %1634 = vmatprep.subr.mxu0 0.0
      %1635 = vmatpush1.msra.mxu0 0.0
      %1636 = vmatprep.subr.mxu0 0.0
      %1637 = vmatpush1.msra.mxu0 0.0
      %1638 = vmatprep.subr.mxu0 0.0
      %1639 = vmatpush1.msra.mxu0 0.0
      %1640 = vmatprep.subr.mxu0 0.0
      %1641 = vmatpush1.msra.mxu0 0.0
      %1642 = vmatprep.subr.mxu0 0.0
      %1643 = vmatpush1.msra.mxu0 0.0
      %1644 = vmatprep.mubr.f32.mxu0 0.0
      %1645 = vmatmul.mubr.f32.gmra.mrb[0].mxu0 %v1578
      %v1646 = vpop.f32.mrb[0].mxu0
      %v1647 = vadd.f32 %v1574, %v1646
      %v1648 = vpop.f32.mrb[0].mxu0
      %1649 = vdwg.mxu0
      %v1650 = vadd.f32 %v1481, %v1647
      %v1651 = vsel %vm344, %v1650, 0.0
      %1652 = vadd.xlane.f32.xlu0 %v1651
      %v1653 = vpop.xlane.xlu0 %1652
      %v1654 = vmul.f32 %v1653, %v348
      %v1655 = vsub.f32 %v1650, %v1654
      %v1656 = vmul.f32 %v1655, %v1655
      %v1657 = vsel %vm344, %v1656, 0.0
      %1658 = vadd.xlane.f32.xlu0 %v1657
      %v1659 = vpop.xlane.xlu0 %1658
      %v1660 = vmul.f32 %v1659, %v348
      %v1661 = vadd.f32 %v1660, 1e-12
      %v1662 = vrsqrt.pop %v1661
      %v1663 = vmul.f32 %v1655, %v1662
      %v1664 = vlaneseq
      %v1665 = vshrl.u32 %v1664, 7
      %v1666 = vsub.s32 4, %v1665
      %v1667 = vrot.slane %v342, %v1666
      %v1668 = vmul.f32 %v1663, %v1667
      %v1669 = vlaneseq
      %v1670 = vshrl.u32 %v1669, 7
      %v1671 = vsub.s32 5, %v1670
      %v1672 = vrot.slane %v342, %v1671
      %v1673 = vadd.f32 %v1668, %v1672
      %1674 = vst.msk [vmem:[%s341] sm:$0xff] %vm344, %v1673
      %p1675 = scmp.lt.s32.totalorder %s20, 5
      %s1676 = scalar_select %p1675, %s20, 5
      %s1677 = smul.addr %s1676, 8
      %s1678 = scalar_lea.vmem %s9, %s1677
      // Predicated region
      $region57: #{xvlm_for_similarities.4} parent=55 // pred_check
        %p1679 = pneg %p237
      $region58: #{xvlm_for_similarities.4} parent=55 // pred_check_branch
        %1681 = sbr.rel (%p1679) target = $region60
      $region59: #{xvlm_for_similarities.4} parent=55 // pred_region
        _
      $region60: #{xvlm_for_similarities.4} parent=55 // pred_fallthru
        _
    $region56: #{xvlm_for_similarities.4} parent=5 // pred_fallthru
      _
    %p1682 = scmp.le.s32.totalorder 2, %s15
    // Predicated region
    $region61: #{xvlm_for_similarities.4} parent=5 // pred_check
      %p1683 = pneg %p1682
    $region62: #{xvlm_for_similarities.4} parent=5 // pred_check_branch
      %1685 = sbr.rel (%p1683) target = $region64
    $region63: #{xvlm_for_similarities.4} parent=5 // pred_region
      %s1686 = ssub.s32 %s15, 2
      // Predicated region
      $region65: #{xvlm_for_similarities.4} parent=63 // pred_check
        %p1687 = pneg %p243
      $region66: #{xvlm_for_similarities.4} parent=63 // pred_check_branch
        %1689 = sbr.rel (%p1687) target = $region68
      $region67: #{xvlm_for_similarities.4} parent=63 // pred_region
        %p1690 = scmp.lt.s32.totalorder %s21, 5
        %s1691 = scalar_select %p1690, %s21, 5
        %s1692 = smul.addr %s1691, 8
        %s1693 = scalar_lea.vmem %s9, %s1692
      $region68: #{xvlm_for_similarities.4} parent=63 // pred_fallthru
        _
    $region64: #{xvlm_for_similarities.4} parent=5 // pred_fallthru
      _
  $region6: #{xvlm_for_similarities.4} parent=0 // loop_footer
    %s19 = sadd.s32 1, %s15
  $region7: #{xvlm_for_similarities.4} parent=0 // loop_footer_branch
    %14 = sbr.rel target = $region3
  $region8: #{xvlm_for_similarities.4} parent=0 // loop_exit
    _

// kernel: xvlm_for_similarities.3
$region0: #{xvlm_for_similarities.3}
  #allocation0 [shape = 'u32[]', space=smem, size = 0x4, offset = 0x4, fixed_abs, tag = 'smem constant byte address 0x4 - core index']
  #allocation1 [shape = 'u32[144,128]{1,0:T(1,128)}', space=vmem, size = 0x12000, scoped, tag = 'internal scratch']
  %s0 = inlined_call_operand.vmem [shape: f32[2,17,64], index: 0, kind: input, shape index: {}]
  %s1 = inlined_call_operand.vmem [shape: f32[64,32], index: 1, kind: input, shape index: {}]
  %s2 = inlined_call_operand.vmem [shape: f32[1,32], index: 2, kind: input, shape index: {}]
  %s3 = inlined_call_operand.vmem [shape: f32[17,32], index: 3, kind: input, shape index: {}]
  %s4 = inlined_call_operand.vmem [shape: f32[32,128], index: 4, kind: input, shape index: {}]
  %s5 = inlined_call_operand.vmem [shape: f32[1,128], index: 5, kind: input, shape index: {}]
  %s6 = inlined_call_operand.vmem [shape: f32[32,64], index: 6, kind: input, shape index: {}]
  %s7 = inlined_call_operand.vmem [shape: f32[1,64], index: 7, kind: input, shape index: {}]
  %s8 = inlined_call_operand.vmem [shape: f32[64,32], index: 8, kind: input, shape index: {}]
  %s9 = inlined_call_operand.vmem [shape: f32[1,32], index: 9, kind: input, shape index: {}]
  %s10 = inlined_call_operand.vmem [shape: f32[4,32], index: 10, kind: input, shape index: {}]
  %s11 = inlined_call_operand.vmem [shape: f32[2,17,32], index: 11, kind: output, shape index: {}]
  %s12 = sld [smem:[#allocation0]]
  $region77: #{xvlm_for_similarities.3} parent=0
    _
  %s14 = ssub.s32 1, %s12
  %s15 = scalar_select 0, %s14, %s12
  loop: start=0, step=1, limit=4
  $region2: #{xvlm_for_similarities.3} parent=0 // loop_pre_header
    _
  $region3: #{xvlm_for_similarities.3} parent=0 // loop_header
    %s17 = sphi 0, %s21
    %p18 = scmp.ge.s32.totalorder %s17, 4
    %s27 = sphi 0, %s29
    %s30 = sphi 0, %s27
    %s31 = sphi 0, %s30
    %s47 = sphi 0, %s31
    %s51 = sphi 0, %s51
    %s53 = sphi 0, %s51
    %s54 = sphi 0, %s53
    %s68 = sphi 0, %s54
    %s72 = sphi 0, %s72
    %s74 = sphi 0, %s72
    %s75 = sphi 0, %s74
    %s89 = sphi 0, %s75
    %s93 = sphi 0, %s93
    %s95 = sphi 0, %s93
    %s96 = sphi 0, %s95
    %s110 = sphi 0, %s96
    %s114 = sphi 0, %s114
    %s116 = sphi 0, %s114
    %s117 = sphi 0, %s116
    %s131 = sphi 0, %s117
    %s135 = sphi 0, %s135
    %s137 = sphi 0, %s135
    %s138 = sphi 0, %s137
    %s152 = sphi 0, %s138
    %s156 = sphi 0, %s156
    %s158 = sphi 0, %s156
    %s159 = sphi 0, %s158
    %s173 = sphi 0, %s159
    %s177 = sphi 0, %s177
    %s179 = sphi 0, %s177
    %s180 = sphi 0, %s179
    %s194 = sphi 0, %s180
    %s198 = sphi 0, %s198
    %s200 = sphi 0, %s198
    %s201 = sphi 0, %s200
    %s215 = sphi 0, %s201
    %s219 = sphi 0, %s219
    %s221 = sphi 0, %s219
    %s222 = sphi 0, %s221
    %s236 = sphi 0, %s222
    %s240 = sphi 0, %s240
    %s242 = sphi 0, %s240
    %s243 = sphi 0, %s242
    %s257 = sphi 0, %s243
    %s263 = sphi 0, %s265
    %s266 = sphi 0, %s263
    %s267 = sphi 0, %s266
    %s283 = sphi 0, %s267
  $region4: #{xvlm_for_similarities.3} parent=0 // loop_header_branch
    %20 = sbr.rel (%p18) target = $region8
  $region5: #{xvlm_for_similarities.3} parent=0 // loop_body
    %s22 = ssub.s32 %s17, 1
    %s23 = ssub.s32 %s17, 2
    %s24 = sadd.s32 %s17, 1
    %s25 = ssub.s32 %s17, %s24
    %p26 = scmp.eq.s32.totalorder %s25, 0
    %s28 = sadd.s32 %s27, 1
    %s29 = scalar_select %p26, %s27, %s28
    %p32 = pneg %p26
    %p33 = scmp.eq.s32.totalorder %s17, 1
    %p34 = por %p32, %p33
    %p35 = scmp.ne.s32.totalorder %s27, %s30
    %p36 = scmp.eq.s32.totalorder %s17, 0
    %p37 = por %p35, %p36
    %p38 = scmp.ne.s32.totalorder %s27, %s30
    %p39 = scmp.eq.s32.totalorder %s22, 1
    %p40 = por %p38, %p39
    %p41 = scmp.ne.s32.totalorder %s30, %s31
    %p42 = scmp.eq.s32.totalorder %s22, 0
    %p43 = por %p41, %p42
    %p44 = scmp.ne.s32.totalorder %s30, %s31
    %p45 = scmp.eq.s32.totalorder %s23, 1
    %p46 = por %p44, %p45
    %p48 = scmp.ne.s32.totalorder %s31, %s47
    %p49 = scmp.eq.s32.totalorder %s23, 0
    %p50 = por %p48, %p49
    %s52 = sadd.s32 %s51, 1
    %p55 = scmp.eq.s32.totalorder %s17, 1
    %p56 = scmp.ne.s32.totalorder %s51, %s53
    %p57 = scmp.eq.s32.totalorder %s17, 0
    %p58 = por %p56, %p57
    %p59 = scmp.ne.s32.totalorder %s51, %s53
    %p60 = scmp.eq.s32.totalorder %s22, 1
    %p61 = por %p59, %p60
    %p62 = scmp.ne.s32.totalorder %s53, %s54
    %p63 = scmp.eq.s32.totalorder %s22, 0
    %p64 = por %p62, %p63
    %p65 = scmp.ne.s32.totalorder %s53, %s54
    %p66 = scmp.eq.s32.totalorder %s23, 1
    %p67 = por %p65, %p66
    %p69 = scmp.ne.s32.totalorder %s54, %s68
    %p70 = scmp.eq.s32.totalorder %s23, 0
    %p71 = por %p69, %p70
    %s73 = sadd.s32 %s72, 1
    %p76 = scmp.eq.s32.totalorder %s17, 1
    %p77 = scmp.ne.s32.totalorder %s72, %s74
    %p78 = scmp.eq.s32.totalorder %s17, 0
    %p79 = por %p77, %p78
    %p80 = scmp.ne.s32.totalorder %s72, %s74
    %p81 = scmp.eq.s32.totalorder %s22, 1
    %p82 = por %p80, %p81
    %p83 = scmp.ne.s32.totalorder %s74, %s75
    %p84 = scmp.eq.s32.totalorder %s22, 0
    %p85 = por %p83, %p84
    %p86 = scmp.ne.s32.totalorder %s74, %s75
    %p87 = scmp.eq.s32.totalorder %s23, 1
    %p88 = por %p86, %p87
    %p90 = scmp.ne.s32.totalorder %s75, %s89
    %p91 = scmp.eq.s32.totalorder %s23, 0
    %p92 = por %p90, %p91
    %s94 = sadd.s32 %s93, 1
    %p97 = scmp.eq.s32.totalorder %s17, 1
    %p98 = scmp.ne.s32.totalorder %s93, %s95
    %p99 = scmp.eq.s32.totalorder %s17, 0
    %p100 = por %p98, %p99
    %p101 = scmp.ne.s32.totalorder %s93, %s95
    %p102 = scmp.eq.s32.totalorder %s22, 1
    %p103 = por %p101, %p102
    %p104 = scmp.ne.s32.totalorder %s95, %s96
    %p105 = scmp.eq.s32.totalorder %s22, 0
    %p106 = por %p104, %p105
    %p107 = scmp.ne.s32.totalorder %s95, %s96
    %p108 = scmp.eq.s32.totalorder %s23, 1
    %p109 = por %p107, %p108
    %p111 = scmp.ne.s32.totalorder %s96, %s110
    %p112 = scmp.eq.s32.totalorder %s23, 0
    %p113 = por %p111, %p112
    %s115 = sadd.s32 %s114, 1
    %p118 = scmp.eq.s32.totalorder %s17, 1
    %p119 = scmp.ne.s32.totalorder %s114, %s116
    %p120 = scmp.eq.s32.totalorder %s17, 0
    %p121 = por %p119, %p120
    %p122 = scmp.ne.s32.totalorder %s114, %s116
    %p123 = scmp.eq.s32.totalorder %s22, 1
    %p124 = por %p122, %p123
    %p125 = scmp.ne.s32.totalorder %s116, %s117
    %p126 = scmp.eq.s32.totalorder %s22, 0
    %p127 = por %p125, %p126
    %p128 = scmp.ne.s32.totalorder %s116, %s117
    %p129 = scmp.eq.s32.totalorder %s23, 1
    %p130 = por %p128, %p129
    %p132 = scmp.ne.s32.totalorder %s117, %s131
    %p133 = scmp.eq.s32.totalorder %s23, 0
    %p134 = por %p132, %p133
    %s136 = sadd.s32 %s135, 1
    %p139 = scmp.eq.s32.totalorder %s17, 1
    %p140 = scmp.ne.s32.totalorder %s135, %s137
    %p141 = scmp.eq.s32.totalorder %s17, 0
    %p142 = por %p140, %p141
    %p143 = scmp.ne.s32.totalorder %s135, %s137
    %p144 = scmp.eq.s32.totalorder %s22, 1
    %p145 = por %p143, %p144
    %p146 = scmp.ne.s32.totalorder %s137, %s138
    %p147 = scmp.eq.s32.totalorder %s22, 0
    %p148 = por %p146, %p147
    %p149 = scmp.ne.s32.totalorder %s137, %s138
    %p150 = scmp.eq.s32.totalorder %s23, 1
    %p151 = por %p149, %p150
    %p153 = scmp.ne.s32.totalorder %s138, %s152
    %p154 = scmp.eq.s32.totalorder %s23, 0
    %p155 = por %p153, %p154
    %s157 = sadd.s32 %s156, 1
    %p160 = scmp.eq.s32.totalorder %s17, 1
    %p161 = scmp.ne.s32.totalorder %s156, %s158
    %p162 = scmp.eq.s32.totalorder %s17, 0
    %p163 = por %p161, %p162
    %p164 = scmp.ne.s32.totalorder %s156, %s158
    %p165 = scmp.eq.s32.totalorder %s22, 1
    %p166 = por %p164, %p165
    %p167 = scmp.ne.s32.totalorder %s158, %s159
    %p168 = scmp.eq.s32.totalorder %s22, 0
    %p169 = por %p167, %p168
    %p170 = scmp.ne.s32.totalorder %s158, %s159
    %p171 = scmp.eq.s32.totalorder %s23, 1
    %p172 = por %p170, %p171
    %p174 = scmp.ne.s32.totalorder %s159, %s173
    %p175 = scmp.eq.s32.totalorder %s23, 0
    %p176 = por %p174, %p175
    %s178 = sadd.s32 %s177, 1
    %p181 = scmp.eq.s32.totalorder %s17, 1
    %p182 = scmp.ne.s32.totalorder %s177, %s179
    %p183 = scmp.eq.s32.totalorder %s17, 0
    %p184 = por %p182, %p183
    %p185 = scmp.ne.s32.totalorder %s177, %s179
    %p186 = scmp.eq.s32.totalorder %s22, 1
    %p187 = por %p185, %p186
    %p188 = scmp.ne.s32.totalorder %s179, %s180
    %p189 = scmp.eq.s32.totalorder %s22, 0
    %p190 = por %p188, %p189
    %p191 = scmp.ne.s32.totalorder %s179, %s180
    %p192 = scmp.eq.s32.totalorder %s23, 1
    %p193 = por %p191, %p192
    %p195 = scmp.ne.s32.totalorder %s180, %s194
    %p196 = scmp.eq.s32.totalorder %s23, 0
    %p197 = por %p195, %p196
    %s199 = sadd.s32 %s198, 1
    %p202 = scmp.eq.s32.totalorder %s17, 1
    %p203 = scmp.ne.s32.totalorder %s198, %s200
    %p204 = scmp.eq.s32.totalorder %s17, 0
    %p205 = por %p203, %p204
    %p206 = scmp.ne.s32.totalorder %s198, %s200
    %p207 = scmp.eq.s32.totalorder %s22, 1
    %p208 = por %p206, %p207
    %p209 = scmp.ne.s32.totalorder %s200, %s201
    %p210 = scmp.eq.s32.totalorder %s22, 0
    %p211 = por %p209, %p210
    %p212 = scmp.ne.s32.totalorder %s200, %s201
    %p213 = scmp.eq.s32.totalorder %s23, 1
    %p214 = por %p212, %p213
    %p216 = scmp.ne.s32.totalorder %s201, %s215
    %p217 = scmp.eq.s32.totalorder %s23, 0
    %p218 = por %p216, %p217
    %s220 = sadd.s32 %s219, 1
    %p223 = scmp.eq.s32.totalorder %s17, 1
    %p224 = scmp.ne.s32.totalorder %s219, %s221
    %p225 = scmp.eq.s32.totalorder %s17, 0
    %p226 = por %p224, %p225
    %p227 = scmp.ne.s32.totalorder %s219, %s221
    %p228 = scmp.eq.s32.totalorder %s22, 1
    %p229 = por %p227, %p228
    %p230 = scmp.ne.s32.totalorder %s221, %s222
    %p231 = scmp.eq.s32.totalorder %s22, 0
    %p232 = por %p230, %p231
    %p233 = scmp.ne.s32.totalorder %s221, %s222
    %p234 = scmp.eq.s32.totalorder %s23, 1
    %p235 = por %p233, %p234
    %p237 = scmp.ne.s32.totalorder %s222, %s236
    %p238 = scmp.eq.s32.totalorder %s23, 0
    %p239 = por %p237, %p238
    %s241 = sadd.s32 %s240, 1
    %p244 = scmp.eq.s32.totalorder %s17, 1
    %p245 = scmp.ne.s32.totalorder %s240, %s242
    %p246 = scmp.eq.s32.totalorder %s17, 0
    %p247 = por %p245, %p246
    %p248 = scmp.ne.s32.totalorder %s240, %s242
    %p249 = scmp.eq.s32.totalorder %s22, 1
    %p250 = por %p248, %p249
    %p251 = scmp.ne.s32.totalorder %s242, %s243
    %p252 = scmp.eq.s32.totalorder %s22, 0
    %p253 = por %p251, %p252
    %p254 = scmp.ne.s32.totalorder %s242, %s243
    %p255 = scmp.eq.s32.totalorder %s23, 1
    %p256 = por %p254, %p255
    %p258 = scmp.ne.s32.totalorder %s243, %s257
    %p259 = scmp.eq.s32.totalorder %s23, 0
    %p260 = por %p258, %p259
    %s261 = ssub.s32 %s17, %s24
    %p262 = scmp.eq.s32.totalorder %s261, 0
    %s264 = sadd.s32 %s263, 1
    %s265 = scalar_select %p262, %s263, %s264
    %p268 = pneg %p262
    %p269 = scmp.eq.s32.totalorder %s17, 1
    %p270 = por %p268, %p269
    %p271 = scmp.ne.s32.totalorder %s263, %s266
    %p272 = scmp.eq.s32.totalorder %s17, 0
    %p273 = por %p271, %p272
    %p274 = scmp.ne.s32.totalorder %s263, %s266
    %p275 = scmp.eq.s32.totalorder %s22, 1
    %p276 = por %p274, %p275
    %p277 = scmp.ne.s32.totalorder %s266, %s267
    %p278 = scmp.eq.s32.totalorder %s22, 0
    %p279 = por %p277, %p278
    %p280 = scmp.ne.s32.totalorder %s266, %s267
    %p281 = scmp.eq.s32.totalorder %s23, 1
    %p282 = por %p280, %p281
    %p284 = scmp.ne.s32.totalorder %s267, %s283
    %p285 = scmp.eq.s32.totalorder %s23, 0
    %p286 = por %p284, %p285
    %p287 = scmp.le.s32.totalorder 1, %s17
    %p288 = scmp.lt.s32.totalorder %s17, 3
    %p289 = pnand %p287, %p288
    %p290 = pneg %p289
    // Predicated region
    $region9: #{xvlm_for_similarities.3} parent=5 // pred_check
      _
    $region10: #{xvlm_for_similarities.3} parent=5 // pred_check_branch
      %292 = sbr.rel (%p289) target = $region12
    $region11: #{xvlm_for_similarities.3} parent=5 // pred_region
      %s293 = ssub.s32 %s17, 1
      // Predicated region
      $region13: #{xvlm_for_similarities.3} parent=11 // pred_check
        %p294 = pneg %p64
      $region14: #{xvlm_for_similarities.3} parent=11 // pred_check_branch
        %296 = sbr.rel (%p294) target = $region16
      $region15: #{xvlm_for_similarities.3} parent=11 // pred_region
        _
      $region16: #{xvlm_for_similarities.3} parent=11 // pred_fallthru
        _
      // Predicated region
      $region17: #{xvlm_for_similarities.3} parent=11 // pred_check
        %p297 = pneg %p85
      $region18: #{xvlm_for_similarities.3} parent=11 // pred_check_branch
        %299 = sbr.rel (%p297) target = $region20
      $region19: #{xvlm_for_similarities.3} parent=11 // pred_region
        _
      $region20: #{xvlm_for_similarities.3} parent=11 // pred_fallthru
        _
      // Predicated region
      $region21: #{xvlm_for_similarities.3} parent=11 // pred_check
        %p300 = pneg %p106
      $region22: #{xvlm_for_similarities.3} parent=11 // pred_check_branch
        %302 = sbr.rel (%p300) target = $region24
      $region23: #{xvlm_for_similarities.3} parent=11 // pred_region
        _
      $region24: #{xvlm_for_similarities.3} parent=11 // pred_fallthru
        _
      // Predicated region
      $region25: #{xvlm_for_similarities.3} parent=11 // pred_check
        %p303 = pneg %p127
      $region26: #{xvlm_for_similarities.3} parent=11 // pred_check_branch
        %305 = sbr.rel (%p303) target = $region28
      $region27: #{xvlm_for_similarities.3} parent=11 // pred_region
        _
      $region28: #{xvlm_for_similarities.3} parent=11 // pred_fallthru
        _
      // Predicated region
      $region29: #{xvlm_for_similarities.3} parent=11 // pred_check
        %p306 = pneg %p148
      $region30: #{xvlm_for_similarities.3} parent=11 // pred_check_branch
        %308 = sbr.rel (%p306) target = $region32
      $region31: #{xvlm_for_similarities.3} parent=11 // pred_region
        _
      $region32: #{xvlm_for_similarities.3} parent=11 // pred_fallthru
        _
      // Predicated region
      $region33: #{xvlm_for_similarities.3} parent=11 // pred_check
        %p309 = pneg %p169
      $region34: #{xvlm_for_similarities.3} parent=11 // pred_check_branch
        %311 = sbr.rel (%p309) target = $region36
      $region35: #{xvlm_for_similarities.3} parent=11 // pred_region
        _
      $region36: #{xvlm_for_similarities.3} parent=11 // pred_fallthru
        _
      // Predicated region
      $region37: #{xvlm_for_similarities.3} parent=11 // pred_check
        %p312 = pneg %p190
      $region38: #{xvlm_for_similarities.3} parent=11 // pred_check_branch
        %314 = sbr.rel (%p312) target = $region40
      $region39: #{xvlm_for_similarities.3} parent=11 // pred_region
        _
      $region40: #{xvlm_for_similarities.3} parent=11 // pred_fallthru
        _
      // Predicated region
      $region41: #{xvlm_for_similarities.3} parent=11 // pred_check
        %p315 = pneg %p211
      $region42: #{xvlm_for_similarities.3} parent=11 // pred_check_branch
        %317 = sbr.rel (%p315) target = $region44
      $region43: #{xvlm_for_similarities.3} parent=11 // pred_region
        _
      $region44: #{xvlm_for_similarities.3} parent=11 // pred_fallthru
        _
      // Predicated region
      $region45: #{xvlm_for_similarities.3} parent=11 // pred_check
        %p318 = pneg %p232
      $region46: #{xvlm_for_similarities.3} parent=11 // pred_check_branch
        %320 = sbr.rel (%p318) target = $region48
      $region47: #{xvlm_for_similarities.3} parent=11 // pred_region
        _
      $region48: #{xvlm_for_similarities.3} parent=11 // pred_fallthru
        _
      // Predicated region
      $region49: #{xvlm_for_similarities.3} parent=11 // pred_check
        %p321 = pneg %p253
      $region50: #{xvlm_for_similarities.3} parent=11 // pred_check_branch
        %323 = sbr.rel (%p321) target = $region52
      $region51: #{xvlm_for_similarities.3} parent=11 // pred_region
        _
      $region52: #{xvlm_for_similarities.3} parent=11 // pred_fallthru
        _
    $region12: #{xvlm_for_similarities.3} parent=5 // pred_fallthru
      _
    %p324 = scmp.lt.s32.totalorder %s17, 2
    // Predicated region
    $region53: #{xvlm_for_similarities.3} parent=5 // pred_check
      %p325 = pneg %p324
    $region54: #{xvlm_for_similarities.3} parent=5 // pred_check_branch
      %327 = sbr.rel (%p325) target = $region56
    $region55: #{xvlm_for_similarities.3} parent=5 // pred_region
      // Predicated region
      $region57: #{xvlm_for_similarities.3} parent=55 // pred_check
        %p328 = pneg %p37
      $region58: #{xvlm_for_similarities.3} parent=55 // pred_check_branch
        %330 = sbr.rel (%p328) target = $region60
      $region59: #{xvlm_for_similarities.3} parent=55 // pred_region
        %p331 = scmp.lt.s32.totalorder %s17, 1
        %s332 = scalar_select %p331, %s17, 1
        %s333 = smul.addr %s332, 3
        %s334 = smul.addr %s333, 8
        %s335 = scalar_lea.vmem %s0, %s334
      $region60: #{xvlm_for_similarities.3} parent=55 // pred_fallthru
        _
    $region56: #{xvlm_for_similarities.3} parent=5 // pred_fallthru
      _
    %p336 = scmp.le.s32.totalorder 1, %s17
    %p337 = scmp.lt.s32.totalorder %s17, 3
    %p338 = pnand %p336, %p337
    %p339 = pneg %p338
    // Predicated region
    $region61: #{xvlm_for_similarities.3} parent=5 // pred_check
      _
    $region62: #{xvlm_for_similarities.3} parent=5 // pred_check_branch
      %341 = sbr.rel (%p338) target = $region64
    $region63: #{xvlm_for_similarities.3} parent=5 // pred_region
      %s342 = ssub.s32 %s17, 1
      %p343 = scmp.lt.s32.totalorder %s22, 1
      %s344 = scalar_select %p343, %s22, 1
      %s345 = smul.addr %s344, 3
      %s346 = smul.addr %s345, 8
      %s347 = scalar_lea.vmem %s0, %s346
      %p348 = pneg %p43
      %p349 = pneg %p40
      %p350 = pneg %p64
      %p351 = pneg %p61
      %p352 = pneg %p85
      %p353 = pneg %p82
      %p354 = pneg %p106
      %p355 = pneg %p103
      %p356 = pneg %p127
      %p357 = pneg %p124
      %p358 = pneg %p148
      %p359 = pneg %p145
      %p360 = pneg %p169
      %p361 = pneg %p166
      %p362 = pneg %p190
      %p363 = pneg %p187
      %p364 = pneg %p211
      %p365 = pneg %p208
      %p366 = pneg %p232
      %p367 = pneg %p229
      %p368 = pneg %p253
      %p369 = pneg %p250
      %p370 = pneg %p279
      %p371 = pneg %p276
      %p372 = scmp.lt.s32.totalorder %s22, 1
      %s373 = scalar_select %p372, %s22, 1
      %s374 = smul.addr %s373, 3
      %s375 = smul.addr %s374, 8
      %s376 = scalar_lea.vmem %s11, %s375
      %p377 = scmp.lt.s32.totalorder %s22, 1
      %s378 = scalar_select %p377, %s22, 1
      %s379 = smul.addr %s378, 3
      %s380 = smul.addr %s379, 8
      %s381 = scalar_lea.vmem %s0, %s380
      %p382 = scmp.lt.s32.totalorder %s22, 1
      %s383 = scalar_select %p382, %s22, 1
      %s384 = smul.addr %s383, 3
      %s385 = smul.addr %s384, 8
      %s386 = scalar_lea.vmem %s11, %s385
      %v387 = vld [vmem:[%s381] sm:$0xff]
      %v388 = vld [vmem:[%s381 + $0x8] sm:$0xff]
      %v389 = vld [vmem:[%s381 + $0x10] sm:$0x1]
      %v390 = vld [vmem:[%s1] sm:$0xff]
      %v391 = vld [vmem:[%s1 + $0x8] sm:$0xff]
      %v392 = vld [vmem:[%s1 + $0x10] sm:$0xff]
      %v393 = vld [vmem:[%s1 + $0x18] sm:$0xff]
      %v394 = vld [vmem:[%s1 + $0x20] sm:$0xff]
      %v395 = vld [vmem:[%s1 + $0x28] sm:$0xff]
      %v396 = vld [vmem:[%s1 + $0x30] sm:$0xff]
      %v397 = vld [vmem:[%s1 + $0x38] sm:$0xff]
      %v398 = vld [vmem:[%s2] sm:$0x1]
      %v400 = vlaneseq
      %v401 = vshrl.u32 %v400, 7
      %v402 = vsub.s32 0, %v401
      %v403 = vrot.slane %v398, %v402
      %vm405 = vcmask 523264
      %v407 = vsel %vm405, %v387, 0
      %v410 = vsel %vm405, %v388, 0
      %v413 = vsel %vm405, %v389, 0
      %415 = vmatprep.subr.mxu0 0.0
      %416 = vmatpush1.msra.mxu0 %v390
      %417 = vmatprep.subr.mxu0 0.0
      %418 = vmatpush1.msra.mxu0 %v391
      %419 = vmatprep.subr.mxu0 0.0
      %420 = vmatpush1.msra.mxu0 %v392
      %421 = vmatprep.subr.mxu0 0.0
      %422 = vmatpush1.msra.mxu0 %v393
      %423 = vmatprep.subr.mxu0 0.0
      %424 = vmatpush1.msra.mxu0 %v394
      %425 = vmatprep.subr.mxu0 0.0
      %426 = vmatpush1.msra.mxu0 %v395
      %427 = vmatprep.subr.mxu0 0.0
      %428 = vmatpush1.msra.mxu0 %v396
      %429 = vmatprep.subr.mxu0 0.0
      %430 = vmatpush1.msra.mxu0 %v397
      %431 = vmatprep.subr.mxu0 0.0
      %432 = vmatpush1.msra.mxu0 0.0
      %433 = vmatprep.subr.mxu0 0.0
      %434 = vmatpush1.msra.mxu0 0.0
      %435 = vmatprep.subr.mxu0 0.0
      %436 = vmatpush1.msra.mxu0 0.0
      %437 = vmatprep.subr.mxu0 0.0
      %438 = vmatpush1.msra.mxu0 0.0
      %439 = vmatprep.subr.mxu0 0.0
      %440 = vmatpush1.msra.mxu0 0.0
      %441 = vmatprep.subr.mxu0 0.0
      %442 = vmatpush1.msra.mxu0 0.0
      %443 = vmatprep.subr.mxu0 0.0
      %444 = vmatpush1.msra.mxu0 0.0
      %445 = vmatprep.subr.mxu0 0.0
      %446 = vmatpush1.msra.mxu0 0.0
      %447 = vmatprep.subr.mxu0 0.0
      %448 = vmatpush1.msra.mxu0 0.0
      %449 = vmatprep.subr.mxu0 0.0
      %450 = vmatpush1.msra.mxu0 0.0
      %451 = vmatprep.subr.mxu0 0.0
      %452 = vmatpush1.msra.mxu0 0.0
      %453 = vmatprep.subr.mxu0 0.0
      %454 = vmatpush1.msra.mxu0 0.0
      %455 = vmatprep.subr.mxu0 0.0
      %456 = vmatpush1.msra.mxu0 0.0
      %457 = vmatprep.subr.mxu0 0.0
      %458 = vmatpush1.msra.mxu0 0.0
      %459 = vmatprep.subr.mxu0 0.0
      %460 = vmatpush1.msra.mxu0 0.0
      %461 = vmatprep.subr.mxu0 0.0
      %462 = vmatpush1.msra.mxu0 0.0
      %463 = vmatprep.subr.mxu0 0.0
      %464 = vmatpush1.msra.mxu0 0.0
      %465 = vmatprep.subr.mxu0 0.0
      %466 = vmatpush1.msra.mxu0 0.0
      %467 = vmatprep.subr.mxu0 0.0
      %468 = vmatpush1.msra.mxu0 0.0
      %469 = vmatprep.subr.mxu0 0.0
      %470 = vmatpush1.msra.mxu0 0.0
      %471 = vmatprep.subr.mxu0 0.0
      %472 = vmatpush1.msra.mxu0 0.0
      %473 = vmatprep.subr.mxu0 0.0
      %474 = vmatpush1.msra.mxu0 0.0
      %475 = vmatprep.subr.mxu0 0.0
      %476 = vmatpush1.msra.mxu0 0.0
      %477 = vmatprep.subr.mxu0 0.0
      %478 = vmatpush1.msra.mxu0 0.0
      %479 = vmatprep.mubr.f32.mxu0 0.0
      %480 = vmatmul.mubr.f32.gmra.mrb[0].mxu0 %v407
      %v481 = vpop.f32.mrb[0].mxu0
      %v482 = vadd.f32 %v403, %v481
      %v483 = vpop.f32.mrb[0].mxu0
      %484 = vmatprep.mubr.f32.mxu0 0.0
      %485 = vmatmul.mubr.f32.gmra.mrb[0].mxu0 %v410
      %v486 = vpop.f32.mrb[0].mxu0
      %v487 = vadd.f32 %v403, %v486
      %v488 = vpop.f32.mrb[0].mxu0
      %489 = vmatprep.mubr.f32.mxu0 0.0
      %490 = vmatmul.mubr.f32.gmra.mrb[0].mxu0 %v413
      %v491 = vpop.f32.mrb[0].mxu0
      %v492 = vadd.f32 %v403, %v491
      %v493 = vpop.f32.mrb[0].mxu0
      %494 = vdwg.mxu0
      %v495 = vld [vmem:[%s3] sm:$0xff]
      %v496 = vld [vmem:[%s3 + $0x8] sm:$0xff]
      %v497 = vld [vmem:[%s3 + $0x10] sm:$0x1]
      %v498 = vadd.f32 %v482, %v495
      %v499 = vadd.f32 %v487, %v496
      %v500 = vadd.f32 %v492, %v497
      %v501 = vld [vmem:[%s10] sm:$0xf]
      %v502 = vld [vmem:[%s4] sm:$0xff]
      %v503 = vld [vmem:[%s4 + $0x8] sm:$0xff]
      %v504 = vld [vmem:[%s4 + $0x10] sm:$0xff]
      %v505 = vld [vmem:[%s4 + $0x18] sm:$0xff]
      %v506 = vld [vmem:[%s5] sm:$0x1]
      %v507 = vld [vmem:[%s6] sm:$0xff]
      %v508 = vld [vmem:[%s6 + $0x8] sm:$0xff]
      %v509 = vld [vmem:[%s6 + $0x10] sm:$0xff]
      %v510 = vld [vmem:[%s6 + $0x18] sm:$0xff]
      %v511 = vld [vmem:[%s7] sm:$0x1]
      %v512 = vld [vmem:[%s8] sm:$0xff]
      %v513 = vld [vmem:[%s8 + $0x8] sm:$0xff]
      %v514 = vld [vmem:[%s8 + $0x10] sm:$0xff]
      %v515 = vld [vmem:[%s8 + $0x18] sm:$0xff]
      %v516 = vld [vmem:[%s8 + $0x20] sm:$0xff]
      %v517 = vld [vmem:[%s8 + $0x28] sm:$0xff]
      %v518 = vld [vmem:[%s8 + $0x30] sm:$0xff]
      %v519 = vld [vmem:[%s8 + $0x38] sm:$0xff]
      %v520 = vld [vmem:[%s9] sm:$0x1]
      %v522 = vlaneseq
      %v523 = vshrl.u32 %v522, 7
      %v524 = vsub.s32 0, %v523
      %v525 = vrot.slane %v506, %v524
      %vm527 = vcmask 261120
      %v529 = vsel %vm527, %v498, 0
      %v532 = vsel %vm527, %v499, 0
      %v535 = vsel %vm527, %v500, 0
      %537 = vmatprep.subr.mxu0 0.0
      %538 = vmatpush1.msra.mxu0 %v502
      %539 = vmatprep.subr.mxu0 0.0
      %540 = vmatpush1.msra.mxu0 %v503
      %541 = vmatprep.subr.mxu0 0.0
      %542 = vmatpush1.msra.mxu0 %v504
      %543 = vmatprep.subr.mxu0 0.0
      %544 = vmatpush1.msra.mxu0 %v505
      %545 = vmatprep.subr.mxu0 0.0
      %546 = vmatpush1.msra.mxu0 0.0
      %547 = vmatprep.subr.mxu0 0.0
      %548 = vmatpush1.msra.mxu0 0.0
      %549 = vmatprep.subr.mxu0 0.0
      %550 = vmatpush1.msra.mxu0 0.0
      %551 = vmatprep.subr.mxu0 0.0
      %552 = vmatpush1.msra.mxu0 0.0
      %553 = vmatprep.subr.mxu0 0.0
      %554 = vmatpush1.msra.mxu0 0.0
      %555 = vmatprep.subr.mxu0 0.0
      %556 = vmatpush1.msra.mxu0 0.0
      %557 = vmatprep.subr.mxu0 0.0
      %558 = vmatpush1.msra.mxu0 0.0
      %559 = vmatprep.subr.mxu0 0.0
      %560 = vmatpush1.msra.mxu0 0.0
      %561 = vmatprep.subr.mxu0 0.0
      %562 = vmatpush1.msra.mxu0 0.0
      %563 = vmatprep.subr.mxu0 0.0
      %564 = vmatpush1.msra.mxu0 0.0
      %565 = vmatprep.subr.mxu0 0.0
      %566 = vmatpush1.msra.mxu0 0.0
      %567 = vmatprep.subr.mxu0 0.0
      %568 = vmatpush1.msra.mxu0 0.0
      %569 = vmatprep.subr.mxu0 0.0
      %570 = vmatpush1.msra.mxu0 0.0
      %571 = vmatprep.subr.mxu0 0.0
      %572 = vmatpush1.msra.mxu0 0.0
      %573 = vmatprep.subr.mxu0 0.0
      %574 = vmatpush1.msra.mxu0 0.0
      %575 = vmatprep.subr.mxu0 0.0
      %576 = vmatpush1.msra.mxu0 0.0
      %577 = vmatprep.subr.mxu0 0.0
      %578 = vmatpush1.msra.mxu0 0.0
      %579 = vmatprep.subr.mxu0 0.0
      %580 = vmatpush1.msra.mxu0 0.0
      %581 = vmatprep.subr.mxu0 0.0
      %582 = vmatpush1.msra.mxu0 0.0
      %583 = vmatprep.subr.mxu0 0.0
      %584 = vmatpush1.msra.mxu0 0.0
      %585 = vmatprep.subr.mxu0 0.0
      %586 = vmatpush1.msra.mxu0 0.0
      %587 = vmatprep.subr.mxu0 0.0
      %588 = vmatpush1.msra.mxu0 0.0
      %589 = vmatprep.subr.mxu0 0.0
      %590 = vmatpush1.msra.mxu0 0.0
      %591 = vmatprep.subr.mxu0 0.0
      %592 = vmatpush1.msra.mxu0 0.0
      %593 = vmatprep.subr.mxu0 0.0
      %594 = vmatpush1.msra.mxu0 0.0
      %595 = vmatprep.subr.mxu0 0.0
      %596 = vmatpush1.msra.mxu0 0.0
      %597 = vmatprep.subr.mxu0 0.0
      %598 = vmatpush1.msra.mxu0 0.0
      %599 = vmatprep.subr.mxu0 0.0
      %600 = vmatpush1.msra.mxu0 0.0
      %601 = vmatprep.mubr.f32.mxu0 0.0
      %602 = vmatmul.mubr.f32.gmra.mrb[0].mxu0 %v529
      %v603 = vpop.f32.mrb[0].mxu0
      %v604 = vadd.f32 %v525, %v603
      %v605 = vpop.f32.mrb[0].mxu0
      %606 = vmatprep.mubr.f32.mxu0 0.0
      %607 = vmatmul.mubr.f32.gmra.mrb[0].mxu0 %v532
      %v608 = vpop.f32.mrb[0].mxu0
      %v609 = vadd.f32 %v525, %v608
      %v610 = vpop.f32.mrb[0].mxu0
      %611 = vmatprep.mubr.f32.mxu0 0.0
      %612 = vmatmul.mubr.f32.gmra.mrb[0].mxu0 %v535
      %v613 = vpop.f32.mrb[0].mxu0
      %v614 = vadd.f32 %v525, %v613
      %v615 = vpop.f32.mrb[0].mxu0
      %616 = vdwg.mxu0
      %620 = vrot.lane.b32.xlu0 %v604, 96
      %v621 = vpop.permute.xlu0 %620
      %622 = vrot.lane.b32.xlu0 %v609, 96
      %v623 = vpop.permute.xlu0 %622
      %624 = vrot.lane.b32.xlu0 %v614, 96
      %v625 = vpop.permute.xlu0 %624
      %vm626 = vcmask 64512
      %v627 = vsel %vm626, %v604, 0
      %v629 = vsel %vm626, %v609, 0
      %v631 = vsel %vm626, %v614, 0
      %v633 = vsel %vm626, %v621, 0
      %v635 = vsel %vm626, %v623, 0
      %v637 = vsel %vm626, %v625, 0
      %639 = vmatprep.subr.mxu0 0.0
      %640 = vmatpush1.xpose.msra.mxu0 %v633
      %641 = vmatprep.subr.mxu0 0.0
      %642 = vmatpush1.xpose.msra.mxu0 %v635
      %643 = vmatprep.subr.mxu0 0.0
      %644 = vmatpush1.xpose.msra.mxu0 %v637
      %645 = vmatprep.subr.mxu0 0.0
      %646 = vmatpush1.xpose.msra.mxu0 0.0
      %647 = vmatprep.subr.mxu0 0.0
      %648 = vmatpush1.xpose.msra.mxu0 0.0
      %649 = vmatprep.subr.mxu0 0.0
      %650 = vmatpush1.xpose.msra.mxu0 0.0
      %651 = vmatprep.subr.mxu0 0.0
      %652 = vmatpush1.xpose.msra.mxu0 0.0
      %653 = vmatprep.subr.mxu0 0.0
      %654 = vmatpush1.xpose.msra.mxu0 0.0
      %655 = vmatprep.subr.mxu0 0.0
      %656 = vmatpush1.xpose.msra.mxu0 0.0
      %657 = vmatprep.subr.mxu0 0.0
      %658 = vmatpush1.xpose.msra.mxu0 0.0
      %659 = vmatprep.subr.mxu0 0.0
      %660 = vmatpush1.xpose.msra.mxu0 0.0
      %661 = vmatprep.subr.mxu0 0.0
      %662 = vmatpush1.xpose.msra.mxu0 0.0
      %663 = vmatprep.subr.mxu0 0.0
      %664 = vmatpush1.xpose.msra.mxu0 0.0
      %665 = vmatprep.subr.mxu0 0.0
      %666 = vmatpush1.xpose.msra.mxu0 0.0
      %667 = vmatprep.subr.mxu0 0.0
      %668 = vmatpush1.xpose.msra.mxu0 0.0
      %669 = vmatprep.subr.mxu0 0.0
      %670 = vmatpush1.xpose.msra.mxu0 0.0
      %671 = vmatprep.subr.mxu0 0.0
      %672 = vmatpush1.xpose.msra.mxu0 0.0
      %673 = vmatprep.subr.mxu0 0.0
      %674 = vmatpush1.xpose.msra.mxu0 0.0
      %675 = vmatprep.subr.mxu0 0.0
      %676 = vmatpush1.xpose.msra.mxu0 0.0
      %677 = vmatprep.subr.mxu0 0.0
      %678 = vmatpush1.xpose.msra.mxu0 0.0
      %679 = vmatprep.subr.mxu0 0.0
      %680 = vmatpush1.xpose.msra.mxu0 0.0
      %681 = vmatprep.subr.mxu0 0.0
      %682 = vmatpush1.xpose.msra.mxu0 0.0
      %683 = vmatprep.subr.mxu0 0.0
      %684 = vmatpush1.xpose.msra.mxu0 0.0
      %685 = vmatprep.subr.mxu0 0.0
      %686 = vmatpush1.xpose.msra.mxu0 0.0
      %687 = vmatprep.subr.mxu0 0.0
      %688 = vmatpush1.xpose.msra.mxu0 0.0
      %689 = vmatprep.subr.mxu0 0.0
      %690 = vmatpush1.xpose.msra.mxu0 0.0
      %691 = vmatprep.subr.mxu0 0.0
      %692 = vmatpush1.xpose.msra.mxu0 0.0
      %693 = vmatprep.subr.mxu0 0.0
      %694 = vmatpush1.xpose.msra.mxu0 0.0
      %695 = vmatprep.subr.mxu0 0.0
      %696 = vmatpush1.xpose.msra.mxu0 0.0
      %697 = vmatprep.subr.mxu0 0.0
      %698 = vmatpush1.xpose.msra.mxu0 0.0
      %699 = vmatprep.subr.mxu0 0.0
      %700 = vmatpush1.xpose.msra.mxu0 0.0
      %701 = vmatprep.subr.mxu0 0.0
      %702 = vmatpush1.xpose.msra.mxu0 0.0
      %703 = vmatprep.mubr.f32.mxu0 0.0
      %704 = vmatmul.mubr.f32.gmra.mrb[0].mxu0 %v627
      %v705 = vpop.f32.mrb[0].mxu0
      %v706 = vadd.f32 0.0, %v705
      %v707 = vpop.f32.mrb[0].mxu0
      %708 = vmatprep.mubr.f32.mxu0 0.0
      %709 = vmatmul.mubr.f32.gmra.mrb[0].mxu0 %v629
      %v710 = vpop.f32.mrb[0].mxu0
      %v711 = vadd.f32 0.0, %v710
      %v712 = vpop.f32.mrb[0].mxu0
      %713 = vmatprep.mubr.f32.mxu0 0.0
      %714 = vmatmul.mubr.f32.gmra.mrb[0].mxu0 %v631
      %v715 = vpop.f32.mrb[0].mxu0
      %v716 = vadd.f32 0.0, %v715
      %v717 = vpop.f32.mrb[0].mxu0
      %718 = vdwg.mxu0
      %v719 = vmul.f32 %v706, 0.35355338
      %v720 = vmul.f32 %v711, 0.35355338
      %v721 = vmul.f32 %v716, 0.35355338
      %v722 = vadd.f32 %v719, 0.0
      %v723 = vadd.f32 %v720, 0.0
      %v724 = vadd.f32 %v721, 0.0
      %vm725 = vcmask 138240
      %v726 = vsel %vm725, %v722, -inf
      %727 = vmax.xlane.f32.xlu0 %v726
      %v728 = vpop.xlane.xlu0 %727
      %v729 = vsel %vm725, %v723, -inf
      %730 = vmax.xlane.f32.xlu0 %v729
      %v731 = vpop.xlane.xlu0 %730
      %vm732 = vcmask 131072
      %v733 = vsel %vm732, %v724, -inf
      %734 = vmax.xlane.f32.xlu0 %v733
      %v735 = vpop.xlane.xlu0 %734
      %v736 = vsub.f32 %v722, %v728
      %v737 = vsub.f32 %v723, %v731
      %v738 = vsub.f32 %v724, %v735
      %v739 = vmul.f32 %v736, 1.442695
      %v740 = vpow.pop %v739
      %v741 = vmul.f32 %v737, 1.442695
      %v742 = vpow.pop %v741
      %v743 = vmul.f32 %v738, 1.442695
      %v744 = vpow.pop %v743
      %v745 = vsel %vm725, %v740, 0.0
      %746 = vadd.xlane.f32.xlu0 %v745
      %v747 = vpop.xlane.xlu0 %746
      %v748 = vsel %vm725, %v742, 0.0
      %749 = vadd.xlane.f32.xlu0 %v748
      %v750 = vpop.xlane.xlu0 %749
      %v751 = vsel %vm732, %v744, 0.0
      %752 = vadd.xlane.f32.xlu0 %v751
      %v753 = vpop.xlane.xlu0 %752
      %v754 = vrcp.pop %v747
      %v755 = vrcp.pop %v750
      %v756 = vrcp.pop %v753
      %v757 = vmul.f32 %v740, %v754
      %v758 = vmul.f32 %v742, %v755
      %v759 = vmul.f32 %v744, %v756
      %760 = vrot.lane.b32.xlu0 %v604, 64
      %v761 = vpop.permute.xlu0 %760
      %762 = vrot.lane.b32.xlu0 %v609, 64
      %v763 = vpop.permute.xlu0 %762
      %764 = vrot.lane.b32.xlu0 %v614, 64
      %v765 = vpop.permute.xlu0 %764
      %v769 = vsel %vm725, %v757, 0
      %v772 = vsel %vm725, %v758, 0
      %v775 = vsel %vm725, %v759, 0
      %vm777 = vcmask 1040384
      %v778 = vsel %vm777, %v765, 0
      %780 = vmatprep.subr.mxu0 0.0
      %781 = vmatpush1.msra.mxu0 %v761
      %782 = vmatprep.subr.mxu0 0.0
      %783 = vmatpush1.msra.mxu0 %v763
      %784 = vmatprep.subr.mxu0 0.0
      %785 = vmatpush1.msra.mxu0 %v778
      %786 = vmatprep.subr.mxu0 0.0
      %787 = vmatpush1.msra.mxu0 0.0
      %788 = vmatprep.subr.mxu0 0.0
      %789 = vmatpush1.msra.mxu0 0.0
      %790 = vmatprep.subr.mxu0 0.0
      %791 = vmatpush1.msra.mxu0 0.0
      %792 = vmatprep.subr.mxu0 0.0
      %793 = vmatpush1.msra.mxu0 0.0
      %794 = vmatprep.subr.mxu0 0.0
      %795 = vmatpush1.msra.mxu0 0.0
      %796 = vmatprep.subr.mxu0 0.0
      %797 = vmatpush1.msra.mxu0 0.0
      %798 = vmatprep.subr.mxu0 0.0
      %799 = vmatpush1.msra.mxu0 0.0
      %800 = vmatprep.subr.mxu0 0.0
      %801 = vmatpush1.msra.mxu0 0.0
      %802 = vmatprep.subr.mxu0 0.0
      %803 = vmatpush1.msra.mxu0 0.0
      %804 = vmatprep.subr.mxu0 0.0
      %805 = vmatpush1.msra.mxu0 0.0
      %806 = vmatprep.subr.mxu0 0.0
      %807 = vmatpush1.msra.mxu0 0.0
      %808 = vmatprep.subr.mxu0 0.0
      %809 = vmatpush1.msra.mxu0 0.0
      %810 = vmatprep.subr.mxu0 0.0
      %811 = vmatpush1.msra.mxu0 0.0
      %812 = vmatprep.subr.mxu0 0.0
      %813 = vmatpush1.msra.mxu0 0.0
      %814 = vmatprep.subr.mxu0 0.0
      %815 = vmatpush1.msra.mxu0 0.0
      %816 = vmatprep.subr.mxu0 0.0
      %817 = vmatpush1.msra.mxu0 0.0
      %818 = vmatprep.subr.mxu0 0.0
      %819 = vmatpush1.msra.mxu0 0.0
      %820 = vmatprep.subr.mxu0 0.0
      %821 = vmatpush1.msra.mxu0 0.0
      %822 = vmatprep.subr.mxu0 0.0
      %823 = vmatpush1.msra.mxu0 0.0
      %824 = vmatprep.subr.mxu0 0.0
      %825 = vmatpush1.msra.mxu0 0.0
      %826 = vmatprep.subr.mxu0 0.0
      %827 = vmatpush1.msra.mxu0 0.0
      %828 = vmatprep.subr.mxu0 0.0
      %829 = vmatpush1.msra.mxu0 0.0
      %830 = vmatprep.subr.mxu0 0.0
      %831 = vmatpush1.msra.mxu0 0.0
      %832 = vmatprep.subr.mxu0 0.0
      %833 = vmatpush1.msra.mxu0 0.0
      %834 = vmatprep.subr.mxu0 0.0
      %835 = vmatpush1.msra.mxu0 0.0
      %836 = vmatprep.subr.mxu0 0.0
      %837 = vmatpush1.msra.mxu0 0.0
      %838 = vmatprep.subr.mxu0 0.0
      %839 = vmatpush1.msra.mxu0 0.0
      %840 = vmatprep.subr.mxu0 0.0
      %841 = vmatpush1.msra.mxu0 0.0
      %842 = vmatprep.subr.mxu0 0.0
      %843 = vmatpush1.msra.mxu0 0.0
      %844 = vmatprep.mubr.f32.mxu0 0.0
      %845 = vmatmul.mubr.f32.gmra.mrb[0].mxu0 %v769
      %v846 = vpop.f32.mrb[0].mxu0
      %v847 = vadd.f32 0.0, %v846
      %v848 = vpop.f32.mrb[0].mxu0
      %849 = vmatprep.mubr.f32.mxu0 0.0
      %850 = vmatmul.mubr.f32.gmra.mrb[0].mxu0 %v772
      %v851 = vpop.f32.mrb[0].mxu0
      %v852 = vadd.f32 0.0, %v851
      %v853 = vpop.f32.mrb[0].mxu0
      %854 = vmatprep.mubr.f32.mxu0 0.0
      %855 = vmatmul.mubr.f32.gmra.mrb[0].mxu0 %v775
      %v856 = vpop.f32.mrb[0].mxu0
      %v857 = vadd.f32 0.0, %v856
      %v858 = vpop.f32.mrb[0].mxu0
      %859 = vdwg.mxu0
      %860 = vrot.lane.b32.xlu0 %v604, 120
      %v861 = vpop.permute.xlu0 %860
      %862 = vrot.lane.b32.xlu0 %v609, 120
      %v863 = vpop.permute.xlu0 %862
      %864 = vrot.lane.b32.xlu0 %v614, 120
      %v865 = vpop.permute.xlu0 %864
      %866 = vrot.lane.b32.xlu0 %v604, 88
      %v867 = vpop.permute.xlu0 %866
      %868 = vrot.lane.b32.xlu0 %v609, 88
      %v869 = vpop.permute.xlu0 %868
      %870 = vrot.lane.b32.xlu0 %v614, 88
      %v871 = vpop.permute.xlu0 %870
      %v872 = vsel %vm626, %v861, 0
      %v874 = vsel %vm626, %v863, 0
      %v876 = vsel %vm626, %v865, 0
      %v878 = vsel %vm626, %v867, 0
      %v880 = vsel %vm626, %v869, 0
      %v882 = vsel %vm626, %v871, 0
      %884 = vmatprep.subr.mxu0 0.0
      %885 = vmatpush1.xpose.msra.mxu0 %v878
      %886 = vmatprep.subr.mxu0 0.0
      %887 = vmatpush1.xpose.msra.mxu0 %v880
      %888 = vmatprep.subr.mxu0 0.0
      %889 = vmatpush1.xpose.msra.mxu0 %v882
      %890 = vmatprep.subr.mxu0 0.0
      %891 = vmatpush1.xpose.msra.mxu0 0.0
      %892 = vmatprep.subr.mxu0 0.0
      %893 = vmatpush1.xpose.msra.mxu0 0.0
      %894 = vmatprep.subr.mxu0 0.0
      %895 = vmatpush1.xpose.msra.mxu0 0.0
      %896 = vmatprep.subr.mxu0 0.0
      %897 = vmatpush1.xpose.msra.mxu0 0.0
      %898 = vmatprep.subr.mxu0 0.0
      %899 = vmatpush1.xpose.msra.mxu0 0.0
      %900 = vmatprep.subr.mxu0 0.0
      %901 = vmatpush1.xpose.msra.mxu0 0.0
      %902 = vmatprep.subr.mxu0 0.0
      %903 = vmatpush1.xpose.msra.mxu0 0.0
      %904 = vmatprep.subr.mxu0 0.0
      %905 = vmatpush1.xpose.msra.mxu0 0.0
      %906 = vmatprep.subr.mxu0 0.0
      %907 = vmatpush1.xpose.msra.mxu0 0.0
      %908 = vmatprep.subr.mxu0 0.0
      %909 = vmatpush1.xpose.msra.mxu0 0.0
      %910 = vmatprep.subr.mxu0 0.0
      %911 = vmatpush1.xpose.msra.mxu0 0.0
      %912 = vmatprep.subr.mxu0 0.0
      %913 = vmatpush1.xpose.msra.mxu0 0.0
      %914 = vmatprep.subr.mxu0 0.0
      %915 = vmatpush1.xpose.msra.mxu0 0.0
      %916 = vmatprep.subr.mxu0 0.0
      %917 = vmatpush1.xpose.msra.mxu0 0.0
      %918 = vmatprep.subr.mxu0 0.0
      %919 = vmatpush1.xpose.msra.mxu0 0.0
      %920 = vmatprep.subr.mxu0 0.0
      %921 = vmatpush1.xpose.msra.mxu0 0.0
      %922 = vmatprep.subr.mxu0 0.0
      %923 = vmatpush1.xpose.msra.mxu0 0.0
      %924 = vmatprep.subr.mxu0 0.0
      %925 = vmatpush1.xpose.msra.mxu0 0.0
      %926 = vmatprep.subr.mxu0 0.0
      %927 = vmatpush1.xpose.msra.mxu0 0.0
      %928 = vmatprep.subr.mxu0 0.0
      %929 = vmatpush1.xpose.msra.mxu0 0.0
      %930 = vmatprep.subr.mxu0 0.0
      %931 = vmatpush1.xpose.msra.mxu0 0.0
      %932 = vmatprep.subr.mxu0 0.0
      %933 = vmatpush1.xpose.msra.mxu0 0.0
      %934 = vmatprep.subr.mxu0 0.0
      %935 = vmatpush1.xpose.msra.mxu0 0.0
      %936 = vmatprep.subr.mxu0 0.0
      %937 = vmatpush1.xpose.msra.mxu0 0.0
      %938 = vmatprep.subr.mxu0 0.0
      %939 = vmatpush1.xpose.msra.mxu0 0.0
      %940 = vmatprep.subr.mxu0 0.0
      %941 = vmatpush1.xpose.msra.mxu0 0.0
      %942 = vmatprep.subr.mxu0 0.0
      %943 = vmatpush1.xpose.msra.mxu0 0.0
      %944 = vmatprep.subr.mxu0 0.0
      %945 = vmatpush1.xpose.msra.mxu0 0.0
      %946 = vmatprep.subr.mxu0 0.0
      %947 = vmatpush1.xpose.msra.mxu0 0.0
      %948 = vmatprep.mubr.f32.mxu0 0.0
      %949 = vmatmul.mubr.f32.gmra.mrb[0].mxu0 %v872
      %v950 = vpop.f32.mrb[0].mxu0
      %v951 = vadd.f32 0.0, %v950
      %v952 = vpop.f32.mrb[0].mxu0
      %953 = vmatprep.mubr.f32.mxu0 0.0
      %954 = vmatmul.mubr.f32.gmra.mrb[0].mxu0 %v874
      %v955 = vpop.f32.mrb[0].mxu0
      %v956 = vadd.f32 0.0, %v955
      %v957 = vpop.f32.mrb[0].mxu0
      %958 = vmatprep.mubr.f32.mxu0 0.0
      %959 = vmatmul.mubr.f32.gmra.mrb[0].mxu0 %v876
      %v960 = vpop.f32.mrb[0].mxu0
      %v961 = vadd.f32 0.0, %v960
      %v962 = vpop.f32.mrb[0].mxu0
      %963 = vdwg.mxu0
      %v964 = vmul.f32 %v951, 0.35355338
      %v965 = vmul.f32 %v956, 0.35355338
      %v966 = vmul.f32 %v961, 0.35355338
      %v967 = vadd.f32 %v964, 0.0
      %v968 = vadd.f32 %v965, 0.0
      %v969 = vadd.f32 %v966, 0.0
      %v970 = vsel %vm725, %v967, -inf
      %971 = vmax.xlane.f32.xlu0 %v970
      %v972 = vpop.xlane.xlu0 %971
      %v973 = vsel %vm725, %v968, -inf
      %974 = vmax.xlane.f32.xlu0 %v973
      %v975 = vpop.xlane.xlu0 %974
      %v976 = vsel %vm732, %v969, -inf
      %977 = vmax.xlane.f32.xlu0 %v976
      %v978 = vpop.xlane.xlu0 %977
      %v979 = vsub.f32 %v967, %v972
      %v980 = vsub.f32 %v968, %v975
      %v981 = vsub.f32 %v969, %v978
      %v982 = vmul.f32 %v979, 1.442695
      %v983 = vpow.pop %v982
      %v984 = vmul.f32 %v980, 1.442695
      %v985 = vpow.pop %v984
      %v986 = vmul.f32 %v981, 1.442695
      %v987 = vpow.pop %v986
      %v988 = vsel %vm725, %v983, 0.0
      %989 = vadd.xlane.f32.xlu0 %v988
      %v990 = vpop.xlane.xlu0 %989
      %v991 = vsel %vm725, %v985, 0.0
      %992 = vadd.xlane.f32.xlu0 %v991
      %v993 = vpop.xlane.xlu0 %992
      %v994 = vsel %vm732, %v987, 0.0
      %995 = vadd.xlane.f32.xlu0 %v994
      %v996 = vpop.xlane.xlu0 %995
      %v997 = vrcp.pop %v990
      %v998 = vrcp.pop %v993
      %v999 = vrcp.pop %v996
      %v1000 = vmul.f32 %v983, %v997
      %v1001 = vmul.f32 %v985, %v998
      %v1002 = vmul.f32 %v987, %v999
      %1003 = vrot.lane.b32.xlu0 %v604, 56
      %v1004 = vpop.permute.xlu0 %1003
      %1005 = vrot.lane.b32.xlu0 %v609, 56
      %v1006 = vpop.permute.xlu0 %1005
      %1007 = vrot.lane.b32.xlu0 %v614, 56
      %v1008 = vpop.permute.xlu0 %1007
      %v1012 = vsel %vm725, %v1000, 0
      %v1015 = vsel %vm725, %v1001, 0
      %v1018 = vsel %vm725, %v1002, 0
      %v1020 = vsel %vm777, %v1008, 0
      %1022 = vmatprep.subr.mxu0 0.0
      %1023 = vmatpush1.msra.mxu0 %v1004
      %1024 = vmatprep.subr.mxu0 0.0
      %1025 = vmatpush1.msra.mxu0 %v1006
      %1026 = vmatprep.subr.mxu0 0.0
      %1027 = vmatpush1.msra.mxu0 %v1020
      %1028 = vmatprep.subr.mxu0 0.0
      %1029 = vmatpush1.msra.mxu0 0.0
      %1030 = vmatprep.subr.mxu0 0.0
      %1031 = vmatpush1.msra.mxu0 0.0
      %1032 = vmatprep.subr.mxu0 0.0
      %1033 = vmatpush1.msra.mxu0 0.0
      %1034 = vmatprep.subr.mxu0 0.0
      %1035 = vmatpush1.msra.mxu0 0.0
      %1036 = vmatprep.subr.mxu0 0.0
      %1037 = vmatpush1.msra.mxu0 0.0
      %1038 = vmatprep.subr.mxu0 0.0
      %1039 = vmatpush1.msra.mxu0 0.0
      %1040 = vmatprep.subr.mxu0 0.0
      %1041 = vmatpush1.msra.mxu0 0.0
      %1042 = vmatprep.subr.mxu0 0.0
      %1043 = vmatpush1.msra.mxu0 0.0
      %1044 = vmatprep.subr.mxu0 0.0
      %1045 = vmatpush1.msra.mxu0 0.0
      %1046 = vmatprep.subr.mxu0 0.0
      %1047 = vmatpush1.msra.mxu0 0.0
      %1048 = vmatprep.subr.mxu0 0.0
      %1049 = vmatpush1.msra.mxu0 0.0
      %1050 = vmatprep.subr.mxu0 0.0
      %1051 = vmatpush1.msra.mxu0 0.0
      %1052 = vmatprep.subr.mxu0 0.0
      %1053 = vmatpush1.msra.mxu0 0.0
      %1054 = vmatprep.subr.mxu0 0.0
      %1055 = vmatpush1.msra.mxu0 0.0
      %1056 = vmatprep.subr.mxu0 0.0
      %1057 = vmatpush1.msra.mxu0 0.0
      %1058 = vmatprep.subr.mxu0 0.0
      %1059 = vmatpush1.msra.mxu0 0.0
      %1060 = vmatprep.subr.mxu0 0.0
      %1061 = vmatpush1.msra.mxu0 0.0
      %1062 = vmatprep.subr.mxu0 0.0
      %1063 = vmatpush1.msra.mxu0 0.0
      %1064 = vmatprep.subr.mxu0 0.0
      %1065 = vmatpush1.msra.mxu0 0.0
      %1066 = vmatprep.subr.mxu0 0.0
      %1067 = vmatpush1.msra.mxu0 0.0
      %1068 = vmatprep.subr.mxu0 0.0
      %1069 = vmatpush1.msra.mxu0 0.0
      %1070 = vmatprep.subr.mxu0 0.0
      %1071 = vmatpush1.msra.mxu0 0.0
      %1072 = vmatprep.subr.mxu0 0.0
      %1073 = vmatpush1.msra.mxu0 0.0
      %1074 = vmatprep.subr.mxu0 0.0
      %1075 = vmatpush1.msra.mxu0 0.0
      %1076 = vmatprep.subr.mxu0 0.0
      %1077 = vmatpush1.msra.mxu0 0.0
      %1078 = vmatprep.subr.mxu0 0.0
      %1079 = vmatpush1.msra.mxu0 0.0
      %1080 = vmatprep.subr.mxu0 0.0
      %1081 = vmatpush1.msra.mxu0 0.0
      %1082 = vmatprep.subr.mxu0 0.0
      %1083 = vmatpush1.msra.mxu0 0.0
      %1084 = vmatprep.subr.mxu0 0.0
      %1085 = vmatpush1.msra.mxu0 0.0
      %1086 = vmatprep.mubr.f32.mxu0 0.0
      %1087 = vmatmul.mubr.f32.gmra.mrb[0].mxu0 %v1012
      %v1088 = vpop.f32.mrb[0].mxu0
      %v1089 = vadd.f32 0.0, %v1088
      %v1090 = vpop.f32.mrb[0].mxu0
      %1091 = vmatprep.mubr.f32.mxu0 0.0
      %1092 = vmatmul.mubr.f32.gmra.mrb[0].mxu0 %v1015
      %v1093 = vpop.f32.mrb[0].mxu0
      %v1094 = vadd.f32 0.0, %v1093
      %v1095 = vpop.f32.mrb[0].mxu0
      %1096 = vmatprep.mubr.f32.mxu0 0.0
      %1097 = vmatmul.mubr.f32.gmra.mrb[0].mxu0 %v1018
      %v1098 = vpop.f32.mrb[0].mxu0
      %v1099 = vadd.f32 0.0, %v1098
      %v1100 = vpop.f32.mrb[0].mxu0
      %1101 = vdwg.mxu0
      %1103 = vrot.lane.b32.xlu0 %v503, 32
      %v1104 = vpop.permute.xlu0 %1103
      %v1107 = vsel %vm626, %v1089, 0
      %v1110 = vsel %vm626, %v1094, 0
      %v1113 = vsel %vm626, %v1099, 0
      %1115 = vmatprep.subr.mxu0 0.0
      %1116 = vmatpush1.msra.mxu0 %v1104
      %1117 = vmatprep.subr.mxu0 0.0
      %1118 = vmatpush1.msra.mxu0 0.0
      %1119 = vmatprep.subr.mxu0 0.0
      %1120 = vmatpush1.msra.mxu0 0.0
      %1121 = vmatprep.subr.mxu0 0.0
      %1122 = vmatpush1.msra.mxu0 0.0
      %1123 = vmatprep.subr.mxu0 0.0
      %1124 = vmatpush1.msra.mxu0 0.0
      %1125 = vmatprep.subr.mxu0 0.0
      %1126 = vmatpush1.msra.mxu0 0.0
      %1127 = vmatprep.subr.mxu0 0.0
      %1128 = vmatpush1.msra.mxu0 0.0
      %1129 = vmatprep.subr.mxu0 0.0
      %1130 = vmatpush1.msra.mxu0 0.0
      %1131 = vmatprep.subr.mxu0 0.0
      %1132 = vmatpush1.msra.mxu0 0.0
      %1133 = vmatprep.subr.mxu0 0.0
      %1134 = vmatpush1.msra.mxu0 0.0
      %1135 = vmatprep.subr.mxu0 0.0
      %1136 = vmatpush1.msra.mxu0 0.0
      %1137 = vmatprep.subr.mxu0 0.0
      %1138 = vmatpush1.msra.mxu0 0.0
      %1139 = vmatprep.subr.mxu0 0.0
      %1140 = vmatpush1.msra.mxu0 0.0
      %1141 = vmatprep.subr.mxu0 0.0
      %1142 = vmatpush1.msra.mxu0 0.0
      %1143 = vmatprep.subr.mxu0 0.0
      %1144 = vmatpush1.msra.mxu0 0.0
      %1145 = vmatprep.subr.mxu0 0.0
      %1146 = vmatpush1.msra.mxu0 0.0
      %1147 = vmatprep.subr.mxu0 0.0
      %1148 = vmatpush1.msra.mxu0 0.0
      %1149 = vmatprep.subr.mxu0 0.0
      %1150 = vmatpush1.msra.mxu0 0.0
      %1151 = vmatprep.subr.mxu0 0.0
      %1152 = vmatpush1.msra.mxu0 0.0
      %1153 = vmatprep.subr.mxu0 0.0
      %1154 = vmatpush1.msra.mxu0 0.0
      %1155 = vmatprep.subr.mxu0 0.0
      %1156 = vmatpush1.msra.mxu0 0.0
      %1157 = vmatprep.subr.mxu0 0.0
      %1158 = vmatpush1.msra.mxu0 0.0
      %1159 = vmatprep.subr.mxu0 0.0
      %1160 = vmatpush1.msra.mxu0 0.0
      %1161 = vmatprep.subr.mxu0 0.0
      %1162 = vmatpush1.msra.mxu0 0.0
      %1163 = vmatprep.subr.mxu0 0.0
      %1164 = vmatpush1.msra.mxu0 0.0
      %1165 = vmatprep.subr.mxu0 0.0
      %1166 = vmatpush1.msra.mxu0 0.0
      %1167 = vmatprep.subr.mxu0 0.0
      %1168 = vmatpush1.msra.mxu0 0.0
      %1169 = vmatprep.subr.mxu0 0.0
      %1170 = vmatpush1.msra.mxu0 0.0
      %1171 = vmatprep.subr.mxu0 0.0
      %1172 = vmatpush1.msra.mxu0 0.0
      %1173 = vmatprep.subr.mxu0 0.0
      %1174 = vmatpush1.msra.mxu0 0.0
      %1175 = vmatprep.subr.mxu0 0.0
      %1176 = vmatpush1.msra.mxu0 0.0
      %1177 = vmatprep.subr.mxu0 0.0
      %1178 = vmatpush1.msra.mxu0 0.0
      %1179 = vmatprep.mubr.f32.mxu0 0.0
      %1180 = vmatmul.mubr.f32.gmra.mrb[0].mxu0 %v1107
      %v1181 = vpop.f32.mrb[0].mxu0
      %v1182 = vadd.f32 0.0, %v1181
      %v1183 = vpop.f32.mrb[0].mxu0
      %1184 = vmatprep.mubr.f32.mxu0 0.0
      %1185 = vmatmul.mubr.f32.gmra.mrb[0].mxu0 %v1110
      %v1186 = vpop.f32.mrb[0].mxu0
      %v1187 = vadd.f32 0.0, %v1186
      %v1188 = vpop.f32.mrb[0].mxu0
      %1189 = vmatprep.mubr.f32.mxu0 0.0
      %1190 = vmatmul.mubr.f32.gmra.mrb[0].mxu0 %v1113
      %v1191 = vpop.f32.mrb[0].mxu0
      %v1192 = vadd.f32 0.0, %v1191
      %v1193 = vpop.f32.mrb[0].mxu0
      %1194 = vdwg.mxu0
      %1196 = vrot.lane.b32.xlu0 %v502, 32
      %v1197 = vpop.permute.xlu0 %1196
      %v1200 = vsel %vm626, %v847, 0
      %v1203 = vsel %vm626, %v852, 0
      %v1206 = vsel %vm626, %v857, 0
      %1208 = vmatprep.subr.mxu0 0.0
      %1209 = vmatpush1.msra.mxu0 %v1197
      %1210 = vmatprep.subr.mxu0 0.0
      %1211 = vmatpush1.msra.mxu0 0.0
      %1212 = vmatprep.subr.mxu0 0.0
      %1213 = vmatpush1.msra.mxu0 0.0
      %1214 = vmatprep.subr.mxu0 0.0
      %1215 = vmatpush1.msra.mxu0 0.0
      %1216 = vmatprep.subr.mxu0 0.0
      %1217 = vmatpush1.msra.mxu0 0.0
      %1218 = vmatprep.subr.mxu0 0.0
      %1219 = vmatpush1.msra.mxu0 0.0
      %1220 = vmatprep.subr.mxu0 0.0
      %1221 = vmatpush1.msra.mxu0 0.0
      %1222 = vmatprep.subr.mxu0 0.0
      %1223 = vmatpush1.msra.mxu0 0.0
      %1224 = vmatprep.subr.mxu0 0.0
      %1225 = vmatpush1.msra.mxu0 0.0
      %1226 = vmatprep.subr.mxu0 0.0
      %1227 = vmatpush1.msra.mxu0 0.0
      %1228 = vmatprep.subr.mxu0 0.0
      %1229 = vmatpush1.msra.mxu0 0.0
      %1230 = vmatprep.subr.mxu0 0.0
      %1231 = vmatpush1.msra.mxu0 0.0
      %1232 = vmatprep.subr.mxu0 0.0
      %1233 = vmatpush1.msra.mxu0 0.0
      %1234 = vmatprep.subr.mxu0 0.0
      %1235 = vmatpush1.msra.mxu0 0.0
      %1236 = vmatprep.subr.mxu0 0.0
      %1237 = vmatpush1.msra.mxu0 0.0
      %1238 = vmatprep.subr.mxu0 0.0
      %1239 = vmatpush1.msra.mxu0 0.0
      %1240 = vmatprep.subr.mxu0 0.0
      %1241 = vmatpush1.msra.mxu0 0.0
      %1242 = vmatprep.subr.mxu0 0.0
      %1243 = vmatpush1.msra.mxu0 0.0
      %1244 = vmatprep.subr.mxu0 0.0
      %1245 = vmatpush1.msra.mxu0 0.0
      %1246 = vmatprep.subr.mxu0 0.0
      %1247 = vmatpush1.msra.mxu0 0.0
      %1248 = vmatprep.subr.mxu0 0.0
      %1249 = vmatpush1.msra.mxu0 0.0
      %1250 = vmatprep.subr.mxu0 0.0
      %1251 = vmatpush1.msra.mxu0 0.0
      %1252 = vmatprep.subr.mxu0 0.0
      %1253 = vmatpush1.msra.mxu0 0.0
      %1254 = vmatprep.subr.mxu0 0.0
      %1255 = vmatpush1.msra.mxu0 0.0
      %1256 = vmatprep.subr.mxu0 0.0
      %1257 = vmatpush1.msra.mxu0 0.0
      %1258 = vmatprep.subr.mxu0 0.0
      %1259 = vmatpush1.msra.mxu0 0.0
      %1260 = vmatprep.subr.mxu0 0.0
      %1261 = vmatpush1.msra.mxu0 0.0
      %1262 = vmatprep.subr.mxu0 0.0
      %1263 = vmatpush1.msra.mxu0 0.0
      %1264 = vmatprep.subr.mxu0 0.0
      %1265 = vmatpush1.msra.mxu0 0.0
      %1266 = vmatprep.subr.mxu0 0.0
      %1267 = vmatpush1.msra.mxu0 0.0
      %1268 = vmatprep.subr.mxu0 0.0
      %1269 = vmatpush1.msra.mxu0 0.0
      %1270 = vmatprep.subr.mxu0 0.0
      %1271 = vmatpush1.msra.mxu0 0.0
      %1272 = vmatprep.mubr.f32.mxu0 0.0
      %1273 = vmatmul.mubr.f32.gmra.mrb[0].mxu0 %v1200
      %v1274 = vpop.f32.mrb[0].mxu0
      %v1275 = vadd.f32 %v1182, %v1274
      %v1276 = vpop.f32.mrb[0].mxu0
      %1277 = vmatprep.mubr.f32.mxu0 0.0
      %1278 = vmatmul.mubr.f32.gmra.mrb[0].mxu0 %v1203
      %v1279 = vpop.f32.mrb[0].mxu0
      %v1280 = vadd.f32 %v1187, %v1279
      %v1281 = vpop.f32.mrb[0].mxu0
      %1282 = vmatprep.mubr.f32.mxu0 0.0
      %1283 = vmatmul.mubr.f32.gmra.mrb[0].mxu0 %v1206
      %v1284 = vpop.f32.mrb[0].mxu0
      %v1285 = vadd.f32 %v1192, %v1284
      %v1286 = vpop.f32.mrb[0].mxu0
      %1287 = vdwg.mxu0
      %1288 = vrot.lane.b32.xlu0 %v604, 112
      %v1289 = vpop.permute.xlu0 %1288
      %1290 = vrot.lane.b32.xlu0 %v609, 112
      %v1291 = vpop.permute.xlu0 %1290
      %1292 = vrot.lane.b32.xlu0 %v614, 112
      %v1293 = vpop.permute.xlu0 %1292
      %1294 = vrot.lane.b32.xlu0 %v604, 80
      %v1295 = vpop.permute.xlu0 %1294
      %1296 = vrot.lane.b32.xlu0 %v609, 80
      %v1297 = vpop.permute.xlu0 %1296
      %1298 = vrot.lane.b32.xlu0 %v614, 80
      %v1299 = vpop.permute.xlu0 %1298
      %v1300 = vsel %vm626, %v1289, 0
      %v1302 = vsel %vm626, %v1291, 0
      %v1304 = vsel %vm626, %v1293, 0
      %v1306 = vsel %vm626, %v1295, 0
      %v1308 = vsel %vm626, %v1297, 0
      %v1310 = vsel %vm626, %v1299, 0
      %1312 = vmatprep.subr.mxu0 0.0
      %1313 = vmatpush1.xpose.msra.mxu0 %v1306
      %1314 = vmatprep.subr.mxu0 0.0
      %1315 = vmatpush1.xpose.msra.mxu0 %v1308
      %1316 = vmatprep.subr.mxu0 0.0
      %1317 = vmatpush1.xpose.msra.mxu0 %v1310
      %1318 = vmatprep.subr.mxu0 0.0
      %1319 = vmatpush1.xpose.msra.mxu0 0.0
      %1320 = vmatprep.subr.mxu0 0.0
      %1321 = vmatpush1.xpose.msra.mxu0 0.0
      %1322 = vmatprep.subr.mxu0 0.0
      %1323 = vmatpush1.xpose.msra.mxu0 0.0
      %1324 = vmatprep.subr.mxu0 0.0
      %1325 = vmatpush1.xpose.msra.mxu0 0.0
      %1326 = vmatprep.subr.mxu0 0.0
      %1327 = vmatpush1.xpose.msra.mxu0 0.0
      %1328 = vmatprep.subr.mxu0 0.0
      %1329 = vmatpush1.xpose.msra.mxu0 0.0
      %1330 = vmatprep.subr.mxu0 0.0
      %1331 = vmatpush1.xpose.msra.mxu0 0.0
      %1332 = vmatprep.subr.mxu0 0.0
      %1333 = vmatpush1.xpose.msra.mxu0 0.0
      %1334 = vmatprep.subr.mxu0 0.0
      %1335 = vmatpush1.xpose.msra.mxu0 0.0
      %1336 = vmatprep.subr.mxu0 0.0
      %1337 = vmatpush1.xpose.msra.mxu0 0.0
      %1338 = vmatprep.subr.mxu0 0.0
      %1339 = vmatpush1.xpose.msra.mxu0 0.0
      %1340 = vmatprep.subr.mxu0 0.0
      %1341 = vmatpush1.xpose.msra.mxu0 0.0
      %1342 = vmatprep.subr.mxu0 0.0
      %1343 = vmatpush1.xpose.msra.mxu0 0.0
      %1344 = vmatprep.subr.mxu0 0.0
      %1345 = vmatpush1.xpose.msra.mxu0 0.0
      %1346 = vmatprep.subr.mxu0 0.0
      %1347 = vmatpush1.xpose.msra.mxu0 0.0
      %1348 = vmatprep.subr.mxu0 0.0
      %1349 = vmatpush1.xpose.msra.mxu0 0.0
      %1350 = vmatprep.subr.mxu0 0.0
      %1351 = vmatpush1.xpose.msra.mxu0 0.0
      %1352 = vmatprep.subr.mxu0 0.0
      %1353 = vmatpush1.xpose.msra.mxu0 0.0
      %1354 = vmatprep.subr.mxu0 0.0
      %1355 = vmatpush1.xpose.msra.mxu0 0.0
      %1356 = vmatprep.subr.mxu0 0.0
      %1357 = vmatpush1.xpose.msra.mxu0 0.0
      %1358 = vmatprep.subr.mxu0 0.0
      %1359 = vmatpush1.xpose.msra.mxu0 0.0
      %1360 = vmatprep.subr.mxu0 0.0
      %1361 = vmatpush1.xpose.msra.mxu0 0.0
      %1362 = vmatprep.subr.mxu0 0.0
      %1363 = vmatpush1.xpose.msra.mxu0 0.0
      %1364 = vmatprep.subr.mxu0 0.0
      %1365 = vmatpush1.xpose.msra.mxu0 0.0
      %1366 = vmatprep.subr.mxu0 0.0
      %1367 = vmatpush1.xpose.msra.mxu0 0.0
      %1368 = vmatprep.subr.mxu0 0.0
      %1369 = vmatpush1.xpose.msra.mxu0 0.0
      %1370 = vmatprep.subr.mxu0 0.0
      %1371 = vmatpush1.xpose.msra.mxu0 0.0
      %1372 = vmatprep.subr.mxu0 0.0
      %1373 = vmatpush1.xpose.msra.mxu0 0.0
      %1374 = vmatprep.subr.mxu0 0.0
      %1375 = vmatpush1.xpose.msra.mxu0 0.0
      %1376 = vmatprep.mubr.f32.mxu0 0.0
      %1377 = vmatmul.mubr.f32.gmra.mrb[0].mxu0 %v1300
      %v1378 = vpop.f32.mrb[0].mxu0
      %v1379 = vadd.f32 0.0, %v1378
      %v1380 = vpop.f32.mrb[0].mxu0
      %1381 = vmatprep.mubr.f32.mxu0 0.0
      %1382 = vmatmul.mubr.f32.gmra.mrb[0].mxu0 %v1302
      %v1383 = vpop.f32.mrb[0].mxu0
      %v1384 = vadd.f32 0.0, %v1383
      %v1385 = vpop.f32.mrb[0].mxu0
      %1386 = vmatprep.mubr.f32.mxu0 0.0
      %1387 = vmatmul.mubr.f32.gmra.mrb[0].mxu0 %v1304
      %v1388 = vpop.f32.mrb[0].mxu0
      %v1389 = vadd.f32 0.0, %v1388
      %v1390 = vpop.f32.mrb[0].mxu0
      %1391 = vdwg.mxu0
      %v1392 = vmul.f32 %v1379, 0.35355338
      %v1393 = vmul.f32 %v1384, 0.35355338
      %v1394 = vmul.f32 %v1389, 0.35355338
      %v1395 = vadd.f32 %v1392, 0.0
      %v1396 = vadd.f32 %v1393, 0.0
      %v1397 = vadd.f32 %v1394, 0.0
      %v1398 = vsel %vm725, %v1395, -inf
      %1399 = vmax.xlane.f32.xlu0 %v1398
      %v1400 = vpop.xlane.xlu0 %1399
      %v1401 = vsel %vm725, %v1396, -inf
      %1402 = vmax.xlane.f32.xlu0 %v1401
      %v1403 = vpop.xlane.xlu0 %1402
      %v1404 = vsel %vm732, %v1397, -inf
      %1405 = vmax.xlane.f32.xlu0 %v1404
      %v1406 = vpop.xlane.xlu0 %1405
      %v1407 = vsub.f32 %v1395, %v1400
      %v1408 = vsub.f32 %v1396, %v1403
      %v1409 = vsub.f32 %v1397, %v1406
      %v1410 = vmul.f32 %v1407, 1.442695
      %v1411 = vpow.pop %v1410
      %v1412 = vmul.f32 %v1408, 1.442695
      %v1413 = vpow.pop %v1412
      %v1414 = vmul.f32 %v1409, 1.442695
      %v1415 = vpow.pop %v1414
      %v1416 = vsel %vm725, %v1411, 0.0
      %1417 = vadd.xlane.f32.xlu0 %v1416
      %v1418 = vpop.xlane.xlu0 %1417
      %v1419 = vsel %vm725, %v1413, 0.0
      %1420 = vadd.xlane.f32.xlu0 %v1419
      %v1421 = vpop.xlane.xlu0 %1420
      %v1422 = vsel %vm732, %v1415, 0.0
      %1423 = vadd.xlane.f32.xlu0 %v1422
      %v1424 = vpop.xlane.xlu0 %1423
      %v1425 = vrcp.pop %v1418
      %v1426 = vrcp.pop %v1421
      %v1427 = vrcp.pop %v1424
      %v1428 = vmul.f32 %v1411, %v1425
      %v1429 = vmul.f32 %v1413, %v1426
      %v1430 = vmul.f32 %v1415, %v1427
      %1431 = vrot.lane.b32.xlu0 %v604, 48
      %v1432 = vpop.permute.xlu0 %1431
      %1433 = vrot.lane.b32.xlu0 %v609, 48
      %v1434 = vpop.permute.xlu0 %1433
      %1435 = vrot.lane.b32.xlu0 %v614, 48
      %v1436 = vpop.permute.xlu0 %1435
      %v1440 = vsel %vm725, %v1428, 0
      %v1443 = vsel %vm725, %v1429, 0
      %v1446 = vsel %vm725, %v1430, 0
      %v1448 = vsel %vm777, %v1436, 0
      %1450 = vmatprep.subr.mxu0 0.0
      %1451 = vmatpush1.msra.mxu0 %v1432
      %1452 = vmatprep.subr.mxu0 0.0
      %1453 = vmatpush1.msra.mxu0 %v1434
      %1454 = vmatprep.subr.mxu0 0.0
      %1455 = vmatpush1.msra.mxu0 %v1448
      %1456 = vmatprep.subr.mxu0 0.0
      %1457 = vmatpush1.msra.mxu0 0.0
      %1458 = vmatprep.subr.mxu0 0.0
      %1459 = vmatpush1.msra.mxu0 0.0
      %1460 = vmatprep.subr.mxu0 0.0
      %1461 = vmatpush1.msra.mxu0 0.0
      %1462 = vmatprep.subr.mxu0 0.0
      %1463 = vmatpush1.msra.mxu0 0.0
      %1464 = vmatprep.subr.mxu0 0.0
      %1465 = vmatpush1.msra.mxu0 0.0
      %1466 = vmatprep.subr.mxu0 0.0
      %1467 = vmatpush1.msra.mxu0 0.0
      %1468 = vmatprep.subr.mxu0 0.0
      %1469 = vmatpush1.msra.mxu0 0.0
      %1470 = vmatprep.subr.mxu0 0.0
      %1471 = vmatpush1.msra.mxu0 0.0
      %1472 = vmatprep.subr.mxu0 0.0
      %1473 = vmatpush1.msra.mxu0 0.0
      %1474 = vmatprep.subr.mxu0 0.0
      %1475 = vmatpush1.msra.mxu0 0.0
      %1476 = vmatprep.subr.mxu0 0.0
      %1477 = vmatpush1.msra.mxu0 0.0
      %1478 = vmatprep.subr.mxu0 0.0
      %1479 = vmatpush1.msra.mxu0 0.0
      %1480 = vmatprep.subr.mxu0 0.0
      %1481 = vmatpush1.msra.mxu0 0.0
      %1482 = vmatprep.subr.mxu0 0.0
      %1483 = vmatpush1.msra.mxu0 0.0
      %1484 = vmatprep.subr.mxu0 0.0
      %1485 = vmatpush1.msra.mxu0 0.0
      %1486 = vmatprep.subr.mxu0 0.0
      %1487 = vmatpush1.msra.mxu0 0.0
      %1488 = vmatprep.subr.mxu0 0.0
      %1489 = vmatpush1.msra.mxu0 0.0
      %1490 = vmatprep.subr.mxu0 0.0
      %1491 = vmatpush1.msra.mxu0 0.0
      %1492 = vmatprep.subr.mxu0 0.0
      %1493 = vmatpush1.msra.mxu0 0.0
      %1494 = vmatprep.subr.mxu0 0.0
      %1495 = vmatpush1.msra.mxu0 0.0
      %1496 = vmatprep.subr.mxu0 0.0
      %1497 = vmatpush1.msra.mxu0 0.0
      %1498 = vmatprep.subr.mxu0 0.0
      %1499 = vmatpush1.msra.mxu0 0.0
      %1500 = vmatprep.subr.mxu0 0.0
      %1501 = vmatpush1.msra.mxu0 0.0
      %1502 = vmatprep.subr.mxu0 0.0
      %1503 = vmatpush1.msra.mxu0 0.0
      %1504 = vmatprep.subr.mxu0 0.0
      %1505 = vmatpush1.msra.mxu0 0.0
      %1506 = vmatprep.subr.mxu0 0.0
      %1507 = vmatpush1.msra.mxu0 0.0
      %1508 = vmatprep.subr.mxu0 0.0
      %1509 = vmatpush1.msra.mxu0 0.0
      %1510 = vmatprep.subr.mxu0 0.0
      %1511 = vmatpush1.msra.mxu0 0.0
      %1512 = vmatprep.subr.mxu0 0.0
      %1513 = vmatpush1.msra.mxu0 0.0
      %1514 = vmatprep.mubr.f32.mxu0 0.0
      %1515 = vmatmul.mubr.f32.gmra.mrb[0].mxu0 %v1440
      %v1516 = vpop.f32.mrb[0].mxu0
      %v1517 = vadd.f32 0.0, %v1516
      %v1518 = vpop.f32.mrb[0].mxu0
      %1519 = vmatprep.mubr.f32.mxu0 0.0
      %1520 = vmatmul.mubr.f32.gmra.mrb[0].mxu0 %v1443
      %v1521 = vpop.f32.mrb[0].mxu0
      %v1522 = vadd.f32 0.0, %v1521
      %v1523 = vpop.f32.mrb[0].mxu0
      %1524 = vmatprep.mubr.f32.mxu0 0.0
      %1525 = vmatmul.mubr.f32.gmra.mrb[0].mxu0 %v1446
      %v1526 = vpop.f32.mrb[0].mxu0
      %v1527 = vadd.f32 0.0, %v1526
      %v1528 = vpop.f32.mrb[0].mxu0
      %1529 = vdwg.mxu0
      %1531 = vrot.lane.b32.xlu0 %v504, 32
      %v1532 = vpop.permute.xlu0 %1531
      %v1535 = vsel %vm626, %v1517, 0
      %v1538 = vsel %vm626, %v1522, 0
      %v1541 = vsel %vm626, %v1527, 0
      %1543 = vmatprep.subr.mxu0 0.0
      %1544 = vmatpush1.msra.mxu0 %v1532
      %1545 = vmatprep.subr.mxu0 0.0
      %1546 = vmatpush1.msra.mxu0 0.0
      %1547 = vmatprep.subr.mxu0 0.0
      %1548 = vmatpush1.msra.mxu0 0.0
      %1549 = vmatprep.subr.mxu0 0.0
      %1550 = vmatpush1.msra.mxu0 0.0
      %1551 = vmatprep.subr.mxu0 0.0
      %1552 = vmatpush1.msra.mxu0 0.0
      %1553 = vmatprep.subr.mxu0 0.0
      %1554 = vmatpush1.msra.mxu0 0.0
      %1555 = vmatprep.subr.mxu0 0.0
      %1556 = vmatpush1.msra.mxu0 0.0
      %1557 = vmatprep.subr.mxu0 0.0
      %1558 = vmatpush1.msra.mxu0 0.0
      %1559 = vmatprep.subr.mxu0 0.0
      %1560 = vmatpush1.msra.mxu0 0.0
      %1561 = vmatprep.subr.mxu0 0.0
      %1562 = vmatpush1.msra.mxu0 0.0
      %1563 = vmatprep.subr.mxu0 0.0
      %1564 = vmatpush1.msra.mxu0 0.0
      %1565 = vmatprep.subr.mxu0 0.0
      %1566 = vmatpush1.msra.mxu0 0.0
      %1567 = vmatprep.subr.mxu0 0.0
      %1568 = vmatpush1.msra.mxu0 0.0
      %1569 = vmatprep.subr.mxu0 0.0
      %1570 = vmatpush1.msra.mxu0 0.0
      %1571 = vmatprep.subr.mxu0 0.0
      %1572 = vmatpush1.msra.mxu0 0.0
      %1573 = vmatprep.subr.mxu0 0.0
      %1574 = vmatpush1.msra.mxu0 0.0
      %1575 = vmatprep.subr.mxu0 0.0
      %1576 = vmatpush1.msra.mxu0 0.0
      %1577 = vmatprep.subr.mxu0 0.0
      %1578 = vmatpush1.msra.mxu0 0.0
      %1579 = vmatprep.subr.mxu0 0.0
      %1580 = vmatpush1.msra.mxu0 0.0
      %1581 = vmatprep.subr.mxu0 0.0
      %1582 = vmatpush1.msra.mxu0 0.0
      %1583 = vmatprep.subr.mxu0 0.0
      %1584 = vmatpush1.msra.mxu0 0.0
      %1585 = vmatprep.subr.mxu0 0.0
      %1586 = vmatpush1.msra.mxu0 0.0
      %1587 = vmatprep.subr.mxu0 0.0
      %1588 = vmatpush1.msra.mxu0 0.0
      %1589 = vmatprep.subr.mxu0 0.0
      %1590 = vmatpush1.msra.mxu0 0.0
      %1591 = vmatprep.subr.mxu0 0.0
      %1592 = vmatpush1.msra.mxu0 0.0
      %1593 = vmatprep.subr.mxu0 0.0
      %1594 = vmatpush1.msra.mxu0 0.0
      %1595 = vmatprep.subr.mxu0 0.0
      %1596 = vmatpush1.msra.mxu0 0.0
      %1597 = vmatprep.subr.mxu0 0.0
      %1598 = vmatpush1.msra.mxu0 0.0
      %1599 = vmatprep.subr.mxu0 0.0
      %1600 = vmatpush1.msra.mxu0 0.0
      %1601 = vmatprep.subr.mxu0 0.0
      %1602 = vmatpush1.msra.mxu0 0.0
      %1603 = vmatprep.subr.mxu0 0.0
      %1604 = vmatpush1.msra.mxu0 0.0
      %1605 = vmatprep.subr.mxu0 0.0
      %1606 = vmatpush1.msra.mxu0 0.0
      %1607 = vmatprep.mubr.f32.mxu0 0.0
      %1608 = vmatmul.mubr.f32.gmra.mrb[0].mxu0 %v1535
      %v1609 = vpop.f32.mrb[0].mxu0
      %v1610 = vadd.f32 0.0, %v1609
      %v1611 = vpop.f32.mrb[0].mxu0
      %1612 = vmatprep.mubr.f32.mxu0 0.0
      %1613 = vmatmul.mubr.f32.gmra.mrb[0].mxu0 %v1538
      %v1614 = vpop.f32.mrb[0].mxu0
      %v1615 = vadd.f32 0.0, %v1614
      %v1616 = vpop.f32.mrb[0].mxu0
      %1617 = vmatprep.mubr.f32.mxu0 0.0
      %1618 = vmatmul.mubr.f32.gmra.mrb[0].mxu0 %v1541
      %v1619 = vpop.f32.mrb[0].mxu0
      %v1620 = vadd.f32 0.0, %v1619
      %v1621 = vpop.f32.mrb[0].mxu0
      %1622 = vdwg.mxu0
      %v1623 = vadd.f32 %v1275, %v1610
      %v1624 = vadd.f32 %v1280, %v1615
      %v1625 = vadd.f32 %v1285, %v1620
      %1626 = vrot.lane.b32.xlu0 %v604, 104
      %v1627 = vpop.permute.xlu0 %1626
      %1628 = vrot.lane.b32.xlu0 %v609, 104
      %v1629 = vpop.permute.xlu0 %1628
      %1630 = vrot.lane.b32.xlu0 %v614, 104
      %v1631 = vpop.permute.xlu0 %1630
      %1632 = vrot.lane.b32.xlu0 %v604, 72
      %v1633 = vpop.permute.xlu0 %1632
      %1634 = vrot.lane.b32.xlu0 %v609, 72
      %v1635 = vpop.permute.xlu0 %1634
      %1636 = vrot.lane.b32.xlu0 %v614, 72
      %v1637 = vpop.permute.xlu0 %1636
      %v1638 = vsel %vm626, %v1627, 0
      %v1640 = vsel %vm626, %v1629, 0
      %v1642 = vsel %vm626, %v1631, 0
      %v1644 = vsel %vm626, %v1633, 0
      %v1646 = vsel %vm626, %v1635, 0
      %v1648 = vsel %vm626, %v1637, 0
      %1650 = vmatprep.subr.mxu0 0.0
      %1651 = vmatpush1.xpose.msra.mxu0 %v1644
      %1652 = vmatprep.subr.mxu0 0.0
      %1653 = vmatpush1.xpose.msra.mxu0 %v1646
      %1654 = vmatprep.subr.mxu0 0.0
      %1655 = vmatpush1.xpose.msra.mxu0 %v1648
      %1656 = vmatprep.subr.mxu0 0.0
      %1657 = vmatpush1.xpose.msra.mxu0 0.0
      %1658 = vmatprep.subr.mxu0 0.0
      %1659 = vmatpush1.xpose.msra.mxu0 0.0
      %1660 = vmatprep.subr.mxu0 0.0
      %1661 = vmatpush1.xpose.msra.mxu0 0.0
      %1662 = vmatprep.subr.mxu0 0.0
      %1663 = vmatpush1.xpose.msra.mxu0 0.0
      %1664 = vmatprep.subr.mxu0 0.0
      %1665 = vmatpush1.xpose.msra.mxu0 0.0
      %1666 = vmatprep.subr.mxu0 0.0
      %1667 = vmatpush1.xpose.msra.mxu0 0.0
      %1668 = vmatprep.subr.mxu0 0.0
      %1669 = vmatpush1.xpose.msra.mxu0 0.0
      %1670 = vmatprep.subr.mxu0 0.0
      %1671 = vmatpush1.xpose.msra.mxu0 0.0
      %1672 = vmatprep.subr.mxu0 0.0
      %1673 = vmatpush1.xpose.msra.mxu0 0.0
      %1674 = vmatprep.subr.mxu0 0.0
      %1675 = vmatpush1.xpose.msra.mxu0 0.0
      %1676 = vmatprep.subr.mxu0 0.0
      %1677 = vmatpush1.xpose.msra.mxu0 0.0
      %1678 = vmatprep.subr.mxu0 0.0
      %1679 = vmatpush1.xpose.msra.mxu0 0.0
      %1680 = vmatprep.subr.mxu0 0.0
      %1681 = vmatpush1.xpose.msra.mxu0 0.0
      %1682 = vmatprep.subr.mxu0 0.0
      %1683 = vmatpush1.xpose.msra.mxu0 0.0
      %1684 = vmatprep.subr.mxu0 0.0
      %1685 = vmatpush1.xpose.msra.mxu0 0.0
      %1686 = vmatprep.subr.mxu0 0.0
      %1687 = vmatpush1.xpose.msra.mxu0 0.0
      %1688 = vmatprep.subr.mxu0 0.0
      %1689 = vmatpush1.xpose.msra.mxu0 0.0
      %1690 = vmatprep.subr.mxu0 0.0
      %1691 = vmatpush1.xpose.msra.mxu0 0.0
      %1692 = vmatprep.subr.mxu0 0.0
      %1693 = vmatpush1.xpose.msra.mxu0 0.0
      %1694 = vmatprep.subr.mxu0 0.0
      %1695 = vmatpush1.xpose.msra.mxu0 0.0
      %1696 = vmatprep.subr.mxu0 0.0
      %1697 = vmatpush1.xpose.msra.mxu0 0.0
      %1698 = vmatprep.subr.mxu0 0.0
      %1699 = vmatpush1.xpose.msra.mxu0 0.0
      %1700 = vmatprep.subr.mxu0 0.0
      %1701 = vmatpush1.xpose.msra.mxu0 0.0
      %1702 = vmatprep.subr.mxu0 0.0
      %1703 = vmatpush1.xpose.msra.mxu0 0.0
      %1704 = vmatprep.subr.mxu0 0.0
      %1705 = vmatpush1.xpose.msra.mxu0 0.0
      %1706 = vmatprep.subr.mxu0 0.0
      %1707 = vmatpush1.xpose.msra.mxu0 0.0
      %1708 = vmatprep.subr.mxu0 0.0
      %1709 = vmatpush1.xpose.msra.mxu0 0.0
      %1710 = vmatprep.subr.mxu0 0.0
      %1711 = vmatpush1.xpose.msra.mxu0 0.0
      %1712 = vmatprep.subr.mxu0 0.0
      %1713 = vmatpush1.xpose.msra.mxu0 0.0
      %1714 = vmatprep.mubr.f32.mxu0 0.0
      %1715 = vmatmul.mubr.f32.gmra.mrb[0].mxu0 %v1638
      %v1716 = vpop.f32.mrb[0].mxu0
      %v1717 = vadd.f32 0.0, %v1716
      %v1718 = vpop.f32.mrb[0].mxu0
      %1719 = vmatprep.mubr.f32.mxu0 0.0
      %1720 = vmatmul.mubr.f32.gmra.mrb[0].mxu0 %v1640
      %v1721 = vpop.f32.mrb[0].mxu0
      %v1722 = vadd.f32 0.0, %v1721
      %v1723 = vpop.f32.mrb[0].mxu0
      %1724 = vmatprep.mubr.f32.mxu0 0.0
      %1725 = vmatmul.mubr.f32.gmra.mrb[0].mxu0 %v1642
      %v1726 = vpop.f32.mrb[0].mxu0
      %v1727 = vadd.f32 0.0, %v1726
      %v1728 = vpop.f32.mrb[0].mxu0
      %1729 = vdwg.mxu0
      %v1730 = vmul.f32 %v1717, 0.35355338
      %v1731 = vmul.f32 %v1722, 0.35355338
      %v1732 = vmul.f32 %v1727, 0.35355338
      %v1733 = vadd.f32 %v1730, 0.0
      %v1734 = vadd.f32 %v1731, 0.0
      %v1735 = vadd.f32 %v1732, 0.0
      %v1736 = vsel %vm725, %v1733, -inf
      %1737 = vmax.xlane.f32.xlu0 %v1736
      %v1738 = vpop.xlane.xlu0 %1737
      %v1739 = vsel %vm725, %v1734, -inf
      %1740 = vmax.xlane.f32.xlu0 %v1739
      %v1741 = vpop.xlane.xlu0 %1740
      %v1742 = vsel %vm732, %v1735, -inf
      %1743 = vmax.xlane.f32.xlu0 %v1742
      %v1744 = vpop.xlane.xlu0 %1743
      %v1745 = vsub.f32 %v1733, %v1738
      %v1746 = vsub.f32 %v1734, %v1741
      %v1747 = vsub.f32 %v1735, %v1744
      %v1748 = vmul.f32 %v1745, 1.442695
      %v1749 = vpow.pop %v1748
      %v1750 = vmul.f32 %v1746, 1.442695
      %v1751 = vpow.pop %v1750
      %v1752 = vmul.f32 %v1747, 1.442695
      %v1753 = vpow.pop %v1752
      %v1754 = vsel %vm725, %v1749, 0.0
      %1755 = vadd.xlane.f32.xlu0 %v1754
      %v1756 = vpop.xlane.xlu0 %1755
      %v1757 = vsel %vm725, %v1751, 0.0
      %1758 = vadd.xlane.f32.xlu0 %v1757
      %v1759 = vpop.xlane.xlu0 %1758
      %v1760 = vsel %vm732, %v1753, 0.0
      %1761 = vadd.xlane.f32.xlu0 %v1760
      %v1762 = vpop.xlane.xlu0 %1761
      %v1763 = vrcp.pop %v1756
      %v1764 = vrcp.pop %v1759
      %v1765 = vrcp.pop %v1762
      %v1766 = vmul.f32 %v1749, %v1763
      %v1767 = vmul.f32 %v1751, %v1764
      %v1768 = vmul.f32 %v1753, %v1765
      %1769 = vrot.lane.b32.xlu0 %v604, 40
      %v1770 = vpop.permute.xlu0 %1769
      %1771 = vrot.lane.b32.xlu0 %v609, 40
      %v1772 = vpop.permute.xlu0 %1771
      %1773 = vrot.lane.b32.xlu0 %v614, 40
      %v1774 = vpop.permute.xlu0 %1773
      %v1778 = vsel %vm725, %v1766, 0
      %v1781 = vsel %vm725, %v1767, 0
      %v1784 = vsel %vm725, %v1768, 0
      %v1786 = vsel %vm777, %v1774, 0
      %1788 = vmatprep.subr.mxu0 0.0
      %1789 = vmatpush1.msra.mxu0 %v1770
      %1790 = vmatprep.subr.mxu0 0.0
      %1791 = vmatpush1.msra.mxu0 %v1772
      %1792 = vmatprep.subr.mxu0 0.0
      %1793 = vmatpush1.msra.mxu0 %v1786
      %1794 = vmatprep.subr.mxu0 0.0
      %1795 = vmatpush1.msra.mxu0 0.0
      %1796 = vmatprep.subr.mxu0 0.0
      %1797 = vmatpush1.msra.mxu0 0.0
      %1798 = vmatprep.subr.mxu0 0.0
      %1799 = vmatpush1.msra.mxu0 0.0
      %1800 = vmatprep.subr.mxu0 0.0
      %1801 = vmatpush1.msra.mxu0 0.0
      %1802 = vmatprep.subr.mxu0 0.0
      %1803 = vmatpush1.msra.mxu0 0.0
      %1804 = vmatprep.subr.mxu0 0.0
      %1805 = vmatpush1.msra.mxu0 0.0
      %1806 = vmatprep.subr.mxu0 0.0
      %1807 = vmatpush1.msra.mxu0 0.0
      %1808 = vmatprep.subr.mxu0 0.0
      %1809 = vmatpush1.msra.mxu0 0.0
      %1810 = vmatprep.subr.mxu0 0.0
      %1811 = vmatpush1.msra.mxu0 0.0
      %1812 = vmatprep.subr.mxu0 0.0
      %1813 = vmatpush1.msra.mxu0 0.0
      %1814 = vmatprep.subr.mxu0 0.0
      %1815 = vmatpush1.msra.mxu0 0.0
      %1816 = vmatprep.subr.mxu0 0.0
      %1817 = vmatpush1.msra.mxu0 0.0
      %1818 = vmatprep.subr.mxu0 0.0
      %1819 = vmatpush1.msra.mxu0 0.0
      %1820 = vmatprep.subr.mxu0 0.0
      %1821 = vmatpush1.msra.mxu0 0.0
      %1822 = vmatprep.subr.mxu0 0.0
      %1823 = vmatpush1.msra.mxu0 0.0
      %1824 = vmatprep.subr.mxu0 0.0
      %1825 = vmatpush1.msra.mxu0 0.0
      %1826 = vmatprep.subr.mxu0 0.0
      %1827 = vmatpush1.msra.mxu0 0.0
      %1828 = vmatprep.subr.mxu0 0.0
      %1829 = vmatpush1.msra.mxu0 0.0
      %1830 = vmatprep.subr.mxu0 0.0
      %1831 = vmatpush1.msra.mxu0 0.0
      %1832 = vmatprep.subr.mxu0 0.0
      %1833 = vmatpush1.msra.mxu0 0.0
      %1834 = vmatprep.subr.mxu0 0.0
      %1835 = vmatpush1.msra.mxu0 0.0
      %1836 = vmatprep.subr.mxu0 0.0
      %1837 = vmatpush1.msra.mxu0 0.0
      %1838 = vmatprep.subr.mxu0 0.0
      %1839 = vmatpush1.msra.mxu0 0.0
      %1840 = vmatprep.subr.mxu0 0.0
      %1841 = vmatpush1.msra.mxu0 0.0
      %1842 = vmatprep.subr.mxu0 0.0
      %1843 = vmatpush1.msra.mxu0 0.0
      %1844 = vmatprep.subr.mxu0 0.0
      %1845 = vmatpush1.msra.mxu0 0.0
      %1846 = vmatprep.subr.mxu0 0.0
      %1847 = vmatpush1.msra.mxu0 0.0
      %1848 = vmatprep.subr.mxu0 0.0
      %1849 = vmatpush1.msra.mxu0 0.0
      %1850 = vmatprep.subr.mxu0 0.0
      %1851 = vmatpush1.msra.mxu0 0.0
      %1852 = vmatprep.mubr.f32.mxu0 0.0
      %1853 = vmatmul.mubr.f32.gmra.mrb[0].mxu0 %v1778
      %v1854 = vpop.f32.mrb[0].mxu0
      %v1855 = vadd.f32 0.0, %v1854
      %v1856 = vpop.f32.mrb[0].mxu0
      %1857 = vmatprep.mubr.f32.mxu0 0.0
      %1858 = vmatmul.mubr.f32.gmra.mrb[0].mxu0 %v1781
      %v1859 = vpop.f32.mrb[0].mxu0
      %v1860 = vadd.f32 0.0, %v1859
      %v1861 = vpop.f32.mrb[0].mxu0
      %1862 = vmatprep.mubr.f32.mxu0 0.0
      %1863 = vmatmul.mubr.f32.gmra.mrb[0].mxu0 %v1784
      %v1864 = vpop.f32.mrb[0].mxu0
      %v1865 = vadd.f32 0.0, %v1864
      %v1866 = vpop.f32.mrb[0].mxu0
      %1867 = vdwg.mxu0
      %1869 = vrot.lane.b32.xlu0 %v505, 32
      %v1870 = vpop.permute.xlu0 %1869
      %v1873 = vsel %vm626, %v1855, 0
      %v1876 = vsel %vm626, %v1860, 0
      %v1879 = vsel %vm626, %v1865, 0
      %1881 = vmatprep.subr.mxu0 0.0
      %1882 = vmatpush1.msra.mxu0 %v1870
      %1883 = vmatprep.subr.mxu0 0.0
      %1884 = vmatpush1.msra.mxu0 0.0
      %1885 = vmatprep.subr.mxu0 0.0
      %1886 = vmatpush1.msra.mxu0 0.0
      %1887 = vmatprep.subr.mxu0 0.0
      %1888 = vmatpush1.msra.mxu0 0.0
      %1889 = vmatprep.subr.mxu0 0.0
      %1890 = vmatpush1.msra.mxu0 0.0
      %1891 = vmatprep.subr.mxu0 0.0
      %1892 = vmatpush1.msra.mxu0 0.0
      %1893 = vmatprep.subr.mxu0 0.0
      %1894 = vmatpush1.msra.mxu0 0.0
      %1895 = vmatprep.subr.mxu0 0.0
      %1896 = vmatpush1.msra.mxu0 0.0
      %1897 = vmatprep.subr.mxu0 0.0
      %1898 = vmatpush1.msra.mxu0 0.0
      %1899 = vmatprep.subr.mxu0 0.0
      %1900 = vmatpush1.msra.mxu0 0.0
      %1901 = vmatprep.subr.mxu0 0.0
      %1902 = vmatpush1.msra.mxu0 0.0
      %1903 = vmatprep.subr.mxu0 0.0
      %1904 = vmatpush1.msra.mxu0 0.0
      %1905 = vmatprep.subr.mxu0 0.0
      %1906 = vmatpush1.msra.mxu0 0.0
      %1907 = vmatprep.subr.mxu0 0.0
      %1908 = vmatpush1.msra.mxu0 0.0
      %1909 = vmatprep.subr.mxu0 0.0
      %1910 = vmatpush1.msra.mxu0 0.0
      %1911 = vmatprep.subr.mxu0 0.0
      %1912 = vmatpush1.msra.mxu0 0.0
      %1913 = vmatprep.subr.mxu0 0.0
      %1914 = vmatpush1.msra.mxu0 0.0
      %1915 = vmatprep.subr.mxu0 0.0
      %1916 = vmatpush1.msra.mxu0 0.0
      %1917 = vmatprep.subr.mxu0 0.0
      %1918 = vmatpush1.msra.mxu0 0.0
      %1919 = vmatprep.subr.mxu0 0.0
      %1920 = vmatpush1.msra.mxu0 0.0
      %1921 = vmatprep.subr.mxu0 0.0
      %1922 = vmatpush1.msra.mxu0 0.0
      %1923 = vmatprep.subr.mxu0 0.0
      %1924 = vmatpush1.msra.mxu0 0.0
      %1925 = vmatprep.subr.mxu0 0.0
      %1926 = vmatpush1.msra.mxu0 0.0
      %1927 = vmatprep.subr.mxu0 0.0
      %1928 = vmatpush1.msra.mxu0 0.0
      %1929 = vmatprep.subr.mxu0 0.0
      %1930 = vmatpush1.msra.mxu0 0.0
      %1931 = vmatprep.subr.mxu0 0.0
      %1932 = vmatpush1.msra.mxu0 0.0
      %1933 = vmatprep.subr.mxu0 0.0
      %1934 = vmatpush1.msra.mxu0 0.0
      %1935 = vmatprep.subr.mxu0 0.0
      %1936 = vmatpush1.msra.mxu0 0.0
      %1937 = vmatprep.subr.mxu0 0.0
      %1938 = vmatpush1.msra.mxu0 0.0
      %1939 = vmatprep.subr.mxu0 0.0
      %1940 = vmatpush1.msra.mxu0 0.0
      %1941 = vmatprep.subr.mxu0 0.0
      %1942 = vmatpush1.msra.mxu0 0.0
      %1943 = vmatprep.subr.mxu0 0.0
      %1944 = vmatpush1.msra.mxu0 0.0
      %1945 = vmatprep.mubr.f32.mxu0 0.0
      %1946 = vmatmul.mubr.f32.gmra.mrb[0].mxu0 %v1873
      %v1947 = vpop.f32.mrb[0].mxu0
      %v1948 = vadd.f32 0.0, %v1947
      %v1949 = vpop.f32.mrb[0].mxu0
      %1950 = vmatprep.mubr.f32.mxu0 0.0
      %1951 = vmatmul.mubr.f32.gmra.mrb[0].mxu0 %v1876
      %v1952 = vpop.f32.mrb[0].mxu0
      %v1953 = vadd.f32 0.0, %v1952
      %v1954 = vpop.f32.mrb[0].mxu0
      %1955 = vmatprep.mubr.f32.mxu0 0.0
      %1956 = vmatmul.mubr.f32.gmra.mrb[0].mxu0 %v1879
      %v1957 = vpop.f32.mrb[0].mxu0
      %v1958 = vadd.f32 0.0, %v1957
      %v1959 = vpop.f32.mrb[0].mxu0
      %1960 = vdwg.mxu0
      %v1961 = vadd.f32 %v1623, %v1948
      %v1962 = vadd.f32 %v1624, %v1953
      %v1963 = vadd.f32 %v1625, %v1958
      %1964 = vrot.lane.b32.xlu0 %v525, 32
      %v1965 = vpop.permute.xlu0 %1964
      %v1967 = vadd.f32 %v1961, %v1965
      %v1968 = vadd.f32 %v1962, %v1965
      %v1969 = vadd.f32 %v1963, %v1965
      %v1970 = vadd.f32 %v498, %v1967
      %v1971 = vadd.f32 %v499, %v1968
      %v1972 = vadd.f32 %v500, %v1969
      %v1973 = vsel %vm527, %v1970, 0.0
      %1974 = vadd.xlane.f32.xlu0 %v1973
      %v1975 = vpop.xlane.xlu0 %1974
      %v1976 = vsel %vm527, %v1971, 0.0
      %1977 = vadd.xlane.f32.xlu0 %v1976
      %v1978 = vpop.xlane.xlu0 %1977
      %vm1979 = vcmask 253952
      %v1980 = vsel %vm1979, %v1972, 0.0
      %1981 = vadd.xlane.f32.xlu0 %v1980
      %v1982 = vpop.xlane.xlu0 %1981
      %v1983 = vrcp.pop 32.0
      %v1984 = vmul.f32 %v1975, %v1983
      %v1985 = vmul.f32 %v1978, %v1983
      %v1986 = vmul.f32 %v1982, %v1983
      %v1987 = vsub.f32 %v1970, %v1984
      %v1988 = vsub.f32 %v1971, %v1985
      %v1989 = vsub.f32 %v1972, %v1986
      %v1990 = vmul.f32 %v1987, %v1987
      %v1991 = vmul.f32 %v1988, %v1988
      %v1992 = vmul.f32 %v1989, %v1989
      %v1993 = vsel %vm527, %v1990, 0.0
      %1994 = vadd.xlane.f32.xlu0 %v1993
      %v1995 = vpop.xlane.xlu0 %1994
      %v1996 = vsel %vm527, %v1991, 0.0
      %1997 = vadd.xlane.f32.xlu0 %v1996
      %v1998 = vpop.xlane.xlu0 %1997
      %v1999 = vsel %vm1979, %v1992, 0.0
      %2000 = vadd.xlane.f32.xlu0 %v1999
      %v2001 = vpop.xlane.xlu0 %2000
      %v2002 = vmul.f32 %v1995, %v1983
      %v2003 = vmul.f32 %v1998, %v1983
      %v2004 = vmul.f32 %v2001, %v1983
      %v2005 = vadd.f32 %v2002, 1e-12
      %v2006 = vadd.f32 %v2003, 1e-12
      %v2007 = vadd.f32 %v2004, 1e-12
      %v2008 = vrsqrt.pop %v2005
      %v2009 = vrsqrt.pop %v2006
      %v2010 = vrsqrt.pop %v2007
      %v2011 = vmul.f32 %v1987, %v2008
      %v2012 = vmul.f32 %v1988, %v2009
      %v2013 = vmul.f32 %v1989, %v2010
      %v2014 = vlaneseq
      %v2015 = vshrl.u32 %v2014, 7
      %v2016 = vsub.s32 0, %v2015
      %v2017 = vrot.slane %v501, %v2016
      %v2018 = vmul.f32 %v2011, %v2017
      %v2019 = vmul.f32 %v2012, %v2017
      %v2020 = vmul.f32 %v2013, %v2017
      %v2021 = vlaneseq
      %v2022 = vshrl.u32 %v2021, 7
      %v2023 = vsub.s32 1, %v2022
      %v2024 = vrot.slane %v501, %v2023
      %v2025 = vadd.f32 %v2018, %v2024
      %v2026 = vadd.f32 %v2019, %v2024
      %v2027 = vadd.f32 %v2020, %v2024
      %v2029 = vlaneseq
      %v2030 = vshrl.u32 %v2029, 7
      %v2031 = vsub.s32 0, %v2030
      %v2032 = vrot.slane %v511, %v2031
      %v2035 = vsel %vm527, %v2025, 0
      %v2038 = vsel %vm527, %v2026, 0
      %v2041 = vsel %vm527, %v2027, 0
      %2043 = vmatprep.subr.mxu0 0.0
      %2044 = vmatpush1.msra.mxu0 %v507
      %2045 = vmatprep.subr.mxu0 0.0
      %2046 = vmatpush1.msra.mxu0 %v508
      %2047 = vmatprep.subr.mxu0 0.0
      %2048 = vmatpush1.msra.mxu0 %v509
      %2049 = vmatprep.subr.mxu0 0.0
      %2050 = vmatpush1.msra.mxu0 %v510
      %2051 = vmatprep.subr.mxu0 0.0
      %2052 = vmatpush1.msra.mxu0 0.0
      %2053 = vmatprep.subr.mxu0 0.0
      %2054 = vmatpush1.msra.mxu0 0.0
      %2055 = vmatprep.subr.mxu0 0.0
      %2056 = vmatpush1.msra.mxu0 0.0
      %2057 = vmatprep.subr.mxu0 0.0
      %2058 = vmatpush1.msra.mxu0 0.0
      %2059 = vmatprep.subr.mxu0 0.0
      %2060 = vmatpush1.msra.mxu0 0.0
      %2061 = vmatprep.subr.mxu0 0.0
      %2062 = vmatpush1.msra.mxu0 0.0
      %2063 = vmatprep.subr.mxu0 0.0
      %2064 = vmatpush1.msra.mxu0 0.0
      %2065 = vmatprep.subr.mxu0 0.0
      %2066 = vmatpush1.msra.mxu0 0.0
      %2067 = vmatprep.subr.mxu0 0.0
      %2068 = vmatpush1.msra.mxu0 0.0
      %2069 = vmatprep.subr.mxu0 0.0
      %2070 = vmatpush1.msra.mxu0 0.0
      %2071 = vmatprep.subr.mxu0 0.0
      %2072 = vmatpush1.msra.mxu0 0.0
      %2073 = vmatprep.subr.mxu0 0.0
      %2074 = vmatpush1.msra.mxu0 0.0
      %2075 = vmatprep.subr.mxu0 0.0
      %2076 = vmatpush1.msra.mxu0 0.0
      %2077 = vmatprep.subr.mxu0 0.0
      %2078 = vmatpush1.msra.mxu0 0.0
      %2079 = vmatprep.subr.mxu0 0.0
      %2080 = vmatpush1.msra.mxu0 0.0
      %2081 = vmatprep.subr.mxu0 0.0
      %2082 = vmatpush1.msra.mxu0 0.0
      %2083 = vmatprep.subr.mxu0 0.0
      %2084 = vmatpush1.msra.mxu0 0.0
      %2085 = vmatprep.subr.mxu0 0.0
      %2086 = vmatpush1.msra.mxu0 0.0
      %2087 = vmatprep.subr.mxu0 0.0
      %2088 = vmatpush1.msra.mxu0 0.0
      %2089 = vmatprep.subr.mxu0 0.0
      %2090 = vmatpush1.msra.mxu0 0.0
      %2091 = vmatprep.subr.mxu0 0.0
      %2092 = vmatpush1.msra.mxu0 0.0
      %2093 = vmatprep.subr.mxu0 0.0
      %2094 = vmatpush1.msra.mxu0 0.0
      %2095 = vmatprep.subr.mxu0 0.0
      %2096 = vmatpush1.msra.mxu0 0.0
      %2097 = vmatprep.subr.mxu0 0.0
      %2098 = vmatpush1.msra.mxu0 0.0
      %2099 = vmatprep.subr.mxu0 0.0
      %2100 = vmatpush1.msra.mxu0 0.0
      %2101 = vmatprep.subr.mxu0 0.0
      %2102 = vmatpush1.msra.mxu0 0.0
      %2103 = vmatprep.subr.mxu0 0.0
      %2104 = vmatpush1.msra.mxu0 0.0
      %2105 = vmatprep.subr.mxu0 0.0
      %2106 = vmatpush1.msra.mxu0 0.0
      %2107 = vmatprep.mubr.f32.mxu0 0.0
      %2108 = vmatmul.mubr.f32.gmra.mrb[0].mxu0 %v2035
      %v2109 = vpop.f32.mrb[0].mxu0
      %v2110 = vadd.f32 %v2032, %v2109
      %v2111 = vpop.f32.mrb[0].mxu0
      %2112 = vmatprep.mubr.f32.mxu0 0.0
      %2113 = vmatmul.mubr.f32.gmra.mrb[0].mxu0 %v2038
      %v2114 = vpop.f32.mrb[0].mxu0
      %v2115 = vadd.f32 %v2032, %v2114
      %v2116 = vpop.f32.mrb[0].mxu0
      %2117 = vmatprep.mubr.f32.mxu0 0.0
      %2118 = vmatmul.mubr.f32.gmra.mrb[0].mxu0 %v2041
      %v2119 = vpop.f32.mrb[0].mxu0
      %v2120 = vadd.f32 %v2032, %v2119
      %v2121 = vpop.f32.mrb[0].mxu0
      %2122 = vdwg.mxu0
      %v2123 = vmul.f32 %v2110, 0.5
      %v2124 = vmul.f32 %v2115, 0.5
      %v2125 = vmul.f32 %v2120, 0.5
      %v2126 = vmul.f32 %v2110, 0.044715
      %v2127 = vmul.f32 %v2115, 0.044715
      %v2128 = vmul.f32 %v2120, 0.044715
      %v2129 = vmul.f32 %v2126, %v2110
      %v2130 = vmul.f32 %v2127, %v2115
      %v2131 = vmul.f32 %v2128, %v2120
      %v2132 = vmul.f32 %v2129, %v2110
      %v2133 = vmul.f32 %v2130, %v2115
      %v2134 = vmul.f32 %v2131, %v2120
      %v2135 = vadd.f32 %v2110, %v2132
      %v2136 = vadd.f32 %v2115, %v2133
      %v2137 = vadd.f32 %v2120, %v2134
      %v2138 = vmul.f32 %v2135, 0.7978846
      %v2139 = vmul.f32 %v2136, 0.7978846
      %v2140 = vmul.f32 %v2137, 0.7978846
      %v2141 = vtanh.pop %v2138
      %v2142 = vtanh.pop %v2139
      %v2143 = vtanh.pop %v2140
      %v2144 = vadd.f32 %v2141, 1.0
      %v2145 = vadd.f32 %v2142, 1.0
      %v2146 = vadd.f32 %v2143, 1.0
      %v2147 = vmul.f32 %v2123, %v2144
      %v2148 = vmul.f32 %v2124, %v2145
      %v2149 = vmul.f32 %v2125, %v2146
      %v2151 = vlaneseq
      %v2152 = vshrl.u32 %v2151, 7
      %v2153 = vsub.s32 0, %v2152
      %v2154 = vrot.slane %v520, %v2153
      %v2157 = vsel %vm405, %v2147, 0
      %v2160 = vsel %vm405, %v2148, 0
      %v2163 = vsel %vm405, %v2149, 0
      %2165 = vmatprep.subr.mxu0 0.0
      %2166 = vmatpush1.msra.mxu0 %v512
      %2167 = vmatprep.subr.mxu0 0.0
      %2168 = vmatpush1.msra.mxu0 %v513
      %2169 = vmatprep.subr.mxu0 0.0
      %2170 = vmatpush1.msra.mxu0 %v514
      %2171 = vmatprep.subr.mxu0 0.0
      %2172 = vmatpush1.msra.mxu0 %v515
      %2173 = vmatprep.subr.mxu0 0.0
      %2174 = vmatpush1.msra.mxu0 %v516
      %2175 = vmatprep.subr.mxu0 0.0
      %2176 = vmatpush1.msra.mxu0 %v517
      %2177 = vmatprep.subr.mxu0 0.0
      %2178 = vmatpush1.msra.mxu0 %v518
      %2179 = vmatprep.subr.mxu0 0.0
      %2180 = vmatpush1.msra.mxu0 %v519
      %2181 = vmatprep.subr.mxu0 0.0
      %2182 = vmatpush1.msra.mxu0 0.0
      %2183 = vmatprep.subr.mxu0 0.0
      %2184 = vmatpush1.msra.mxu0 0.0
      %2185 = vmatprep.subr.mxu0 0.0
      %2186 = vmatpush1.msra.mxu0 0.0
      %2187 = vmatprep.subr.mxu0 0.0
      %2188 = vmatpush1.msra.mxu0 0.0
      %2189 = vmatprep.subr.mxu0 0.0
      %2190 = vmatpush1.msra.mxu0 0.0
      %2191 = vmatprep.subr.mxu0 0.0
      %2192 = vmatpush1.msra.mxu0 0.0
      %2193 = vmatprep.subr.mxu0 0.0
      %2194 = vmatpush1.msra.mxu0 0.0
      %2195 = vmatprep.subr.mxu0 0.0
      %2196 = vmatpush1.msra.mxu0 0.0
      %2197 = vmatprep.subr.mxu0 0.0
      %2198 = vmatpush1.msra.mxu0 0.0
      %2199 = vmatprep.subr.mxu0 0.0
      %2200 = vmatpush1.msra.mxu0 0.0
      %2201 = vmatprep.subr.mxu0 0.0
      %2202 = vmatpush1.msra.mxu0 0.0
      %2203 = vmatprep.subr.mxu0 0.0
      %2204 = vmatpush1.msra.mxu0 0.0
      %2205 = vmatprep.subr.mxu0 0.0
      %2206 = vmatpush1.msra.mxu0 0.0
      %2207 = vmatprep.subr.mxu0 0.0
      %2208 = vmatpush1.msra.mxu0 0.0
      %2209 = vmatprep.subr.mxu0 0.0
      %2210 = vmatpush1.msra.mxu0 0.0
      %2211 = vmatprep.subr.mxu0 0.0
      %2212 = vmatpush1.msra.mxu0 0.0
      %2213 = vmatprep.subr.mxu0 0.0
      %2214 = vmatpush1.msra.mxu0 0.0
      %2215 = vmatprep.subr.mxu0 0.0
      %2216 = vmatpush1.msra.mxu0 0.0
      %2217 = vmatprep.subr.mxu0 0.0
      %2218 = vmatpush1.msra.mxu0 0.0
      %2219 = vmatprep.subr.mxu0 0.0
      %2220 = vmatpush1.msra.mxu0 0.0
      %2221 = vmatprep.subr.mxu0 0.0
      %2222 = vmatpush1.msra.mxu0 0.0
      %2223 = vmatprep.subr.mxu0 0.0
      %2224 = vmatpush1.msra.mxu0 0.0
      %2225 = vmatprep.subr.mxu0 0.0
      %2226 = vmatpush1.msra.mxu0 0.0
      %2227 = vmatprep.subr.mxu0 0.0
      %2228 = vmatpush1.msra.mxu0 0.0
      %2229 = vmatprep.mubr.f32.mxu0 0.0
      %2230 = vmatmul.mubr.f32.gmra.mrb[0].mxu0 %v2157
      %v2231 = vpop.f32.mrb[0].mxu0
      %v2232 = vadd.f32 %v2154, %v2231
      %v2233 = vpop.f32.mrb[0].mxu0
      %2234 = vmatprep.mubr.f32.mxu0 0.0
      %2235 = vmatmul.mubr.f32.gmra.mrb[0].mxu0 %v2160
      %v2236 = vpop.f32.mrb[0].mxu0
      %v2237 = vadd.f32 %v2154, %v2236
      %v2238 = vpop.f32.mrb[0].mxu0
      %2239 = vmatprep.mubr.f32.mxu0 0.0
      %2240 = vmatmul.mubr.f32.gmra.mrb[0].mxu0 %v2163
      %v2241 = vpop.f32.mrb[0].mxu0
      %v2242 = vadd.f32 %v2154, %v2241
      %v2243 = vpop.f32.mrb[0].mxu0
      %2244 = vdwg.mxu0
      %v2245 = vadd.f32 %v2025, %v2232
      %v2246 = vadd.f32 %v2026, %v2237
      %v2247 = vadd.f32 %v2027, %v2242
      %v2248 = vsel %vm527, %v2245, 0.0
      %2249 = vadd.xlane.f32.xlu0 %v2248
      %v2250 = vpop.xlane.xlu0 %2249
      %v2251 = vsel %vm527, %v2246, 0.0
      %2252 = vadd.xlane.f32.xlu0 %v2251
      %v2253 = vpop.xlane.xlu0 %2252
      %v2254 = vsel %vm1979, %v2247, 0.0
      %2255 = vadd.xlane.f32.xlu0 %v2254
      %v2256 = vpop.xlane.xlu0 %2255
      %v2257 = vmul.f32 %v2250, %v1983
      %v2258 = vmul.f32 %v2253, %v1983
      %v2259 = vmul.f32 %v2256, %v1983
      %v2260 = vsub.f32 %v2245, %v2257
      %v2261 = vsub.f32 %v2246, %v2258
      %v2262 = vsub.f32 %v2247, %v2259
      %v2263 = vmul.f32 %v2260, %v2260
      %v2264 = vmul.f32 %v2261, %v2261
      %v2265 = vmul.f32 %v2262, %v2262
      %v2266 = vsel %vm527, %v2263, 0.0
      %2267 = vadd.xlane.f32.xlu0 %v2266
      %v2268 = vpop.xlane.xlu0 %2267
      %v2269 = vsel %vm527, %v2264, 0.0
      %2270 = vadd.xlane.f32.xlu0 %v2269
      %v2271 = vpop.xlane.xlu0 %2270
      %v2272 = vsel %vm1979, %v2265, 0.0
      %2273 = vadd.xlane.f32.xlu0 %v2272
      %v2274 = vpop.xlane.xlu0 %2273
      %v2275 = vmul.f32 %v2268, %v1983
      %v2276 = vmul.f32 %v2271, %v1983
      %v2277 = vmul.f32 %v2274, %v1983
      %v2278 = vadd.f32 %v2275, 1e-12
      %v2279 = vadd.f32 %v2276, 1e-12
      %v2280 = vadd.f32 %v2277, 1e-12
      %v2281 = vrsqrt.pop %v2278
      %v2282 = vrsqrt.pop %v2279
      %v2283 = vrsqrt.pop %v2280
      %v2284 = vmul.f32 %v2260, %v2281
      %v2285 = vmul.f32 %v2261, %v2282
      %v2286 = vmul.f32 %v2262, %v2283
      %v2287 = vlaneseq
      %v2288 = vshrl.u32 %v2287, 7
      %v2289 = vsub.s32 2, %v2288
      %v2290 = vrot.slane %v501, %v2289
      %v2291 = vmul.f32 %v2284, %v2290
      %v2292 = vmul.f32 %v2285, %v2290
      %v2293 = vmul.f32 %v2286, %v2290
      %v2294 = vlaneseq
      %v2295 = vshrl.u32 %v2294, 7
      %v2296 = vsub.s32 3, %v2295
      %v2297 = vrot.slane %v501, %v2296
      %v2298 = vadd.f32 %v2291, %v2297
      %v2299 = vadd.f32 %v2292, %v2297
      %v2300 = vadd.f32 %v2293, %v2297
      %2301 = vst.msk [vmem:[%s386] sm:$0xff] %vm527, %v2298
      %2302 = vst.msk [vmem:[%s386 + $0x8] sm:$0xff] %vm527, %v2299
      %2303 = vst.msk [vmem:[%s386 + $0x10] sm:$0x1] %vm1979, %v2300
      %p2304 = scmp.lt.s32.totalorder %s22, 1
      %s2305 = scalar_select %p2304, %s22, 1
      %s2306 = smul.addr %s2305, 3
      %s2307 = smul.addr %s2306, 8
      %s2308 = scalar_lea.vmem %s11, %s2307
      // Predicated region
      $region65: #{xvlm_for_similarities.3} parent=63 // pred_check
        %p2309 = pneg %p276
      $region66: #{xvlm_for_similarities.3} parent=63 // pred_check_branch
        %2311 = sbr.rel (%p2309) target = $region68
      $region67: #{xvlm_for_similarities.3} parent=63 // pred_region
        _
      $region68: #{xvlm_for_similarities.3} parent=63 // pred_fallthru
        _
    $region64: #{xvlm_for_similarities.3} parent=5 // pred_fallthru
      _
    %p2312 = scmp.le.s32.totalorder 2, %s17
    // Predicated region
    $region69: #{xvlm_for_similarities.3} parent=5 // pred_check
      %p2313 = pneg %p2312
    $region70: #{xvlm_for_similarities.3} parent=5 // pred_check_branch
      %2315 = sbr.rel (%p2313) target = $region72
    $region71: #{xvlm_for_similarities.3} parent=5 // pred_region
      %s2316 = ssub.s32 %s17, 2
      // Predicated region
      $region73: #{xvlm_for_similarities.3} parent=71 // pred_check
        %p2317 = pneg %p282
      $region74: #{xvlm_for_similarities.3} parent=71 // pred_check_branch
        %2319 = sbr.rel (%p2317) target = $region76
      $region75: #{xvlm_for_similarities.3} parent=71 // pred_region
        %p2320 = scmp.lt.s32.totalorder %s23, 1
        %s2321 = scalar_select %p2320, %s23, 1
        %s2322 = smul.addr %s2321, 3
        %s2323 = smul.addr %s2322, 8
        %s2324 = scalar_lea.vmem %s11, %s2323
      $region76: #{xvlm_for_similarities.3} parent=71 // pred_fallthru
        _
    $region72: #{xvlm_for_similarities.3} parent=5 // pred_fallthru
      _
  $region6: #{xvlm_for_similarities.3} parent=0 // loop_footer
    %s21 = sadd.s32 1, %s17
  $region7: #{xvlm_for_similarities.3} parent=0 // loop_footer_branch
    %16 = sbr.rel target = $region3
  $region8: #{xvlm_for_similarities.3} parent=0 // loop_exit
    _

// kernel: xvlm_for_similarities.5
$region0: #{xvlm_for_similarities.5}
  #allocation0 [shape = 'u32[]', space=smem, size = 0x4, offset = 0x4, fixed_abs, tag = 'smem constant byte address 0x4 - core index']
  #allocation1 [shape = 'u32[144,128]{1,0:T(1,128)}', space=vmem, size = 0x12000, scoped, tag = 'internal scratch']
  %s0 = inlined_call_operand.vmem [shape: f32[6,8,32], index: 0, kind: input, shape index: {}]
  %s1 = inlined_call_operand.vmem [shape: f32[6,1,8], index: 1, kind: input, shape index: {}]
  %s2 = inlined_call_operand.vmem [shape: f32[2,17,32], index: 2, kind: input, shape index: {}]
  %s3 = inlined_call_operand.vmem [shape: f32[2,1,17], index: 3, kind: input, shape index: {}]
  %s4 = inlined_call_operand.vmem [shape: f32[32,128], index: 4, kind: input, shape index: {}]
  %s5 = inlined_call_operand.vmem [shape: f32[1,128], index: 5, kind: input, shape index: {}]
  %s6 = inlined_call_operand.vmem [shape: f32[32,128], index: 6, kind: input, shape index: {}]
  %s7 = inlined_call_operand.vmem [shape: f32[1,128], index: 7, kind: input, shape index: {}]
  %s8 = inlined_call_operand.vmem [shape: f32[32,64], index: 8, kind: input, shape index: {}]
  %s9 = inlined_call_operand.vmem [shape: f32[1,64], index: 9, kind: input, shape index: {}]
  %s10 = inlined_call_operand.vmem [shape: f32[64,32], index: 10, kind: input, shape index: {}]
  %s11 = inlined_call_operand.vmem [shape: f32[1,32], index: 11, kind: input, shape index: {}]
  %s12 = inlined_call_operand.vmem [shape: f32[6,32], index: 12, kind: input, shape index: {}]
  %s13 = inlined_call_operand.vmem [shape: f32[6,1,32], index: 13, kind: output, shape index: {}]
  %s14 = sld [smem:[#allocation0]]
  $region85: #{xvlm_for_similarities.5} parent=0
    _
  %s16 = ssub.s32 1, %s14
  %s17 = scalar_select 0, %s16, %s14
  loop: start=0, step=1, limit=8
  $region2: #{xvlm_for_similarities.5} parent=0 // loop_pre_header
    _
  $region3: #{xvlm_for_similarities.5} parent=0 // loop_header
    %s19 = sphi 0, %s23
    %p20 = scmp.ge.s32.totalorder %s19, 8
    %s29 = sphi 0, %s31
    %s32 = sphi 0, %s29
    %s33 = sphi 0, %s32
    %s49 = sphi 0, %s33
    %s55 = sphi 0, %s57
    %s58 = sphi 0, %s55
    %s59 = sphi 0, %s58
    %s75 = sphi 0, %s59
    %s105 = sphi 0, %s107
    %s108 = sphi 0, %s105
    %s109 = sphi 0, %s108
    %s125 = sphi 0, %s109
    %s155 = sphi 0, %s157
    %s158 = sphi 0, %s155
    %s159 = sphi 0, %s158
    %s175 = sphi 0, %s159
    %s179 = sphi 0, %s179
    %s181 = sphi 0, %s179
    %s182 = sphi 0, %s181
    %s196 = sphi 0, %s182
    %s200 = sphi 0, %s200
    %s202 = sphi 0, %s200
    %s203 = sphi 0, %s202
    %s217 = sphi 0, %s203
    %s221 = sphi 0, %s221
    %s223 = sphi 0, %s221
    %s224 = sphi 0, %s223
    %s238 = sphi 0, %s224
    %s242 = sphi 0, %s242
    %s244 = sphi 0, %s242
    %s245 = sphi 0, %s244
    %s259 = sphi 0, %s245
    %s263 = sphi 0, %s263
    %s265 = sphi 0, %s263
    %s266 = sphi 0, %s265
    %s280 = sphi 0, %s266
    %s284 = sphi 0, %s284
    %s286 = sphi 0, %s284
    %s287 = sphi 0, %s286
    %s301 = sphi 0, %s287
    %s305 = sphi 0, %s305
    %s307 = sphi 0, %s305
    %s308 = sphi 0, %s307
    %s322 = sphi 0, %s308
    %s326 = sphi 0, %s326
    %s328 = sphi 0, %s326
    %s329 = sphi 0, %s328
    %s343 = sphi 0, %s329
    %s347 = sphi 0, %s347
    %s349 = sphi 0, %s347
    %s350 = sphi 0, %s349
    %s364 = sphi 0, %s350
    %s370 = sphi 0, %s372
    %s373 = sphi 0, %s370
    %s374 = sphi 0, %s373
    %s390 = sphi 0, %s374
  $region4: #{xvlm_for_similarities.5} parent=0 // loop_header_branch
    %22 = sbr.rel (%p20) target = $region8
  $region5: #{xvlm_for_similarities.5} parent=0 // loop_body
    %s24 = ssub.s32 %s19, 1
    %s25 = ssub.s32 %s19, 2
    %s26 = sadd.s32 %s19, 1
    %s27 = ssub.s32 %s19, %s26
    %p28 = scmp.eq.s32.totalorder %s27, 0
    %s30 = sadd.s32 %s29, 1
    %s31 = scalar_select %p28, %s29, %s30
    %p34 = pneg %p28
    %p35 = scmp.eq.s32.totalorder %s19, 5
    %p36 = por %p34, %p35
    %p37 = scmp.ne.s32.totalorder %s29, %s32
    %p38 = scmp.eq.s32.totalorder %s19, 0
    %p39 = por %p37, %p38
    %p40 = scmp.ne.s32.totalorder %s29, %s32
    %p41 = scmp.eq.s32.totalorder %s24, 5
    %p42 = por %p40, %p41
    %p43 = scmp.ne.s32.totalorder %s32, %s33
    %p44 = scmp.eq.s32.totalorder %s24, 0
    %p45 = por %p43, %p44
    %p46 = scmp.ne.s32.totalorder %s32, %s33
    %p47 = scmp.eq.s32.totalorder %s25, 5
    %p48 = por %p46, %p47
    %p50 = scmp.ne.s32.totalorder %s33, %s49
    %p51 = scmp.eq.s32.totalorder %s25, 0
    %p52 = por %p50, %p51
    %s53 = ssub.s32 %s19, %s26
    %p54 = scmp.eq.s32.totalorder %s53, 0
    %s56 = sadd.s32 %s55, 1
    %s57 = scalar_select %p54, %s55, %s56
    %p60 = pneg %p54
    %p61 = scmp.eq.s32.totalorder %s19, 5
    %p62 = por %p60, %p61
    %p63 = scmp.ne.s32.totalorder %s55, %s58
    %p64 = scmp.eq.s32.totalorder %s19, 0
    %p65 = por %p63, %p64
    %p66 = scmp.ne.s32.totalorder %s55, %s58
    %p67 = scmp.eq.s32.totalorder %s24, 5
    %p68 = por %p66, %p67
    %p69 = scmp.ne.s32.totalorder %s58, %s59
    %p70 = scmp.eq.s32.totalorder %s24, 0
    %p71 = por %p69, %p70
    %p72 = scmp.ne.s32.totalorder %s58, %s59
    %p73 = scmp.eq.s32.totalorder %s25, 5
    %p74 = por %p72, %p73
    %p76 = scmp.ne.s32.totalorder %s59, %s75
    %p77 = scmp.eq.s32.totalorder %s25, 0
    %p78 = por %p76, %p77
    %p79 = scmp.lt.s32.totalorder %s19, 0
    %s80 = ssub.s32 0, %s19
    %s81 = scalar_select %p79, %s80, %s19
    %s82 = sand.u32 %s81, 1
    %s83 = ssub.s32 0, %s82
    %s84 = scalar_select %p79, %s83, %s82
    %p85 = scmp.ne.s32.totalorder %s84, 0
    %p86 = scmp.lt.s32.totalorder %s84, 0
    %p87 = pnand %p86, %p85
    %p88 = pneg %p87
    %s89 = sadd.s32 %s84, 2
    %s90 = scalar_select %p88, %s89, %s84
    %p91 = scmp.lt.s32.totalorder %s26, 0
    %s92 = ssub.s32 0, %s26
    %s93 = scalar_select %p91, %s92, %s26
    %s94 = sand.u32 %s93, 1
    %s95 = ssub.s32 0, %s94
    %s96 = scalar_select %p91, %s95, %s94
    %p97 = scmp.ne.s32.totalorder %s96, 0
    %p98 = scmp.lt.s32.totalorder %s96, 0
    %p99 = pnand %p98, %p97
    %p100 = pneg %p99
    %s101 = sadd.s32 %s96, 2
    %s102 = scalar_select %p100, %s101, %s96
    %s103 = ssub.s32 %s90, %s102
    %p104 = scmp.eq.s32.totalorder %s103, 0
    %s106 = sadd.s32 %s105, 1
    %s107 = scalar_select %p104, %s105, %s106
    %p110 = pneg %p104
    %p111 = scmp.eq.s32.totalorder %s19, 5
    %p112 = por %p110, %p111
    %p113 = scmp.ne.s32.totalorder %s105, %s108
    %p114 = scmp.eq.s32.totalorder %s19, 0
    %p115 = por %p113, %p114
    %p116 = scmp.ne.s32.totalorder %s105, %s108
    %p117 = scmp.eq.s32.totalorder %s24, 5
    %p118 = por %p116, %p117
    %p119 = scmp.ne.s32.totalorder %s108, %s109
    %p120 = scmp.eq.s32.totalorder %s24, 0
    %p121 = por %p119, %p120
    %p122 = scmp.ne.s32.totalorder %s108, %s109
    %p123 = scmp.eq.s32.totalorder %s25, 5
    %p124 = por %p122, %p123
    %p126 = scmp.ne.s32.totalorder %s109, %s125
    %p127 = scmp.eq.s32.totalorder %s25, 0
    %p128 = por %p126, %p127
    %p129 = scmp.lt.s32.totalorder %s19, 0
    %s130 = ssub.s32 0, %s19
    %s131 = scalar_select %p129, %s130, %s19
    %s132 = sand.u32 %s131, 1
    %s133 = ssub.s32 0, %s132
    %s134 = scalar_select %p129, %s133, %s132
    %p135 = scmp.ne.s32.totalorder %s134, 0
    %p136 = scmp.lt.s32.totalorder %s134, 0
    %p137 = pnand %p136, %p135
    %p138 = pneg %p137
    %s139 = sadd.s32 %s134, 2
    %s140 = scalar_select %p138, %s139, %s134
    %p141 = scmp.lt.s32.totalorder %s26, 0
    %s142 = ssub.s32 0, %s26
    %s143 = scalar_select %p141, %s142, %s26
    %s144 = sand.u32 %s143, 1
    %s145 = ssub.s32 0, %s144
    %s146 = scalar_select %p141, %s145, %s144
    %p147 = scmp.ne.s32.totalorder %s146, 0
    %p148 = scmp.lt.s32.totalorder %s146, 0
    %p149 = pnand %p148, %p147
    %p150 = pneg %p149
    %s151 = sadd.s32 %s146, 2
    %s152 = scalar_select %p150, %s151, %s146
    %s153 = ssub.s32 %s140, %s152
    %p154 = scmp.eq.s32.totalorder %s153, 0
    %s156 = sadd.s32 %s155, 1
    %s157 = scalar_select %p154, %s155, %s156
    %p160 = pneg %p154
    %p161 = scmp.eq.s32.totalorder %s19, 5
    %p162 = por %p160, %p161
    %p163 = scmp.ne.s32.totalorder %s155, %s158
    %p164 = scmp.eq.s32.totalorder %s19, 0
    %p165 = por %p163, %p164
    %p166 = scmp.ne.s32.totalorder %s155, %s158
    %p167 = scmp.eq.s32.totalorder %s24, 5
    %p168 = por %p166, %p167
    %p169 = scmp.ne.s32.totalorder %s158, %s159
    %p170 = scmp.eq.s32.totalorder %s24, 0
    %p171 = por %p169, %p170
    %p172 = scmp.ne.s32.totalorder %s158, %s159
    %p173 = scmp.eq.s32.totalorder %s25, 5
    %p174 = por %p172, %p173
    %p176 = scmp.ne.s32.totalorder %s159, %s175
    %p177 = scmp.eq.s32.totalorder %s25, 0
    %p178 = por %p176, %p177
    %s180 = sadd.s32 %s179, 1
    %p183 = scmp.eq.s32.totalorder %s19, 5
    %p184 = scmp.ne.s32.totalorder %s179, %s181
    %p185 = scmp.eq.s32.totalorder %s19, 0
    %p186 = por %p184, %p185
    %p187 = scmp.ne.s32.totalorder %s179, %s181
    %p188 = scmp.eq.s32.totalorder %s24, 5
    %p189 = por %p187, %p188
    %p190 = scmp.ne.s32.totalorder %s181, %s182
    %p191 = scmp.eq.s32.totalorder %s24, 0
    %p192 = por %p190, %p191
    %p193 = scmp.ne.s32.totalorder %s181, %s182
    %p194 = scmp.eq.s32.totalorder %s25, 5
    %p195 = por %p193, %p194
    %p197 = scmp.ne.s32.totalorder %s182, %s196
    %p198 = scmp.eq.s32.totalorder %s25, 0
    %p199 = por %p197, %p198
    %s201 = sadd.s32 %s200, 1
    %p204 = scmp.eq.s32.totalorder %s19, 5
    %p205 = scmp.ne.s32.totalorder %s200, %s202
    %p206 = scmp.eq.s32.totalorder %s19, 0
    %p207 = por %p205, %p206
    %p208 = scmp.ne.s32.totalorder %s200, %s202
    %p209 = scmp.eq.s32.totalorder %s24, 5
    %p210 = por %p208, %p209
    %p211 = scmp.ne.s32.totalorder %s202, %s203
    %p212 = scmp.eq.s32.totalorder %s24, 0
    %p213 = por %p211, %p212
    %p214 = scmp.ne.s32.totalorder %s202, %s203
    %p215 = scmp.eq.s32.totalorder %s25, 5
    %p216 = por %p214, %p215
    %p218 = scmp.ne.s32.totalorder %s203, %s217
    %p219 = scmp.eq.s32.totalorder %s25, 0
    %p220 = por %p218, %p219
    %s222 = sadd.s32 %s221, 1
    %p225 = scmp.eq.s32.totalorder %s19, 5
    %p226 = scmp.ne.s32.totalorder %s221, %s223
    %p227 = scmp.eq.s32.totalorder %s19, 0
    %p228 = por %p226, %p227
    %p229 = scmp.ne.s32.totalorder %s221, %s223
    %p230 = scmp.eq.s32.totalorder %s24, 5
    %p231 = por %p229, %p230
    %p232 = scmp.ne.s32.totalorder %s223, %s224
    %p233 = scmp.eq.s32.totalorder %s24, 0
    %p234 = por %p232, %p233
    %p235 = scmp.ne.s32.totalorder %s223, %s224
    %p236 = scmp.eq.s32.totalorder %s25, 5
    %p237 = por %p235, %p236
    %p239 = scmp.ne.s32.totalorder %s224, %s238
    %p240 = scmp.eq.s32.totalorder %s25, 0
    %p241 = por %p239, %p240
    %s243 = sadd.s32 %s242, 1
    %p246 = scmp.eq.s32.totalorder %s19, 5
    %p247 = scmp.ne.s32.totalorder %s242, %s244
    %p248 = scmp.eq.s32.totalorder %s19, 0
    %p249 = por %p247, %p248
    %p250 = scmp.ne.s32.totalorder %s242, %s244
    %p251 = scmp.eq.s32.totalorder %s24, 5
    %p252 = por %p250, %p251
    %p253 = scmp.ne.s32.totalorder %s244, %s245
    %p254 = scmp.eq.s32.totalorder %s24, 0
    %p255 = por %p253, %p254
    %p256 = scmp.ne.s32.totalorder %s244, %s245
    %p257 = scmp.eq.s32.totalorder %s25, 5
    %p258 = por %p256, %p257
    %p260 = scmp.ne.s32.totalorder %s245, %s259
    %p261 = scmp.eq.s32.totalorder %s25, 0
    %p262 = por %p260, %p261
    %s264 = sadd.s32 %s263, 1
    %p267 = scmp.eq.s32.totalorder %s19, 5
    %p268 = scmp.ne.s32.totalorder %s263, %s265
    %p269 = scmp.eq.s32.totalorder %s19, 0
    %p270 = por %p268, %p269
    %p271 = scmp.ne.s32.totalorder %s263, %s265
    %p272 = scmp.eq.s32.totalorder %s24, 5
    %p273 = por %p271, %p272
    %p274 = scmp.ne.s32.totalorder %s265, %s266
    %p275 = scmp.eq.s32.totalorder %s24, 0
    %p276 = por %p274, %p275
    %p277 = scmp.ne.s32.totalorder %s265, %s266
    %p278 = scmp.eq.s32.totalorder %s25, 5
    %p279 = por %p277, %p278
    %p281 = scmp.ne.s32.totalorder %s266, %s280
    %p282 = scmp.eq.s32.totalorder %s25, 0
    %p283 = por %p281, %p282
    %s285 = sadd.s32 %s284, 1
    %p288 = scmp.eq.s32.totalorder %s19, 5
    %p289 = scmp.ne.s32.totalorder %s284, %s286
    %p290 = scmp.eq.s32.totalorder %s19, 0
    %p291 = por %p289, %p290
    %p292 = scmp.ne.s32.totalorder %s284, %s286
    %p293 = scmp.eq.s32.totalorder %s24, 5
    %p294 = por %p292, %p293
    %p295 = scmp.ne.s32.totalorder %s286, %s287
    %p296 = scmp.eq.s32.totalorder %s24, 0
    %p297 = por %p295, %p296
    %p298 = scmp.ne.s32.totalorder %s286, %s287
    %p299 = scmp.eq.s32.totalorder %s25, 5
    %p300 = por %p298, %p299
    %p302 = scmp.ne.s32.totalorder %s287, %s301
    %p303 = scmp.eq.s32.totalorder %s25, 0
    %p304 = por %p302, %p303
    %s306 = sadd.s32 %s305, 1
    %p309 = scmp.eq.s32.totalorder %s19, 5
    %p310 = scmp.ne.s32.totalorder %s305, %s307
    %p311 = scmp.eq.s32.totalorder %s19, 0
    %p312 = por %p310, %p311
    %p313 = scmp.ne.s32.totalorder %s305, %s307
    %p314 = scmp.eq.s32.totalorder %s24, 5
    %p315 = por %p313, %p314
    %p316 = scmp.ne.s32.totalorder %s307, %s308
    %p317 = scmp.eq.s32.totalorder %s24, 0
    %p318 = por %p316, %p317
    %p319 = scmp.ne.s32.totalorder %s307, %s308
    %p320 = scmp.eq.s32.totalorder %s25, 5
    %p321 = por %p319, %p320
    %p323 = scmp.ne.s32.totalorder %s308, %s322
    %p324 = scmp.eq.s32.totalorder %s25, 0
    %p325 = por %p323, %p324
    %s327 = sadd.s32 %s326, 1
    %p330 = scmp.eq.s32.totalorder %s19, 5
    %p331 = scmp.ne.s32.totalorder %s326, %s328
    %p332 = scmp.eq.s32.totalorder %s19, 0
    %p333 = por %p331, %p332
    %p334 = scmp.ne.s32.totalorder %s326, %s328
    %p335 = scmp.eq.s32.totalorder %s24, 5
    %p336 = por %p334, %p335
    %p337 = scmp.ne.s32.totalorder %s328, %s329
    %p338 = scmp.eq.s32.totalorder %s24, 0
    %p339 = por %p337, %p338
    %p340 = scmp.ne.s32.totalorder %s328, %s329
    %p341 = scmp.eq.s32.totalorder %s25, 5
    %p342 = por %p340, %p341
    %p344 = scmp.ne.s32.totalorder %s329, %s343
    %p345 = scmp.eq.s32.totalorder %s25, 0
    %p346 = por %p344, %p345
    %s348 = sadd.s32 %s347, 1
    %p351 = scmp.eq.s32.totalorder %s19, 5
    %p352 = scmp.ne.s32.totalorder %s347, %s349
    %p353 = scmp.eq.s32.totalorder %s19, 0
    %p354 = por %p352, %p353
    %p355 = scmp.ne.s32.totalorder %s347, %s349
    %p356 = scmp.eq.s32.totalorder %s24, 5
    %p357 = por %p355, %p356
    %p358 = scmp.ne.s32.totalorder %s349, %s350
    %p359 = scmp.eq.s32.totalorder %s24, 0
    %p360 = por %p358, %p359
    %p361 = scmp.ne.s32.totalorder %s349, %s350
    %p362 = scmp.eq.s32.totalorder %s25, 5
    %p363 = por %p361, %p362
    %p365 = scmp.ne.s32.totalorder %s350, %s364
    %p366 = scmp.eq.s32.totalorder %s25, 0
    %p367 = por %p365, %p366
    %s368 = ssub.s32 %s19, %s26
    %p369 = scmp.eq.s32.totalorder %s368, 0
    %s371 = sadd.s32 %s370, 1
    %s372 = scalar_select %p369, %s370, %s371
    %p375 = pneg %p369
    %p376 = scmp.eq.s32.totalorder %s19, 5
    %p377 = por %p375, %p376
    %p378 = scmp.ne.s32.totalorder %s370, %s373
    %p379 = scmp.eq.s32.totalorder %s19, 0
    %p380 = por %p378, %p379
    %p381 = scmp.ne.s32.totalorder %s370, %s373
    %p382 = scmp.eq.s32.totalorder %s24, 5
    %p383 = por %p381, %p382
    %p384 = scmp.ne.s32.totalorder %s373, %s374
    %p385 = scmp.eq.s32.totalorder %s24, 0
    %p386 = por %p384, %p385
    %p387 = scmp.ne.s32.totalorder %s373, %s374
    %p388 = scmp.eq.s32.totalorder %s25, 5
    %p389 = por %p387, %p388
    %p391 = scmp.ne.s32.totalorder %s374, %s390
    %p392 = scmp.eq.s32.totalorder %s25, 0
    %p393 = por %p391, %p392
    %p394 = scmp.le.s32.totalorder 1, %s19
    %p395 = scmp.lt.s32.totalorder %s19, 7
    %p396 = pnand %p394, %p395
    %p397 = pneg %p396
    // Predicated region
    $region9: #{xvlm_for_similarities.5} parent=5 // pred_check
      _
    $region10: #{xvlm_for_similarities.5} parent=5 // pred_check_branch
      %399 = sbr.rel (%p396) target = $region12
    $region11: #{xvlm_for_similarities.5} parent=5 // pred_region
      %s400 = ssub.s32 %s19, 1
      // Predicated region
      $region13: #{xvlm_for_similarities.5} parent=11 // pred_check
        %p401 = pneg %p192
      $region14: #{xvlm_for_similarities.5} parent=11 // pred_check_branch
        %403 = sbr.rel (%p401) target = $region16
      $region15: #{xvlm_for_similarities.5} parent=11 // pred_region
        _
      $region16: #{xvlm_for_similarities.5} parent=11 // pred_fallthru
        _
      // Predicated region
      $region17: #{xvlm_for_similarities.5} parent=11 // pred_check
        %p404 = pneg %p213
      $region18: #{xvlm_for_similarities.5} parent=11 // pred_check_branch
        %406 = sbr.rel (%p404) target = $region20
      $region19: #{xvlm_for_similarities.5} parent=11 // pred_region
        _
      $region20: #{xvlm_for_similarities.5} parent=11 // pred_fallthru
        _
      // Predicated region
      $region21: #{xvlm_for_similarities.5} parent=11 // pred_check
        %p407 = pneg %p234
      $region22: #{xvlm_for_similarities.5} parent=11 // pred_check_branch
        %409 = sbr.rel (%p407) target = $region24
      $region23: #{xvlm_for_similarities.5} parent=11 // pred_region
        _
      $region24: #{xvlm_for_similarities.5} parent=11 // pred_fallthru
        _
      // Predicated region
      $region25: #{xvlm_for_similarities.5} parent=11 // pred_check
        %p410 = pneg %p255
      $region26: #{xvlm_for_similarities.5} parent=11 // pred_check_branch
        %412 = sbr.rel (%p410) target = $region28
      $region27: #{xvlm_for_similarities.5} parent=11 // pred_region
        _
      $region28: #{xvlm_for_similarities.5} parent=11 // pred_fallthru
        _
      // Predicated region
      $region29: #{xvlm_for_similarities.5} parent=11 // pred_check
        %p413 = pneg %p276
      $region30: #{xvlm_for_similarities.5} parent=11 // pred_check_branch
        %415 = sbr.rel (%p413) target = $region32
      $region31: #{xvlm_for_similarities.5} parent=11 // pred_region
        _
      $region32: #{xvlm_for_similarities.5} parent=11 // pred_fallthru
        _
      // Predicated region
      $region33: #{xvlm_for_similarities.5} parent=11 // pred_check
        %p416 = pneg %p297
      $region34: #{xvlm_for_similarities.5} parent=11 // pred_check_branch
        %418 = sbr.rel (%p416) target = $region36
      $region35: #{xvlm_for_similarities.5} parent=11 // pred_region
        _
      $region36: #{xvlm_for_similarities.5} parent=11 // pred_fallthru
        _
      // Predicated region
      $region37: #{xvlm_for_similarities.5} parent=11 // pred_check
        %p419 = pneg %p318
      $region38: #{xvlm_for_similarities.5} parent=11 // pred_check_branch
        %421 = sbr.rel (%p419) target = $region40
      $region39: #{xvlm_for_similarities.5} parent=11 // pred_region
        _
      $region40: #{xvlm_for_similarities.5} parent=11 // pred_fallthru
        _
      // Predicated region
      $region41: #{xvlm_for_similarities.5} parent=11 // pred_check
        %p422 = pneg %p339
      $region42: #{xvlm_for_similarities.5} parent=11 // pred_check_branch
        %424 = sbr.rel (%p422) target = $region44
      $region43: #{xvlm_for_similarities.5} parent=11 // pred_region
        _
      $region44: #{xvlm_for_similarities.5} parent=11 // pred_fallthru
        _
      // Predicated region
      $region45: #{xvlm_for_similarities.5} parent=11 // pred_check
        %p425 = pneg %p360
      $region46: #{xvlm_for_similarities.5} parent=11 // pred_check_branch
        %427 = sbr.rel (%p425) target = $region48
      $region47: #{xvlm_for_similarities.5} parent=11 // pred_region
        _
      $region48: #{xvlm_for_similarities.5} parent=11 // pred_fallthru
        _
    $region12: #{xvlm_for_similarities.5} parent=5 // pred_fallthru
      _
    %p428 = scmp.lt.s32.totalorder %s19, 6
    // Predicated region
    $region49: #{xvlm_for_similarities.5} parent=5 // pred_check
      %p429 = pneg %p428
    $region50: #{xvlm_for_similarities.5} parent=5 // pred_check_branch
      %431 = sbr.rel (%p429) target = $region52
    $region51: #{xvlm_for_similarities.5} parent=5 // pred_region
      // Predicated region
      $region53: #{xvlm_for_similarities.5} parent=51 // pred_check
        %p432 = pneg %p39
      $region54: #{xvlm_for_similarities.5} parent=51 // pred_check_branch
        %434 = sbr.rel (%p432) target = $region56
      $region55: #{xvlm_for_similarities.5} parent=51 // pred_region
        %p435 = scmp.lt.s32.totalorder %s19, 5
        %s436 = scalar_select %p435, %s19, 5
        %s437 = smul.addr %s436, 8
        %s438 = scalar_lea.vmem %s0, %s437
      $region56: #{xvlm_for_similarities.5} parent=51 // pred_fallthru
        _
      // Predicated region
      $region57: #{xvlm_for_similarities.5} parent=51 // pred_check
        %p439 = pneg %p65
      $region58: #{xvlm_for_similarities.5} parent=51 // pred_check_branch
        %441 = sbr.rel (%p439) target = $region60
      $region59: #{xvlm_for_similarities.5} parent=51 // pred_region
        %p442 = scmp.lt.s32.totalorder %s19, 5
        %s443 = scalar_select %p442, %s19, 5
        %s444 = scalar_lea.vmem %s1, %s443
      $region60: #{xvlm_for_similarities.5} parent=51 // pred_fallthru
        _
      // Predicated region
      $region61: #{xvlm_for_similarities.5} parent=51 // pred_check
        %p445 = pneg %p115
      $region62: #{xvlm_for_similarities.5} parent=51 // pred_check_branch
        %447 = sbr.rel (%p445) target = $region64
      $region63: #{xvlm_for_similarities.5} parent=51 // pred_region
        %p448 = scmp.lt.s32.totalorder %s19, 0
        %s449 = ssub.s32 0, %s19
        %s450 = scalar_select %p448, %s449, %s19
        %s451 = sand.u32 %s450, 1
        %s452 = ssub.s32 0, %s451
        %s453 = scalar_select %p448, %s452, %s451
        %p454 = scmp.ne.s32.totalorder %s453, 0
        %p455 = scmp.lt.s32.totalorder %s453, 0
        %p456 = pnand %p455, %p454
        %p457 = pneg %p456
        %s458 = sadd.s32 %s453, 2
        %s459 = scalar_select %p457, %s458, %s453
        %p460 = scmp.lt.s32.totalorder %s459, 1
        %s461 = scalar_select %p460, %s459, 1
        %s462 = smul.addr %s461, 3
        %s463 = smul.addr %s462, 8
        %s464 = scalar_lea.vmem %s2, %s463
        %p465 = scmp.lt.s32.totalorder %s19, 0
        %s466 = ssub.s32 0, %s19
        %s467 = scalar_select %p465, %s466, %s19
        %s468 = sand.u32 %s467, 1
        %s469 = ssub.s32 0, %s468
        %s470 = scalar_select %p465, %s469, %s468
        %p471 = scmp.ne.s32.totalorder %s470, 0
        %p472 = scmp.lt.s32.totalorder %s470, 0
        %p473 = pnand %p472, %p471
        %p474 = pneg %p473
        %s475 = sadd.s32 %s470, 2
        %s476 = scalar_select %p474, %s475, %s470
      $region64: #{xvlm_for_similarities.5} parent=51 // pred_fallthru
        _
      // Predicated region
      $region65: #{xvlm_for_similarities.5} parent=51 // pred_check
        %p477 = pneg %p165
      $region66: #{xvlm_for_similarities.5} parent=51 // pred_check_branch
        %479 = sbr.rel (%p477) target = $region68
      $region67: #{xvlm_for_similarities.5} parent=51 // pred_region
        %p480 = scmp.lt.s32.totalorder %s19, 0
        %s481 = ssub.s32 0, %s19
        %s482 = scalar_select %p480, %s481, %s19
        %s483 = sand.u32 %s482, 1
        %s484 = ssub.s32 0, %s483
        %s485 = scalar_select %p480, %s484, %s483
        %p486 = scmp.ne.s32.totalorder %s485, 0
        %p487 = scmp.lt.s32.totalorder %s485, 0
        %p488 = pnand %p487, %p486
        %p489 = pneg %p488
        %s490 = sadd.s32 %s485, 2
        %s491 = scalar_select %p489, %s490, %s485
        %p492 = scmp.lt.s32.totalorder %s491, 1
        %s493 = scalar_select %p492, %s491, 1
        %s494 = scalar_lea.vmem %s3, %s493
        %p495 = scmp.lt.s32.totalorder %s19, 0
        %s496 = ssub.s32 0, %s19
        %s497 = scalar_select %p495, %s496, %s19
        %s498 = sand.u32 %s497, 1
        %s499 = ssub.s32 0, %s498
        %s500 = scalar_select %p495, %s499, %s498
        %p501 = scmp.ne.s32.totalorder %s500, 0
        %p502 = scmp.lt.s32.totalorder %s500, 0
        %p503 = pnand %p502, %p501
        %p504 = pneg %p503
        %s505 = sadd.s32 %s500, 2
        %s506 = scalar_select %p504, %s505, %s500
      $region68: #{xvlm_for_similarities.5} parent=51 // pred_fallthru
        _
    $region52: #{xvlm_for_similarities.5} parent=5 // pred_fallthru
      _
    %p507 = scmp.le.s32.totalorder 1, %s19
    %p508 = scmp.lt.s32.totalorder %s19, 7
    %p509 = pnand %p507, %p508
    %p510 = pneg %p509
    // Predicated region
    $region69: #{xvlm_for_similarities.5} parent=5 // pred_check
      _
    $region70: #{xvlm_for_similarities.5} parent=5 // pred_check_branch
      %512 = sbr.rel (%p509) target = $region72
    $region71: #{xvlm_for_similarities.5} parent=5 // pred_region
      %s513 = ssub.s32 %s19, 1
      %p514 = scmp.lt.s32.totalorder %s24, 5
      %s515 = scalar_select %p514, %s24, 5
      %s516 = smul.addr %s515, 8
      %s517 = scalar_lea.vmem %s0, %s516
      %p518 = pneg %p45
      %p519 = pneg %p42
      %p520 = scmp.lt.s32.totalorder %s24, 5
      %s521 = scalar_select %p520, %s24, 5
      %s522 = scalar_lea.vmem %s1, %s521
      %p523 = pneg %p71
      %p524 = pneg %p68
      %p525 = scmp.lt.s32.totalorder %s24, 0
      %s526 = ssub.s32 0, %s24
      %s527 = scalar_select %p525, %s526, %s24
      %s528 = sand.u32 %s527, 1
      %s529 = ssub.s32 0, %s528
      %s530 = scalar_select %p525, %s529, %s528
      %p531 = scmp.ne.s32.totalorder %s530, 0
      %p532 = scmp.lt.s32.totalorder %s530, 0
      %p533 = pnand %p532, %p531
      %p534 = pneg %p533
      %s535 = sadd.s32 %s530, 2
      %s536 = scalar_select %p534, %s535, %s530
      %p537 = scmp.lt.s32.totalorder %s536, 1
      %s538 = scalar_select %p537, %s536, 1
      %s539 = smul.addr %s538, 3
      %s540 = smul.addr %s539, 8
      %s541 = scalar_lea.vmem %s2, %s540
      %p542 = pneg %p121
      %p543 = pneg %p118
      %p544 = scmp.lt.s32.totalorder %s24, 0
      %s545 = ssub.s32 0, %s24
      %s546 = scalar_select %p544, %s545, %s24
      %s547 = sand.u32 %s546, 1
      %s548 = ssub.s32 0, %s547
      %s549 = scalar_select %p544, %s548, %s547
      %p550 = scmp.ne.s32.totalorder %s549, 0
      %p551 = scmp.lt.s32.totalorder %s549, 0
      %p552 = pnand %p551, %p550
      %p553 = pneg %p552
      %s554 = sadd.s32 %s549, 2
      %s555 = scalar_select %p553, %s554, %s549
      %p556 = scmp.lt.s32.totalorder %s555, 1
      %s557 = scalar_select %p556, %s555, 1
      %s558 = scalar_lea.vmem %s3, %s557
      %p559 = pneg %p171
      %p560 = pneg %p168
      %p561 = pneg %p192
      %p562 = pneg %p189
      %p563 = pneg %p213
      %p564 = pneg %p210
      %p565 = pneg %p234
      %p566 = pneg %p231
      %p567 = pneg %p255
      %p568 = pneg %p252
      %p569 = pneg %p276
      %p570 = pneg %p273
      %p571 = pneg %p297
      %p572 = pneg %p294
      %p573 = pneg %p318
      %p574 = pneg %p315
      %p575 = pneg %p339
      %p576 = pneg %p336
      %p577 = pneg %p360
      %p578 = pneg %p357
      %p579 = pneg %p386
      %p580 = pneg %p383
      %p581 = scmp.lt.s32.totalorder %s24, 5
      %s582 = scalar_select %p581, %s24, 5
      %s583 = scalar_lea.vmem %s13, %s582
      %p584 = scmp.lt.s32.totalorder %s24, 5
      %s585 = scalar_select %p584, %s24, 5
      %s586 = smul.addr %s585, 8
      %s587 = scalar_lea.vmem %s0, %s586
      %p588 = scmp.lt.s32.totalorder %s24, 5
      %s589 = scalar_select %p588, %s24, 5
      %s590 = scalar_lea.vmem %s1, %s589
      %p591 = scmp.lt.s32.totalorder %s24, 0
      %s592 = ssub.s32 0, %s24
      %s593 = scalar_select %p591, %s592, %s24
      %s594 = sand.u32 %s593, 1
      %s595 = ssub.s32 0, %s594
      %s596 = scalar_select %p591, %s595, %s594
      %p597 = scmp.ne.s32.totalorder %s596, 0
      %p598 = scmp.lt.s32.totalorder %s596, 0
      %p599 = pnand %p598, %p597
      %p600 = pneg %p599
      %s601 = sadd.s32 %s596, 2
      %s602 = scalar_select %p600, %s601, %s596
      %p603 = scmp.lt.s32.totalorder %s602, 1
      %s604 = scalar_select %p603, %s602, 1
      %s605 = smul.addr %s604, 3
      %s606 = smul.addr %s605, 8
      %s607 = scalar_lea.vmem %s2, %s606
      %p608 = scmp.lt.s32.totalorder %s24, 0
      %s609 = ssub.s32 0, %s24
      %s610 = scalar_select %p608, %s609, %s24
      %s611 = sand.u32 %s610, 1
      %s612 = ssub.s32 0, %s611
      %s613 = scalar_select %p608, %s612, %s611
      %p614 = scmp.ne.s32.totalorder %s613, 0
      %p615 = scmp.lt.s32.totalorder %s613, 0
      %p616 = pnand %p615, %p614
      %p617 = pneg %p616
      %s618 = sadd.s32 %s613, 2
      %s619 = scalar_select %p617, %s618, %s613
      %p620 = scmp.lt.s32.totalorder %s24, 0
      %s621 = ssub.s32 0, %s24
      %s622 = scalar_select %p620, %s621, %s24
      %s623 = sand.u32 %s622, 1
      %s624 = ssub.s32 0, %s623
      %s625 = scalar_select %p620, %s624, %s623
      %p626 = scmp.ne.s32.totalorder %s625, 0
      %p627 = scmp.lt.s32.totalorder %s625, 0
      %p628 = pnand %p627, %p626
      %p629 = pneg %p628
      %s630 = sadd.s32 %s625, 2
      %s631 = scalar_select %p629, %s630, %s625
      %p632 = scmp.lt.s32.totalorder %s631, 1
      %s633 = scalar_select %p632, %s631, 1
      %s634 = scalar_lea.vmem %s3, %s633
      %p635 = scmp.lt.s32.totalorder %s24, 0
      %s636 = ssub.s32 0, %s24
      %s637 = scalar_select %p635, %s636, %s24
      %s638 = sand.u32 %s637, 1
      %s639 = ssub.s32 0, %s638
      %s640 = scalar_select %p635, %s639, %s638
      %p641 = scmp.ne.s32.totalorder %s640, 0
      %p642 = scmp.lt.s32.totalorder %s640, 0
      %p643 = pnand %p642, %p641
      %p644 = pneg %p643
      %s645 = sadd.s32 %s640, 2
      %s646 = scalar_select %p644, %s645, %s640
      %p647 = scmp.lt.s32.totalorder %s24, 5
      %s648 = scalar_select %p647, %s24, 5
      %s649 = scalar_lea.vmem %s13, %s648
      %v650 = vld [vmem:[%s587] sm:$0xff]
      %v651 = vld [vmem:[%s607] sm:$0xff]
      %v652 = vld [vmem:[%s607 + $0x8] sm:$0xff]
      %v653 = vld [vmem:[%s607 + $0x10] sm:$0x1]
      %v654 = vld [vmem:[%s12] sm:$0x3f]
      %v655 = vld [vmem:[%s590] sm:$0x1]
      %v656 = vsub.f32 1.0, %v655
      %v657 = vmul.f32 %v656, -1e+09
      %v658 = vld [vmem:[%s634] sm:$0x1]
      %v659 = vsub.f32 1.0, %v658
      %v660 = vmul.f32 %v659, -1e+09
      %v661 = vld [vmem:[%s4] sm:$0xff]
      %v662 = vld [vmem:[%s4 + $0x8] sm:$0xff]
      %v663 = vld [vmem:[%s4 + $0x10] sm:$0xff]
      %v664 = vld [vmem:[%s4 + $0x18] sm:$0xff]
      %v665 = vld [vmem:[%s5] sm:$0x1]
      %v667 = vlaneseq
      %v668 = vshrl.u32 %v667, 7
      %v669 = vsub.s32 0, %v668
      %v670 = vrot.slane %v665, %v669
      %vm672 = vcmask 261120
      %v674 = vsel %vm672, %v650, 0
      %676 = vmatprep.subr.mxu0 0.0
      %677 = vmatpush1.msra.mxu0 %v661
      %678 = vmatprep.subr.mxu0 0.0
      %679 = vmatpush1.msra.mxu0 %v662
      %680 = vmatprep.subr.mxu0 0.0
      %681 = vmatpush1.msra.mxu0 %v663
      %682 = vmatprep.subr.mxu0 0.0
      %683 = vmatpush1.msra.mxu0 %v664
      %684 = vmatprep.subr.mxu0 0.0
      %685 = vmatpush1.msra.mxu0 0.0
      %686 = vmatprep.subr.mxu0 0.0
      %687 = vmatpush1.msra.mxu0 0.0
      %688 = vmatprep.subr.mxu0 0.0
      %689 = vmatpush1.msra.mxu0 0.0
      %690 = vmatprep.subr.mxu0 0.0
      %691 = vmatpush1.msra.mxu0 0.0
      %692 = vmatprep.subr.mxu0 0.0
      %693 = vmatpush1.msra.mxu0 0.0
      %694 = vmatprep.subr.mxu0 0.0
      %695 = vmatpush1.msra.mxu0 0.0
      %696 = vmatprep.subr.mxu0 0.0
      %697 = vmatpush1.msra.mxu0 0.0
      %698 = vmatprep.subr.mxu0 0.0
      %699 = vmatpush1.msra.mxu0 0.0
      %700 = vmatprep.subr.mxu0 0.0
      %701 = vmatpush1.msra.mxu0 0.0
      %702 = vmatprep.subr.mxu0 0.0
      %703 = vmatpush1.msra.mxu0 0.0
      %704 = vmatprep.subr.mxu0 0.0
      %705 = vmatpush1.msra.mxu0 0.0
      %706 = vmatprep.subr.mxu0 0.0
      %707 = vmatpush1.msra.mxu0 0.0
      %708 = vmatprep.subr.mxu0 0.0
      %709 = vmatpush1.msra.mxu0 0.0
      %710 = vmatprep.subr.mxu0 0.0
      %711 = vmatpush1.msra.mxu0 0.0
      %712 = vmatprep.subr.mxu0 0.0
      %713 = vmatpush1.msra.mxu0 0.0
      %714 = vmatprep.subr.mxu0 0.0
      %715 = vmatpush1.msra.mxu0 0.0
      %716 = vmatprep.subr.mxu0 0.0
      %717 = vmatpush1.msra.mxu0 0.0
      %718 = vmatprep.subr.mxu0 0.0
      %719 = vmatpush1.msra.mxu0 0.0
      %720 = vmatprep.subr.mxu0 0.0
      %721 = vmatpush1.msra.mxu0 0.0
      %722 = vmatprep.subr.mxu0 0.0
      %723 = vmatpush1.msra.mxu0 0.0
      %724 = vmatprep.subr.mxu0 0.0
      %725 = vmatpush1.msra.mxu0 0.0
      %726 = vmatprep.subr.mxu0 0.0
      %727 = vmatpush1.msra.mxu0 0.0
      %728 = vmatprep.subr.mxu0 0.0
      %729 = vmatpush1.msra.mxu0 0.0
      %730 = vmatprep.subr.mxu0 0.0
      %731 = vmatpush1.msra.mxu0 0.0
      %732 = vmatprep.subr.mxu0 0.0
      %733 = vmatpush1.msra.mxu0 0.0
      %734 = vmatprep.subr.mxu0 0.0
      %735 = vmatpush1.msra.mxu0 0.0
      %736 = vmatprep.subr.mxu0 0.0
      %737 = vmatpush1.msra.mxu0 0.0
      %738 = vmatprep.subr.mxu0 0.0
      %739 = vmatpush1.msra.mxu0 0.0
      %740 = vmatprep.mubr.f32.mxu0 0.0
      %741 = vmatmul.mubr.f32.gmra.mrb[0].mxu0 %v674
      %v742 = vpop.f32.mrb[0].mxu0
      %v743 = vadd.f32 %v670, %v742
      %v744 = vpop.f32.mrb[0].mxu0
      %745 = vdwg.mxu0
      %747 = vrot.lane.b32.xlu0 %v743, 96
      %v748 = vpop.permute.xlu0 %747
      %vm749 = vcmask 64512
      %v750 = vsel %vm749, %v743, 0
      %v752 = vsel %vm749, %v748, 0
      %754 = vmatprep.subr.mxu0 0.0
      %755 = vmatpush1.xpose.msra.mxu0 %v752
      %756 = vmatprep.subr.mxu0 0.0
      %757 = vmatpush1.xpose.msra.mxu0 0.0
      %758 = vmatprep.subr.mxu0 0.0
      %759 = vmatpush1.xpose.msra.mxu0 0.0
      %760 = vmatprep.subr.mxu0 0.0
      %761 = vmatpush1.xpose.msra.mxu0 0.0
      %762 = vmatprep.subr.mxu0 0.0
      %763 = vmatpush1.xpose.msra.mxu0 0.0
      %764 = vmatprep.subr.mxu0 0.0
      %765 = vmatpush1.xpose.msra.mxu0 0.0
      %766 = vmatprep.subr.mxu0 0.0
      %767 = vmatpush1.xpose.msra.mxu0 0.0
      %768 = vmatprep.subr.mxu0 0.0
      %769 = vmatpush1.xpose.msra.mxu0 0.0
      %770 = vmatprep.subr.mxu0 0.0
      %771 = vmatpush1.xpose.msra.mxu0 0.0
      %772 = vmatprep.subr.mxu0 0.0
      %773 = vmatpush1.xpose.msra.mxu0 0.0
      %774 = vmatprep.subr.mxu0 0.0
      %775 = vmatpush1.xpose.msra.mxu0 0.0
      %776 = vmatprep.subr.mxu0 0.0
      %777 = vmatpush1.xpose.msra.mxu0 0.0
      %778 = vmatprep.subr.mxu0 0.0
      %779 = vmatpush1.xpose.msra.mxu0 0.0
      %780 = vmatprep.subr.mxu0 0.0
      %781 = vmatpush1.xpose.msra.mxu0 0.0
      %782 = vmatprep.subr.mxu0 0.0
      %783 = vmatpush1.xpose.msra.mxu0 0.0
      %784 = vmatprep.subr.mxu0 0.0
      %785 = vmatpush1.xpose.msra.mxu0 0.0
      %786 = vmatprep.subr.mxu0 0.0
      %787 = vmatpush1.xpose.msra.mxu0 0.0
      %788 = vmatprep.subr.mxu0 0.0
      %789 = vmatpush1.xpose.msra.mxu0 0.0
      %790 = vmatprep.subr.mxu0 0.0
      %791 = vmatpush1.xpose.msra.mxu0 0.0
      %792 = vmatprep.subr.mxu0 0.0
      %793 = vmatpush1.xpose.msra.mxu0 0.0
      %794 = vmatprep.subr.mxu0 0.0
      %795 = vmatpush1.xpose.msra.mxu0 0.0
      %796 = vmatprep.subr.mxu0 0.0
      %797 = vmatpush1.xpose.msra.mxu0 0.0
      %798 = vmatprep.subr.mxu0 0.0
      %799 = vmatpush1.xpose.msra.mxu0 0.0
      %800 = vmatprep.subr.mxu0 0.0
      %801 = vmatpush1.xpose.msra.mxu0 0.0
      %802 = vmatprep.subr.mxu0 0.0
      %803 = vmatpush1.xpose.msra.mxu0 0.0
      %804 = vmatprep.subr.mxu0 0.0
      %805 = vmatpush1.xpose.msra.mxu0 0.0
      %806 = vmatprep.subr.mxu0 0.0
      %807 = vmatpush1.xpose.msra.mxu0 0.0
      %808 = vmatprep.subr.mxu0 0.0
      %809 = vmatpush1.xpose.msra.mxu0 0.0
      %810 = vmatprep.subr.mxu0 0.0
      %811 = vmatpush1.xpose.msra.mxu0 0.0
      %812 = vmatprep.subr.mxu0 0.0
      %813 = vmatpush1.xpose.msra.mxu0 0.0
      %814 = vmatprep.subr.mxu0 0.0
      %815 = vmatpush1.xpose.msra.mxu0 0.0
      %816 = vmatprep.subr.mxu0 0.0
      %817 = vmatpush1.xpose.msra.mxu0 0.0
      %818 = vmatprep.mubr.f32.mxu0 0.0
      %819 = vmatmul.mubr.f32.gmra.mrb[0].mxu0 %v750
      %v820 = vpop.f32.mrb[0].mxu0
      %v821 = vadd.f32 0.0, %v820
      %v822 = vpop.f32.mrb[0].mxu0
      %823 = vdwg.mxu0
      %v824 = vmul.f32 %v821, 0.35355338
      %v825 = vadd.f32 %v824, %v657
      %vm826 = vcmask 57344
      %v827 = vsel %vm826, %v825, -inf
      %828 = vmax.xlane.f32.xlu0 %v827
      %v829 = vpop.xlane.xlu0 %828
      %v830 = vsub.f32 %v825, %v829
      %v831 = vmul.f32 %v830, 1.442695
      %v832 = vpow.pop %v831
      %v833 = vsel %vm826, %v832, 0.0
      %834 = vadd.xlane.f32.xlu0 %v833
      %v835 = vpop.xlane.xlu0 %834
      %v836 = vrcp.pop %v835
      %v837 = vmul.f32 %v832, %v836
      %838 = vrot.lane.b32.xlu0 %v743, 64
      %v839 = vpop.permute.xlu0 %838
      %v842 = vsel %vm749, %v837, 0
      %844 = vmatprep.subr.mxu0 0.0
      %845 = vmatpush1.msra.mxu0 %v839
      %846 = vmatprep.subr.mxu0 0.0
      %847 = vmatpush1.msra.mxu0 0.0
      %848 = vmatprep.subr.mxu0 0.0
      %849 = vmatpush1.msra.mxu0 0.0
      %850 = vmatprep.subr.mxu0 0.0
      %851 = vmatpush1.msra.mxu0 0.0
      %852 = vmatprep.subr.mxu0 0.0
      %853 = vmatpush1.msra.mxu0 0.0
      %854 = vmatprep.subr.mxu0 0.0
      %855 = vmatpush1.msra.mxu0 0.0
      %856 = vmatprep.subr.mxu0 0.0
      %857 = vmatpush1.msra.mxu0 0.0
      %858 = vmatprep.subr.mxu0 0.0
      %859 = vmatpush1.msra.mxu0 0.0
      %860 = vmatprep.subr.mxu0 0.0
      %861 = vmatpush1.msra.mxu0 0.0
      %862 = vmatprep.subr.mxu0 0.0
      %863 = vmatpush1.msra.mxu0 0.0
      %864 = vmatprep.subr.mxu0 0.0
      %865 = vmatpush1.msra.mxu0 0.0
      %866 = vmatprep.subr.mxu0 0.0
      %867 = vmatpush1.msra.mxu0 0.0
      %868 = vmatprep.subr.mxu0 0.0
      %869 = vmatpush1.msra.mxu0 0.0
      %870 = vmatprep.subr.mxu0 0.0
      %871 = vmatpush1.msra.mxu0 0.0
      %872 = vmatprep.subr.mxu0 0.0
      %873 = vmatpush1.msra.mxu0 0.0
      %874 = vmatprep.subr.mxu0 0.0
      %875 = vmatpush1.msra.mxu0 0.0
      %876 = vmatprep.subr.mxu0 0.0
      %877 = vmatpush1.msra.mxu0 0.0
      %878 = vmatprep.subr.mxu0 0.0
      %879 = vmatpush1.msra.mxu0 0.0
      %880 = vmatprep.subr.mxu0 0.0
      %881 = vmatpush1.msra.mxu0 0.0
      %882 = vmatprep.subr.mxu0 0.0
      %883 = vmatpush1.msra.mxu0 0.0
      %884 = vmatprep.subr.mxu0 0.0
      %885 = vmatpush1.msra.mxu0 0.0
      %886 = vmatprep.subr.mxu0 0.0
      %887 = vmatpush1.msra.mxu0 0.0
      %888 = vmatprep.subr.mxu0 0.0
      %889 = vmatpush1.msra.mxu0 0.0
      %890 = vmatprep.subr.mxu0 0.0
      %891 = vmatpush1.msra.mxu0 0.0
      %892 = vmatprep.subr.mxu0 0.0
      %893 = vmatpush1.msra.mxu0 0.0
      %894 = vmatprep.subr.mxu0 0.0
      %895 = vmatpush1.msra.mxu0 0.0
      %896 = vmatprep.subr.mxu0 0.0
      %897 = vmatpush1.msra.mxu0 0.0
      %898 = vmatprep.subr.mxu0 0.0
      %899 = vmatpush1.msra.mxu0 0.0
      %900 = vmatprep.subr.mxu0 0.0
      %901 = vmatpush1.msra.mxu0 0.0
      %902 = vmatprep.subr.mxu0 0.0
      %903 = vmatpush1.msra.mxu0 0.0
      %904 = vmatprep.subr.mxu0 0.0
      %905 = vmatpush1.msra.mxu0 0.0
      %906 = vmatprep.subr.mxu0 0.0
      %907 = vmatpush1.msra.mxu0 0.0
      %908 = vmatprep.mubr.f32.mxu0 0.0
      %909 = vmatmul.mubr.f32.gmra.mrb[0].mxu0 %v842
      %v910 = vpop.f32.mrb[0].mxu0
      %v911 = vadd.f32 0.0, %v910
      %v912 = vpop.f32.mrb[0].mxu0
      %913 = vdwg.mxu0
      %914 = vrot.lane.b32.xlu0 %v743, 120
      %v915 = vpop.permute.xlu0 %914
      %916 = vrot.lane.b32.xlu0 %v743, 88
      %v917 = vpop.permute.xlu0 %916
      %v918 = vsel %vm749, %v915, 0
      %v920 = vsel %vm749, %v917, 0
      %922 = vmatprep.subr.mxu0 0.0
      %923 = vmatpush1.xpose.msra.mxu0 %v920
      %924 = vmatprep.subr.mxu0 0.0
      %925 = vmatpush1.xpose.msra.mxu0 0.0
      %926 = vmatprep.subr.mxu0 0.0
      %927 = vmatpush1.xpose.msra.mxu0 0.0
      %928 = vmatprep.subr.mxu0 0.0
      %929 = vmatpush1.xpose.msra.mxu0 0.0
      %930 = vmatprep.subr.mxu0 0.0
      %931 = vmatpush1.xpose.msra.mxu0 0.0
      %932 = vmatprep.subr.mxu0 0.0
      %933 = vmatpush1.xpose.msra.mxu0 0.0
      %934 = vmatprep.subr.mxu0 0.0
      %935 = vmatpush1.xpose.msra.mxu0 0.0
      %936 = vmatprep.subr.mxu0 0.0
      %937 = vmatpush1.xpose.msra.mxu0 0.0
      %938 = vmatprep.subr.mxu0 0.0
      %939 = vmatpush1.xpose.msra.mxu0 0.0
      %940 = vmatprep.subr.mxu0 0.0
      %941 = vmatpush1.xpose.msra.mxu0 0.0
      %942 = vmatprep.subr.mxu0 0.0
      %943 = vmatpush1.xpose.msra.mxu0 0.0
      %944 = vmatprep.subr.mxu0 0.0
      %945 = vmatpush1.xpose.msra.mxu0 0.0
      %946 = vmatprep.subr.mxu0 0.0
      %947 = vmatpush1.xpose.msra.mxu0 0.0
      %948 = vmatprep.subr.mxu0 0.0
      %949 = vmatpush1.xpose.msra.mxu0 0.0
      %950 = vmatprep.subr.mxu0 0.0
      %951 = vmatpush1.xpose.msra.mxu0 0.0
      %952 = vmatprep.subr.mxu0 0.0
      %953 = vmatpush1.xpose.msra.mxu0 0.0
      %954 = vmatprep.subr.mxu0 0.0
      %955 = vmatpush1.xpose.msra.mxu0 0.0
      %956 = vmatprep.subr.mxu0 0.0
      %957 = vmatpush1.xpose.msra.mxu0 0.0
      %958 = vmatprep.subr.mxu0 0.0
      %959 = vmatpush1.xpose.msra.mxu0 0.0
      %960 = vmatprep.subr.mxu0 0.0
      %961 = vmatpush1.xpose.msra.mxu0 0.0
      %962 = vmatprep.subr.mxu0 0.0
      %963 = vmatpush1.xpose.msra.mxu0 0.0
      %964 = vmatprep.subr.mxu0 0.0
      %965 = vmatpush1.xpose.msra.mxu0 0.0
      %966 = vmatprep.subr.mxu0 0.0
      %967 = vmatpush1.xpose.msra.mxu0 0.0
      %968 = vmatprep.subr.mxu0 0.0
      %969 = vmatpush1.xpose.msra.mxu0 0.0
      %970 = vmatprep.subr.mxu0 0.0
      %971 = vmatpush1.xpose.msra.mxu0 0.0
      %972 = vmatprep.subr.mxu0 0.0
      %973 = vmatpush1.xpose.msra.mxu0 0.0
      %974 = vmatprep.subr.mxu0 0.0
      %975 = vmatpush1.xpose.msra.mxu0 0.0
      %976 = vmatprep.subr.mxu0 0.0
      %977 = vmatpush1.xpose.msra.mxu0 0.0
      %978 = vmatprep.subr.mxu0 0.0
      %979 = vmatpush1.xpose.msra.mxu0 0.0
      %980 = vmatprep.subr.mxu0 0.0
      %981 = vmatpush1.xpose.msra.mxu0 0.0
      %982 = vmatprep.subr.mxu0 0.0
      %983 = vmatpush1.xpose.msra.mxu0 0.0
      %984 = vmatprep.subr.mxu0 0.0
      %985 = vmatpush1.xpose.msra.mxu0 0.0
      %986 = vmatprep.mubr.f32.mxu0 0.0
      %987 = vmatmul.mubr.f32.gmra.mrb[0].mxu0 %v918
      %v988 = vpop.f32.mrb[0].mxu0
      %v989 = vadd.f32 0.0, %v988
      %v990 = vpop.f32.mrb[0].mxu0
      %991 = vdwg.mxu0
      %v992 = vmul.f32 %v989, 0.35355338
      %v993 = vadd.f32 %v992, %v657
      %v994 = vsel %vm826, %v993, -inf
      %995 = vmax.xlane.f32.xlu0 %v994
      %v996 = vpop.xlane.xlu0 %995
      %v997 = vsub.f32 %v993, %v996
      %v998 = vmul.f32 %v997, 1.442695
      %v999 = vpow.pop %v998
      %v1000 = vsel %vm826, %v999, 0.0
      %1001 = vadd.xlane.f32.xlu0 %v1000
      %v1002 = vpop.xlane.xlu0 %1001
      %v1003 = vrcp.pop %v1002
      %v1004 = vmul.f32 %v999, %v1003
      %1005 = vrot.lane.b32.xlu0 %v743, 56
      %v1006 = vpop.permute.xlu0 %1005
      %v1009 = vsel %vm749, %v1004, 0
      %1011 = vmatprep.subr.mxu0 0.0
      %1012 = vmatpush1.msra.mxu0 %v1006
      %1013 = vmatprep.subr.mxu0 0.0
      %1014 = vmatpush1.msra.mxu0 0.0
      %1015 = vmatprep.subr.mxu0 0.0
      %1016 = vmatpush1.msra.mxu0 0.0
      %1017 = vmatprep.subr.mxu0 0.0
      %1018 = vmatpush1.msra.mxu0 0.0
      %1019 = vmatprep.subr.mxu0 0.0
      %1020 = vmatpush1.msra.mxu0 0.0
      %1021 = vmatprep.subr.mxu0 0.0
      %1022 = vmatpush1.msra.mxu0 0.0
      %1023 = vmatprep.subr.mxu0 0.0
      %1024 = vmatpush1.msra.mxu0 0.0
      %1025 = vmatprep.subr.mxu0 0.0
      %1026 = vmatpush1.msra.mxu0 0.0
      %1027 = vmatprep.subr.mxu0 0.0
      %1028 = vmatpush1.msra.mxu0 0.0
      %1029 = vmatprep.subr.mxu0 0.0
      %1030 = vmatpush1.msra.mxu0 0.0
      %1031 = vmatprep.subr.mxu0 0.0
      %1032 = vmatpush1.msra.mxu0 0.0
      %1033 = vmatprep.subr.mxu0 0.0
      %1034 = vmatpush1.msra.mxu0 0.0
      %1035 = vmatprep.subr.mxu0 0.0
      %1036 = vmatpush1.msra.mxu0 0.0
      %1037 = vmatprep.subr.mxu0 0.0
      %1038 = vmatpush1.msra.mxu0 0.0
      %1039 = vmatprep.subr.mxu0 0.0
      %1040 = vmatpush1.msra.mxu0 0.0
      %1041 = vmatprep.subr.mxu0 0.0
      %1042 = vmatpush1.msra.mxu0 0.0
      %1043 = vmatprep.subr.mxu0 0.0
      %1044 = vmatpush1.msra.mxu0 0.0
      %1045 = vmatprep.subr.mxu0 0.0
      %1046 = vmatpush1.msra.mxu0 0.0
      %1047 = vmatprep.subr.mxu0 0.0
      %1048 = vmatpush1.msra.mxu0 0.0
      %1049 = vmatprep.subr.mxu0 0.0
      %1050 = vmatpush1.msra.mxu0 0.0
      %1051 = vmatprep.subr.mxu0 0.0
      %1052 = vmatpush1.msra.mxu0 0.0
      %1053 = vmatprep.subr.mxu0 0.0
      %1054 = vmatpush1.msra.mxu0 0.0
      %1055 = vmatprep.subr.mxu0 0.0
      %1056 = vmatpush1.msra.mxu0 0.0
      %1057 = vmatprep.subr.mxu0 0.0
      %1058 = vmatpush1.msra.mxu0 0.0
      %1059 = vmatprep.subr.mxu0 0.0
      %1060 = vmatpush1.msra.mxu0 0.0
      %1061 = vmatprep.subr.mxu0 0.0
      %1062 = vmatpush1.msra.mxu0 0.0
      %1063 = vmatprep.subr.mxu0 0.0
      %1064 = vmatpush1.msra.mxu0 0.0
      %1065 = vmatprep.subr.mxu0 0.0
      %1066 = vmatpush1.msra.mxu0 0.0
      %1067 = vmatprep.subr.mxu0 0.0
      %1068 = vmatpush1.msra.mxu0 0.0
      %1069 = vmatprep.subr.mxu0 0.0
      %1070 = vmatpush1.msra.mxu0 0.0
      %1071 = vmatprep.subr.mxu0 0.0
      %1072 = vmatpush1.msra.mxu0 0.0
      %1073 = vmatprep.subr.mxu0 0.0
      %1074 = vmatpush1.msra.mxu0 0.0
      %1075 = vmatprep.mubr.f32.mxu0 0.0
      %1076 = vmatmul.mubr.f32.gmra.mrb[0].mxu0 %v1009
      %v1077 = vpop.f32.mrb[0].mxu0
      %v1078 = vadd.f32 0.0, %v1077
      %v1079 = vpop.f32.mrb[0].mxu0
      %1080 = vdwg.mxu0
      %1082 = vrot.lane.b32.xlu0 %v662, 32
      %v1083 = vpop.permute.xlu0 %1082
      %v1086 = vsel %vm749, %v1078, 0
      %1088 = vmatprep.subr.mxu0 0.0
      %1089 = vmatpush1.msra.mxu0 %v1083
      %1090 = vmatprep.subr.mxu0 0.0
      %1091 = vmatpush1.msra.mxu0 0.0
      %1092 = vmatprep.subr.mxu0 0.0
      %1093 = vmatpush1.msra.mxu0 0.0
      %1094 = vmatprep.subr.mxu0 0.0
      %1095 = vmatpush1.msra.mxu0 0.0
      %1096 = vmatprep.subr.mxu0 0.0
      %1097 = vmatpush1.msra.mxu0 0.0
      %1098 = vmatprep.subr.mxu0 0.0
      %1099 = vmatpush1.msra.mxu0 0.0
      %1100 = vmatprep.subr.mxu0 0.0
      %1101 = vmatpush1.msra.mxu0 0.0
      %1102 = vmatprep.subr.mxu0 0.0
      %1103 = vmatpush1.msra.mxu0 0.0
      %1104 = vmatprep.subr.mxu0 0.0
      %1105 = vmatpush1.msra.mxu0 0.0
      %1106 = vmatprep.subr.mxu0 0.0
      %1107 = vmatpush1.msra.mxu0 0.0
      %1108 = vmatprep.subr.mxu0 0.0
      %1109 = vmatpush1.msra.mxu0 0.0
      %1110 = vmatprep.subr.mxu0 0.0
      %1111 = vmatpush1.msra.mxu0 0.0
      %1112 = vmatprep.subr.mxu0 0.0
      %1113 = vmatpush1.msra.mxu0 0.0
      %1114 = vmatprep.subr.mxu0 0.0
      %1115 = vmatpush1.msra.mxu0 0.0
      %1116 = vmatprep.subr.mxu0 0.0
      %1117 = vmatpush1.msra.mxu0 0.0
      %1118 = vmatprep.subr.mxu0 0.0
      %1119 = vmatpush1.msra.mxu0 0.0
      %1120 = vmatprep.subr.mxu0 0.0
      %1121 = vmatpush1.msra.mxu0 0.0
      %1122 = vmatprep.subr.mxu0 0.0
      %1123 = vmatpush1.msra.mxu0 0.0
      %1124 = vmatprep.subr.mxu0 0.0
      %1125 = vmatpush1.msra.mxu0 0.0
      %1126 = vmatprep.subr.mxu0 0.0
      %1127 = vmatpush1.msra.mxu0 0.0
      %1128 = vmatprep.subr.mxu0 0.0
      %1129 = vmatpush1.msra.mxu0 0.0
      %1130 = vmatprep.subr.mxu0 0.0
      %1131 = vmatpush1.msra.mxu0 0.0
      %1132 = vmatprep.subr.mxu0 0.0
      %1133 = vmatpush1.msra.mxu0 0.0
      %1134 = vmatprep.subr.mxu0 0.0
      %1135 = vmatpush1.msra.mxu0 0.0
      %1136 = vmatprep.subr.mxu0 0.0
      %1137 = vmatpush1.msra.mxu0 0.0
      %1138 = vmatprep.subr.mxu0 0.0
      %1139 = vmatpush1.msra.mxu0 0.0
      %1140 = vmatprep.subr.mxu0 0.0
      %1141 = vmatpush1.msra.mxu0 0.0
      %1142 = vmatprep.subr.mxu0 0.0
      %1143 = vmatpush1.msra.mxu0 0.0
      %1144 = vmatprep.subr.mxu0 0.0
      %1145 = vmatpush1.msra.mxu0 0.0
      %1146 = vmatprep.subr.mxu0 0.0
      %1147 = vmatpush1.msra.mxu0 0.0
      %1148 = vmatprep.subr.mxu0 0.0
      %1149 = vmatpush1.msra.mxu0 0.0
      %1150 = vmatprep.subr.mxu0 0.0
      %1151 = vmatpush1.msra.mxu0 0.0
      %1152 = vmatprep.mubr.f32.mxu0 0.0
      %1153 = vmatmul.mubr.f32.gmra.mrb[0].mxu0 %v1086
      %v1154 = vpop.f32.mrb[0].mxu0
      %v1155 = vadd.f32 0.0, %v1154
      %v1156 = vpop.f32.mrb[0].mxu0
      %1157 = vdwg.mxu0
      %1159 = vrot.lane.b32.xlu0 %v661, 32
      %v1160 = vpop.permute.xlu0 %1159
      %v1163 = vsel %vm749, %v911, 0
      %1165 = vmatprep.subr.mxu0 0.0
      %1166 = vmatpush1.msra.mxu0 %v1160
      %1167 = vmatprep.subr.mxu0 0.0
      %1168 = vmatpush1.msra.mxu0 0.0
      %1169 = vmatprep.subr.mxu0 0.0
      %1170 = vmatpush1.msra.mxu0 0.0
      %1171 = vmatprep.subr.mxu0 0.0
      %1172 = vmatpush1.msra.mxu0 0.0
      %1173 = vmatprep.subr.mxu0 0.0
      %1174 = vmatpush1.msra.mxu0 0.0
      %1175 = vmatprep.subr.mxu0 0.0
      %1176 = vmatpush1.msra.mxu0 0.0
      %1177 = vmatprep.subr.mxu0 0.0
      %1178 = vmatpush1.msra.mxu0 0.0
      %1179 = vmatprep.subr.mxu0 0.0
      %1180 = vmatpush1.msra.mxu0 0.0
      %1181 = vmatprep.subr.mxu0 0.0
      %1182 = vmatpush1.msra.mxu0 0.0
      %1183 = vmatprep.subr.mxu0 0.0
      %1184 = vmatpush1.msra.mxu0 0.0
      %1185 = vmatprep.subr.mxu0 0.0
      %1186 = vmatpush1.msra.mxu0 0.0
      %1187 = vmatprep.subr.mxu0 0.0
      %1188 = vmatpush1.msra.mxu0 0.0
      %1189 = vmatprep.subr.mxu0 0.0
      %1190 = vmatpush1.msra.mxu0 0.0
      %1191 = vmatprep.subr.mxu0 0.0
      %1192 = vmatpush1.msra.mxu0 0.0
      %1193 = vmatprep.subr.mxu0 0.0
      %1194 = vmatpush1.msra.mxu0 0.0
      %1195 = vmatprep.subr.mxu0 0.0
      %1196 = vmatpush1.msra.mxu0 0.0
      %1197 = vmatprep.subr.mxu0 0.0
      %1198 = vmatpush1.msra.mxu0 0.0
      %1199 = vmatprep.subr.mxu0 0.0
      %1200 = vmatpush1.msra.mxu0 0.0
      %1201 = vmatprep.subr.mxu0 0.0
      %1202 = vmatpush1.msra.mxu0 0.0
      %1203 = vmatprep.subr.mxu0 0.0
      %1204 = vmatpush1.msra.mxu0 0.0
      %1205 = vmatprep.subr.mxu0 0.0
      %1206 = vmatpush1.msra.mxu0 0.0
      %1207 = vmatprep.subr.mxu0 0.0
      %1208 = vmatpush1.msra.mxu0 0.0
      %1209 = vmatprep.subr.mxu0 0.0
      %1210 = vmatpush1.msra.mxu0 0.0
      %1211 = vmatprep.subr.mxu0 0.0
      %1212 = vmatpush1.msra.mxu0 0.0
      %1213 = vmatprep.subr.mxu0 0.0
      %1214 = vmatpush1.msra.mxu0 0.0
      %1215 = vmatprep.subr.mxu0 0.0
      %1216 = vmatpush1.msra.mxu0 0.0
      %1217 = vmatprep.subr.mxu0 0.0
      %1218 = vmatpush1.msra.mxu0 0.0
      %1219 = vmatprep.subr.mxu0 0.0
      %1220 = vmatpush1.msra.mxu0 0.0
      %1221 = vmatprep.subr.mxu0 0.0
      %1222 = vmatpush1.msra.mxu0 0.0
      %1223 = vmatprep.subr.mxu0 0.0
      %1224 = vmatpush1.msra.mxu0 0.0
      %1225 = vmatprep.subr.mxu0 0.0
      %1226 = vmatpush1.msra.mxu0 0.0
      %1227 = vmatprep.subr.mxu0 0.0
      %1228 = vmatpush1.msra.mxu0 0.0
      %1229 = vmatprep.mubr.f32.mxu0 0.0
      %1230 = vmatmul.mubr.f32.gmra.mrb[0].mxu0 %v1163
      %v1231 = vpop.f32.mrb[0].mxu0
      %v1232 = vadd.f32 %v1155, %v1231
      %v1233 = vpop.f32.mrb[0].mxu0
      %1234 = vdwg.mxu0
      %1235 = vrot.lane.b32.xlu0 %v743, 112
      %v1236 = vpop.permute.xlu0 %1235
      %1237 = vrot.lane.b32.xlu0 %v743, 80
      %v1238 = vpop.permute.xlu0 %1237
      %v1239 = vsel %vm749, %v1236, 0
      %v1241 = vsel %vm749, %v1238, 0
      %1243 = vmatprep.subr.mxu0 0.0
      %1244 = vmatpush1.xpose.msra.mxu0 %v1241
      %1245 = vmatprep.subr.mxu0 0.0
      %1246 = vmatpush1.xpose.msra.mxu0 0.0
      %1247 = vmatprep.subr.mxu0 0.0
      %1248 = vmatpush1.xpose.msra.mxu0 0.0
      %1249 = vmatprep.subr.mxu0 0.0
      %1250 = vmatpush1.xpose.msra.mxu0 0.0
      %1251 = vmatprep.subr.mxu0 0.0
      %1252 = vmatpush1.xpose.msra.mxu0 0.0
      %1253 = vmatprep.subr.mxu0 0.0
      %1254 = vmatpush1.xpose.msra.mxu0 0.0
      %1255 = vmatprep.subr.mxu0 0.0
      %1256 = vmatpush1.xpose.msra.mxu0 0.0
      %1257 = vmatprep.subr.mxu0 0.0
      %1258 = vmatpush1.xpose.msra.mxu0 0.0
      %1259 = vmatprep.subr.mxu0 0.0
      %1260 = vmatpush1.xpose.msra.mxu0 0.0
      %1261 = vmatprep.subr.mxu0 0.0
      %1262 = vmatpush1.xpose.msra.mxu0 0.0
      %1263 = vmatprep.subr.mxu0 0.0
      %1264 = vmatpush1.xpose.msra.mxu0 0.0
      %1265 = vmatprep.subr.mxu0 0.0
      %1266 = vmatpush1.xpose.msra.mxu0 0.0
      %1267 = vmatprep.subr.mxu0 0.0
      %1268 = vmatpush1.xpose.msra.mxu0 0.0
      %1269 = vmatprep.subr.mxu0 0.0
      %1270 = vmatpush1.xpose.msra.mxu0 0.0
      %1271 = vmatprep.subr.mxu0 0.0
      %1272 = vmatpush1.xpose.msra.mxu0 0.0
      %1273 = vmatprep.subr.mxu0 0.0
      %1274 = vmatpush1.xpose.msra.mxu0 0.0
      %1275 = vmatprep.subr.mxu0 0.0
      %1276 = vmatpush1.xpose.msra.mxu0 0.0
      %1277 = vmatprep.subr.mxu0 0.0
      %1278 = vmatpush1.xpose.msra.mxu0 0.0
      %1279 = vmatprep.subr.mxu0 0.0
      %1280 = vmatpush1.xpose.msra.mxu0 0.0
      %1281 = vmatprep.subr.mxu0 0.0
      %1282 = vmatpush1.xpose.msra.mxu0 0.0
      %1283 = vmatprep.subr.mxu0 0.0
      %1284 = vmatpush1.xpose.msra.mxu0 0.0
      %1285 = vmatprep.subr.mxu0 0.0
      %1286 = vmatpush1.xpose.msra.mxu0 0.0
      %1287 = vmatprep.subr.mxu0 0.0
      %1288 = vmatpush1.xpose.msra.mxu0 0.0
      %1289 = vmatprep.subr.mxu0 0.0
      %1290 = vmatpush1.xpose.msra.mxu0 0.0
      %1291 = vmatprep.subr.mxu0 0.0
      %1292 = vmatpush1.xpose.msra.mxu0 0.0
      %1293 = vmatprep.subr.mxu0 0.0
      %1294 = vmatpush1.xpose.msra.mxu0 0.0
      %1295 = vmatprep.subr.mxu0 0.0
      %1296 = vmatpush1.xpose.msra.mxu0 0.0
      %1297 = vmatprep.subr.mxu0 0.0
      %1298 = vmatpush1.xpose.msra.mxu0 0.0
      %1299 = vmatprep.subr.mxu0 0.0
      %1300 = vmatpush1.xpose.msra.mxu0 0.0
      %1301 = vmatprep.subr.mxu0 0.0
      %1302 = vmatpush1.xpose.msra.mxu0 0.0
      %1303 = vmatprep.subr.mxu0 0.0
      %1304 = vmatpush1.xpose.msra.mxu0 0.0
      %1305 = vmatprep.subr.mxu0 0.0
      %1306 = vmatpush1.xpose.msra.mxu0 0.0
      %1307 = vmatprep.mubr.f32.mxu0 0.0
      %1308 = vmatmul.mubr.f32.gmra.mrb[0].mxu0 %v1239
      %v1309 = vpop.f32.mrb[0].mxu0
      %v1310 = vadd.f32 0.0, %v1309
      %v1311 = vpop.f32.mrb[0].mxu0
      %1312 = vdwg.mxu0
      %v1313 = vmul.f32 %v1310, 0.35355338
      %v1314 = vadd.f32 %v1313, %v657
      %v1315 = vsel %vm826, %v1314, -inf
      %1316 = vmax.xlane.f32.xlu0 %v1315
      %v1317 = vpop.xlane.xlu0 %1316
      %v1318 = vsub.f32 %v1314, %v1317
      %v1319 = vmul.f32 %v1318, 1.442695
      %v1320 = vpow.pop %v1319
      %v1321 = vsel %vm826, %v1320, 0.0
      %1322 = vadd.xlane.f32.xlu0 %v1321
      %v1323 = vpop.xlane.xlu0 %1322
      %v1324 = vrcp.pop %v1323
      %v1325 = vmul.f32 %v1320, %v1324
      %1326 = vrot.lane.b32.xlu0 %v743, 48
      %v1327 = vpop.permute.xlu0 %1326
      %v1330 = vsel %vm749, %v1325, 0
      %1332 = vmatprep.subr.mxu0 0.0
      %1333 = vmatpush1.msra.mxu0 %v1327
      %1334 = vmatprep.subr.mxu0 0.0
      %1335 = vmatpush1.msra.mxu0 0.0
      %1336 = vmatprep.subr.mxu0 0.0
      %1337 = vmatpush1.msra.mxu0 0.0
      %1338 = vmatprep.subr.mxu0 0.0
      %1339 = vmatpush1.msra.mxu0 0.0
      %1340 = vmatprep.subr.mxu0 0.0
      %1341 = vmatpush1.msra.mxu0 0.0
      %1342 = vmatprep.subr.mxu0 0.0
      %1343 = vmatpush1.msra.mxu0 0.0
      %1344 = vmatprep.subr.mxu0 0.0
      %1345 = vmatpush1.msra.mxu0 0.0
      %1346 = vmatprep.subr.mxu0 0.0
      %1347 = vmatpush1.msra.mxu0 0.0
      %1348 = vmatprep.subr.mxu0 0.0
      %1349 = vmatpush1.msra.mxu0 0.0
      %1350 = vmatprep.subr.mxu0 0.0
      %1351 = vmatpush1.msra.mxu0 0.0
      %1352 = vmatprep.subr.mxu0 0.0
      %1353 = vmatpush1.msra.mxu0 0.0
      %1354 = vmatprep.subr.mxu0 0.0
      %1355 = vmatpush1.msra.mxu0 0.0
      %1356 = vmatprep.subr.mxu0 0.0
      %1357 = vmatpush1.msra.mxu0 0.0
      %1358 = vmatprep.subr.mxu0 0.0
      %1359 = vmatpush1.msra.mxu0 0.0
      %1360 = vmatprep.subr.mxu0 0.0
      %1361 = vmatpush1.msra.mxu0 0.0
      %1362 = vmatprep.subr.mxu0 0.0
      %1363 = vmatpush1.msra.mxu0 0.0
      %1364 = vmatprep.subr.mxu0 0.0
      %1365 = vmatpush1.msra.mxu0 0.0
      %1366 = vmatprep.subr.mxu0 0.0
      %1367 = vmatpush1.msra.mxu0 0.0
      %1368 = vmatprep.subr.mxu0 0.0
      %1369 = vmatpush1.msra.mxu0 0.0
      %1370 = vmatprep.subr.mxu0 0.0
      %1371 = vmatpush1.msra.mxu0 0.0
      %1372 = vmatprep.subr.mxu0 0.0
      %1373 = vmatpush1.msra.mxu0 0.0
      %1374 = vmatprep.subr.mxu0 0.0
      %1375 = vmatpush1.msra.mxu0 0.0
      %1376 = vmatprep.subr.mxu0 0.0
      %1377 = vmatpush1.msra.mxu0 0.0
      %1378 = vmatprep.subr.mxu0 0.0
      %1379 = vmatpush1.msra.mxu0 0.0
      %1380 = vmatprep.subr.mxu0 0.0
      %1381 = vmatpush1.msra.mxu0 0.0
      %1382 = vmatprep.subr.mxu0 0.0
      %1383 = vmatpush1.msra.mxu0 0.0
      %1384 = vmatprep.subr.mxu0 0.0
      %1385 = vmatpush1.msra.mxu0 0.0
      %1386 = vmatprep.subr.mxu0 0.0
      %1387 = vmatpush1.msra.mxu0 0.0
      %1388 = vmatprep.subr.mxu0 0.0
      %1389 = vmatpush1.msra.mxu0 0.0
      %1390 = vmatprep.subr.mxu0 0.0
      %1391 = vmatpush1.msra.mxu0 0.0
      %1392 = vmatprep.subr.mxu0 0.0
      %1393 = vmatpush1.msra.mxu0 0.0
      %1394 = vmatprep.subr.mxu0 0.0
      %1395 = vmatpush1.msra.mxu0 0.0
      %1396 = vmatprep.mubr.f32.mxu0 0.0
      %1397 = vmatmul.mubr.f32.gmra.mrb[0].mxu0 %v1330
      %v1398 = vpop.f32.mrb[0].mxu0
      %v1399 = vadd.f32 0.0, %v1398
      %v1400 = vpop.f32.mrb[0].mxu0
      %1401 = vdwg.mxu0
      %1403 = vrot.lane.b32.xlu0 %v663, 32
      %v1404 = vpop.permute.xlu0 %1403
      %v1407 = vsel %vm749, %v1399, 0
      %1409 = vmatprep.subr.mxu0 0.0
      %1410 = vmatpush1.msra.mxu0 %v1404
      %1411 = vmatprep.subr.mxu0 0.0
      %1412 = vmatpush1.msra.mxu0 0.0
      %1413 = vmatprep.subr.mxu0 0.0
      %1414 = vmatpush1.msra.mxu0 0.0
      %1415 = vmatprep.subr.mxu0 0.0
      %1416 = vmatpush1.msra.mxu0 0.0
      %1417 = vmatprep.subr.mxu0 0.0
      %1418 = vmatpush1.msra.mxu0 0.0
      %1419 = vmatprep.subr.mxu0 0.0
      %1420 = vmatpush1.msra.mxu0 0.0
      %1421 = vmatprep.subr.mxu0 0.0
      %1422 = vmatpush1.msra.mxu0 0.0
      %1423 = vmatprep.subr.mxu0 0.0
      %1424 = vmatpush1.msra.mxu0 0.0
      %1425 = vmatprep.subr.mxu0 0.0
      %1426 = vmatpush1.msra.mxu0 0.0
      %1427 = vmatprep.subr.mxu0 0.0
      %1428 = vmatpush1.msra.mxu0 0.0
      %1429 = vmatprep.subr.mxu0 0.0
      %1430 = vmatpush1.msra.mxu0 0.0
      %1431 = vmatprep.subr.mxu0 0.0
      %1432 = vmatpush1.msra.mxu0 0.0
      %1433 = vmatprep.subr.mxu0 0.0
      %1434 = vmatpush1.msra.mxu0 0.0
      %1435 = vmatprep.subr.mxu0 0.0
      %1436 = vmatpush1.msra.mxu0 0.0
      %1437 = vmatprep.subr.mxu0 0.0
      %1438 = vmatpush1.msra.mxu0 0.0
      %1439 = vmatprep.subr.mxu0 0.0
      %1440 = vmatpush1.msra.mxu0 0.0
      %1441 = vmatprep.subr.mxu0 0.0
      %1442 = vmatpush1.msra.mxu0 0.0
      %1443 = vmatprep.subr.mxu0 0.0
      %1444 = vmatpush1.msra.mxu0 0.0
      %1445 = vmatprep.subr.mxu0 0.0
      %1446 = vmatpush1.msra.mxu0 0.0
      %1447 = vmatprep.subr.mxu0 0.0
      %1448 = vmatpush1.msra.mxu0 0.0
      %1449 = vmatprep.subr.mxu0 0.0
      %1450 = vmatpush1.msra.mxu0 0.0
      %1451 = vmatprep.subr.mxu0 0.0
      %1452 = vmatpush1.msra.mxu0 0.0
      %1453 = vmatprep.subr.mxu0 0.0
      %1454 = vmatpush1.msra.mxu0 0.0
      %1455 = vmatprep.subr.mxu0 0.0
      %1456 = vmatpush1.msra.mxu0 0.0
      %1457 = vmatprep.subr.mxu0 0.0
      %1458 = vmatpush1.msra.mxu0 0.0
      %1459 = vmatprep.subr.mxu0 0.0
      %1460 = vmatpush1.msra.mxu0 0.0
      %1461 = vmatprep.subr.mxu0 0.0
      %1462 = vmatpush1.msra.mxu0 0.0
      %1463 = vmatprep.subr.mxu0 0.0
      %1464 = vmatpush1.msra.mxu0 0.0
      %1465 = vmatprep.subr.mxu0 0.0
      %1466 = vmatpush1.msra.mxu0 0.0
      %1467 = vmatprep.subr.mxu0 0.0
      %1468 = vmatpush1.msra.mxu0 0.0
      %1469 = vmatprep.subr.mxu0 0.0
      %1470 = vmatpush1.msra.mxu0 0.0
      %1471 = vmatprep.subr.mxu0 0.0
      %1472 = vmatpush1.msra.mxu0 0.0
      %1473 = vmatprep.mubr.f32.mxu0 0.0
      %1474 = vmatmul.mubr.f32.gmra.mrb[0].mxu0 %v1407
      %v1475 = vpop.f32.mrb[0].mxu0
      %v1476 = vadd.f32 0.0, %v1475
      %v1477 = vpop.f32.mrb[0].mxu0
      %1478 = vdwg.mxu0
      %v1479 = vadd.f32 %v1232, %v1476
      %1480 = vrot.lane.b32.xlu0 %v743, 104
      %v1481 = vpop.permute.xlu0 %1480
      %1482 = vrot.lane.b32.xlu0 %v743, 72
      %v1483 = vpop.permute.xlu0 %1482
      %v1484 = vsel %vm749, %v1481, 0
      %v1486 = vsel %vm749, %v1483, 0
      %1488 = vmatprep.subr.mxu0 0.0
      %1489 = vmatpush1.xpose.msra.mxu0 %v1486
      %1490 = vmatprep.subr.mxu0 0.0
      %1491 = vmatpush1.xpose.msra.mxu0 0.0
      %1492 = vmatprep.subr.mxu0 0.0
      %1493 = vmatpush1.xpose.msra.mxu0 0.0
      %1494 = vmatprep.subr.mxu0 0.0
      %1495 = vmatpush1.xpose.msra.mxu0 0.0
      %1496 = vmatprep.subr.mxu0 0.0
      %1497 = vmatpush1.xpose.msra.mxu0 0.0
      %1498 = vmatprep.subr.mxu0 0.0
      %1499 = vmatpush1.xpose.msra.mxu0 0.0
      %1500 = vmatprep.subr.mxu0 0.0
      %1501 = vmatpush1.xpose.msra.mxu0 0.0
      %1502 = vmatprep.subr.mxu0 0.0
      %1503 = vmatpush1.xpose.msra.mxu0 0.0
      %1504 = vmatprep.subr.mxu0 0.0
      %1505 = vmatpush1.xpose.msra.mxu0 0.0
      %1506 = vmatprep.subr.mxu0 0.0
      %1507 = vmatpush1.xpose.msra.mxu0 0.0
      %1508 = vmatprep.subr.mxu0 0.0
      %1509 = vmatpush1.xpose.msra.mxu0 0.0
      %1510 = vmatprep.subr.mxu0 0.0
      %1511 = vmatpush1.xpose.msra.mxu0 0.0
      %1512 = vmatprep.subr.mxu0 0.0
      %1513 = vmatpush1.xpose.msra.mxu0 0.0
      %1514 = vmatprep.subr.mxu0 0.0
      %1515 = vmatpush1.xpose.msra.mxu0 0.0
      %1516 = vmatprep.subr.mxu0 0.0
      %1517 = vmatpush1.xpose.msra.mxu0 0.0
      %1518 = vmatprep.subr.mxu0 0.0
      %1519 = vmatpush1.xpose.msra.mxu0 0.0
      %1520 = vmatprep.subr.mxu0 0.0
      %1521 = vmatpush1.xpose.msra.mxu0 0.0
      %1522 = vmatprep.subr.mxu0 0.0
      %1523 = vmatpush1.xpose.msra.mxu0 0.0
      %1524 = vmatprep.subr.mxu0 0.0
      %1525 = vmatpush1.xpose.msra.mxu0 0.0
      %1526 = vmatprep.subr.mxu0 0.0
      %1527 = vmatpush1.xpose.msra.mxu0 0.0
      %1528 = vmatprep.subr.mxu0 0.0
      %1529 = vmatpush1.xpose.msra.mxu0 0.0
      %1530 = vmatprep.subr.mxu0 0.0
      %1531 = vmatpush1.xpose.msra.mxu0 0.0
      %1532 = vmatprep.subr.mxu0 0.0
      %1533 = vmatpush1.xpose.msra.mxu0 0.0
      %1534 = vmatprep.subr.mxu0 0.0
      %1535 = vmatpush1.xpose.msra.mxu0 0.0
      %1536 = vmatprep.subr.mxu0 0.0
      %1537 = vmatpush1.xpose.msra.mxu0 0.0
      %1538 = vmatprep.subr.mxu0 0.0
      %1539 = vmatpush1.xpose.msra.mxu0 0.0
      %1540 = vmatprep.subr.mxu0 0.0
      %1541 = vmatpush1.xpose.msra.mxu0 0.0
      %1542 = vmatprep.subr.mxu0 0.0
      %1543 = vmatpush1.xpose.msra.mxu0 0.0
      %1544 = vmatprep.subr.mxu0 0.0
      %1545 = vmatpush1.xpose.msra.mxu0 0.0
      %1546 = vmatprep.subr.mxu0 0.0
      %1547 = vmatpush1.xpose.msra.mxu0 0.0
      %1548 = vmatprep.subr.mxu0 0.0
      %1549 = vmatpush1.xpose.msra.mxu0 0.0
      %1550 = vmatprep.subr.mxu0 0.0
      %1551 = vmatpush1.xpose.msra.mxu0 0.0
      %1552 = vmatprep.mubr.f32.mxu0 0.0
      %1553 = vmatmul.mubr.f32.gmra.mrb[0].mxu0 %v1484
      %v1554 = vpop.f32.mrb[0].mxu0
      %v1555 = vadd.f32 0.0, %v1554
      %v1556 = vpop.f32.mrb[0].mxu0
      %1557 = vdwg.mxu0
      %v1558 = vmul.f32 %v1555, 0.35355338
      %v1559 = vadd.f32 %v1558, %v657
      %v1560 = vsel %vm826, %v1559, -inf
      %1561 = vmax.xlane.f32.xlu0 %v1560
      %v1562 = vpop.xlane.xlu0 %1561
      %v1563 = vsub.f32 %v1559, %v1562
      %v1564 = vmul.f32 %v1563, 1.442695
      %v1565 = vpow.pop %v1564
      %v1566 = vsel %vm826, %v1565, 0.0
      %1567 = vadd.xlane.f32.xlu0 %v1566
      %v1568 = vpop.xlane.xlu0 %1567
      %v1569 = vrcp.pop %v1568
      %v1570 = vmul.f32 %v1565, %v1569
      %1571 = vrot.lane.b32.xlu0 %v743, 40
      %v1572 = vpop.permute.xlu0 %1571
      %v1575 = vsel %vm749, %v1570, 0
      %1577 = vmatprep.subr.mxu0 0.0
      %1578 = vmatpush1.msra.mxu0 %v1572
      %1579 = vmatprep.subr.mxu0 0.0
      %1580 = vmatpush1.msra.mxu0 0.0
      %1581 = vmatprep.subr.mxu0 0.0
      %1582 = vmatpush1.msra.mxu0 0.0
      %1583 = vmatprep.subr.mxu0 0.0
      %1584 = vmatpush1.msra.mxu0 0.0
      %1585 = vmatprep.subr.mxu0 0.0
      %1586 = vmatpush1.msra.mxu0 0.0
      %1587 = vmatprep.subr.mxu0 0.0
      %1588 = vmatpush1.msra.mxu0 0.0
      %1589 = vmatprep.subr.mxu0 0.0
      %1590 = vmatpush1.msra.mxu0 0.0
      %1591 = vmatprep.subr.mxu0 0.0
      %1592 = vmatpush1.msra.mxu0 0.0
      %1593 = vmatprep.subr.mxu0 0.0
      %1594 = vmatpush1.msra.mxu0 0.0
      %1595 = vmatprep.subr.mxu0 0.0
      %1596 = vmatpush1.msra.mxu0 0.0
      %1597 = vmatprep.subr.mxu0 0.0
      %1598 = vmatpush1.msra.mxu0 0.0
      %1599 = vmatprep.subr.mxu0 0.0
      %1600 = vmatpush1.msra.mxu0 0.0
      %1601 = vmatprep.subr.mxu0 0.0
      %1602 = vmatpush1.msra.mxu0 0.0
      %1603 = vmatprep.subr.mxu0 0.0
      %1604 = vmatpush1.msra.mxu0 0.0
      %1605 = vmatprep.subr.mxu0 0.0
      %1606 = vmatpush1.msra.mxu0 0.0
      %1607 = vmatprep.subr.mxu0 0.0
      %1608 = vmatpush1.msra.mxu0 0.0
      %1609 = vmatprep.subr.mxu0 0.0
      %1610 = vmatpush1.msra.mxu0 0.0
      %1611 = vmatprep.subr.mxu0 0.0
      %1612 = vmatpush1.msra.mxu0 0.0
      %1613 = vmatprep.subr.mxu0 0.0
      %1614 = vmatpush1.msra.mxu0 0.0
      %1615 = vmatprep.subr.mxu0 0.0
      %1616 = vmatpush1.msra.mxu0 0.0
      %1617 = vmatprep.subr.mxu0 0.0
      %1618 = vmatpush1.msra.mxu0 0.0
      %1619 = vmatprep.subr.mxu0 0.0
      %1620 = vmatpush1.msra.mxu0 0.0
      %1621 = vmatprep.subr.mxu0 0.0
      %1622 = vmatpush1.msra.mxu0 0.0
      %1623 = vmatprep.subr.mxu0 0.0
      %1624 = vmatpush1.msra.mxu0 0.0
      %1625 = vmatprep.subr.mxu0 0.0
      %1626 = vmatpush1.msra.mxu0 0.0
      %1627 = vmatprep.subr.mxu0 0.0
      %1628 = vmatpush1.msra.mxu0 0.0
      %1629 = vmatprep.subr.mxu0 0.0
      %1630 = vmatpush1.msra.mxu0 0.0
      %1631 = vmatprep.subr.mxu0 0.0
      %1632 = vmatpush1.msra.mxu0 0.0
      %1633 = vmatprep.subr.mxu0 0.0
      %1634 = vmatpush1.msra.mxu0 0.0
      %1635 = vmatprep.subr.mxu0 0.0
      %1636 = vmatpush1.msra.mxu0 0.0
      %1637 = vmatprep.subr.mxu0 0.0
      %1638 = vmatpush1.msra.mxu0 0.0
      %1639 = vmatprep.subr.mxu0 0.0
      %1640 = vmatpush1.msra.mxu0 0.0
      %1641 = vmatprep.mubr.f32.mxu0 0.0
      %1642 = vmatmul.mubr.f32.gmra.mrb[0].mxu0 %v1575
      %v1643 = vpop.f32.mrb[0].mxu0
      %v1644 = vadd.f32 0.0, %v1643
      %v1645 = vpop.f32.mrb[0].mxu0
      %1646 = vdwg.mxu0
      %1648 = vrot.lane.b32.xlu0 %v664, 32
      %v1649 = vpop.permute.xlu0 %1648
      %v1652 = vsel %vm749, %v1644, 0
      %1654 = vmatprep.subr.mxu0 0.0
      %1655 = vmatpush1.msra.mxu0 %v1649
      %1656 = vmatprep.subr.mxu0 0.0
      %1657 = vmatpush1.msra.mxu0 0.0
      %1658 = vmatprep.subr.mxu0 0.0
      %1659 = vmatpush1.msra.mxu0 0.0
      %1660 = vmatprep.subr.mxu0 0.0
      %1661 = vmatpush1.msra.mxu0 0.0
      %1662 = vmatprep.subr.mxu0 0.0
      %1663 = vmatpush1.msra.mxu0 0.0
      %1664 = vmatprep.subr.mxu0 0.0
      %1665 = vmatpush1.msra.mxu0 0.0
      %1666 = vmatprep.subr.mxu0 0.0
      %1667 = vmatpush1.msra.mxu0 0.0
      %1668 = vmatprep.subr.mxu0 0.0
      %1669 = vmatpush1.msra.mxu0 0.0
      %1670 = vmatprep.subr.mxu0 0.0
      %1671 = vmatpush1.msra.mxu0 0.0
      %1672 = vmatprep.subr.mxu0 0.0
      %1673 = vmatpush1.msra.mxu0 0.0
      %1674 = vmatprep.subr.mxu0 0.0
      %1675 = vmatpush1.msra.mxu0 0.0
      %1676 = vmatprep.subr.mxu0 0.0
      %1677 = vmatpush1.msra.mxu0 0.0
      %1678 = vmatprep.subr.mxu0 0.0
      %1679 = vmatpush1.msra.mxu0 0.0
      %1680 = vmatprep.subr.mxu0 0.0
      %1681 = vmatpush1.msra.mxu0 0.0
      %1682 = vmatprep.subr.mxu0 0.0
      %1683 = vmatpush1.msra.mxu0 0.0
      %1684 = vmatprep.subr.mxu0 0.0
      %1685 = vmatpush1.msra.mxu0 0.0
      %1686 = vmatprep.subr.mxu0 0.0
      %1687 = vmatpush1.msra.mxu0 0.0
      %1688 = vmatprep.subr.mxu0 0.0
      %1689 = vmatpush1.msra.mxu0 0.0
      %1690 = vmatprep.subr.mxu0 0.0
      %1691 = vmatpush1.msra.mxu0 0.0
      %1692 = vmatprep.subr.mxu0 0.0
      %1693 = vmatpush1.msra.mxu0 0.0
      %1694 = vmatprep.subr.mxu0 0.0
      %1695 = vmatpush1.msra.mxu0 0.0
      %1696 = vmatprep.subr.mxu0 0.0
      %1697 = vmatpush1.msra.mxu0 0.0
      %1698 = vmatprep.subr.mxu0 0.0
      %1699 = vmatpush1.msra.mxu0 0.0
      %1700 = vmatprep.subr.mxu0 0.0
      %1701 = vmatpush1.msra.mxu0 0.0
      %1702 = vmatprep.subr.mxu0 0.0
      %1703 = vmatpush1.msra.mxu0 0.0
      %1704 = vmatprep.subr.mxu0 0.0
      %1705 = vmatpush1.msra.mxu0 0.0
      %1706 = vmatprep.subr.mxu0 0.0
      %1707 = vmatpush1.msra.mxu0 0.0
      %1708 = vmatprep.subr.mxu0 0.0
      %1709 = vmatpush1.msra.mxu0 0.0
      %1710 = vmatprep.subr.mxu0 0.0
      %1711 = vmatpush1.msra.mxu0 0.0
      %1712 = vmatprep.subr.mxu0 0.0
      %1713 = vmatpush1.msra.mxu0 0.0
      %1714 = vmatprep.subr.mxu0 0.0
      %1715 = vmatpush1.msra.mxu0 0.0
      %1716 = vmatprep.subr.mxu0 0.0
      %1717 = vmatpush1.msra.mxu0 0.0
      %1718 = vmatprep.mubr.f32.mxu0 0.0
      %1719 = vmatmul.mubr.f32.gmra.mrb[0].mxu0 %v1652
      %v1720 = vpop.f32.mrb[0].mxu0
      %v1721 = vadd.f32 0.0, %v1720
      %v1722 = vpop.f32.mrb[0].mxu0
      %1723 = vdwg.mxu0
      %v1724 = vadd.f32 %v1479, %v1721
      %1725 = vrot.lane.b32.xlu0 %v670, 32
      %v1726 = vpop.permute.xlu0 %1725
      %v1728 = vadd.f32 %v1724, %v1726
      %v1729 = vadd.f32 %v650, %v1728
      %vm1730 = vcmask 253952
      %v1731 = vsel %vm1730, %v1729, 0.0
      %1732 = vadd.xlane.f32.xlu0 %v1731
      %v1733 = vpop.xlane.xlu0 %1732
      %v1734 = vrcp.pop 32.0
      %v1735 = vmul.f32 %v1733, %v1734
      %v1736 = vsub.f32 %v1729, %v1735
      %v1737 = vmul.f32 %v1736, %v1736
      %v1738 = vsel %vm1730, %v1737, 0.0
      %1739 = vadd.xlane.f32.xlu0 %v1738
      %v1740 = vpop.xlane.xlu0 %1739
      %v1741 = vmul.f32 %v1740, %v1734
      %v1742 = vadd.f32 %v1741, 1e-12
      %v1743 = vrsqrt.pop %v1742
      %v1744 = vmul.f32 %v1736, %v1743
      %v1745 = vmul.f32 %v1744, %v654
      %v1747 = vrot.slane %v654, 1
      %v1749 = vadd.f32 %v1745, %v1747
      %v1750 = vld [vmem:[%s6] sm:$0xff]
      %v1751 = vld [vmem:[%s6 + $0x8] sm:$0xff]
      %v1752 = vld [vmem:[%s6 + $0x10] sm:$0xff]
      %v1753 = vld [vmem:[%s6 + $0x18] sm:$0xff]
      %v1754 = vld [vmem:[%s7] sm:$0x1]
      %v1756 = vsel %vm672, %v1749, 0
      %1758 = vmatprep.subr.mxu0 0.0
      %1759 = vmatpush1.msra.mxu0 %v1750
      %1760 = vmatprep.subr.mxu0 0.0
      %1761 = vmatpush1.msra.mxu0 %v1751
      %1762 = vmatprep.subr.mxu0 0.0
      %1763 = vmatpush1.msra.mxu0 %v1752
      %1764 = vmatprep.subr.mxu0 0.0
      %1765 = vmatpush1.msra.mxu0 %v1753
      %1766 = vmatprep.subr.mxu0 0.0
      %1767 = vmatpush1.msra.mxu0 0.0
      %1768 = vmatprep.subr.mxu0 0.0
      %1769 = vmatpush1.msra.mxu0 0.0
      %1770 = vmatprep.subr.mxu0 0.0
      %1771 = vmatpush1.msra.mxu0 0.0
      %1772 = vmatprep.subr.mxu0 0.0
      %1773 = vmatpush1.msra.mxu0 0.0
      %1774 = vmatprep.subr.mxu0 0.0
      %1775 = vmatpush1.msra.mxu0 0.0
      %1776 = vmatprep.subr.mxu0 0.0
      %1777 = vmatpush1.msra.mxu0 0.0
      %1778 = vmatprep.subr.mxu0 0.0
      %1779 = vmatpush1.msra.mxu0 0.0
      %1780 = vmatprep.subr.mxu0 0.0
      %1781 = vmatpush1.msra.mxu0 0.0
      %1782 = vmatprep.subr.mxu0 0.0
      %1783 = vmatpush1.msra.mxu0 0.0
      %1784 = vmatprep.subr.mxu0 0.0
      %1785 = vmatpush1.msra.mxu0 0.0
      %1786 = vmatprep.subr.mxu0 0.0
      %1787 = vmatpush1.msra.mxu0 0.0
      %1788 = vmatprep.subr.mxu0 0.0
      %1789 = vmatpush1.msra.mxu0 0.0
      %1790 = vmatprep.subr.mxu0 0.0
      %1791 = vmatpush1.msra.mxu0 0.0
      %1792 = vmatprep.subr.mxu0 0.0
      %1793 = vmatpush1.msra.mxu0 0.0
      %1794 = vmatprep.subr.mxu0 0.0
      %1795 = vmatpush1.msra.mxu0 0.0
      %1796 = vmatprep.subr.mxu0 0.0
      %1797 = vmatpush1.msra.mxu0 0.0
      %1798 = vmatprep.subr.mxu0 0.0
      %1799 = vmatpush1.msra.mxu0 0.0
      %1800 = vmatprep.subr.mxu0 0.0
      %1801 = vmatpush1.msra.mxu0 0.0
      %1802 = vmatprep.subr.mxu0 0.0
      %1803 = vmatpush1.msra.mxu0 0.0
      %1804 = vmatprep.subr.mxu0 0.0
      %1805 = vmatpush1.msra.mxu0 0.0
      %1806 = vmatprep.subr.mxu0 0.0
      %1807 = vmatpush1.msra.mxu0 0.0
      %1808 = vmatprep.subr.mxu0 0.0
      %1809 = vmatpush1.msra.mxu0 0.0
      %1810 = vmatprep.subr.mxu0 0.0
      %1811 = vmatpush1.msra.mxu0 0.0
      %1812 = vmatprep.subr.mxu0 0.0
      %1813 = vmatpush1.msra.mxu0 0.0
      %1814 = vmatprep.subr.mxu0 0.0
      %1815 = vmatpush1.msra.mxu0 0.0
      %1816 = vmatprep.subr.mxu0 0.0
      %1817 = vmatpush1.msra.mxu0 0.0
      %1818 = vmatprep.subr.mxu0 0.0
      %1819 = vmatpush1.msra.mxu0 0.0
      %1820 = vmatprep.subr.mxu0 0.0
      %1821 = vmatpush1.msra.mxu0 0.0
      %1822 = vmatprep.mubr.f32.mxu0 0.0
      %1823 = vmatmul.mubr.f32.gmra.mrb[0].mxu0 %v1756
      %v1824 = vpop.f32.mrb[0].mxu0
      %v1825 = vadd.f32 %v1754, %v1824
      %v1826 = vpop.f32.mrb[0].mxu0
      %1827 = vdwg.mxu0
      %v1829 = vlaneseq
      %v1830 = vshrl.u32 %v1829, 7
      %v1831 = vsub.s32 0, %v1830
      %v1832 = vrot.slane %v1754, %v1831
      %v1835 = vsel %vm672, %v651, 0
      %v1838 = vsel %vm672, %v652, 0
      %v1841 = vsel %vm672, %v653, 0
      %1843 = vmatprep.subr.mxu0 0.0
      %1844 = vmatpush1.msra.mxu0 %v1750
      %1845 = vmatprep.subr.mxu0 0.0
      %1846 = vmatpush1.msra.mxu0 %v1751
      %1847 = vmatprep.subr.mxu0 0.0
      %1848 = vmatpush1.msra.mxu0 %v1752
      %1849 = vmatprep.subr.mxu0 0.0
      %1850 = vmatpush1.msra.mxu0 %v1753
      %1851 = vmatprep.subr.mxu0 0.0
      %1852 = vmatpush1.msra.mxu0 0.0
      %1853 = vmatprep.subr.mxu0 0.0
      %1854 = vmatpush1.msra.mxu0 0.0
      %1855 = vmatprep.subr.mxu0 0.0
      %1856 = vmatpush1.msra.mxu0 0.0
      %1857 = vmatprep.subr.mxu0 0.0
      %1858 = vmatpush1.msra.mxu0 0.0
      %1859 = vmatprep.subr.mxu0 0.0
      %1860 = vmatpush1.msra.mxu0 0.0
      %1861 = vmatprep.subr.mxu0 0.0
      %1862 = vmatpush1.msra.mxu0 0.0
      %1863 = vmatprep.subr.mxu0 0.0
      %1864 = vmatpush1.msra.mxu0 0.0
      %1865 = vmatprep.subr.mxu0 0.0
      %1866 = vmatpush1.msra.mxu0 0.0
      %1867 = vmatprep.subr.mxu0 0.0
      %1868 = vmatpush1.msra.mxu0 0.0
      %1869 = vmatprep.subr.mxu0 0.0
      %1870 = vmatpush1.msra.mxu0 0.0
      %1871 = vmatprep.subr.mxu0 0.0
      %1872 = vmatpush1.msra.mxu0 0.0
      %1873 = vmatprep.subr.mxu0 0.0
      %1874 = vmatpush1.msra.mxu0 0.0
      %1875 = vmatprep.subr.mxu0 0.0
      %1876 = vmatpush1.msra.mxu0 0.0
      %1877 = vmatprep.subr.mxu0 0.0
      %1878 = vmatpush1.msra.mxu0 0.0
      %1879 = vmatprep.subr.mxu0 0.0
      %1880 = vmatpush1.msra.mxu0 0.0
      %1881 = vmatprep.subr.mxu0 0.0
      %1882 = vmatpush1.msra.mxu0 0.0
      %1883 = vmatprep.subr.mxu0 0.0
      %1884 = vmatpush1.msra.mxu0 0.0
      %1885 = vmatprep.subr.mxu0 0.0
      %1886 = vmatpush1.msra.mxu0 0.0
      %1887 = vmatprep.subr.mxu0 0.0
      %1888 = vmatpush1.msra.mxu0 0.0
      %1889 = vmatprep.subr.mxu0 0.0
      %1890 = vmatpush1.msra.mxu0 0.0
      %1891 = vmatprep.subr.mxu0 0.0
      %1892 = vmatpush1.msra.mxu0 0.0
      %1893 = vmatprep.subr.mxu0 0.0
      %1894 = vmatpush1.msra.mxu0 0.0
      %1895 = vmatprep.subr.mxu0 0.0
      %1896 = vmatpush1.msra.mxu0 0.0
      %1897 = vmatprep.subr.mxu0 0.0
      %1898 = vmatpush1.msra.mxu0 0.0
      %1899 = vmatprep.subr.mxu0 0.0
      %1900 = vmatpush1.msra.mxu0 0.0
      %1901 = vmatprep.subr.mxu0 0.0
      %1902 = vmatpush1.msra.mxu0 0.0
      %1903 = vmatprep.subr.mxu0 0.0
      %1904 = vmatpush1.msra.mxu0 0.0
      %1905 = vmatprep.subr.mxu0 0.0
      %1906 = vmatpush1.msra.mxu0 0.0
      %1907 = vmatprep.mubr.f32.mxu0 0.0
      %1908 = vmatmul.mubr.f32.gmra.mrb[0].mxu0 %v1835
      %v1909 = vpop.f32.mrb[0].mxu0
      %v1910 = vadd.f32 %v1832, %v1909
      %v1911 = vpop.f32.mrb[0].mxu0
      %1912 = vmatprep.mubr.f32.mxu0 0.0
      %1913 = vmatmul.mubr.f32.gmra.mrb[0].mxu0 %v1838
      %v1914 = vpop.f32.mrb[0].mxu0
      %v1915 = vadd.f32 %v1832, %v1914
      %v1916 = vpop.f32.mrb[0].mxu0
      %1917 = vmatprep.mubr.f32.mxu0 0.0
      %1918 = vmatmul.mubr.f32.gmra.mrb[0].mxu0 %v1841
      %v1919 = vpop.f32.mrb[0].mxu0
      %v1920 = vadd.f32 %v1832, %v1919
      %v1921 = vpop.f32.mrb[0].mxu0
      %1922 = vdwg.mxu0
      %1926 = vrot.lane.b32.xlu0 %v1910, 96
      %v1927 = vpop.permute.xlu0 %1926
      %1928 = vrot.lane.b32.xlu0 %v1915, 96
      %v1929 = vpop.permute.xlu0 %1928
      %1930 = vrot.lane.b32.xlu0 %v1920, 96
      %v1931 = vpop.permute.xlu0 %1930
      %v1933 = vsel %vm749, %v1825, 0
      %v1935 = vsel %vm749, %v1927, 0
      %v1937 = vsel %vm749, %v1929, 0
      %v1939 = vsel %vm749, %v1931, 0
      %1941 = vmatprep.subr.mxu0 0.0
      %1942 = vmatpush1.xpose.msra.mxu0 %v1935
      %1943 = vmatprep.subr.mxu0 0.0
      %1944 = vmatpush1.xpose.msra.mxu0 %v1937
      %1945 = vmatprep.subr.mxu0 0.0
      %1946 = vmatpush1.xpose.msra.mxu0 %v1939
      %1947 = vmatprep.subr.mxu0 0.0
      %1948 = vmatpush1.xpose.msra.mxu0 0.0
      %1949 = vmatprep.subr.mxu0 0.0
      %1950 = vmatpush1.xpose.msra.mxu0 0.0
      %1951 = vmatprep.subr.mxu0 0.0
      %1952 = vmatpush1.xpose.msra.mxu0 0.0
      %1953 = vmatprep.subr.mxu0 0.0
      %1954 = vmatpush1.xpose.msra.mxu0 0.0
      %1955 = vmatprep.subr.mxu0 0.0
      %1956 = vmatpush1.xpose.msra.mxu0 0.0
      %1957 = vmatprep.subr.mxu0 0.0
      %1958 = vmatpush1.xpose.msra.mxu0 0.0
      %1959 = vmatprep.subr.mxu0 0.0
      %1960 = vmatpush1.xpose.msra.mxu0 0.0
      %1961 = vmatprep.subr.mxu0 0.0
      %1962 = vmatpush1.xpose.msra.mxu0 0.0
      %1963 = vmatprep.subr.mxu0 0.0
      %1964 = vmatpush1.xpose.msra.mxu0 0.0
      %1965 = vmatprep.subr.mxu0 0.0
      %1966 = vmatpush1.xpose.msra.mxu0 0.0
      %1967 = vmatprep.subr.mxu0 0.0
      %1968 = vmatpush1.xpose.msra.mxu0 0.0
      %1969 = vmatprep.subr.mxu0 0.0
      %1970 = vmatpush1.xpose.msra.mxu0 0.0
      %1971 = vmatprep.subr.mxu0 0.0
      %1972 = vmatpush1.xpose.msra.mxu0 0.0
      %1973 = vmatprep.subr.mxu0 0.0
      %1974 = vmatpush1.xpose.msra.mxu0 0.0
      %1975 = vmatprep.subr.mxu0 0.0
      %1976 = vmatpush1.xpose.msra.mxu0 0.0
      %1977 = vmatprep.subr.mxu0 0.0
      %1978 = vmatpush1.xpose.msra.mxu0 0.0
      %1979 = vmatprep.subr.mxu0 0.0
      %1980 = vmatpush1.xpose.msra.mxu0 0.0
      %1981 = vmatprep.subr.mxu0 0.0
      %1982 = vmatpush1.xpose.msra.mxu0 0.0
      %1983 = vmatprep.subr.mxu0 0.0
      %1984 = vmatpush1.xpose.msra.mxu0 0.0
      %1985 = vmatprep.subr.mxu0 0.0
      %1986 = vmatpush1.xpose.msra.mxu0 0.0
      %1987 = vmatprep.subr.mxu0 0.0
      %1988 = vmatpush1.xpose.msra.mxu0 0.0
      %1989 = vmatprep.subr.mxu0 0.0
      %1990 = vmatpush1.xpose.msra.mxu0 0.0
      %1991 = vmatprep.subr.mxu0 0.0
      %1992 = vmatpush1.xpose.msra.mxu0 0.0
      %1993 = vmatprep.subr.mxu0 0.0
      %1994 = vmatpush1.xpose.msra.mxu0 0.0
      %1995 = vmatprep.subr.mxu0 0.0
      %1996 = vmatpush1.xpose.msra.mxu0 0.0
      %1997 = vmatprep.subr.mxu0 0.0
      %1998 = vmatpush1.xpose.msra.mxu0 0.0
      %1999 = vmatprep.subr.mxu0 0.0
      %2000 = vmatpush1.xpose.msra.mxu0 0.0
      %2001 = vmatprep.subr.mxu0 0.0
      %2002 = vmatpush1.xpose.msra.mxu0 0.0
      %2003 = vmatprep.subr.mxu0 0.0
      %2004 = vmatpush1.xpose.msra.mxu0 0.0
      %2005 = vmatprep.mubr.f32.mxu0 0.0
      %2006 = vmatmul.mubr.f32.gmra.mrb[0].mxu0 %v1933
      %v2007 = vpop.f32.mrb[0].mxu0
      %v2008 = vadd.f32 0.0, %v2007
      %v2009 = vpop.f32.mrb[0].mxu0
      %2010 = vdwg.mxu0
      %v2011 = vmul.f32 %v2008, 0.35355338
      %v2012 = vadd.f32 %v2011, %v660
      %vm2013 = vcmask 131072
      %v2014 = vsel %vm2013, %v2012, -inf
      %2015 = vmax.xlane.f32.xlu0 %v2014
      %v2016 = vpop.xlane.xlu0 %2015
      %v2017 = vsub.f32 %v2012, %v2016
      %v2018 = vmul.f32 %v2017, 1.442695
      %v2019 = vpow.pop %v2018
      %v2020 = vsel %vm2013, %v2019, 0.0
      %2021 = vadd.xlane.f32.xlu0 %v2020
      %v2022 = vpop.xlane.xlu0 %2021
      %v2023 = vrcp.pop %v2022
      %v2024 = vmul.f32 %v2019, %v2023
      %2025 = vrot.lane.b32.xlu0 %v1910, 64
      %v2026 = vpop.permute.xlu0 %2025
      %2027 = vrot.lane.b32.xlu0 %v1915, 64
      %v2028 = vpop.permute.xlu0 %2027
      %2029 = vrot.lane.b32.xlu0 %v1920, 64
      %v2030 = vpop.permute.xlu0 %2029
      %vm2033 = vcmask 138240
      %v2035 = vsel %vm2033, %v2024, 0
      %vm2037 = vcmask 1040384
      %v2038 = vsel %vm2037, %v2030, 0
      %2040 = vmatprep.subr.mxu0 0.0
      %2041 = vmatpush1.msra.mxu0 %v2026
      %2042 = vmatprep.subr.mxu0 0.0
      %2043 = vmatpush1.msra.mxu0 %v2028
      %2044 = vmatprep.subr.mxu0 0.0
      %2045 = vmatpush1.msra.mxu0 %v2038
      %2046 = vmatprep.subr.mxu0 0.0
      %2047 = vmatpush1.msra.mxu0 0.0
      %2048 = vmatprep.subr.mxu0 0.0
      %2049 = vmatpush1.msra.mxu0 0.0
      %2050 = vmatprep.subr.mxu0 0.0
      %2051 = vmatpush1.msra.mxu0 0.0
      %2052 = vmatprep.subr.mxu0 0.0
      %2053 = vmatpush1.msra.mxu0 0.0
      %2054 = vmatprep.subr.mxu0 0.0
      %2055 = vmatpush1.msra.mxu0 0.0
      %2056 = vmatprep.subr.mxu0 0.0
      %2057 = vmatpush1.msra.mxu0 0.0
      %2058 = vmatprep.subr.mxu0 0.0
      %2059 = vmatpush1.msra.mxu0 0.0
      %2060 = vmatprep.subr.mxu0 0.0
      %2061 = vmatpush1.msra.mxu0 0.0
      %2062 = vmatprep.subr.mxu0 0.0
      %2063 = vmatpush1.msra.mxu0 0.0
      %2064 = vmatprep.subr.mxu0 0.0
      %2065 = vmatpush1.msra.mxu0 0.0
      %2066 = vmatprep.subr.mxu0 0.0
      %2067 = vmatpush1.msra.mxu0 0.0
      %2068 = vmatprep.subr.mxu0 0.0
      %2069 = vmatpush1.msra.mxu0 0.0
      %2070 = vmatprep.subr.mxu0 0.0
      %2071 = vmatpush1.msra.mxu0 0.0
      %2072 = vmatprep.subr.mxu0 0.0
      %2073 = vmatpush1.msra.mxu0 0.0
      %2074 = vmatprep.subr.mxu0 0.0
      %2075 = vmatpush1.msra.mxu0 0.0
      %2076 = vmatprep.subr.mxu0 0.0
      %2077 = vmatpush1.msra.mxu0 0.0
      %2078 = vmatprep.subr.mxu0 0.0
      %2079 = vmatpush1.msra.mxu0 0.0
      %2080 = vmatprep.subr.mxu0 0.0
      %2081 = vmatpush1.msra.mxu0 0.0
      %2082 = vmatprep.subr.mxu0 0.0
      %2083 = vmatpush1.msra.mxu0 0.0
      %2084 = vmatprep.subr.mxu0 0.0
      %2085 = vmatpush1.msra.mxu0 0.0
      %2086 = vmatprep.subr.mxu0 0.0
      %2087 = vmatpush1.msra.mxu0 0.0
      %2088 = vmatprep.subr.mxu0 0.0
      %2089 = vmatpush1.msra.mxu0 0.0
      %2090 = vmatprep.subr.mxu0 0.0
      %2091 = vmatpush1.msra.mxu0 0.0
      %2092 = vmatprep.subr.mxu0 0.0
      %2093 = vmatpush1.msra.mxu0 0.0
      %2094 = vmatprep.subr.mxu0 0.0
      %2095 = vmatpush1.msra.mxu0 0.0
      %2096 = vmatprep.subr.mxu0 0.0
      %2097 = vmatpush1.msra.mxu0 0.0
      %2098 = vmatprep.subr.mxu0 0.0
      %2099 = vmatpush1.msra.mxu0 0.0
      %2100 = vmatprep.subr.mxu0 0.0
      %2101 = vmatpush1.msra.mxu0 0.0
      %2102 = vmatprep.subr.mxu0 0.0
      %2103 = vmatpush1.msra.mxu0 0.0
      %2104 = vmatprep.mubr.f32.mxu0 0.0
      %2105 = vmatmul.mubr.f32.gmra.mrb[0].mxu0 %v2035
      %v2106 = vpop.f32.mrb[0].mxu0
      %v2107 = vadd.f32 0.0, %v2106
      %v2108 = vpop.f32.mrb[0].mxu0
      %2109 = vdwg.mxu0
      %2110 = vrot.lane.b32.xlu0 %v1825, 120
      %v2111 = vpop.permute.xlu0 %2110
      %2112 = vrot.lane.b32.xlu0 %v1910, 88
      %v2113 = vpop.permute.xlu0 %2112
      %2114 = vrot.lane.b32.xlu0 %v1915, 88
      %v2115 = vpop.permute.xlu0 %2114
      %2116 = vrot.lane.b32.xlu0 %v1920, 88
      %v2117 = vpop.permute.xlu0 %2116
      %v2118 = vsel %vm749, %v2111, 0
      %v2120 = vsel %vm749, %v2113, 0
      %v2122 = vsel %vm749, %v2115, 0
      %v2124 = vsel %vm749, %v2117, 0
      %2126 = vmatprep.subr.mxu0 0.0
      %2127 = vmatpush1.xpose.msra.mxu0 %v2120
      %2128 = vmatprep.subr.mxu0 0.0
      %2129 = vmatpush1.xpose.msra.mxu0 %v2122
      %2130 = vmatprep.subr.mxu0 0.0
      %2131 = vmatpush1.xpose.msra.mxu0 %v2124
      %2132 = vmatprep.subr.mxu0 0.0
      %2133 = vmatpush1.xpose.msra.mxu0 0.0
      %2134 = vmatprep.subr.mxu0 0.0
      %2135 = vmatpush1.xpose.msra.mxu0 0.0
      %2136 = vmatprep.subr.mxu0 0.0
      %2137 = vmatpush1.xpose.msra.mxu0 0.0
      %2138 = vmatprep.subr.mxu0 0.0
      %2139 = vmatpush1.xpose.msra.mxu0 0.0
      %2140 = vmatprep.subr.mxu0 0.0
      %2141 = vmatpush1.xpose.msra.mxu0 0.0
      %2142 = vmatprep.subr.mxu0 0.0
      %2143 = vmatpush1.xpose.msra.mxu0 0.0
      %2144 = vmatprep.subr.mxu0 0.0
      %2145 = vmatpush1.xpose.msra.mxu0 0.0
      %2146 = vmatprep.subr.mxu0 0.0
      %2147 = vmatpush1.xpose.msra.mxu0 0.0
      %2148 = vmatprep.subr.mxu0 0.0
      %2149 = vmatpush1.xpose.msra.mxu0 0.0
      %2150 = vmatprep.subr.mxu0 0.0
      %2151 = vmatpush1.xpose.msra.mxu0 0.0
      %2152 = vmatprep.subr.mxu0 0.0
      %2153 = vmatpush1.xpose.msra.mxu0 0.0
      %2154 = vmatprep.subr.mxu0 0.0
      %2155 = vmatpush1.xpose.msra.mxu0 0.0
      %2156 = vmatprep.subr.mxu0 0.0
      %2157 = vmatpush1.xpose.msra.mxu0 0.0
      %2158 = vmatprep.subr.mxu0 0.0
      %2159 = vmatpush1.xpose.msra.mxu0 0.0
      %2160 = vmatprep.subr.mxu0 0.0
      %2161 = vmatpush1.xpose.msra.mxu0 0.0
      %2162 = vmatprep.subr.mxu0 0.0
      %2163 = vmatpush1.xpose.msra.mxu0 0.0
      %2164 = vmatprep.subr.mxu0 0.0
      %2165 = vmatpush1.xpose.msra.mxu0 0.0
      %2166 = vmatprep.subr.mxu0 0.0
      %2167 = vmatpush1.xpose.msra.mxu0 0.0
      %2168 = vmatprep.subr.mxu0 0.0
      %2169 = vmatpush1.xpose.msra.mxu0 0.0
      %2170 = vmatprep.subr.mxu0 0.0
      %2171 = vmatpush1.xpose.msra.mxu0 0.0
      %2172 = vmatprep.subr.mxu0 0.0
      %2173 = vmatpush1.xpose.msra.mxu0 0.0
      %2174 = vmatprep.subr.mxu0 0.0
      %2175 = vmatpush1.xpose.msra.mxu0 0.0
      %2176 = vmatprep.subr.mxu0 0.0
      %2177 = vmatpush1.xpose.msra.mxu0 0.0
      %2178 = vmatprep.subr.mxu0 0.0
      %2179 = vmatpush1.xpose.msra.mxu0 0.0
      %2180 = vmatprep.subr.mxu0 0.0
      %2181 = vmatpush1.xpose.msra.mxu0 0.0
      %2182 = vmatprep.subr.mxu0 0.0
      %2183 = vmatpush1.xpose.msra.mxu0 0.0
      %2184 = vmatprep.subr.mxu0 0.0
      %2185 = vmatpush1.xpose.msra.mxu0 0.0
      %2186 = vmatprep.subr.mxu0 0.0
      %2187 = vmatpush1.xpose.msra.mxu0 0.0
      %2188 = vmatprep.subr.mxu0 0.0
      %2189 = vmatpush1.xpose.msra.mxu0 0.0
      %2190 = vmatprep.mubr.f32.mxu0 0.0
      %2191 = vmatmul.mubr.f32.gmra.mrb[0].mxu0 %v2118
      %v2192 = vpop.f32.mrb[0].mxu0
      %v2193 = vadd.f32 0.0, %v2192
      %v2194 = vpop.f32.mrb[0].mxu0
      %2195 = vdwg.mxu0
      %v2196 = vmul.f32 %v2193, 0.35355338
      %v2197 = vadd.f32 %v2196, %v660
      %v2198 = vsel %vm2013, %v2197, -inf
      %2199 = vmax.xlane.f32.xlu0 %v2198
      %v2200 = vpop.xlane.xlu0 %2199
      %v2201 = vsub.f32 %v2197, %v2200
      %v2202 = vmul.f32 %v2201, 1.442695
      %v2203 = vpow.pop %v2202
      %v2204 = vsel %vm2013, %v2203, 0.0
      %2205 = vadd.xlane.f32.xlu0 %v2204
      %v2206 = vpop.xlane.xlu0 %2205
      %v2207 = vrcp.pop %v2206
      %v2208 = vmul.f32 %v2203, %v2207
      %2209 = vrot.lane.b32.xlu0 %v1910, 56
      %v2210 = vpop.permute.xlu0 %2209
      %2211 = vrot.lane.b32.xlu0 %v1915, 56
      %v2212 = vpop.permute.xlu0 %2211
      %2213 = vrot.lane.b32.xlu0 %v1920, 56
      %v2214 = vpop.permute.xlu0 %2213
      %v2218 = vsel %vm2033, %v2208, 0
      %v2220 = vsel %vm2037, %v2214, 0
      %2222 = vmatprep.subr.mxu0 0.0
      %2223 = vmatpush1.msra.mxu0 %v2210
      %2224 = vmatprep.subr.mxu0 0.0
      %2225 = vmatpush1.msra.mxu0 %v2212
      %2226 = vmatprep.subr.mxu0 0.0
      %2227 = vmatpush1.msra.mxu0 %v2220
      %2228 = vmatprep.subr.mxu0 0.0
      %2229 = vmatpush1.msra.mxu0 0.0
      %2230 = vmatprep.subr.mxu0 0.0
      %2231 = vmatpush1.msra.mxu0 0.0
      %2232 = vmatprep.subr.mxu0 0.0
      %2233 = vmatpush1.msra.mxu0 0.0
      %2234 = vmatprep.subr.mxu0 0.0
      %2235 = vmatpush1.msra.mxu0 0.0
      %2236 = vmatprep.subr.mxu0 0.0
      %2237 = vmatpush1.msra.mxu0 0.0
      %2238 = vmatprep.subr.mxu0 0.0
      %2239 = vmatpush1.msra.mxu0 0.0
      %2240 = vmatprep.subr.mxu0 0.0
      %2241 = vmatpush1.msra.mxu0 0.0
      %2242 = vmatprep.subr.mxu0 0.0
      %2243 = vmatpush1.msra.mxu0 0.0
      %2244 = vmatprep.subr.mxu0 0.0
      %2245 = vmatpush1.msra.mxu0 0.0
      %2246 = vmatprep.subr.mxu0 0.0
      %2247 = vmatpush1.msra.mxu0 0.0
      %2248 = vmatprep.subr.mxu0 0.0
      %2249 = vmatpush1.msra.mxu0 0.0
      %2250 = vmatprep.subr.mxu0 0.0
      %2251 = vmatpush1.msra.mxu0 0.0
      %2252 = vmatprep.subr.mxu0 0.0
      %2253 = vmatpush1.msra.mxu0 0.0
      %2254 = vmatprep.subr.mxu0 0.0
      %2255 = vmatpush1.msra.mxu0 0.0
      %2256 = vmatprep.subr.mxu0 0.0
      %2257 = vmatpush1.msra.mxu0 0.0
      %2258 = vmatprep.subr.mxu0 0.0
      %2259 = vmatpush1.msra.mxu0 0.0
      %2260 = vmatprep.subr.mxu0 0.0
      %2261 = vmatpush1.msra.mxu0 0.0
      %2262 = vmatprep.subr.mxu0 0.0
      %2263 = vmatpush1.msra.mxu0 0.0
      %2264 = vmatprep.subr.mxu0 0.0
      %2265 = vmatpush1.msra.mxu0 0.0
      %2266 = vmatprep.subr.mxu0 0.0
      %2267 = vmatpush1.msra.mxu0 0.0
      %2268 = vmatprep.subr.mxu0 0.0
      %2269 = vmatpush1.msra.mxu0 0.0
      %2270 = vmatprep.subr.mxu0 0.0
      %2271 = vmatpush1.msra.mxu0 0.0
      %2272 = vmatprep.subr.mxu0 0.0
      %2273 = vmatpush1.msra.mxu0 0.0
      %2274 = vmatprep.subr.mxu0 0.0
      %2275 = vmatpush1.msra.mxu0 0.0
      %2276 = vmatprep.subr.mxu0 0.0
      %2277 = vmatpush1.msra.mxu0 0.0
      %2278 = vmatprep.subr.mxu0 0.0
      %2279 = vmatpush1.msra.mxu0 0.0
      %2280 = vmatprep.subr.mxu0 0.0
      %2281 = vmatpush1.msra.mxu0 0.0
      %2282 = vmatprep.subr.mxu0 0.0
      %2283 = vmatpush1.msra.mxu0 0.0
      %2284 = vmatprep.subr.mxu0 0.0
      %2285 = vmatpush1.msra.mxu0 0.0
      %2286 = vmatprep.mubr.f32.mxu0 0.0
      %2287 = vmatmul.mubr.f32.gmra.mrb[0].mxu0 %v2218
      %v2288 = vpop.f32.mrb[0].mxu0
      %v2289 = vadd.f32 0.0, %v2288
      %v2290 = vpop.f32.mrb[0].mxu0
      %2291 = vdwg.mxu0
      %2293 = vrot.lane.b32.xlu0 %v1751, 32
      %v2294 = vpop.permute.xlu0 %2293
      %v2297 = vsel %vm749, %v2289, 0
      %2299 = vmatprep.subr.mxu0 0.0
      %2300 = vmatpush1.msra.mxu0 %v2294
      %2301 = vmatprep.subr.mxu0 0.0
      %2302 = vmatpush1.msra.mxu0 0.0
      %2303 = vmatprep.subr.mxu0 0.0
      %2304 = vmatpush1.msra.mxu0 0.0
      %2305 = vmatprep.subr.mxu0 0.0
      %2306 = vmatpush1.msra.mxu0 0.0
      %2307 = vmatprep.subr.mxu0 0.0
      %2308 = vmatpush1.msra.mxu0 0.0
      %2309 = vmatprep.subr.mxu0 0.0
      %2310 = vmatpush1.msra.mxu0 0.0
      %2311 = vmatprep.subr.mxu0 0.0
      %2312 = vmatpush1.msra.mxu0 0.0
      %2313 = vmatprep.subr.mxu0 0.0
      %2314 = vmatpush1.msra.mxu0 0.0
      %2315 = vmatprep.subr.mxu0 0.0
      %2316 = vmatpush1.msra.mxu0 0.0
      %2317 = vmatprep.subr.mxu0 0.0
      %2318 = vmatpush1.msra.mxu0 0.0
      %2319 = vmatprep.subr.mxu0 0.0
      %2320 = vmatpush1.msra.mxu0 0.0
      %2321 = vmatprep.subr.mxu0 0.0
      %2322 = vmatpush1.msra.mxu0 0.0
      %2323 = vmatprep.subr.mxu0 0.0
      %2324 = vmatpush1.msra.mxu0 0.0
      %2325 = vmatprep.subr.mxu0 0.0
      %2326 = vmatpush1.msra.mxu0 0.0
      %2327 = vmatprep.subr.mxu0 0.0
      %2328 = vmatpush1.msra.mxu0 0.0
      %2329 = vmatprep.subr.mxu0 0.0
      %2330 = vmatpush1.msra.mxu0 0.0
      %2331 = vmatprep.subr.mxu0 0.0
      %2332 = vmatpush1.msra.mxu0 0.0
      %2333 = vmatprep.subr.mxu0 0.0
      %2334 = vmatpush1.msra.mxu0 0.0
      %2335 = vmatprep.subr.mxu0 0.0
      %2336 = vmatpush1.msra.mxu0 0.0
      %2337 = vmatprep.subr.mxu0 0.0
      %2338 = vmatpush1.msra.mxu0 0.0
      %2339 = vmatprep.subr.mxu0 0.0
      %2340 = vmatpush1.msra.mxu0 0.0
      %2341 = vmatprep.subr.mxu0 0.0
      %2342 = vmatpush1.msra.mxu0 0.0
      %2343 = vmatprep.subr.mxu0 0.0
      %2344 = vmatpush1.msra.mxu0 0.0
      %2345 = vmatprep.subr.mxu0 0.0
      %2346 = vmatpush1.msra.mxu0 0.0
      %2347 = vmatprep.subr.mxu0 0.0
      %2348 = vmatpush1.msra.mxu0 0.0
      %2349 = vmatprep.subr.mxu0 0.0
      %2350 = vmatpush1.msra.mxu0 0.0
      %2351 = vmatprep.subr.mxu0 0.0
      %2352 = vmatpush1.msra.mxu0 0.0
      %2353 = vmatprep.subr.mxu0 0.0
      %2354 = vmatpush1.msra.mxu0 0.0
      %2355 = vmatprep.subr.mxu0 0.0
      %2356 = vmatpush1.msra.mxu0 0.0
      %2357 = vmatprep.subr.mxu0 0.0
      %2358 = vmatpush1.msra.mxu0 0.0
      %2359 = vmatprep.subr.mxu0 0.0
      %2360 = vmatpush1.msra.mxu0 0.0
      %2361 = vmatprep.subr.mxu0 0.0
      %2362 = vmatpush1.msra.mxu0 0.0
      %2363 = vmatprep.mubr.f32.mxu0 0.0
      %2364 = vmatmul.mubr.f32.gmra.mrb[0].mxu0 %v2297
      %v2365 = vpop.f32.mrb[0].mxu0
      %v2366 = vadd.f32 0.0, %v2365
      %v2367 = vpop.f32.mrb[0].mxu0
      %2368 = vdwg.mxu0
      %2370 = vrot.lane.b32.xlu0 %v1750, 32
      %v2371 = vpop.permute.xlu0 %2370
      %v2374 = vsel %vm749, %v2107, 0
      %2376 = vmatprep.subr.mxu0 0.0
      %2377 = vmatpush1.msra.mxu0 %v2371
      %2378 = vmatprep.subr.mxu0 0.0
      %2379 = vmatpush1.msra.mxu0 0.0
      %2380 = vmatprep.subr.mxu0 0.0
      %2381 = vmatpush1.msra.mxu0 0.0
      %2382 = vmatprep.subr.mxu0 0.0
      %2383 = vmatpush1.msra.mxu0 0.0
      %2384 = vmatprep.subr.mxu0 0.0
      %2385 = vmatpush1.msra.mxu0 0.0
      %2386 = vmatprep.subr.mxu0 0.0
      %2387 = vmatpush1.msra.mxu0 0.0
      %2388 = vmatprep.subr.mxu0 0.0
      %2389 = vmatpush1.msra.mxu0 0.0
      %2390 = vmatprep.subr.mxu0 0.0
      %2391 = vmatpush1.msra.mxu0 0.0
      %2392 = vmatprep.subr.mxu0 0.0
      %2393 = vmatpush1.msra.mxu0 0.0
      %2394 = vmatprep.subr.mxu0 0.0
      %2395 = vmatpush1.msra.mxu0 0.0
      %2396 = vmatprep.subr.mxu0 0.0
      %2397 = vmatpush1.msra.mxu0 0.0
      %2398 = vmatprep.subr.mxu0 0.0
      %2399 = vmatpush1.msra.mxu0 0.0
      %2400 = vmatprep.subr.mxu0 0.0
      %2401 = vmatpush1.msra.mxu0 0.0
      %2402 = vmatprep.subr.mxu0 0.0
      %2403 = vmatpush1.msra.mxu0 0.0
      %2404 = vmatprep.subr.mxu0 0.0
      %2405 = vmatpush1.msra.mxu0 0.0
      %2406 = vmatprep.subr.mxu0 0.0
      %2407 = vmatpush1.msra.mxu0 0.0
      %2408 = vmatprep.subr.mxu0 0.0
      %2409 = vmatpush1.msra.mxu0 0.0
      %2410 = vmatprep.subr.mxu0 0.0
      %2411 = vmatpush1.msra.mxu0 0.0
      %2412 = vmatprep.subr.mxu0 0.0
      %2413 = vmatpush1.msra.mxu0 0.0
      %2414 = vmatprep.subr.mxu0 0.0
      %2415 = vmatpush1.msra.mxu0 0.0
      %2416 = vmatprep.subr.mxu0 0.0
      %2417 = vmatpush1.msra.mxu0 0.0
      %2418 = vmatprep.subr.mxu0 0.0
      %2419 = vmatpush1.msra.mxu0 0.0
      %2420 = vmatprep.subr.mxu0 0.0
      %2421 = vmatpush1.msra.mxu0 0.0
      %2422 = vmatprep.subr.mxu0 0.0
      %2423 = vmatpush1.msra.mxu0 0.0
      %2424 = vmatprep.subr.mxu0 0.0
      %2425 = vmatpush1.msra.mxu0 0.0
      %2426 = vmatprep.subr.mxu0 0.0
      %2427 = vmatpush1.msra.mxu0 0.0
      %2428 = vmatprep.subr.mxu0 0.0
      %2429 = vmatpush1.msra.mxu0 0.0
      %2430 = vmatprep.subr.mxu0 0.0
      %2431 = vmatpush1.msra.mxu0 0.0
      %2432 = vmatprep.subr.mxu0 0.0
      %2433 = vmatpush1.msra.mxu0 0.0
      %2434 = vmatprep.subr.mxu0 0.0
      %2435 = vmatpush1.msra.mxu0 0.0
      %2436 = vmatprep.subr.mxu0 0.0
      %2437 = vmatpush1.msra.mxu0 0.0
      %2438 = vmatprep.subr.mxu0 0.0
      %2439 = vmatpush1.msra.mxu0 0.0
      %2440 = vmatprep.mubr.f32.mxu0 0.0
      %2441 = vmatmul.mubr.f32.gmra.mrb[0].mxu0 %v2374
      %v2442 = vpop.f32.mrb[0].mxu0
      %v2443 = vadd.f32 %v2366, %v2442
      %v2444 = vpop.f32.mrb[0].mxu0
      %2445 = vdwg.mxu0
      %2446 = vrot.lane.b32.xlu0 %v1825, 112
      %v2447 = vpop.permute.xlu0 %2446
      %2448 = vrot.lane.b32.xlu0 %v1910, 80
      %v2449 = vpop.permute.xlu0 %2448
      %2450 = vrot.lane.b32.xlu0 %v1915, 80
      %v2451 = vpop.permute.xlu0 %2450
      %2452 = vrot.lane.b32.xlu0 %v1920, 80
      %v2453 = vpop.permute.xlu0 %2452
      %v2454 = vsel %vm749, %v2447, 0
      %v2456 = vsel %vm749, %v2449, 0
      %v2458 = vsel %vm749, %v2451, 0
      %v2460 = vsel %vm749, %v2453, 0
      %2462 = vmatprep.subr.mxu0 0.0
      %2463 = vmatpush1.xpose.msra.mxu0 %v2456
      %2464 = vmatprep.subr.mxu0 0.0
      %2465 = vmatpush1.xpose.msra.mxu0 %v2458
      %2466 = vmatprep.subr.mxu0 0.0
      %2467 = vmatpush1.xpose.msra.mxu0 %v2460
      %2468 = vmatprep.subr.mxu0 0.0
      %2469 = vmatpush1.xpose.msra.mxu0 0.0
      %2470 = vmatprep.subr.mxu0 0.0
      %2471 = vmatpush1.xpose.msra.mxu0 0.0
      %2472 = vmatprep.subr.mxu0 0.0
      %2473 = vmatpush1.xpose.msra.mxu0 0.0
      %2474 = vmatprep.subr.mxu0 0.0
      %2475 = vmatpush1.xpose.msra.mxu0 0.0
      %2476 = vmatprep.subr.mxu0 0.0
      %2477 = vmatpush1.xpose.msra.mxu0 0.0
      %2478 = vmatprep.subr.mxu0 0.0
      %2479 = vmatpush1.xpose.msra.mxu0 0.0
      %2480 = vmatprep.subr.mxu0 0.0
      %2481 = vmatpush1.xpose.msra.mxu0 0.0
      %2482 = vmatprep.subr.mxu0 0.0
      %2483 = vmatpush1.xpose.msra.mxu0 0.0
      %2484 = vmatprep.subr.mxu0 0.0
      %2485 = vmatpush1.xpose.msra.mxu0 0.0
      %2486 = vmatprep.subr.mxu0 0.0
      %2487 = vmatpush1.xpose.msra.mxu0 0.0
      %2488 = vmatprep.subr.mxu0 0.0
      %2489 = vmatpush1.xpose.msra.mxu0 0.0
      %2490 = vmatprep.subr.mxu0 0.0
      %2491 = vmatpush1.xpose.msra.mxu0 0.0
      %2492 = vmatprep.subr.mxu0 0.0
      %2493 = vmatpush1.xpose.msra.mxu0 0.0
      %2494 = vmatprep.subr.mxu0 0.0
      %2495 = vmatpush1.xpose.msra.mxu0 0.0
      %2496 = vmatprep.subr.mxu0 0.0
      %2497 = vmatpush1.xpose.msra.mxu0 0.0
      %2498 = vmatprep.subr.mxu0 0.0
      %2499 = vmatpush1.xpose.msra.mxu0 0.0
      %2500 = vmatprep.subr.mxu0 0.0
      %2501 = vmatpush1.xpose.msra.mxu0 0.0
      %2502 = vmatprep.subr.mxu0 0.0
      %2503 = vmatpush1.xpose.msra.mxu0 0.0
      %2504 = vmatprep.subr.mxu0 0.0
      %2505 = vmatpush1.xpose.msra.mxu0 0.0
      %2506 = vmatprep.subr.mxu0 0.0
      %2507 = vmatpush1.xpose.msra.mxu0 0.0
      %2508 = vmatprep.subr.mxu0 0.0
      %2509 = vmatpush1.xpose.msra.mxu0 0.0
      %2510 = vmatprep.subr.mxu0 0.0
      %2511 = vmatpush1.xpose.msra.mxu0 0.0
      %2512 = vmatprep.subr.mxu0 0.0
      %2513 = vmatpush1.xpose.msra.mxu0 0.0
      %2514 = vmatprep.subr.mxu0 0.0
      %2515 = vmatpush1.xpose.msra.mxu0 0.0
      %2516 = vmatprep.subr.mxu0 0.0
      %2517 = vmatpush1.xpose.msra.mxu0 0.0
      %2518 = vmatprep.subr.mxu0 0.0
      %2519 = vmatpush1.xpose.msra.mxu0 0.0
      %2520 = vmatprep.subr.mxu0 0.0
      %2521 = vmatpush1.xpose.msra.mxu0 0.0
      %2522 = vmatprep.subr.mxu0 0.0
      %2523 = vmatpush1.xpose.msra.mxu0 0.0
      %2524 = vmatprep.subr.mxu0 0.0
      %2525 = vmatpush1.xpose.msra.mxu0 0.0
      %2526 = vmatprep.mubr.f32.mxu0 0.0
      %2527 = vmatmul.mubr.f32.gmra.mrb[0].mxu0 %v2454
      %v2528 = vpop.f32.mrb[0].mxu0
      %v2529 = vadd.f32 0.0, %v2528
      %v2530 = vpop.f32.mrb[0].mxu0
      %2531 = vdwg.mxu0
      %v2532 = vmul.f32 %v2529, 0.35355338
      %v2533 = vadd.f32 %v2532, %v660
      %v2534 = vsel %vm2013, %v2533, -inf
      %2535 = vmax.xlane.f32.xlu0 %v2534
      %v2536 = vpop.xlane.xlu0 %2535
      %v2537 = vsub.f32 %v2533, %v2536
      %v2538 = vmul.f32 %v2537, 1.442695
      %v2539 = vpow.pop %v2538
      %v2540 = vsel %vm2013, %v2539, 0.0
      %2541 = vadd.xlane.f32.xlu0 %v2540
      %v2542 = vpop.xlane.xlu0 %2541
      %v2543 = vrcp.pop %v2542
      %v2544 = vmul.f32 %v2539, %v2543
      %2545 = vrot.lane.b32.xlu0 %v1910, 48
      %v2546 = vpop.permute.xlu0 %2545
      %2547 = vrot.lane.b32.xlu0 %v1915, 48
      %v2548 = vpop.permute.xlu0 %2547
      %2549 = vrot.lane.b32.xlu0 %v1920, 48
      %v2550 = vpop.permute.xlu0 %2549
      %v2554 = vsel %vm2033, %v2544, 0
      %v2556 = vsel %vm2037, %v2550, 0
      %2558 = vmatprep.subr.mxu0 0.0
      %2559 = vmatpush1.msra.mxu0 %v2546
      %2560 = vmatprep.subr.mxu0 0.0
      %2561 = vmatpush1.msra.mxu0 %v2548
      %2562 = vmatprep.subr.mxu0 0.0
      %2563 = vmatpush1.msra.mxu0 %v2556
      %2564 = vmatprep.subr.mxu0 0.0
      %2565 = vmatpush1.msra.mxu0 0.0
      %2566 = vmatprep.subr.mxu0 0.0
      %2567 = vmatpush1.msra.mxu0 0.0
      %2568 = vmatprep.subr.mxu0 0.0
      %2569 = vmatpush1.msra.mxu0 0.0
      %2570 = vmatprep.subr.mxu0 0.0
      %2571 = vmatpush1.msra.mxu0 0.0
      %2572 = vmatprep.subr.mxu0 0.0
      %2573 = vmatpush1.msra.mxu0 0.0
      %2574 = vmatprep.subr.mxu0 0.0
      %2575 = vmatpush1.msra.mxu0 0.0
      %2576 = vmatprep.subr.mxu0 0.0
      %2577 = vmatpush1.msra.mxu0 0.0
      %2578 = vmatprep.subr.mxu0 0.0
      %2579 = vmatpush1.msra.mxu0 0.0
      %2580 = vmatprep.subr.mxu0 0.0
      %2581 = vmatpush1.msra.mxu0 0.0
      %2582 = vmatprep.subr.mxu0 0.0
      %2583 = vmatpush1.msra.mxu0 0.0
      %2584 = vmatprep.subr.mxu0 0.0
      %2585 = vmatpush1.msra.mxu0 0.0
      %2586 = vmatprep.subr.mxu0 0.0
      %2587 = vmatpush1.msra.mxu0 0.0
      %2588 = vmatprep.subr.mxu0 0.0
      %2589 = vmatpush1.msra.mxu0 0.0
      %2590 = vmatprep.subr.mxu0 0.0
      %2591 = vmatpush1.msra.mxu0 0.0
      %2592 = vmatprep.subr.mxu0 0.0
      %2593 = vmatpush1.msra.mxu0 0.0
      %2594 = vmatprep.subr.mxu0 0.0
      %2595 = vmatpush1.msra.mxu0 0.0
      %2596 = vmatprep.subr.mxu0 0.0
      %2597 = vmatpush1.msra.mxu0 0.0
      %2598 = vmatprep.subr.mxu0 0.0
      %2599 = vmatpush1.msra.mxu0 0.0
      %2600 = vmatprep.subr.mxu0 0.0
      %2601 = vmatpush1.msra.mxu0 0.0
      %2602 = vmatprep.subr.mxu0 0.0
      %2603 = vmatpush1.msra.mxu0 0.0
      %2604 = vmatprep.subr.mxu0 0.0
      %2605 = vmatpush1.msra.mxu0 0.0
      %2606 = vmatprep.subr.mxu0 0.0
      %2607 = vmatpush1.msra.mxu0 0.0
      %2608 = vmatprep.subr.mxu0 0.0
      %2609 = vmatpush1.msra.mxu0 0.0
      %2610 = vmatprep.subr.mxu0 0.0
      %2611 = vmatpush1.msra.mxu0 0.0
      %2612 = vmatprep.subr.mxu0 0.0
      %2613 = vmatpush1.msra.mxu0 0.0
      %2614 = vmatprep.subr.mxu0 0.0
      %2615 = vmatpush1.msra.mxu0 0.0
      %2616 = vmatprep.subr.mxu0 0.0
      %2617 = vmatpush1.msra.mxu0 0.0
      %2618 = vmatprep.subr.mxu0 0.0
      %2619 = vmatpush1.msra.mxu0 0.0
      %2620 = vmatprep.subr.mxu0 0.0
      %2621 = vmatpush1.msra.mxu0 0.0
      %2622 = vmatprep.mubr.f32.mxu0 0.0
      %2623 = vmatmul.mubr.f32.gmra.mrb[0].mxu0 %v2554
      %v2624 = vpop.f32.mrb[0].mxu0
      %v2625 = vadd.f32 0.0, %v2624
      %v2626 = vpop.f32.mrb[0].mxu0
      %2627 = vdwg.mxu0
      %2629 = vrot.lane.b32.xlu0 %v1752, 32
      %v2630 = vpop.permute.xlu0 %2629
      %v2633 = vsel %vm749, %v2625, 0
      %2635 = vmatprep.subr.mxu0 0.0
      %2636 = vmatpush1.msra.mxu0 %v2630
      %2637 = vmatprep.subr.mxu0 0.0
      %2638 = vmatpush1.msra.mxu0 0.0
      %2639 = vmatprep.subr.mxu0 0.0
      %2640 = vmatpush1.msra.mxu0 0.0
      %2641 = vmatprep.subr.mxu0 0.0
      %2642 = vmatpush1.msra.mxu0 0.0
      %2643 = vmatprep.subr.mxu0 0.0
      %2644 = vmatpush1.msra.mxu0 0.0
      %2645 = vmatprep.subr.mxu0 0.0
      %2646 = vmatpush1.msra.mxu0 0.0
      %2647 = vmatprep.subr.mxu0 0.0
      %2648 = vmatpush1.msra.mxu0 0.0
      %2649 = vmatprep.subr.mxu0 0.0
      %2650 = vmatpush1.msra.mxu0 0.0
      %2651 = vmatprep.subr.mxu0 0.0
      %2652 = vmatpush1.msra.mxu0 0.0
      %2653 = vmatprep.subr.mxu0 0.0
      %2654 = vmatpush1.msra.mxu0 0.0
      %2655 = vmatprep.subr.mxu0 0.0
      %2656 = vmatpush1.msra.mxu0 0.0
      %2657 = vmatprep.subr.mxu0 0.0
      %2658 = vmatpush1.msra.mxu0 0.0
      %2659 = vmatprep.subr.mxu0 0.0
      %2660 = vmatpush1.msra.mxu0 0.0
      %2661 = vmatprep.subr.mxu0 0.0
      %2662 = vmatpush1.msra.mxu0 0.0
      %2663 = vmatprep.subr.mxu0 0.0
      %2664 = vmatpush1.msra.mxu0 0.0
      %2665 = vmatprep.subr.mxu0 0.0
      %2666 = vmatpush1.msra.mxu0 0.0
      %2667 = vmatprep.subr.mxu0 0.0
      %2668 = vmatpush1.msra.mxu0 0.0
      %2669 = vmatprep.subr.mxu0 0.0
      %2670 = vmatpush1.msra.mxu0 0.0
      %2671 = vmatprep.subr.mxu0 0.0
      %2672 = vmatpush1.msra.mxu0 0.0
      %2673 = vmatprep.subr.mxu0 0.0
      %2674 = vmatpush1.msra.mxu0 0.0
      %2675 = vmatprep.subr.mxu0 0.0
      %2676 = vmatpush1.msra.mxu0 0.0
      %2677 = vmatprep.subr.mxu0 0.0
      %2678 = vmatpush1.msra.mxu0 0.0
      %2679 = vmatprep.subr.mxu0 0.0
      %2680 = vmatpush1.msra.mxu0 0.0
      %2681 = vmatprep.subr.mxu0 0.0
      %2682 = vmatpush1.msra.mxu0 0.0
      %2683 = vmatprep.subr.mxu0 0.0
      %2684 = vmatpush1.msra.mxu0 0.0
      %2685 = vmatprep.subr.mxu0 0.0
      %2686 = vmatpush1.msra.mxu0 0.0
      %2687 = vmatprep.subr.mxu0 0.0
      %2688 = vmatpush1.msra.mxu0 0.0
      %2689 = vmatprep.subr.mxu0 0.0
      %2690 = vmatpush1.msra.mxu0 0.0
      %2691 = vmatprep.subr.mxu0 0.0
      %2692 = vmatpush1.msra.mxu0 0.0
      %2693 = vmatprep.subr.mxu0 0.0
      %2694 = vmatpush1.msra.mxu0 0.0
      %2695 = vmatprep.subr.mxu0 0.0
      %2696 = vmatpush1.msra.mxu0 0.0
      %2697 = vmatprep.subr.mxu0 0.0
      %2698 = vmatpush1.msra.mxu0 0.0
      %2699 = vmatprep.mubr.f32.mxu0 0.0
      %2700 = vmatmul.mubr.f32.gmra.mrb[0].mxu0 %v2633
      %v2701 = vpop.f32.mrb[0].mxu0
      %v2702 = vadd.f32 0.0, %v2701
      %v2703 = vpop.f32.mrb[0].mxu0
      %2704 = vdwg.mxu0
      %v2705 = vadd.f32 %v2443, %v2702
      %2706 = vrot.lane.b32.xlu0 %v1825, 104
      %v2707 = vpop.permute.xlu0 %2706
      %2708 = vrot.lane.b32.xlu0 %v1910, 72
      %v2709 = vpop.permute.xlu0 %2708
      %2710 = vrot.lane.b32.xlu0 %v1915, 72
      %v2711 = vpop.permute.xlu0 %2710
      %2712 = vrot.lane.b32.xlu0 %v1920, 72
      %v2713 = vpop.permute.xlu0 %2712
      %v2714 = vsel %vm749, %v2707, 0
      %v2716 = vsel %vm749, %v2709, 0
      %v2718 = vsel %vm749, %v2711, 0
      %v2720 = vsel %vm749, %v2713, 0
      %2722 = vmatprep.subr.mxu0 0.0
      %2723 = vmatpush1.xpose.msra.mxu0 %v2716
      %2724 = vmatprep.subr.mxu0 0.0
      %2725 = vmatpush1.xpose.msra.mxu0 %v2718
      %2726 = vmatprep.subr.mxu0 0.0
      %2727 = vmatpush1.xpose.msra.mxu0 %v2720
      %2728 = vmatprep.subr.mxu0 0.0
      %2729 = vmatpush1.xpose.msra.mxu0 0.0
      %2730 = vmatprep.subr.mxu0 0.0
      %2731 = vmatpush1.xpose.msra.mxu0 0.0
      %2732 = vmatprep.subr.mxu0 0.0
      %2733 = vmatpush1.xpose.msra.mxu0 0.0
      %2734 = vmatprep.subr.mxu0 0.0
      %2735 = vmatpush1.xpose.msra.mxu0 0.0
      %2736 = vmatprep.subr.mxu0 0.0
      %2737 = vmatpush1.xpose.msra.mxu0 0.0
      %2738 = vmatprep.subr.mxu0 0.0
      %2739 = vmatpush1.xpose.msra.mxu0 0.0
      %2740 = vmatprep.subr.mxu0 0.0
      %2741 = vmatpush1.xpose.msra.mxu0 0.0
      %2742 = vmatprep.subr.mxu0 0.0
      %2743 = vmatpush1.xpose.msra.mxu0 0.0
      %2744 = vmatprep.subr.mxu0 0.0
      %2745 = vmatpush1.xpose.msra.mxu0 0.0
      %2746 = vmatprep.subr.mxu0 0.0
      %2747 = vmatpush1.xpose.msra.mxu0 0.0
      %2748 = vmatprep.subr.mxu0 0.0
      %2749 = vmatpush1.xpose.msra.mxu0 0.0
      %2750 = vmatprep.subr.mxu0 0.0
      %2751 = vmatpush1.xpose.msra.mxu0 0.0
      %2752 = vmatprep.subr.mxu0 0.0
      %2753 = vmatpush1.xpose.msra.mxu0 0.0
      %2754 = vmatprep.subr.mxu0 0.0
      %2755 = vmatpush1.xpose.msra.mxu0 0.0
      %2756 = vmatprep.subr.mxu0 0.0
      %2757 = vmatpush1.xpose.msra.mxu0 0.0
      %2758 = vmatprep.subr.mxu0 0.0
      %2759 = vmatpush1.xpose.msra.mxu0 0.0
      %2760 = vmatprep.subr.mxu0 0.0
      %2761 = vmatpush1.xpose.msra.mxu0 0.0
      %2762 = vmatprep.subr.mxu0 0.0
      %2763 = vmatpush1.xpose.msra.mxu0 0.0
      %2764 = vmatprep.subr.mxu0 0.0
      %2765 = vmatpush1.xpose.msra.mxu0 0.0
      %2766 = vmatprep.subr.mxu0 0.0
      %2767 = vmatpush1.xpose.msra.mxu0 0.0
      %2768 = vmatprep.subr.mxu0 0.0
      %2769 = vmatpush1.xpose.msra.mxu0 0.0
      %2770 = vmatprep.subr.mxu0 0.0
      %2771 = vmatpush1.xpose.msra.mxu0 0.0
      %2772 = vmatprep.subr.mxu0 0.0
      %2773 = vmatpush1.xpose.msra.mxu0 0.0
      %2774 = vmatprep.subr.mxu0 0.0
      %2775 = vmatpush1.xpose.msra.mxu0 0.0
      %2776 = vmatprep.subr.mxu0 0.0
      %2777 = vmatpush1.xpose.msra.mxu0 0.0
      %2778 = vmatprep.subr.mxu0 0.0
      %2779 = vmatpush1.xpose.msra.mxu0 0.0
      %2780 = vmatprep.subr.mxu0 0.0
      %2781 = vmatpush1.xpose.msra.mxu0 0.0
      %2782 = vmatprep.subr.mxu0 0.0
      %2783 = vmatpush1.xpose.msra.mxu0 0.0
      %2784 = vmatprep.subr.mxu0 0.0
      %2785 = vmatpush1.xpose.msra.mxu0 0.0
      %2786 = vmatprep.mubr.f32.mxu0 0.0
      %2787 = vmatmul.mubr.f32.gmra.mrb[0].mxu0 %v2714
      %v2788 = vpop.f32.mrb[0].mxu0
      %v2789 = vadd.f32 0.0, %v2788
      %v2790 = vpop.f32.mrb[0].mxu0
      %2791 = vdwg.mxu0
      %v2792 = vmul.f32 %v2789, 0.35355338
      %v2793 = vadd.f32 %v2792, %v660
      %v2794 = vsel %vm2013, %v2793, -inf
      %2795 = vmax.xlane.f32.xlu0 %v2794
      %v2796 = vpop.xlane.xlu0 %2795
      %v2797 = vsub.f32 %v2793, %v2796
      %v2798 = vmul.f32 %v2797, 1.442695
      %v2799 = vpow.pop %v2798
      %v2800 = vsel %vm2013, %v2799, 0.0
      %2801 = vadd.xlane.f32.xlu0 %v2800
      %v2802 = vpop.xlane.xlu0 %2801
      %v2803 = vrcp.pop %v2802
      %v2804 = vmul.f32 %v2799, %v2803
      %2805 = vrot.lane.b32.xlu0 %v1910, 40
      %v2806 = vpop.permute.xlu0 %2805
      %2807 = vrot.lane.b32.xlu0 %v1915, 40
      %v2808 = vpop.permute.xlu0 %2807
      %2809 = vrot.lane.b32.xlu0 %v1920, 40
      %v2810 = vpop.permute.xlu0 %2809
      %v2814 = vsel %vm2033, %v2804, 0
      %v2816 = vsel %vm2037, %v2810, 0
      %2818 = vmatprep.subr.mxu0 0.0
      %2819 = vmatpush1.msra.mxu0 %v2806
      %2820 = vmatprep.subr.mxu0 0.0
      %2821 = vmatpush1.msra.mxu0 %v2808
      %2822 = vmatprep.subr.mxu0 0.0
      %2823 = vmatpush1.msra.mxu0 %v2816
      %2824 = vmatprep.subr.mxu0 0.0
      %2825 = vmatpush1.msra.mxu0 0.0
      %2826 = vmatprep.subr.mxu0 0.0
      %2827 = vmatpush1.msra.mxu0 0.0
      %2828 = vmatprep.subr.mxu0 0.0
      %2829 = vmatpush1.msra.mxu0 0.0
      %2830 = vmatprep.subr.mxu0 0.0
      %2831 = vmatpush1.msra.mxu0 0.0
      %2832 = vmatprep.subr.mxu0 0.0
      %2833 = vmatpush1.msra.mxu0 0.0
      %2834 = vmatprep.subr.mxu0 0.0
      %2835 = vmatpush1.msra.mxu0 0.0
      %2836 = vmatprep.subr.mxu0 0.0
      %2837 = vmatpush1.msra.mxu0 0.0
      %2838 = vmatprep.subr.mxu0 0.0
      %2839 = vmatpush1.msra.mxu0 0.0
      %2840 = vmatprep.subr.mxu0 0.0
      %2841 = vmatpush1.msra.mxu0 0.0
      %2842 = vmatprep.subr.mxu0 0.0
      %2843 = vmatpush1.msra.mxu0 0.0
      %2844 = vmatprep.subr.mxu0 0.0
      %2845 = vmatpush1.msra.mxu0 0.0
      %2846 = vmatprep.subr.mxu0 0.0
      %2847 = vmatpush1.msra.mxu0 0.0
      %2848 = vmatprep.subr.mxu0 0.0
      %2849 = vmatpush1.msra.mxu0 0.0
      %2850 = vmatprep.subr.mxu0 0.0
      %2851 = vmatpush1.msra.mxu0 0.0
      %2852 = vmatprep.subr.mxu0 0.0
      %2853 = vmatpush1.msra.mxu0 0.0
      %2854 = vmatprep.subr.mxu0 0.0
      %2855 = vmatpush1.msra.mxu0 0.0
      %2856 = vmatprep.subr.mxu0 0.0
      %2857 = vmatpush1.msra.mxu0 0.0
      %2858 = vmatprep.subr.mxu0 0.0
      %2859 = vmatpush1.msra.mxu0 0.0
      %2860 = vmatprep.subr.mxu0 0.0
      %2861 = vmatpush1.msra.mxu0 0.0
      %2862 = vmatprep.subr.mxu0 0.0
      %2863 = vmatpush1.msra.mxu0 0.0
      %2864 = vmatprep.subr.mxu0 0.0
      %2865 = vmatpush1.msra.mxu0 0.0
      %2866 = vmatprep.subr.mxu0 0.0
      %2867 = vmatpush1.msra.mxu0 0.0
      %2868 = vmatprep.subr.mxu0 0.0
      %2869 = vmatpush1.msra.mxu0 0.0
      %2870 = vmatprep.subr.mxu0 0.0
      %2871 = vmatpush1.msra.mxu0 0.0
      %2872 = vmatprep.subr.mxu0 0.0
      %2873 = vmatpush1.msra.mxu0 0.0
      %2874 = vmatprep.subr.mxu0 0.0
      %2875 = vmatpush1.msra.mxu0 0.0
      %2876 = vmatprep.subr.mxu0 0.0
      %2877 = vmatpush1.msra.mxu0 0.0
      %2878 = vmatprep.subr.mxu0 0.0
      %2879 = vmatpush1.msra.mxu0 0.0
      %2880 = vmatprep.subr.mxu0 0.0
      %2881 = vmatpush1.msra.mxu0 0.0
      %2882 = vmatprep.mubr.f32.mxu0 0.0
      %2883 = vmatmul.mubr.f32.gmra.mrb[0].mxu0 %v2814
      %v2884 = vpop.f32.mrb[0].mxu0
      %v2885 = vadd.f32 0.0, %v2884
      %v2886 = vpop.f32.mrb[0].mxu0
      %2887 = vdwg.mxu0
      %2889 = vrot.lane.b32.xlu0 %v1753, 32
      %v2890 = vpop.permute.xlu0 %2889
      %v2893 = vsel %vm749, %v2885, 0
      %2895 = vmatprep.subr.mxu0 0.0
      %2896 = vmatpush1.msra.mxu0 %v2890
      %2897 = vmatprep.subr.mxu0 0.0
      %2898 = vmatpush1.msra.mxu0 0.0
      %2899 = vmatprep.subr.mxu0 0.0
      %2900 = vmatpush1.msra.mxu0 0.0
      %2901 = vmatprep.subr.mxu0 0.0
      %2902 = vmatpush1.msra.mxu0 0.0
      %2903 = vmatprep.subr.mxu0 0.0
      %2904 = vmatpush1.msra.mxu0 0.0
      %2905 = vmatprep.subr.mxu0 0.0
      %2906 = vmatpush1.msra.mxu0 0.0
      %2907 = vmatprep.subr.mxu0 0.0
      %2908 = vmatpush1.msra.mxu0 0.0
      %2909 = vmatprep.subr.mxu0 0.0
      %2910 = vmatpush1.msra.mxu0 0.0
      %2911 = vmatprep.subr.mxu0 0.0
      %2912 = vmatpush1.msra.mxu0 0.0
      %2913 = vmatprep.subr.mxu0 0.0
      %2914 = vmatpush1.msra.mxu0 0.0
      %2915 = vmatprep.subr.mxu0 0.0
      %2916 = vmatpush1.msra.mxu0 0.0
      %2917 = vmatprep.subr.mxu0 0.0
      %2918 = vmatpush1.msra.mxu0 0.0
      %2919 = vmatprep.subr.mxu0 0.0
      %2920 = vmatpush1.msra.mxu0 0.0
      %2921 = vmatprep.subr.mxu0 0.0
      %2922 = vmatpush1.msra.mxu0 0.0
      %2923 = vmatprep.subr.mxu0 0.0
      %2924 = vmatpush1.msra.mxu0 0.0
      %2925 = vmatprep.subr.mxu0 0.0
      %2926 = vmatpush1.msra.mxu0 0.0
      %2927 = vmatprep.subr.mxu0 0.0
      %2928 = vmatpush1.msra.mxu0 0.0
      %2929 = vmatprep.subr.mxu0 0.0
      %2930 = vmatpush1.msra.mxu0 0.0
      %2931 = vmatprep.subr.mxu0 0.0
      %2932 = vmatpush1.msra.mxu0 0.0
      %2933 = vmatprep.subr.mxu0 0.0
      %2934 = vmatpush1.msra.mxu0 0.0
      %2935 = vmatprep.subr.mxu0 0.0
      %2936 = vmatpush1.msra.mxu0 0.0
      %2937 = vmatprep.subr.mxu0 0.0
      %2938 = vmatpush1.msra.mxu0 0.0
      %2939 = vmatprep.subr.mxu0 0.0
      %2940 = vmatpush1.msra.mxu0 0.0
      %2941 = vmatprep.subr.mxu0 0.0
      %2942 = vmatpush1.msra.mxu0 0.0
      %2943 = vmatprep.subr.mxu0 0.0
      %2944 = vmatpush1.msra.mxu0 0.0
      %2945 = vmatprep.subr.mxu0 0.0
      %2946 = vmatpush1.msra.mxu0 0.0
      %2947 = vmatprep.subr.mxu0 0.0
      %2948 = vmatpush1.msra.mxu0 0.0
      %2949 = vmatprep.subr.mxu0 0.0
      %2950 = vmatpush1.msra.mxu0 0.0
      %2951 = vmatprep.subr.mxu0 0.0
      %2952 = vmatpush1.msra.mxu0 0.0
      %2953 = vmatprep.subr.mxu0 0.0
      %2954 = vmatpush1.msra.mxu0 0.0
      %2955 = vmatprep.subr.mxu0 0.0
      %2956 = vmatpush1.msra.mxu0 0.0
      %2957 = vmatprep.subr.mxu0 0.0
      %2958 = vmatpush1.msra.mxu0 0.0
      %2959 = vmatprep.mubr.f32.mxu0 0.0
      %2960 = vmatmul.mubr.f32.gmra.mrb[0].mxu0 %v2893
      %v2961 = vpop.f32.mrb[0].mxu0
      %v2962 = vadd.f32 0.0, %v2961
      %v2963 = vpop.f32.mrb[0].mxu0
      %2964 = vdwg.mxu0
      %v2965 = vadd.f32 %v2705, %v2962
      %2966 = vrot.lane.b32.xlu0 %v1832, 32
      %v2967 = vpop.permute.xlu0 %2966
      %v2969 = vadd.f32 %v2965, %v2967
      %v2970 = vadd.f32 %v1749, %v2969
      %v2971 = vsel %vm1730, %v2970, 0.0
      %2972 = vadd.xlane.f32.xlu0 %v2971
      %v2973 = vpop.xlane.xlu0 %2972
      %v2974 = vmul.f32 %v2973, %v1734
      %v2975 = vsub.f32 %v2970, %v2974
      %v2976 = vmul.f32 %v2975, %v2975
      %v2977 = vsel %vm1730, %v2976, 0.0
      %2978 = vadd.xlane.f32.xlu0 %v2977
      %v2979 = vpop.xlane.xlu0 %2978
      %v2980 = vmul.f32 %v2979, %v1734
      %v2981 = vadd.f32 %v2980, 1e-12
      %v2982 = vrsqrt.pop %v2981
      %v2983 = vmul.f32 %v2975, %v2982
      %v2984 = vrot.slane %v654, 2
      %v2986 = vmul.f32 %v2983, %v2984
      %v2987 = vrot.slane %v654, 3
      %v2989 = vadd.f32 %v2986, %v2987
      %v2990 = vld [vmem:[%s8] sm:$0xff]
      %v2991 = vld [vmem:[%s8 + $0x8] sm:$0xff]
      %v2992 = vld [vmem:[%s8 + $0x10] sm:$0xff]
      %v2993 = vld [vmem:[%s8 + $0x18] sm:$0xff]
      %v2994 = vld [vmem:[%s9] sm:$0x1]
      %v2996 = vsel %vm672, %v2989, 0
      %2998 = vmatprep.subr.mxu0 0.0
      %2999 = vmatpush1.msra.mxu0 %v2990
      %3000 = vmatprep.subr.mxu0 0.0
      %3001 = vmatpush1.msra.mxu0 %v2991
      %3002 = vmatprep.subr.mxu0 0.0
      %3003 = vmatpush1.msra.mxu0 %v2992
      %3004 = vmatprep.subr.mxu0 0.0
      %3005 = vmatpush1.msra.mxu0 %v2993
      %3006 = vmatprep.subr.mxu0 0.0
      %3007 = vmatpush1.msra.mxu0 0.0
      %3008 = vmatprep.subr.mxu0 0.0
      %3009 = vmatpush1.msra.mxu0 0.0
      %3010 = vmatprep.subr.mxu0 0.0
      %3011 = vmatpush1.msra.mxu0 0.0
      %3012 = vmatprep.subr.mxu0 0.0
      %3013 = vmatpush1.msra.mxu0 0.0
      %3014 = vmatprep.subr.mxu0 0.0
      %3015 = vmatpush1.msra.mxu0 0.0
      %3016 = vmatprep.subr.mxu0 0.0
      %3017 = vmatpush1.msra.mxu0 0.0
      %3018 = vmatprep.subr.mxu0 0.0
      %3019 = vmatpush1.msra.mxu0 0.0
      %3020 = vmatprep.subr.mxu0 0.0
      %3021 = vmatpush1.msra.mxu0 0.0
      %3022 = vmatprep.subr.mxu0 0.0
      %3023 = vmatpush1.msra.mxu0 0.0
      %3024 = vmatprep.subr.mxu0 0.0
      %3025 = vmatpush1.msra.mxu0 0.0
      %3026 = vmatprep.subr.mxu0 0.0
      %3027 = vmatpush1.msra.mxu0 0.0
      %3028 = vmatprep.subr.mxu0 0.0
      %3029 = vmatpush1.msra.mxu0 0.0
      %3030 = vmatprep.subr.mxu0 0.0
      %3031 = vmatpush1.msra.mxu0 0.0
      %3032 = vmatprep.subr.mxu0 0.0
      %3033 = vmatpush1.msra.mxu0 0.0
      %3034 = vmatprep.subr.mxu0 0.0
      %3035 = vmatpush1.msra.mxu0 0.0
      %3036 = vmatprep.subr.mxu0 0.0
      %3037 = vmatpush1.msra.mxu0 0.0
      %3038 = vmatprep.subr.mxu0 0.0
      %3039 = vmatpush1.msra.mxu0 0.0
      %3040 = vmatprep.subr.mxu0 0.0
      %3041 = vmatpush1.msra.mxu0 0.0
      %3042 = vmatprep.subr.mxu0 0.0
      %3043 = vmatpush1.msra.mxu0 0.0
      %3044 = vmatprep.subr.mxu0 0.0
      %3045 = vmatpush1.msra.mxu0 0.0
      %3046 = vmatprep.subr.mxu0 0.0
      %3047 = vmatpush1.msra.mxu0 0.0
      %3048 = vmatprep.subr.mxu0 0.0
      %3049 = vmatpush1.msra.mxu0 0.0
      %3050 = vmatprep.subr.mxu0 0.0
      %3051 = vmatpush1.msra.mxu0 0.0
      %3052 = vmatprep.subr.mxu0 0.0
      %3053 = vmatpush1.msra.mxu0 0.0
      %3054 = vmatprep.subr.mxu0 0.0
      %3055 = vmatpush1.msra.mxu0 0.0
      %3056 = vmatprep.subr.mxu0 0.0
      %3057 = vmatpush1.msra.mxu0 0.0
      %3058 = vmatprep.subr.mxu0 0.0
      %3059 = vmatpush1.msra.mxu0 0.0
      %3060 = vmatprep.subr.mxu0 0.0
      %3061 = vmatpush1.msra.mxu0 0.0
      %3062 = vmatprep.mubr.f32.mxu0 0.0
      %3063 = vmatmul.mubr.f32.gmra.mrb[0].mxu0 %v2996
      %v3064 = vpop.f32.mrb[0].mxu0
      %v3065 = vadd.f32 %v2994, %v3064
      %v3066 = vpop.f32.mrb[0].mxu0
      %3067 = vdwg.mxu0
      %v3068 = vmul.f32 %v3065, 0.5
      %v3069 = vmul.f32 %v3065, 0.044715
      %v3070 = vmul.f32 %v3069, %v3065
      %v3071 = vmul.f32 %v3070, %v3065
      %v3072 = vadd.f32 %v3065, %v3071
      %v3073 = vmul.f32 %v3072, 0.7978846
      %v3074 = vtanh.pop %v3073
      %v3075 = vadd.f32 %v3074, 1.0
      %v3076 = vmul.f32 %v3068, %v3075
      %v3077 = vld [vmem:[%s10] sm:$0xff]
      %v3078 = vld [vmem:[%s10 + $0x8] sm:$0xff]
      %v3079 = vld [vmem:[%s10 + $0x10] sm:$0xff]
      %v3080 = vld [vmem:[%s10 + $0x18] sm:$0xff]
      %v3081 = vld [vmem:[%s10 + $0x20] sm:$0xff]
      %v3082 = vld [vmem:[%s10 + $0x28] sm:$0xff]
      %v3083 = vld [vmem:[%s10 + $0x30] sm:$0xff]
      %v3084 = vld [vmem:[%s10 + $0x38] sm:$0xff]
      %v3085 = vld [vmem:[%s11] sm:$0x1]
      %vm3086 = vcmask 523264
      %v3088 = vsel %vm3086, %v3076, 0
      %3090 = vmatprep.subr.mxu0 0.0
      %3091 = vmatpush1.msra.mxu0 %v3077
      %3092 = vmatprep.subr.mxu0 0.0
      %3093 = vmatpush1.msra.mxu0 %v3078
      %3094 = vmatprep.subr.mxu0 0.0
      %3095 = vmatpush1.msra.mxu0 %v3079
      %3096 = vmatprep.subr.mxu0 0.0
      %3097 = vmatpush1.msra.mxu0 %v3080
      %3098 = vmatprep.subr.mxu0 0.0
      %3099 = vmatpush1.msra.mxu0 %v3081
      %3100 = vmatprep.subr.mxu0 0.0
      %3101 = vmatpush1.msra.mxu0 %v3082
      %3102 = vmatprep.subr.mxu0 0.0
      %3103 = vmatpush1.msra.mxu0 %v3083
      %3104 = vmatprep.subr.mxu0 0.0
      %3105 = vmatpush1.msra.mxu0 %v3084
      %3106 = vmatprep.subr.mxu0 0.0
      %3107 = vmatpush1.msra.mxu0 0.0
      %3108 = vmatprep.subr.mxu0 0.0
      %3109 = vmatpush1.msra.mxu0 0.0
      %3110 = vmatprep.subr.mxu0 0.0
      %3111 = vmatpush1.msra.mxu0 0.0
      %3112 = vmatprep.subr.mxu0 0.0
      %3113 = vmatpush1.msra.mxu0 0.0
      %3114 = vmatprep.subr.mxu0 0.0
      %3115 = vmatpush1.msra.mxu0 0.0
      %3116 = vmatprep.subr.mxu0 0.0
      %3117 = vmatpush1.msra.mxu0 0.0
      %3118 = vmatprep.subr.mxu0 0.0
      %3119 = vmatpush1.msra.mxu0 0.0
      %3120 = vmatprep.subr.mxu0 0.0
      %3121 = vmatpush1.msra.mxu0 0.0
      %3122 = vmatprep.subr.mxu0 0.0
      %3123 = vmatpush1.msra.mxu0 0.0
      %3124 = vmatprep.subr.mxu0 0.0
      %3125 = vmatpush1.msra.mxu0 0.0
      %3126 = vmatprep.subr.mxu0 0.0
      %3127 = vmatpush1.msra.mxu0 0.0
      %3128 = vmatprep.subr.mxu0 0.0
      %3129 = vmatpush1.msra.mxu0 0.0
      %3130 = vmatprep.subr.mxu0 0.0
      %3131 = vmatpush1.msra.mxu0 0.0
      %3132 = vmatprep.subr.mxu0 0.0
      %3133 = vmatpush1.msra.mxu0 0.0
      %3134 = vmatprep.subr.mxu0 0.0
      %3135 = vmatpush1.msra.mxu0 0.0
      %3136 = vmatprep.subr.mxu0 0.0
      %3137 = vmatpush1.msra.mxu0 0.0
      %3138 = vmatprep.subr.mxu0 0.0
      %3139 = vmatpush1.msra.mxu0 0.0
      %3140 = vmatprep.subr.mxu0 0.0
      %3141 = vmatpush1.msra.mxu0 0.0
      %3142 = vmatprep.subr.mxu0 0.0
      %3143 = vmatpush1.msra.mxu0 0.0
      %3144 = vmatprep.subr.mxu0 0.0
      %3145 = vmatpush1.msra.mxu0 0.0
      %3146 = vmatprep.subr.mxu0 0.0
      %3147 = vmatpush1.msra.mxu0 0.0
      %3148 = vmatprep.subr.mxu0 0.0
      %3149 = vmatpush1.msra.mxu0 0.0
      %3150 = vmatprep.subr.mxu0 0.0
      %3151 = vmatpush1.msra.mxu0 0.0
      %3152 = vmatprep.subr.mxu0 0.0
      %3153 = vmatpush1.msra.mxu0 0.0
      %3154 = vmatprep.mubr.f32.mxu0 0.0
      %3155 = vmatmul.mubr.f32.gmra.mrb[0].mxu0 %v3088
      %v3156 = vpop.f32.mrb[0].mxu0
      %v3157 = vadd.f32 %v3085, %v3156
      %v3158 = vpop.f32.mrb[0].mxu0
      %3159 = vdwg.mxu0
      %v3160 = vadd.f32 %v2989, %v3157
      %v3161 = vsel %vm1730, %v3160, 0.0
      %3162 = vadd.xlane.f32.xlu0 %v3161
      %v3163 = vpop.xlane.xlu0 %3162
      %v3164 = vmul.f32 %v3163, %v1734
      %v3165 = vsub.f32 %v3160, %v3164
      %v3166 = vmul.f32 %v3165, %v3165
      %v3167 = vsel %vm1730, %v3166, 0.0
      %3168 = vadd.xlane.f32.xlu0 %v3167
      %v3169 = vpop.xlane.xlu0 %3168
      %v3170 = vmul.f32 %v3169, %v1734
      %v3171 = vadd.f32 %v3170, 1e-12
      %v3172 = vrsqrt.pop %v3171
      %v3173 = vmul.f32 %v3165, %v3172
      %v3174 = vrot.slane %v654, 4
      %v3176 = vmul.f32 %v3173, %v3174
      %v3177 = vrot.slane %v654, 5
      %v3179 = vadd.f32 %v3176, %v3177
      %3180 = vst.msk [vmem:[%s649] sm:$0x1] %vm1730, %v3179
      %p3181 = scmp.lt.s32.totalorder %s24, 5
      %s3182 = scalar_select %p3181, %s24, 5
      %s3183 = scalar_lea.vmem %s13, %s3182
      // Predicated region
      $region73: #{xvlm_for_similarities.5} parent=71 // pred_check
        %p3184 = pneg %p383
      $region74: #{xvlm_for_similarities.5} parent=71 // pred_check_branch
        %3186 = sbr.rel (%p3184) target = $region76
      $region75: #{xvlm_for_similarities.5} parent=71 // pred_region
        _
      $region76: #{xvlm_for_similarities.5} parent=71 // pred_fallthru
        _
    $region72: #{xvlm_for_similarities.5} parent=5 // pred_fallthru
      _
    %p3187 = scmp.le.s32.totalorder 2, %s19
    // Predicated region
    $region77: #{xvlm_for_similarities.5} parent=5 // pred_check
      %p3188 = pneg %p3187
    $region78: #{xvlm_for_similarities.5} parent=5 // pred_check_branch
      %3190 = sbr.rel (%p3188) target = $region80
    $region79: #{xvlm_for_similarities.5} parent=5 // pred_region
      %s3191 = ssub.s32 %s19, 2
      // Predicated region
      $region81: #{xvlm_for_similarities.5} parent=79 // pred_check
        %p3192 = pneg %p389
      $region82: #{xvlm_for_similarities.5} parent=79 // pred_check_branch
        %3194 = sbr.rel (%p3192) target = $region84
      $region83: #{xvlm_for_similarities.5} parent=79 // pred_region
        %p3195 = scmp.lt.s32.totalorder %s25, 5
        %s3196 = scalar_select %p3195, %s25, 5
        %s3197 = scalar_lea.vmem %s13, %s3196
      $region84: #{xvlm_for_similarities.5} parent=79 // pred_fallthru
        _
    $region80: #{xvlm_for_similarities.5} parent=5 // pred_fallthru
      _
  $region6: #{xvlm_for_similarities.5} parent=0 // loop_footer
    %s23 = sadd.s32 1, %s19
  $region7: #{xvlm_for_similarities.5} parent=0 // loop_footer_branch
    %18 = sbr.rel target = $region3
  $region8: #{xvlm_for_similarities.5} parent=0 // loop_exit
    _

</llo_original>
